<compile_context>
chip_gen: v6e
topology: v6e:2x2x1
jax: 0.10.0
libtpu: 0.0.40
codegen_flags: <defaults>
</compile_context>

<pallas_src>
from functools import partial

import jax
import jax.numpy as jnp
from jax import lax
from jax.experimental import pallas as pl
from jax.experimental.pallas import tpu as pltpu

BN_EPS = 1e-5


def _vmem_limit_bytes():
    """Generation-aware VMEM budget: ~3/4 of physical, capped at 96 MiB."""
    cap = 128 * 1024 * 1024
    try:
        cap = int(pltpu.get_tpu_info().vmem_capacity_bytes)
    except Exception:
        pass
    return int(min(cap * 3 // 4, 96 * 1024 * 1024))


VMEM_LIMIT = _vmem_limit_bytes()


# ---------------------------------------------------------------------------
# Fused kernel.  One grid step = one batch element (full depth slab).
#
#   x_ref:   (1, D, H, W*Cin)      bf16 input slab
#   k1:      (W*Cin, W*Cm)         kron(I_W, w1*bn1_scale), bf16
#   b1t:     (1, W*Cm)             BN1 bias tiled, f32
#   k2:      (W*Cm, W*Cm)          kron(I_W, w2a), bf16
#   gh:      (3, Ho, H)            0/1 row selector gh[kh,oh,h]=[h==s*oh+kh-1]
#   gww:     (3, 3, W*Cm, WoCmP)   depthwise col selector with weights folded
#   s2t/b2t: (1, WoCmP)            BN2 scale/bias tiled (zero padded), f32
#   w3k:     (WoCmP, WoCoP)        kron(I_Wo, w3*bn3_scale), zero padded, bf16
#   wdk:     (W*Cin, WoCoP)        strided shortcut selector x (wds*bnds_scale)
#   bsum:    (1, WoCoP)            bn3_bias + bnds_bias tiled, f32
#   o_ref:   (1, D, Ho, WoCoP)     f32, WoCoP is a multiple of 128 (lane-dense)
#
#   scratch: hrow (3, D, Ho, W*Cm) bf16   cached gh[kh] @ h2[d]
#            h3   (D*Ho, WoCmP)    bf16   BN2+ReLU output (tall conv3 LHS)
#            xs   (D*Ho, W*Cin)    bf16   strided-subsampled shortcut rows
# ---------------------------------------------------------------------------
def _fused_residual_kernel(x_ref, k1_ref, b1_ref, k2_ref, gh_ref, gww_ref,
                           s2_ref, b2_ref, w3_ref, wd_ref, bsum_ref,
                           o_ref, hrow_ref, h3_ref, xs_ref, *, stride):
    f32 = jnp.float32
    bf16 = jnp.bfloat16
    depth = x_ref.shape[1]
    ho = o_ref.shape[2]

    # --- Stage 1: conv1 + BN1 + ReLU + conv2[0]; h2 stays in VMEM only.
    #     The three row selections gh[kh] @ h2[d] are computed ONCE per input
    #     depth slice and cached (they are reused by up to 3 output depths).
    for d in range(depth):
        xd = x_ref[0, d]                                            # (H, W*Cin)
        h1 = jnp.dot(xd, k1_ref[...], preferred_element_type=f32)
        h1 = jnp.maximum(h1 + b1_ref[...], 0.0).astype(bf16)        # (H, W*Cm)
        h2d = jnp.dot(h1, k2_ref[...], preferred_element_type=f32).astype(bf16)
        for kh in range(3):
            hrow_ref[kh, d] = jnp.dot(gh_ref[kh], h2d,
                                      preferred_element_type=f32).astype(bf16)
        # Shortcut rows h = stride*oh (always in bounds).
        # TODO(synk): replace with a sublane-strided load
        #   x_ref[0, d, pl.ds(0, ho, stride=stride), :]
        # once strided bf16 sublane loads are validated on all generations;
        # the selection matmul is negligible at these shapes and known-safe.
        xs_ref[d * ho:(d + 1) * ho, :] = jnp.dot(
            gh_ref[1], xd, preferred_element_type=f32).astype(bf16)

    # --- Stage 2: depthwise 3x3x3 taps (stride + zero padding folded into
    #     gh / gww), f32 register accumulation, BN2 + ReLU.
    # TODO(synk): convert the od loop to lax.fori_loop(unroll=2..4) with
    #     pl.when boundary guards once D grows beyond ~8 (vreg pressure).
    wocm_p = gww_ref.shape[3]
    for od in range(depth):
        acc = jnp.zeros((ho, wocm_p), f32)
        for kd in range(3):
            idd = od + kd - 1
            if idd < 0 or idd >= depth:       # static zero-padding skip along D
                continue
            for kh in range(3):
                acc = acc + jnp.dot(hrow_ref[kh, idd], gww_ref[kd, kh],
                                    preferred_element_type=f32)
        h3 = jnp.maximum(acc * s2_ref[...] + b2_ref[...], 0.0)
        h3_ref[od * ho:(od + 1) * ho, :] = h3.astype(bf16)

    # --- Stage 3: row-batched epilogue: conv3 + BN3 + downsample shortcut +
    #     add + ReLU as one tall matmul pair; lane-dense f32 stores.
    out = jnp.dot(h3_ref[...], w3_ref[...], preferred_element_type=f32)
    out = out + jnp.dot(xs_ref[...], wd_ref[...], preferred_element_type=f32)
    out = jnp.maximum(out + bsum_ref[...], 0.0)
    for od in range(depth):
        o_ref[0, od] = out[od * ho:(od + 1) * ho, :]


def _fused_forward_call(xf, k1, b1t, k2, gh, gww, s2t, b2t, w3k, wdk, bsum,
                        stride):
    n, d, hh, wcin = xf.shape
    wcm = k1.shape[1]
    ho = gh.shape[1]
    wocm_p = gww.shape[3]
    woco_p = w3k.shape[1]

    flops = n * d * (
        2 * hh * wcin * wcm          # conv1
        + 2 * hh * wcm * wcm         # conv2[0]
        + 3 * 2 * ho * hh * wcm      # cached gh row selections
        + 2 * ho * hh * wcin         # shortcut row selection
        + 9 * 2 * ho * wcm * wocm_p  # depthwise taps (upper bound)
        + 2 * ho * wocm_p * woco_p   # conv3
        + 2 * ho * wcin * woco_p)    # downsample
    bytes_accessed = (
        2 * (xf.size + k1.size + k2.size + gh.size + gww.size
             + w3k.size + wdk.size)
        + 4 * (b1t.size + s2t.size + b2t.size + bsum.size)
        + 4 * n * d * ho * woco_p)
    cost = pl.CostEstimate(flops=flops, transcendentals=0,
                           bytes_accessed=bytes_accessed)

    kernel = partial(_fused_residual_kernel, stride=stride)
    return pl.pallas_call(
        kernel,
        out_shape=jax.ShapeDtypeStruct((n, d, ho, woco_p), jnp.float32),
        grid_spec=pltpu.PrefetchScalarGridSpec(
            num_scalar_prefetch=0,
            grid=(n,),
            in_specs=[
                pl.BlockSpec((1, d, hh, wcin), lambda i: (i, 0, 0, 0)),
                pl.BlockSpec(k1.shape, lambda i: (0, 0)),
                pl.BlockSpec(b1t.shape, lambda i: (0, 0)),
                pl.BlockSpec(k2.shape, lambda i: (0, 0)),
                pl.BlockSpec(gh.shape, lambda i: (0, 0, 0)),
                pl.BlockSpec(gww.shape, lambda i: (0, 0, 0, 0)),
                pl.BlockSpec(s2t.shape, lambda i: (0, 0)),
                pl.BlockSpec(b2t.shape, lambda i: (0, 0)),
                pl.BlockSpec(w3k.shape, lambda i: (0, 0)),
                pl.BlockSpec(wdk.shape, lambda i: (0, 0)),
                pl.BlockSpec(bsum.shape, lambda i: (0, 0)),
            ],
            out_specs=pl.BlockSpec((1, d, ho, woco_p), lambda i: (i, 0, 0, 0)),
            scratch_shapes=[
                pltpu.VMEM((3, d, ho, wcm), jnp.bfloat16),   # cached gh @ h2
                pltpu.VMEM((d * ho, wocm_p), jnp.bfloat16),  # tall h3 (conv3 LHS)
                pltpu.VMEM((d * ho, wcin), jnp.bfloat16),    # shortcut rows
            ],
        ),
        compiler_params=pltpu.CompilerParams(
            dimension_semantics=("parallel",),
            vmem_limit_bytes=VMEM_LIMIT,
        ),
        cost_estimate=cost,
    )(xf, k1, b1t, k2, gh, gww, s2t, b2t, w3k, wdk, bsum)


# ---------------------------------------------------------------------------
# Parameter setup (deterministic, synthetic) and BN folding.
# ---------------------------------------------------------------------------
def make_params(key, cin, cm, co):
    ks = jax.random.split(key, 10)

    def bn_params(k, c, zero_gamma=False):
        k1, k2, k3, k4 = jax.random.split(k, 4)
        gamma = (jnp.zeros((c,), jnp.float32) if zero_gamma
                 else jax.random.uniform(k1, (c,), jnp.float32, 0.5, 1.5))
        beta = 0.1 * jax.random.normal(k2, (c,), jnp.float32)
        mean = 0.1 * jax.random.normal(k3, (c,), jnp.float32)
        var = jax.random.uniform(k4, (c,), jnp.float32, 0.5, 1.5)
        return (gamma, beta, mean, var)

    return {
        "w1": 0.3 * jax.random.normal(ks[0], (cin, cm), jnp.float32),
        "bn1": bn_params(ks[1], cm),
        "w2a": 0.3 * jax.random.normal(ks[2], (cm, cm), jnp.float32),
        # depthwise weight, PyTorch shape (Cm, 1, 3, 3, 3) with group dim squeezed
        "w2b": 0.3 * jax.random.normal(ks[3], (cm, 3, 3, 3), jnp.float32),
        "bn2": bn_params(ks[4], cm),
        "w3": 0.3 * jax.random.normal(ks[5], (cm, co), jnp.float32),
        "bn3": bn_params(ks[6], co, zero_gamma=True),  # zero_init_last()
        "wds": 0.3 * jax.random.normal(ks[7], (cin, co), jnp.float32),
        "bnds": bn_params(ks[8], co),
    }


def _fold_bn(p):
    gamma, beta, mean, var = p
    scale = gamma / jnp.sqrt(var + BN_EPS)
    return scale, beta - mean * scale


# ---------------------------------------------------------------------------
# Full forward (Pallas path).  x: (N, D, H, W, Cin) channels-last.
# ---------------------------------------------------------------------------
def residual_conv3d_forward(x, params, stride):
    n, d, hh, ww, cin = x.shape
    cm = params["w1"].shape[1]
    co = params["w3"].shape[1]
    ho = (hh - 1) // stride + 1
    wo = (ww - 1) // stride + 1

    # Lane-density padding: pad output channels so Wo*Co_pad % 128 == 0 and the
    # padded (Ho, Wo*Cm) intermediate width rounds up to a multiple of 128.
    co_pad = co
    while (wo * co_pad) % 128:
        co_pad += 1
    wocm = wo * cm
    wocm_p = -(-wocm // 128) * 128
    woco_p = wo * co_pad

    s1, b1 = _fold_bn(params["bn1"])
    s2, b2 = _fold_bn(params["bn2"])
    s3, b3 = _fold_bn(params["bn3"])
    sds, bds = _fold_bn(params["bnds"])

    f32 = jnp.float32
    bf16 = jnp.bfloat16
    eye_w = jnp.eye(ww, dtype=f32)

    # Stage-1 folded block-diagonal weights (lane-dense W*C layout), bf16.
    k1 = jnp.kron(eye_w, params["w1"] * s1[None, :]).astype(bf16)   # (W*Cin, W*Cm)
    k2 = jnp.kron(eye_w, params["w2a"]).astype(bf16)                # (W*Cm,  W*Cm)
    b1t = jnp.tile(b1, ww)[None, :]                                 # (1, W*Cm) f32

    # Depthwise selection matrices (stride + zero padding baked in).
    k_off = jnp.arange(3)
    w_idx = jnp.arange(ww)
    ow_idx = jnp.arange(wo)
    h_idx = jnp.arange(hh)
    oh_idx = jnp.arange(ho)

    # gh[kh, oh, h] = [h == s*oh + kh - 1]; gh[1] doubles as shortcut selector.
    gh = (h_idx[None, None, :] ==
          (stride * oh_idx[None, :, None] + k_off[:, None, None] - 1)
          ).astype(bf16)                                            # (3, Ho, H)

    # sel_w[kw, w, ow] = [w == s*ow + kw - 1]
    sel_w = (w_idx[None, :, None] ==
             (stride * ow_idx[None, None, :] + k_off[:, None, None] - 1)
             ).astype(f32)                                          # (3, W, Wo)
    t = jnp.einsum("kwo,cdhk->dhwoc", sel_w, params["w2b"])         # (3,3,W,Wo,Cm)
    gww = jnp.einsum("dhwoc,ce->dhwcoe", t, jnp.eye(cm, dtype=f32))
    gww = gww.reshape(3, 3, ww * cm, wocm)
    gww = jnp.pad(gww, ((0, 0), (0, 0), (0, 0), (0, wocm_p - wocm))).astype(bf16)

    s2t = jnp.pad(jnp.tile(s2, wo), (0, wocm_p - wocm))[None, :]    # (1, WoCmP)
    b2t = jnp.pad(jnp.tile(b2, wo), (0, wocm_p - wocm))[None, :]    # pad bias=0

    w3p = jnp.pad(params["w3"] * s3[None, :], ((0, 0), (0, co_pad - co)))
    w3k = jnp.kron(jnp.eye(wo, dtype=f32), w3p)                     # (Wo*Cm, WoCoP)
    w3k = jnp.pad(w3k, ((0, wocm_p - wocm), (0, 0))).astype(bf16)   # (WoCmP, WoCoP)

    sel_ds = (w_idx[:, None] == stride * ow_idx[None, :]).astype(f32)   # (W, Wo)
    wdp = jnp.pad(params["wds"] * sds[None, :], ((0, 0), (0, co_pad - co)))
    wdk = jnp.einsum("wo,ce->wcoe", sel_ds, wdp).reshape(ww * cin, woco_p)
    wdk = wdk.astype(bf16)

    bsum = jnp.tile(jnp.pad(b3 + bds, (0, co_pad - co)), wo)[None, :]   # (1, WoCoP)

    # bf16 activation slab (halves the dominant HBM read).
    xf = x.reshape(n, d, hh, ww * cin).astype(bf16)

    out = _fused_forward_call(xf, k1, b1t, k2, gh, gww, s2t, b2t, w3k, wdk,
                              bsum, stride)
    return out.reshape(n, d, ho, wo, co_pad)[..., :co]


# ---------------------------------------------------------------------------
# Pure-JAX reference (for correctness checking only).
# ---------------------------------------------------------------------------
def reference_forward(x, params, stride):
    hp = lax.Precision.HIGHEST

    def bn(y, p):
        gamma, beta, mean, var = p
        return (y - mean) / jnp.sqrt(var + BN_EPS) * gamma + beta

    cm = params["w1"].shape[1]
    h = jnp.einsum("ndhwc,cm->ndhwm", x, params["w1"], precision=hp)
    h = jax.nn.relu(bn(h, params["bn1"]))
    h = jnp.einsum("ndhwc,cm->ndhwm", h, params["w2a"], precision=hp)
    rhs = params["w2b"].transpose(1, 2, 3, 0)[:, :, :, None, :]  # (3,3,3,1,Cm) DHWIO
    h = lax.conv_general_dilated(
        h, rhs, window_strides=(1, stride, stride),
        padding=((1, 1), (1, 1), (1, 1)),
        dimension_numbers=("NDHWC", "DHWIO", "NDHWC"),
        feature_group_count=cm, precision=hp)
    h = jax.nn.relu(bn(h, params["bn2"]))
    h = jnp.einsum("ndhwc,co->ndhwo", h, params["w3"], precision=hp)
    h = bn(h, params["bn3"])
    sc = x[:, :, ::stride, ::stride, :]
    sc = jnp.einsum("ndhwc,co->ndhwo", sc, params["wds"], precision=hp)
    sc = bn(sc, params["bnds"])
    return jax.nn.relu(h + sc)


if __name__ == "__main__":
    key = jax.random.PRNGKey(0)
    k_x, k_p = jax.random.split(key)

    # Small shapes: batch=2, in_channels=4, depth=4, spatial=16x16,
    # mid_channels=8, out_channels=8, stride=2.
    N, Cin, D, H, W = 2, 4, 4, 16, 16
    Cm, Co, STRIDE = 8, 8, 2

    x = jax.random.normal(k_x, (N, D, H, W, Cin), jnp.float32)  # NDHWC
    params = make_params(k_p, Cin, Cm, Co)

    fwd = jax.jit(residual_conv3d_forward, static_argnums=2)

    # Numerics check variant with nonzero bn3.gamma (main branch exercised).
    g3, b3, m3, v3 = params["bn3"]
    params_check = dict(params)
    params_check["bn3"] = (0.7 * jnp.ones_like(g3), b3, m3, v3)
    out_c = jax.block_until_ready(fwd(x, params_check, STRIDE))
    ref_c = reference_forward(x, params_check, STRIDE)
    assert out_c.shape == (N, D, H // STRIDE, W // STRIDE, Co)
    tol_c = 5e-2 * (float(jnp.max(jnp.abs(ref_c))) + 1.0)   # bf16 data path
    assert float(jnp.max(jnp.abs(out_c - ref_c))) < tol_c

    # Faithful module semantics (bn3.weight zero-initialized by zero_init_last()).
    out = jax.block_until_ready(fwd(x, params, STRIDE))
    ref = reference_forward(x, params, STRIDE)
    assert out.shape == (N, D, H // STRIDE, W // STRIDE, Co)
    tol = 5e-2 * (float(jnp.max(jnp.abs(ref))) + 1.0)
    assert float(jnp.max(jnp.abs(out - ref))) < tol

    print("KERNEL_OK")
</pallas_src>

<mosaic_0001>
module attributes {stable_mosaic.version = 11 : i64} {
  func.func @_fused_residual_kernel(%arg0: i32, %arg1: memref<1x4x16x64xbf16, #tpu.memory_space<vmem>>, %arg2: memref<64x128xbf16, #tpu.memory_space<vmem>>, %arg3: memref<1x128xf32, #tpu.memory_space<vmem>>, %arg4: memref<128x128xbf16, #tpu.memory_space<vmem>>, %arg5: memref<3x8x16xbf16, #tpu.memory_space<vmem>>, %arg6: memref<3x3x128x128xbf16, #tpu.memory_space<vmem>>, %arg7: memref<1x128xf32, #tpu.memory_space<vmem>>, %arg8: memref<1x128xf32, #tpu.memory_space<vmem>>, %arg9: memref<128x128xbf16, #tpu.memory_space<vmem>>, %arg10: memref<64x128xbf16, #tpu.memory_space<vmem>>, %arg11: memref<1x128xf32, #tpu.memory_space<vmem>>, %arg12: memref<1x4x8x128xf32, #tpu.memory_space<vmem>>, %arg13: memref<3x4x8x128xbf16, #tpu.memory_space<vmem>>, %arg14: memref<32x128xbf16, #tpu.memory_space<vmem>>, %arg15: memref<32x64xbf16, #tpu.memory_space<vmem>>) attributes {dimension_semantics = [#tpu.dimension_semantics<parallel>], iteration_bounds = array<i64: 2>, scalar_prefetch = 0 : i64, scratch_operands = 3 : i64, tpu.core_type = #tpu.core_type<tc>, window_params = [{transform_indices = @transform_0, window_bounds = array<i64: 1, 4, 16, 64>}, {pipeline_mode = #tpu.pipeline_mode<synchronous>, transform_indices = @transform_1, window_bounds = array<i64: 64, 128>}, {pipeline_mode = #tpu.pipeline_mode<synchronous>, transform_indices = @transform_2, window_bounds = array<i64: 1, 128>}, {pipeline_mode = #tpu.pipeline_mode<synchronous>, transform_indices = @transform_3, window_bounds = array<i64: 128, 128>}, {pipeline_mode = #tpu.pipeline_mode<synchronous>, transform_indices = @transform_4, window_bounds = array<i64: 3, 8, 16>}, {pipeline_mode = #tpu.pipeline_mode<synchronous>, transform_indices = @transform_5, window_bounds = array<i64: 3, 3, 128, 128>}, {pipeline_mode = #tpu.pipeline_mode<synchronous>, transform_indices = @transform_6, window_bounds = array<i64: 1, 128>}, {pipeline_mode = #tpu.pipeline_mode<synchronous>, transform_indices = @transform_7, window_bounds = array<i64: 1, 128>}, {pipeline_mode = #tpu.pipeline_mode<synchronous>, transform_indices = @transform_8, window_bounds = array<i64: 128, 128>}, {pipeline_mode = #tpu.pipeline_mode<synchronous>, transform_indices = @transform_9, window_bounds = array<i64: 64, 128>}, {pipeline_mode = #tpu.pipeline_mode<synchronous>, transform_indices = @transform_10, window_bounds = array<i64: 1, 128>}, {transform_indices = @transform_11, window_bounds = array<i64: 1, 4, 8, 128>}]} {
    %c0 = arith.constant 0 : index
    %c0_0 = arith.constant 0 : index
    %c0_1 = arith.constant 0 : index
    %c0_2 = arith.constant 0 : index
    %0 = vector.load %arg1[%c0, %c0_0, %c0_1, %c0_2] : memref<1x4x16x64xbf16, #tpu.memory_space<vmem>>, vector<1x1x16x64xbf16>
    %1 = vector.shape_cast %0 : vector<1x1x16x64xbf16> to vector<16x64xbf16>
    %c0_3 = arith.constant 0 : index
    %c0_4 = arith.constant 0 : index
    %2 = vector.load %arg2[%c0_3, %c0_4] : memref<64x128xbf16, #tpu.memory_space<vmem>>, vector<64x128xbf16>
    %cst = arith.constant dense<0.000000e+00> : vector<16x128xf32>
    %3 = tpu.matmul %1, %2, %cst {dimension_numbers = #tpu.dot_dimension_numbers<[1], [0], [0], [1], [0, 0, 1, 1], [], []>} : vector<16x64xbf16>, vector<64x128xbf16>, vector<16x128xf32> -> vector<16x128xf32>
    %c0_5 = arith.constant 0 : index
    %c0_6 = arith.constant 0 : index
    %4 = vector.load %arg3[%c0_5, %c0_6] : memref<1x128xf32, #tpu.memory_space<vmem>>, vector<1x128xf32>
    %5 = vector.broadcast %4 : vector<1x128xf32> to vector<16x128xf32>
    %6 = arith.addf %3, %5 : vector<16x128xf32>
    %cst_7 = arith.constant 0.000000e+00 : f32
    %7 = vector.broadcast %cst_7 : f32 to vector<16x128xf32>
    %8 = arith.maximumf %6, %7 : vector<16x128xf32>
    %9 = arith.truncf %8 : vector<16x128xf32> to vector<16x128xbf16>
    %c0_8 = arith.constant 0 : index
    %c0_9 = arith.constant 0 : index
    %10 = vector.load %arg4[%c0_8, %c0_9] : memref<128x128xbf16, #tpu.memory_space<vmem>>, vector<128x128xbf16>
    %cst_10 = arith.constant dense<0.000000e+00> : vector<16x128xf32>
    %11 = tpu.matmul %9, %10, %cst_10 {dimension_numbers = #tpu.dot_dimension_numbers<[1], [0], [0], [1], [0, 0, 1, 1], [], []>} : vector<16x128xbf16>, vector<128x128xbf16>, vector<16x128xf32> -> vector<16x128xf32>
    %12 = arith.truncf %11 : vector<16x128xf32> to vector<16x128xbf16>
    %c0_11 = arith.constant 0 : index
    %c0_12 = arith.constant 0 : index
    %c0_13 = arith.constant 0 : index
    %13 = vector.load %arg5[%c0_11, %c0_12, %c0_13] : memref<3x8x16xbf16, #tpu.memory_space<vmem>>, vector<1x8x16xbf16>
    %14 = vector.shape_cast %13 : vector<1x8x16xbf16> to vector<8x16xbf16>
    %cst_14 = arith.constant dense<0.000000e+00> : vector<8x128xf32>
    %15 = tpu.matmul %14, %12, %cst_14 {dimension_numbers = #tpu.dot_dimension_numbers<[1], [0], [0], [1], [0, 0, 1, 1], [], []>} : vector<8x16xbf16>, vector<16x128xbf16>, vector<8x128xf32> -> vector<8x128xf32>
    %16 = arith.truncf %15 : vector<8x128xf32> to vector<8x128xbf16>
    %c0_15 = arith.constant 0 : index
    %c0_16 = arith.constant 0 : index
    %c0_17 = arith.constant 0 : index
    %c0_18 = arith.constant 0 : index
    %17 = vector.load %arg13[%c0_15, %c0_16, %c0_17, %c0_18] : memref<3x4x8x128xbf16, #tpu.memory_space<vmem>>, vector<1x1x8x128xbf16>
    %18 = vector.shape_cast %17 : vector<1x1x8x128xbf16> to vector<8x128xbf16>
    %19 = vector.shape_cast %16 : vector<8x128xbf16> to vector<1x1x8x128xbf16>
    tpu.vector_store %arg13[%c0_15, %c0_16, %c0_17, %c0_18], %19 {strides = array<i32>} : memref<3x4x8x128xbf16, #tpu.memory_space<vmem>>, vector<1x1x8x128xbf16>,
    %c1 = arith.constant 1 : index
    %c0_19 = arith.constant 0 : index
    %c0_20 = arith.constant 0 : index
    %20 = vector.load %arg5[%c1, %c0_19, %c0_20] : memref<3x8x16xbf16, #tpu.memory_space<vmem>>, vector<1x8x16xbf16>
    %21 = vector.shape_cast %20 : vector<1x8x16xbf16> to vector<8x16xbf16>
    %cst_21 = arith.constant dense<0.000000e+00> : vector<8x128xf32>
    %22 = tpu.matmul %21, %12, %cst_21 {dimension_numbers = #tpu.dot_dimension_numbers<[1], [0], [0], [1], [0, 0, 1, 1], [], []>} : vector<8x16xbf16>, vector<16x128xbf16>, vector<8x128xf32> -> vector<8x128xf32>
    %23 = arith.truncf %22 : vector<8x128xf32> to vector<8x128xbf16>
    %c1_22 = arith.constant 1 : index
    %c0_23 = arith.constant 0 : index
    %c0_24 = arith.constant 0 : index
    %c0_25 = arith.constant 0 : index
    %24 = vector.load %arg13[%c1_22, %c0_23, %c0_24, %c0_25] : memref<3x4x8x128xbf16, #tpu.memory_space<vmem>>, vector<1x1x8x128xbf16>
    %25 = vector.shape_cast %24 : vector<1x1x8x128xbf16> to vector<8x128xbf16>
    %26 = vector.shape_cast %23 : vector<8x128xbf16> to vector<1x1x8x128xbf16>
    tpu.vector_store %arg13[%c1_22, %c0_23, %c0_24, %c0_25], %26 {strides = array<i32>} : memref<3x4x8x128xbf16, #tpu.memory_space<vmem>>, vector<1x1x8x128xbf16>,
    %c2 = arith.constant 2 : index
    %c0_26 = arith.constant 0 : index
    %c0_27 = arith.constant 0 : index
    %27 = vector.load %arg5[%c2, %c0_26, %c0_27] : memref<3x8x16xbf16, #tpu.memory_space<vmem>>, vector<1x8x16xbf16>
    %28 = vector.shape_cast %27 : vector<1x8x16xbf16> to vector<8x16xbf16>
    %cst_28 = arith.constant dense<0.000000e+00> : vector<8x128xf32>
    %29 = tpu.matmul %28, %12, %cst_28 {dimension_numbers = #tpu.dot_dimension_numbers<[1], [0], [0], [1], [0, 0, 1, 1], [], []>} : vector<8x16xbf16>, vector<16x128xbf16>, vector<8x128xf32> -> vector<8x128xf32>
    %30 = arith.truncf %29 : vector<8x128xf32> to vector<8x128xbf16>
    %c2_29 = arith.constant 2 : index
    %c0_30 = arith.constant 0 : index
    %c0_31 = arith.constant 0 : index
    %c0_32 = arith.constant 0 : index
    %31 = vector.load %arg13[%c2_29, %c0_30, %c0_31, %c0_32] : memref<3x4x8x128xbf16, #tpu.memory_space<vmem>>, vector<1x1x8x128xbf16>
    %32 = vector.shape_cast %31 : vector<1x1x8x128xbf16> to vector<8x128xbf16>
    %33 = vector.shape_cast %30 : vector<8x128xbf16> to vector<1x1x8x128xbf16>
    tpu.vector_store %arg13[%c2_29, %c0_30, %c0_31, %c0_32], %33 {strides = array<i32>} : memref<3x4x8x128xbf16, #tpu.memory_space<vmem>>, vector<1x1x8x128xbf16>,
    %c1_33 = arith.constant 1 : index
    %c0_34 = arith.constant 0 : index
    %c0_35 = arith.constant 0 : index
    %34 = vector.load %arg5[%c1_33, %c0_34, %c0_35] : memref<3x8x16xbf16, #tpu.memory_space<vmem>>, vector<1x8x16xbf16>
    %35 = vector.shape_cast %34 : vector<1x8x16xbf16> to vector<8x16xbf16>
    %cst_36 = arith.constant dense<0.000000e+00> : vector<8x64xf32>
    %36 = tpu.matmul %35, %1, %cst_36 {dimension_numbers = #tpu.dot_dimension_numbers<[1], [0], [0], [1], [0, 0, 1, 1], [], []>} : vector<8x16xbf16>, vector<16x64xbf16>, vector<8x64xf32> -> vector<8x64xf32>
    %37 = arith.truncf %36 : vector<8x64xf32> to vector<8x64xbf16>
    %c0_37 = arith.constant 0 : index
    %c0_38 = arith.constant 0 : index
    %38 = vector.load %arg15[%c0_37, %c0_38] : memref<32x64xbf16, #tpu.memory_space<vmem>>, vector<8x64xbf16>
    tpu.vector_store %arg15[%c0_37, %c0_38], %37 {strides = array<i32>} : memref<32x64xbf16, #tpu.memory_space<vmem>>, vector<8x64xbf16>,
    %c0_39 = arith.constant 0 : index
    %c1_40 = arith.constant 1 : index
    %c0_41 = arith.constant 0 : index
    %c0_42 = arith.constant 0 : index
    %39 = vector.load %arg1[%c0_39, %c1_40, %c0_41, %c0_42] : memref<1x4x16x64xbf16, #tpu.memory_space<vmem>>, vector<1x1x16x64xbf16>
    %40 = vector.shape_cast %39 : vector<1x1x16x64xbf16> to vector<16x64xbf16>
    %c0_43 = arith.constant 0 : index
    %c0_44 = arith.constant 0 : index
    %41 = vector.load %arg2[%c0_43, %c0_44] : memref<64x128xbf16, #tpu.memory_space<vmem>>, vector<64x128xbf16>
    %cst_45 = arith.constant dense<0.000000e+00> : vector<16x128xf32>
    %42 = tpu.matmul %40, %41, %cst_45 {dimension_numbers = #tpu.dot_dimension_numbers<[1], [0], [0], [1], [0, 0, 1, 1], [], []>} : vector<16x64xbf16>, vector<64x128xbf16>, vector<16x128xf32> -> vector<16x128xf32>
    %c0_46 = arith.constant 0 : index
    %c0_47 = arith.constant 0 : index
    %43 = vector.load %arg3[%c0_46, %c0_47] : memref<1x128xf32, #tpu.memory_space<vmem>>, vector<1x128xf32>
    %44 = vector.broadcast %43 : vector<1x128xf32> to vector<16x128xf32>
    %45 = arith.addf %42, %44 : vector<16x128xf32>
    %cst_48 = arith.constant 0.000000e+00 : f32
    %46 = vector.broadcast %cst_48 : f32 to vector<16x128xf32>
    %47 = arith.maximumf %45, %46 : vector<16x128xf32>
    %48 = arith.truncf %47 : vector<16x128xf32> to vector<16x128xbf16>
    %c0_49 = arith.constant 0 : index
    %c0_50 = arith.constant 0 : index
    %49 = vector.load %arg4[%c0_49, %c0_50] : memref<128x128xbf16, #tpu.memory_space<vmem>>, vector<128x128xbf16>
    %cst_51 = arith.constant dense<0.000000e+00> : vector<16x128xf32>
    %50 = tpu.matmul %48, %49, %cst_51 {dimension_numbers = #tpu.dot_dimension_numbers<[1], [0], [0], [1], [0, 0, 1, 1], [], []>} : vector<16x128xbf16>, vector<128x128xbf16>, vector<16x128xf32> -> vector<16x128xf32>
    %51 = arith.truncf %50 : vector<16x128xf32> to vector<16x128xbf16>
    %c0_52 = arith.constant 0 : index
    %c0_53 = arith.constant 0 : index
    %c0_54 = arith.constant 0 : index
    %52 = vector.load %arg5[%c0_52, %c0_53, %c0_54] : memref<3x8x16xbf16, #tpu.memory_space<vmem>>, vector<1x8x16xbf16>
    %53 = vector.shape_cast %52 : vector<1x8x16xbf16> to vector<8x16xbf16>
    %cst_55 = arith.constant dense<0.000000e+00> : vector<8x128xf32>
    %54 = tpu.matmul %53, %51, %cst_55 {dimension_numbers = #tpu.dot_dimension_numbers<[1], [0], [0], [1], [0, 0, 1, 1], [], []>} : vector<8x16xbf16>, vector<16x128xbf16>, vector<8x128xf32> -> vector<8x128xf32>
    %55 = arith.truncf %54 : vector<8x128xf32> to vector<8x128xbf16>
    %c0_56 = arith.constant 0 : index
    %c1_57 = arith.constant 1 : index
    %c0_58 = arith.constant 0 : index
    %c0_59 = arith.constant 0 : index
    %56 = vector.load %arg13[%c0_56, %c1_57, %c0_58, %c0_59] : memref<3x4x8x128xbf16, #tpu.memory_space<vmem>>, vector<1x1x8x128xbf16>
    %57 = vector.shape_cast %56 : vector<1x1x8x128xbf16> to vector<8x128xbf16>
    %58 = vector.shape_cast %55 : vector<8x128xbf16> to vector<1x1x8x128xbf16>
    tpu.vector_store %arg13[%c0_56, %c1_57, %c0_58, %c0_59], %58 {strides = array<i32>} : memref<3x4x8x128xbf16, #tpu.memory_space<vmem>>, vector<1x1x8x128xbf16>,
    %c1_60 = arith.constant 1 : index
    %c0_61 = arith.constant 0 : index
    %c0_62 = arith.constant 0 : index
    %59 = vector.load %arg5[%c1_60, %c0_61, %c0_62] : memref<3x8x16xbf16, #tpu.memory_space<vmem>>, vector<1x8x16xbf16>
    %60 = vector.shape_cast %59 : vector<1x8x16xbf16> to vector<8x16xbf16>
    %cst_63 = arith.constant dense<0.000000e+00> : vector<8x128xf32>
    %61 = tpu.matmul %60, %51, %cst_63 {dimension_numbers = #tpu.dot_dimension_numbers<[1], [0], [0], [1], [0, 0, 1, 1], [], []>} : vector<8x16xbf16>, vector<16x128xbf16>, vector<8x128xf32> -> vector<8x128xf32>
    %62 = arith.truncf %61 : vector<8x128xf32> to vector<8x128xbf16>
    %c1_64 = arith.constant 1 : index
    %c1_65 = arith.constant 1 : index
    %c0_66 = arith.constant 0 : index
    %c0_67 = arith.constant 0 : index
    %63 = vector.load %arg13[%c1_64, %c1_65, %c0_66, %c0_67] : memref<3x4x8x128xbf16, #tpu.memory_space<vmem>>, vector<1x1x8x128xbf16>
    %64 = vector.shape_cast %63 : vector<1x1x8x128xbf16> to vector<8x128xbf16>
    %65 = vector.shape_cast %62 : vector<8x128xbf16> to vector<1x1x8x128xbf16>
    tpu.vector_store %arg13[%c1_64, %c1_65, %c0_66, %c0_67], %65 {strides = array<i32>} : memref<3x4x8x128xbf16, #tpu.memory_space<vmem>>, vector<1x1x8x128xbf16>,
    %c2_68 = arith.constant 2 : index
    %c0_69 = arith.constant 0 : index
    %c0_70 = arith.constant 0 : index
    %66 = vector.load %arg5[%c2_68, %c0_69, %c0_70] : memref<3x8x16xbf16, #tpu.memory_space<vmem>>, vector<1x8x16xbf16>
    %67 = vector.shape_cast %66 : vector<1x8x16xbf16> to vector<8x16xbf16>
    %cst_71 = arith.constant dense<0.000000e+00> : vector<8x128xf32>
    %68 = tpu.matmul %67, %51, %cst_71 {dimension_numbers = #tpu.dot_dimension_numbers<[1], [0], [0], [1], [0, 0, 1, 1], [], []>} : vector<8x16xbf16>, vector<16x128xbf16>, vector<8x128xf32> -> vector<8x128xf32>
    %69 = arith.truncf %68 : vector<8x128xf32> to vector<8x128xbf16>
    %c2_72 = arith.constant 2 : index
    %c1_73 = arith.constant 1 : index
    %c0_74 = arith.constant 0 : index
    %c0_75 = arith.constant 0 : index
    %70 = vector.load %arg13[%c2_72, %c1_73, %c0_74, %c0_75] : memref<3x4x8x128xbf16, #tpu.memory_space<vmem>>, vector<1x1x8x128xbf16>
    %71 = vector.shape_cast %70 : vector<1x1x8x128xbf16> to vector<8x128xbf16>
    %72 = vector.shape_cast %69 : vector<8x128xbf16> to vector<1x1x8x128xbf16>
    tpu.vector_store %arg13[%c2_72, %c1_73, %c0_74, %c0_75], %72 {strides = array<i32>} : memref<3x4x8x128xbf16, #tpu.memory_space<vmem>>, vector<1x1x8x128xbf16>,
    %c1_76 = arith.constant 1 : index
    %c0_77 = arith.constant 0 : index
    %c0_78 = arith.constant 0 : index
    %73 = vector.load %arg5[%c1_76, %c0_77, %c0_78] : memref<3x8x16xbf16, #tpu.memory_space<vmem>>, vector<1x8x16xbf16>
    %74 = vector.shape_cast %73 : vector<1x8x16xbf16> to vector<8x16xbf16>
    %cst_79 = arith.constant dense<0.000000e+00> : vector<8x64xf32>
    %75 = tpu.matmul %74, %40, %cst_79 {dimension_numbers = #tpu.dot_dimension_numbers<[1], [0], [0], [1], [0, 0, 1, 1], [], []>} : vector<8x16xbf16>, vector<16x64xbf16>, vector<8x64xf32> -> vector<8x64xf32>
    %76 = arith.truncf %75 : vector<8x64xf32> to vector<8x64xbf16>
    %c8 = arith.constant 8 : index
    %c0_80 = arith.constant 0 : index
    %77 = vector.load %arg15[%c8, %c0_80] : memref<32x64xbf16, #tpu.memory_space<vmem>>, vector<8x64xbf16>
    tpu.vector_store %arg15[%c8, %c0_80], %76 {strides = array<i32>} : memref<32x64xbf16, #tpu.memory_space<vmem>>, vector<8x64xbf16>,
    %c0_81 = arith.constant 0 : index
    %c2_82 = arith.constant 2 : index
    %c0_83 = arith.constant 0 : index
    %c0_84 = arith.constant 0 : index
    %78 = vector.load %arg1[%c0_81, %c2_82, %c0_83, %c0_84] : memref<1x4x16x64xbf16, #tpu.memory_space<vmem>>, vector<1x1x16x64xbf16>
    %79 = vector.shape_cast %78 : vector<1x1x16x64xbf16> to vector<16x64xbf16>
    %c0_85 = arith.constant 0 : index
    %c0_86 = arith.constant 0 : index
    %80 = vector.load %arg2[%c0_85, %c0_86] : memref<64x128xbf16, #tpu.memory_space<vmem>>, vector<64x128xbf16>
    %cst_87 = arith.constant dense<0.000000e+00> : vector<16x128xf32>
    %81 = tpu.matmul %79, %80, %cst_87 {dimension_numbers = #tpu.dot_dimension_numbers<[1], [0], [0], [1], [0, 0, 1, 1], [], []>} : vector<16x64xbf16>, vector<64x128xbf16>, vector<16x128xf32> -> vector<16x128xf32>
    %c0_88 = arith.constant 0 : index
    %c0_89 = arith.constant 0 : index
    %82 = vector.load %arg3[%c0_88, %c0_89] : memref<1x128xf32, #tpu.memory_space<vmem>>, vector<1x128xf32>
    %83 = vector.broadcast %82 : vector<1x128xf32> to vector<16x128xf32>
    %84 = arith.addf %81, %83 : vector<16x128xf32>
    %cst_90 = arith.constant 0.000000e+00 : f32
    %85 = vector.broadcast %cst_90 : f32 to vector<16x128xf32>
    %86 = arith.maximumf %84, %85 : vector<16x128xf32>
    %87 = arith.truncf %86 : vector<16x128xf32> to vector<16x128xbf16>
    %c0_91 = arith.constant 0 : index
    %c0_92 = arith.constant 0 : index
    %88 = vector.load %arg4[%c0_91, %c0_92] : memref<128x128xbf16, #tpu.memory_space<vmem>>, vector<128x128xbf16>
    %cst_93 = arith.constant dense<0.000000e+00> : vector<16x128xf32>
    %89 = tpu.matmul %87, %88, %cst_93 {dimension_numbers = #tpu.dot_dimension_numbers<[1], [0], [0], [1], [0, 0, 1, 1], [], []>} : vector<16x128xbf16>, vector<128x128xbf16>, vector<16x128xf32> -> vector<16x128xf32>
    %90 = arith.truncf %89 : vector<16x128xf32> to vector<16x128xbf16>
    %c0_94 = arith.constant 0 : index
    %c0_95 = arith.constant 0 : index
    %c0_96 = arith.constant 0 : index
    %91 = vector.load %arg5[%c0_94, %c0_95, %c0_96] : memref<3x8x16xbf16, #tpu.memory_space<vmem>>, vector<1x8x16xbf16>
    %92 = vector.shape_cast %91 : vector<1x8x16xbf16> to vector<8x16xbf16>
    %cst_97 = arith.constant dense<0.000000e+00> : vector<8x128xf32>
    %93 = tpu.matmul %92, %90, %cst_97 {dimension_numbers = #tpu.dot_dimension_numbers<[1], [0], [0], [1], [0, 0, 1, 1], [], []>} : vector<8x16xbf16>, vector<16x128xbf16>, vector<8x128xf32> -> vector<8x128xf32>
    %94 = arith.truncf %93 : vector<8x128xf32> to vector<8x128xbf16>
    %c0_98 = arith.constant 0 : index
    %c2_99 = arith.constant 2 : index
    %c0_100 = arith.constant 0 : index
    %c0_101 = arith.constant 0 : index
    %95 = vector.load %arg13[%c0_98, %c2_99, %c0_100, %c0_101] : memref<3x4x8x128xbf16, #tpu.memory_space<vmem>>, vector<1x1x8x128xbf16>
    %96 = vector.shape_cast %95 : vector<1x1x8x128xbf16> to vector<8x128xbf16>
    %97 = vector.shape_cast %94 : vector<8x128xbf16> to vector<1x1x8x128xbf16>
    tpu.vector_store %arg13[%c0_98, %c2_99, %c0_100, %c0_101], %97 {strides = array<i32>} : memref<3x4x8x128xbf16, #tpu.memory_space<vmem>>, vector<1x1x8x128xbf16>,
    %c1_102 = arith.constant 1 : index
    %c0_103 = arith.constant 0 : index
    %c0_104 = arith.constant 0 : index
    %98 = vector.load %arg5[%c1_102, %c0_103, %c0_104] : memref<3x8x16xbf16, #tpu.memory_space<vmem>>, vector<1x8x16xbf16>
    %99 = vector.shape_cast %98 : vector<1x8x16xbf16> to vector<8x16xbf16>
    %cst_105 = arith.constant dense<0.000000e+00> : vector<8x128xf32>
    %100 = tpu.matmul %99, %90, %cst_105 {dimension_numbers = #tpu.dot_dimension_numbers<[1], [0], [0], [1], [0, 0, 1, 1], [], []>} : vector<8x16xbf16>, vector<16x128xbf16>, vector<8x128xf32> -> vector<8x128xf32>
    %101 = arith.truncf %100 : vector<8x128xf32> to vector<8x128xbf16>
    %c1_106 = arith.constant 1 : index
    %c2_107 = arith.constant 2 : index
    %c0_108 = arith.constant 0 : index
    %c0_109 = arith.constant 0 : index
    %102 = vector.load %arg13[%c1_106, %c2_107, %c0_108, %c0_109] : memref<3x4x8x128xbf16, #tpu.memory_space<vmem>>, vector<1x1x8x128xbf16>
    %103 = vector.shape_cast %102 : vector<1x1x8x128xbf16> to vector<8x128xbf16>
    %104 = vector.shape_cast %101 : vector<8x128xbf16> to vector<1x1x8x128xbf16>
    tpu.vector_store %arg13[%c1_106, %c2_107, %c0_108, %c0_109], %104 {strides = array<i32>} : memref<3x4x8x128xbf16, #tpu.memory_space<vmem>>, vector<1x1x8x128xbf16>,
    %c2_110 = arith.constant 2 : index
    %c0_111 = arith.constant 0 : index
    %c0_112 = arith.constant 0 : index
    %105 = vector.load %arg5[%c2_110, %c0_111, %c0_112] : memref<3x8x16xbf16, #tpu.memory_space<vmem>>, vector<1x8x16xbf16>
    %106 = vector.shape_cast %105 : vector<1x8x16xbf16> to vector<8x16xbf16>
    %cst_113 = arith.constant dense<0.000000e+00> : vector<8x128xf32>
    %107 = tpu.matmul %106, %90, %cst_113 {dimension_numbers = #tpu.dot_dimension_numbers<[1], [0], [0], [1], [0, 0, 1, 1], [], []>} : vector<8x16xbf16>, vector<16x128xbf16>, vector<8x128xf32> -> vector<8x128xf32>
    %108 = arith.truncf %107 : vector<8x128xf32> to vector<8x128xbf16>
    %c2_114 = arith.constant 2 : index
    %c2_115 = arith.constant 2 : index
    %c0_116 = arith.constant 0 : index
    %c0_117 = arith.constant 0 : index
    %109 = vector.load %arg13[%c2_114, %c2_115, %c0_116, %c0_117] : memref<3x4x8x128xbf16, #tpu.memory_space<vmem>>, vector<1x1x8x128xbf16>
    %110 = vector.shape_cast %109 : vector<1x1x8x128xbf16> to vector<8x128xbf16>
    %111 = vector.shape_cast %108 : vector<8x128xbf16> to vector<1x1x8x128xbf16>
    tpu.vector_store %arg13[%c2_114, %c2_115, %c0_116, %c0_117], %111 {strides = array<i32>} : memref<3x4x8x128xbf16, #tpu.memory_space<vmem>>, vector<1x1x8x128xbf16>,
    %c1_118 = arith.constant 1 : index
    %c0_119 = arith.constant 0 : index
    %c0_120 = arith.constant 0 : index
    %112 = vector.load %arg5[%c1_118, %c0_119, %c0_120] : memref<3x8x16xbf16, #tpu.memory_space<vmem>>, vector<1x8x16xbf16>
    %113 = vector.shape_cast %112 : vector<1x8x16xbf16> to vector<8x16xbf16>
    %cst_121 = arith.constant dense<0.000000e+00> : vector<8x64xf32>
    %114 = tpu.matmul %113, %79, %cst_121 {dimension_numbers = #tpu.dot_dimension_numbers<[1], [0], [0], [1], [0, 0, 1, 1], [], []>} : vector<8x16xbf16>, vector<16x64xbf16>, vector<8x64xf32> -> vector<8x64xf32>
    %115 = arith.truncf %114 : vector<8x64xf32> to vector<8x64xbf16>
    %c16 = arith.constant 16 : index
    %c0_122 = arith.constant 0 : index
    %116 = vector.load %arg15[%c16, %c0_122] : memref<32x64xbf16, #tpu.memory_space<vmem>>, vector<8x64xbf16>
    tpu.vector_store %arg15[%c16, %c0_122], %115 {strides = array<i32>} : memref<32x64xbf16, #tpu.memory_space<vmem>>, vector<8x64xbf16>,
    %c0_123 = arith.constant 0 : index
    %c3 = arith.constant 3 : index
    %c0_124 = arith.constant 0 : index
    %c0_125 = arith.constant 0 : index
    %117 = vector.load %arg1[%c0_123, %c3, %c0_124, %c0_125] : memref<1x4x16x64xbf16, #tpu.memory_space<vmem>>, vector<1x1x16x64xbf16>
    %118 = vector.shape_cast %117 : vector<1x1x16x64xbf16> to vector<16x64xbf16>
    %c0_126 = arith.constant 0 : index
    %c0_127 = arith.constant 0 : index
    %119 = vector.load %arg2[%c0_126, %c0_127] : memref<64x128xbf16, #tpu.memory_space<vmem>>, vector<64x128xbf16>
    %cst_128 = arith.constant dense<0.000000e+00> : vector<16x128xf32>
    %120 = tpu.matmul %118, %119, %cst_128 {dimension_numbers = #tpu.dot_dimension_numbers<[1], [0], [0], [1], [0, 0, 1, 1], [], []>} : vector<16x64xbf16>, vector<64x128xbf16>, vector<16x128xf32> -> vector<16x128xf32>
    %c0_129 = arith.constant 0 : index
    %c0_130 = arith.constant 0 : index
    %121 = vector.load %arg3[%c0_129, %c0_130] : memref<1x128xf32, #tpu.memory_space<vmem>>, vector<1x128xf32>
    %122 = vector.broadcast %121 : vector<1x128xf32> to vector<16x128xf32>
    %123 = arith.addf %120, %122 : vector<16x128xf32>
    %cst_131 = arith.constant 0.000000e+00 : f32
    %124 = vector.broadcast %cst_131 : f32 to vector<16x128xf32>
    %125 = arith.maximumf %123, %124 : vector<16x128xf32>
    %126 = arith.truncf %125 : vector<16x128xf32> to vector<16x128xbf16>
    %c0_132 = arith.constant 0 : index
    %c0_133 = arith.constant 0 : index
    %127 = vector.load %arg4[%c0_132, %c0_133] : memref<128x128xbf16, #tpu.memory_space<vmem>>, vector<128x128xbf16>
    %cst_134 = arith.constant dense<0.000000e+00> : vector<16x128xf32>
    %128 = tpu.matmul %126, %127, %cst_134 {dimension_numbers = #tpu.dot_dimension_numbers<[1], [0], [0], [1], [0, 0, 1, 1], [], []>} : vector<16x128xbf16>, vector<128x128xbf16>, vector<16x128xf32> -> vector<16x128xf32>
    %129 = arith.truncf %128 : vector<16x128xf32> to vector<16x128xbf16>
    %c0_135 = arith.constant 0 : index
    %c0_136 = arith.constant 0 : index
    %c0_137 = arith.constant 0 : index
    %130 = vector.load %arg5[%c0_135, %c0_136, %c0_137] : memref<3x8x16xbf16, #tpu.memory_space<vmem>>, vector<1x8x16xbf16>
    %131 = vector.shape_cast %130 : vector<1x8x16xbf16> to vector<8x16xbf16>
    %cst_138 = arith.constant dense<0.000000e+00> : vector<8x128xf32>
    %132 = tpu.matmul %131, %129, %cst_138 {dimension_numbers = #tpu.dot_dimension_numbers<[1], [0], [0], [1], [0, 0, 1, 1], [], []>} : vector<8x16xbf16>, vector<16x128xbf16>, vector<8x128xf32> -> vector<8x128xf32>
    %133 = arith.truncf %132 : vector<8x128xf32> to vector<8x128xbf16>
    %c0_139 = arith.constant 0 : index
    %c3_140 = arith.constant 3 : index
    %c0_141 = arith.constant 0 : index
    %c0_142 = arith.constant 0 : index
    %134 = vector.load %arg13[%c0_139, %c3_140, %c0_141, %c0_142] : memref<3x4x8x128xbf16, #tpu.memory_space<vmem>>, vector<1x1x8x128xbf16>
    %135 = vector.shape_cast %134 : vector<1x1x8x128xbf16> to vector<8x128xbf16>
    %136 = vector.shape_cast %133 : vector<8x128xbf16> to vector<1x1x8x128xbf16>
    tpu.vector_store %arg13[%c0_139, %c3_140, %c0_141, %c0_142], %136 {strides = array<i32>} : memref<3x4x8x128xbf16, #tpu.memory_space<vmem>>, vector<1x1x8x128xbf16>,
    %c1_143 = arith.constant 1 : index
    %c0_144 = arith.constant 0 : index
    %c0_145 = arith.constant 0 : index
    %137 = vector.load %arg5[%c1_143, %c0_144, %c0_145] : memref<3x8x16xbf16, #tpu.memory_space<vmem>>, vector<1x8x16xbf16>
    %138 = vector.shape_cast %137 : vector<1x8x16xbf16> to vector<8x16xbf16>
    %cst_146 = arith.constant dense<0.000000e+00> : vector<8x128xf32>
    %139 = tpu.matmul %138, %129, %cst_146 {dimension_numbers = #tpu.dot_dimension_numbers<[1], [0], [0], [1], [0, 0, 1, 1], [], []>} : vector<8x16xbf16>, vector<16x128xbf16>, vector<8x128xf32> -> vector<8x128xf32>
    %140 = arith.truncf %139 : vector<8x128xf32> to vector<8x128xbf16>
    %c1_147 = arith.constant 1 : index
    %c3_148 = arith.constant 3 : index
    %c0_149 = arith.constant 0 : index
    %c0_150 = arith.constant 0 : index
    %141 = vector.load %arg13[%c1_147, %c3_148, %c0_149, %c0_150] : memref<3x4x8x128xbf16, #tpu.memory_space<vmem>>, vector<1x1x8x128xbf16>
    %142 = vector.shape_cast %141 : vector<1x1x8x128xbf16> to vector<8x128xbf16>
    %143 = vector.shape_cast %140 : vector<8x128xbf16> to vector<1x1x8x128xbf16>
    tpu.vector_store %arg13[%c1_147, %c3_148, %c0_149, %c0_150], %143 {strides = array<i32>} : memref<3x4x8x128xbf16, #tpu.memory_space<vmem>>, vector<1x1x8x128xbf16>,
    %c2_151 = arith.constant 2 : index
    %c0_152 = arith.constant 0 : index
    %c0_153 = arith.constant 0 : index
    %144 = vector.load %arg5[%c2_151, %c0_152, %c0_153] : memref<3x8x16xbf16, #tpu.memory_space<vmem>>, vector<1x8x16xbf16>
    %145 = vector.shape_cast %144 : vector<1x8x16xbf16> to vector<8x16xbf16>
    %cst_154 = arith.constant dense<0.000000e+00> : vector<8x128xf32>
    %146 = tpu.matmul %145, %129, %cst_154 {dimension_numbers = #tpu.dot_dimension_numbers<[1], [0], [0], [1], [0, 0, 1, 1], [], []>} : vector<8x16xbf16>, vector<16x128xbf16>, vector<8x128xf32> -> vector<8x128xf32>
    %147 = arith.truncf %146 : vector<8x128xf32> to vector<8x128xbf16>
    %c2_155 = arith.constant 2 : index
    %c3_156 = arith.constant 3 : index
    %c0_157 = arith.constant 0 : index
    %c0_158 = arith.constant 0 : index
    %148 = vector.load %arg13[%c2_155, %c3_156, %c0_157, %c0_158] : memref<3x4x8x128xbf16, #tpu.memory_space<vmem>>, vector<1x1x8x128xbf16>
    %149 = vector.shape_cast %148 : vector<1x1x8x128xbf16> to vector<8x128xbf16>
    %150 = vector.shape_cast %147 : vector<8x128xbf16> to vector<1x1x8x128xbf16>
    tpu.vector_store %arg13[%c2_155, %c3_156, %c0_157, %c0_158], %150 {strides = array<i32>} : memref<3x4x8x128xbf16, #tpu.memory_space<vmem>>, vector<1x1x8x128xbf16>,
    %c1_159 = arith.constant 1 : index
    %c0_160 = arith.constant 0 : index
    %c0_161 = arith.constant 0 : index
    %151 = vector.load %arg5[%c1_159, %c0_160, %c0_161] : memref<3x8x16xbf16, #tpu.memory_space<vmem>>, vector<1x8x16xbf16>
    %152 = vector.shape_cast %151 : vector<1x8x16xbf16> to vector<8x16xbf16>
    %cst_162 = arith.constant dense<0.000000e+00> : vector<8x64xf32>
    %153 = tpu.matmul %152, %118, %cst_162 {dimension_numbers = #tpu.dot_dimension_numbers<[1], [0], [0], [1], [0, 0, 1, 1], [], []>} : vector<8x16xbf16>, vector<16x64xbf16>, vector<8x64xf32> -> vector<8x64xf32>
    %154 = arith.truncf %153 : vector<8x64xf32> to vector<8x64xbf16>
    %c24 = arith.constant 24 : index
    %c0_163 = arith.constant 0 : index
    %155 = vector.load %arg15[%c24, %c0_163] : memref<32x64xbf16, #tpu.memory_space<vmem>>, vector<8x64xbf16>
    tpu.vector_store %arg15[%c24, %c0_163], %154 {strides = array<i32>} : memref<32x64xbf16, #tpu.memory_space<vmem>>, vector<8x64xbf16>,
    %cst_164 = arith.constant 0.000000e+00 : f32
    %156 = vector.broadcast %cst_164 : f32 to vector<8x128xf32>
    %c0_165 = arith.constant 0 : index
    %c0_166 = arith.constant 0 : index
    %c0_167 = arith.constant 0 : index
    %c0_168 = arith.constant 0 : index
    %157 = vector.load %arg13[%c0_165, %c0_166, %c0_167, %c0_168] : memref<3x4x8x128xbf16, #tpu.memory_space<vmem>>, vector<1x1x8x128xbf16>
    %158 = vector.shape_cast %157 : vector<1x1x8x128xbf16> to vector<8x128xbf16>
    %c1_169 = arith.constant 1 : index
    %c0_170 = arith.constant 0 : index
    %c0_171 = arith.constant 0 : index
    %c0_172 = arith.constant 0 : index
    %159 = vector.load %arg6[%c1_169, %c0_170, %c0_171, %c0_172] : memref<3x3x128x128xbf16, #tpu.memory_space<vmem>>, vector<1x1x128x128xbf16>
    %160 = vector.shape_cast %159 : vector<1x1x128x128xbf16> to vector<128x128xbf16>
    %cst_173 = arith.constant dense<0.000000e+00> : vector<8x128xf32>
    %161 = tpu.matmul %158, %160, %cst_173 {dimension_numbers = #tpu.dot_dimension_numbers<[1], [0], [0], [1], [0, 0, 1, 1], [], []>} : vector<8x128xbf16>, vector<128x128xbf16>, vector<8x128xf32> -> vector<8x128xf32>
    %162 = arith.addf %156, %161 : vector<8x128xf32>
    %c1_174 = arith.constant 1 : index
    %c0_175 = arith.constant 0 : index
    %c0_176 = arith.constant 0 : index
    %c0_177 = arith.constant 0 : index
    %163 = vector.load %arg13[%c1_174, %c0_175, %c0_176, %c0_177] : memref<3x4x8x128xbf16, #tpu.memory_space<vmem>>, vector<1x1x8x128xbf16>
    %164 = vector.shape_cast %163 : vector<1x1x8x128xbf16> to vector<8x128xbf16>
    %c1_178 = arith.constant 1 : index
    %c1_179 = arith.constant 1 : index
    %c0_180 = arith.constant 0 : index
    %c0_181 = arith.constant 0 : index
    %165 = vector.load %arg6[%c1_178, %c1_179, %c0_180, %c0_181] : memref<3x3x128x128xbf16, #tpu.memory_space<vmem>>, vector<1x1x128x128xbf16>
    %166 = vector.shape_cast %165 : vector<1x1x128x128xbf16> to vector<128x128xbf16>
    %cst_182 = arith.constant dense<0.000000e+00> : vector<8x128xf32>
    %167 = tpu.matmul %164, %166, %cst_182 {dimension_numbers = #tpu.dot_dimension_numbers<[1], [0], [0], [1], [0, 0, 1, 1], [], []>} : vector<8x128xbf16>, vector<128x128xbf16>, vector<8x128xf32> -> vector<8x128xf32>
    %168 = arith.addf %162, %167 : vector<8x128xf32>
    %c2_183 = arith.constant 2 : index
    %c0_184 = arith.constant 0 : index
    %c0_185 = arith.constant 0 : index
    %c0_186 = arith.constant 0 : index
    %169 = vector.load %arg13[%c2_183, %c0_184, %c0_185, %c0_186] : memref<3x4x8x128xbf16, #tpu.memory_space<vmem>>, vector<1x1x8x128xbf16>
    %170 = vector.shape_cast %169 : vector<1x1x8x128xbf16> to vector<8x128xbf16>
    %c1_187 = arith.constant 1 : index
    %c2_188 = arith.constant 2 : index
    %c0_189 = arith.constant 0 : index
    %c0_190 = arith.constant 0 : index
    %171 = vector.load %arg6[%c1_187, %c2_188, %c0_189, %c0_190] : memref<3x3x128x128xbf16, #tpu.memory_space<vmem>>, vector<1x1x128x128xbf16>
    %172 = vector.shape_cast %171 : vector<1x1x128x128xbf16> to vector<128x128xbf16>
    %cst_191 = arith.constant dense<0.000000e+00> : vector<8x128xf32>
    %173 = tpu.matmul %170, %172, %cst_191 {dimension_numbers = #tpu.dot_dimension_numbers<[1], [0], [0], [1], [0, 0, 1, 1], [], []>} : vector<8x128xbf16>, vector<128x128xbf16>, vector<8x128xf32> -> vector<8x128xf32>
    %174 = arith.addf %168, %173 : vector<8x128xf32>
    %c0_192 = arith.constant 0 : index
    %c1_193 = arith.constant 1 : index
    %c0_194 = arith.constant 0 : index
    %c0_195 = arith.constant 0 : index
    %175 = vector.load %arg13[%c0_192, %c1_193, %c0_194, %c0_195] : memref<3x4x8x128xbf16, #tpu.memory_space<vmem>>, vector<1x1x8x128xbf16>
    %176 = vector.shape_cast %175 : vector<1x1x8x128xbf16> to vector<8x128xbf16>
    %c2_196 = arith.constant 2 : index
    %c0_197 = arith.constant 0 : index
    %c0_198 = arith.constant 0 : index
    %c0_199 = arith.constant 0 : index
    %177 = vector.load %arg6[%c2_196, %c0_197, %c0_198, %c0_199] : memref<3x3x128x128xbf16, #tpu.memory_space<vmem>>, vector<1x1x128x128xbf16>
    %178 = vector.shape_cast %177 : vector<1x1x128x128xbf16> to vector<128x128xbf16>
    %cst_200 = arith.constant dense<0.000000e+00> : vector<8x128xf32>
    %179 = tpu.matmul %176, %178, %cst_200 {dimension_numbers = #tpu.dot_dimension_numbers<[1], [0], [0], [1], [0, 0, 1, 1], [], []>} : vector<8x128xbf16>, vector<128x128xbf16>, vector<8x128xf32> -> vector<8x128xf32>
    %180 = arith.addf %174, %179 : vector<8x128xf32>
    %c1_201 = arith.constant 1 : index
    %c1_202 = arith.constant 1 : index
    %c0_203 = arith.constant 0 : index
    %c0_204 = arith.constant 0 : index
    %181 = vector.load %arg13[%c1_201, %c1_202, %c0_203, %c0_204] : memref<3x4x8x128xbf16, #tpu.memory_space<vmem>>, vector<1x1x8x128xbf16>
    %182 = vector.shape_cast %181 : vector<1x1x8x128xbf16> to vector<8x128xbf16>
    %c2_205 = arith.constant 2 : index
    %c1_206 = arith.constant 1 : index
    %c0_207 = arith.constant 0 : index
    %c0_208 = arith.constant 0 : index
    %183 = vector.load %arg6[%c2_205, %c1_206, %c0_207, %c0_208] : memref<3x3x128x128xbf16, #tpu.memory_space<vmem>>, vector<1x1x128x128xbf16>
    %184 = vector.shape_cast %183 : vector<1x1x128x128xbf16> to vector<128x128xbf16>
    %cst_209 = arith.constant dense<0.000000e+00> : vector<8x128xf32>
    %185 = tpu.matmul %182, %184, %cst_209 {dimension_numbers = #tpu.dot_dimension_numbers<[1], [0], [0], [1], [0, 0, 1, 1], [], []>} : vector<8x128xbf16>, vector<128x128xbf16>, vector<8x128xf32> -> vector<8x128xf32>
    %186 = arith.addf %180, %185 : vector<8x128xf32>
    %c2_210 = arith.constant 2 : index
    %c1_211 = arith.constant 1 : index
    %c0_212 = arith.constant 0 : index
    %c0_213 = arith.constant 0 : index
    %187 = vector.load %arg13[%c2_210, %c1_211, %c0_212, %c0_213] : memref<3x4x8x128xbf16, #tpu.memory_space<vmem>>, vector<1x1x8x128xbf16>
    %188 = vector.shape_cast %187 : vector<1x1x8x128xbf16> to vector<8x128xbf16>
    %c2_214 = arith.constant 2 : index
    %c2_215 = arith.constant 2 : index
    %c0_216 = arith.constant 0 : index
    %c0_217 = arith.constant 0 : index
    %189 = vector.load %arg6[%c2_214, %c2_215, %c0_216, %c0_217] : memref<3x3x128x128xbf16, #tpu.memory_space<vmem>>, vector<1x1x128x128xbf16>
    %190 = vector.shape_cast %189 : vector<1x1x128x128xbf16> to vector<128x128xbf16>
    %cst_218 = arith.constant dense<0.000000e+00> : vector<8x128xf32>
    %191 = tpu.matmul %188, %190, %cst_218 {dimension_numbers = #tpu.dot_dimension_numbers<[1], [0], [0], [1], [0, 0, 1, 1], [], []>} : vector<8x128xbf16>, vector<128x128xbf16>, vector<8x128xf32> -> vector<8x128xf32>
    %192 = arith.addf %186, %191 : vector<8x128xf32>
    %c0_219 = arith.constant 0 : index
    %c0_220 = arith.constant 0 : index
    %193 = vector.load %arg7[%c0_219, %c0_220] : memref<1x128xf32, #tpu.memory_space<vmem>>, vector<1x128xf32>
    %194 = vector.broadcast %193 : vector<1x128xf32> to vector<8x128xf32>
    %195 = arith.mulf %192, %194 : vector<8x128xf32>
    %c0_221 = arith.constant 0 : index
    %c0_222 = arith.constant 0 : index
    %196 = vector.load %arg8[%c0_221, %c0_222] : memref<1x128xf32, #tpu.memory_space<vmem>>, vector<1x128xf32>
    %197 = vector.broadcast %196 : vector<1x128xf32> to vector<8x128xf32>
    %198 = arith.addf %195, %197 : vector<8x128xf32>
    %cst_223 = arith.constant 0.000000e+00 : f32
    %199 = vector.broadcast %cst_223 : f32 to vector<8x128xf32>
    %200 = arith.maximumf %198, %199 : vector<8x128xf32>
    %201 = arith.truncf %200 : vector<8x128xf32> to vector<8x128xbf16>
    %c0_224 = arith.constant 0 : index
    %c0_225 = arith.constant 0 : index
    %202 = vector.load %arg14[%c0_224, %c0_225] : memref<32x128xbf16, #tpu.memory_space<vmem>>, vector<8x128xbf16>
    tpu.vector_store %arg14[%c0_224, %c0_225], %201 {strides = array<i32>} : memref<32x128xbf16, #tpu.memory_space<vmem>>, vector<8x128xbf16>,
    %cst_226 = arith.constant 0.000000e+00 : f32
    %203 = vector.broadcast %cst_226 : f32 to vector<8x128xf32>
    %c0_227 = arith.constant 0 : index
    %c0_228 = arith.constant 0 : index
    %c0_229 = arith.constant 0 : index
    %c0_230 = arith.constant 0 : index
    %204 = vector.load %arg13[%c0_227, %c0_228, %c0_229, %c0_230] : memref<3x4x8x128xbf16, #tpu.memory_space<vmem>>, vector<1x1x8x128xbf16>
    %205 = vector.shape_cast %204 : vector<1x1x8x128xbf16> to vector<8x128xbf16>
    %c0_231 = arith.constant 0 : index
    %c0_232 = arith.constant 0 : index
    %c0_233 = arith.constant 0 : index
    %c0_234 = arith.constant 0 : index
    %206 = vector.load %arg6[%c0_231, %c0_232, %c0_233, %c0_234] : memref<3x3x128x128xbf16, #tpu.memory_space<vmem>>, vector<1x1x128x128xbf16>
    %207 = vector.shape_cast %206 : vector<1x1x128x128xbf16> to vector<128x128xbf16>
    %cst_235 = arith.constant dense<0.000000e+00> : vector<8x128xf32>
    %208 = tpu.matmul %205, %207, %cst_235 {dimension_numbers = #tpu.dot_dimension_numbers<[1], [0], [0], [1], [0, 0, 1, 1], [], []>} : vector<8x128xbf16>, vector<128x128xbf16>, vector<8x128xf32> -> vector<8x128xf32>
    %209 = arith.addf %203, %208 : vector<8x128xf32>
    %c1_236 = arith.constant 1 : index
    %c0_237 = arith.constant 0 : index
    %c0_238 = arith.constant 0 : index
    %c0_239 = arith.constant 0 : index
    %210 = vector.load %arg13[%c1_236, %c0_237, %c0_238, %c0_239] : memref<3x4x8x128xbf16, #tpu.memory_space<vmem>>, vector<1x1x8x128xbf16>
    %211 = vector.shape_cast %210 : vector<1x1x8x128xbf16> to vector<8x128xbf16>
    %c0_240 = arith.constant 0 : index
    %c1_241 = arith.constant 1 : index
    %c0_242 = arith.constant 0 : index
    %c0_243 = arith.constant 0 : index
    %212 = vector.load %arg6[%c0_240, %c1_241, %c0_242, %c0_243] : memref<3x3x128x128xbf16, #tpu.memory_space<vmem>>, vector<1x1x128x128xbf16>
    %213 = vector.shape_cast %212 : vector<1x1x128x128xbf16> to vector<128x128xbf16>
    %cst_244 = arith.constant dense<0.000000e+00> : vector<8x128xf32>
    %214 = tpu.matmul %211, %213, %cst_244 {dimension_numbers = #tpu.dot_dimension_numbers<[1], [0], [0], [1], [0, 0, 1, 1], [], []>} : vector<8x128xbf16>, vector<128x128xbf16>, vector<8x128xf32> -> vector<8x128xf32>
    %215 = arith.addf %209, %214 : vector<8x128xf32>
    %c2_245 = arith.constant 2 : index
    %c0_246 = arith.constant 0 : index
    %c0_247 = arith.constant 0 : index
    %c0_248 = arith.constant 0 : index
    %216 = vector.load %arg13[%c2_245, %c0_246, %c0_247, %c0_248] : memref<3x4x8x128xbf16, #tpu.memory_space<vmem>>, vector<1x1x8x128xbf16>
    %217 = vector.shape_cast %216 : vector<1x1x8x128xbf16> to vector<8x128xbf16>
    %c0_249 = arith.constant 0 : index
    %c2_250 = arith.constant 2 : index
    %c0_251 = arith.constant 0 : index
    %c0_252 = arith.constant 0 : index
    %218 = vector.load %arg6[%c0_249, %c2_250, %c0_251, %c0_252] : memref<3x3x128x128xbf16, #tpu.memory_space<vmem>>, vector<1x1x128x128xbf16>
    %219 = vector.shape_cast %218 : vector<1x1x128x128xbf16> to vector<128x128xbf16>
    %cst_253 = arith.constant dense<0.000000e+00> : vector<8x128xf32>
    %220 = tpu.matmul %217, %219, %cst_253 {dimension_numbers = #tpu.dot_dimension_numbers<[1], [0], [0], [1], [0, 0, 1, 1], [], []>} : vector<8x128xbf16>, vector<128x128xbf16>, vector<8x128xf32> -> vector<8x128xf32>
    %221 = arith.addf %215, %220 : vector<8x128xf32>
    %c0_254 = arith.constant 0 : index
    %c1_255 = arith.constant 1 : index
    %c0_256 = arith.constant 0 : index
    %c0_257 = arith.constant 0 : index
    %222 = vector.load %arg13[%c0_254, %c1_255, %c0_256, %c0_257] : memref<3x4x8x128xbf16, #tpu.memory_space<vmem>>, vector<1x1x8x128xbf16>
    %223 = vector.shape_cast %222 : vector<1x1x8x128xbf16> to vector<8x128xbf16>
    %c1_258 = arith.constant 1 : index
    %c0_259 = arith.constant 0 : index
    %c0_260 = arith.constant 0 : index
    %c0_261 = arith.constant 0 : index
    %224 = vector.load %arg6[%c1_258, %c0_259, %c0_260, %c0_261] : memref<3x3x128x128xbf16, #tpu.memory_space<vmem>>, vector<1x1x128x128xbf16>
    %225 = vector.shape_cast %224 : vector<1x1x128x128xbf16> to vector<128x128xbf16>
    %cst_262 = arith.constant dense<0.000000e+00> : vector<8x128xf32>
    %226 = tpu.matmul %223, %225, %cst_262 {dimension_numbers = #tpu.dot_dimension_numbers<[1], [0], [0], [1], [0, 0, 1, 1], [], []>} : vector<8x128xbf16>, vector<128x128xbf16>, vector<8x128xf32> -> vector<8x128xf32>
    %227 = arith.addf %221, %226 : vector<8x128xf32>
    %c1_263 = arith.constant 1 : index
    %c1_264 = arith.constant 1 : index
    %c0_265 = arith.constant 0 : index
    %c0_266 = arith.constant 0 : index
    %228 = vector.load %arg13[%c1_263, %c1_264, %c0_265, %c0_266] : memref<3x4x8x128xbf16, #tpu.memory_space<vmem>>, vector<1x1x8x128xbf16>
    %229 = vector.shape_cast %228 : vector<1x1x8x128xbf16> to vector<8x128xbf16>
    %c1_267 = arith.constant 1 : index
    %c1_268 = arith.constant 1 : index
    %c0_269 = arith.constant 0 : index
    %c0_270 = arith.constant 0 : index
    %230 = vector.load %arg6[%c1_267, %c1_268, %c0_269, %c0_270] : memref<3x3x128x128xbf16, #tpu.memory_space<vmem>>, vector<1x1x128x128xbf16>
    %231 = vector.shape_cast %230 : vector<1x1x128x128xbf16> to vector<128x128xbf16>
    %cst_271 = arith.constant dense<0.000000e+00> : vector<8x128xf32>
    %232 = tpu.matmul %229, %231, %cst_271 {dimension_numbers = #tpu.dot_dimension_numbers<[1], [0], [0], [1], [0, 0, 1, 1], [], []>} : vector<8x128xbf16>, vector<128x128xbf16>, vector<8x128xf32> -> vector<8x128xf32>
    %233 = arith.addf %227, %232 : vector<8x128xf32>
    %c2_272 = arith.constant 2 : index
    %c1_273 = arith.constant 1 : index
    %c0_274 = arith.constant 0 : index
    %c0_275 = arith.constant 0 : index
    %234 = vector.load %arg13[%c2_272, %c1_273, %c0_274, %c0_275] : memref<3x4x8x128xbf16, #tpu.memory_space<vmem>>, vector<1x1x8x128xbf16>
    %235 = vector.shape_cast %234 : vector<1x1x8x128xbf16> to vector<8x128xbf16>
    %c1_276 = arith.constant 1 : index
    %c2_277 = arith.constant 2 : index
    %c0_278 = arith.constant 0 : index
    %c0_279 = arith.constant 0 : index
    %236 = vector.load %arg6[%c1_276, %c2_277, %c0_278, %c0_279] : memref<3x3x128x128xbf16, #tpu.memory_space<vmem>>, vector<1x1x128x128xbf16>
    %237 = vector.shape_cast %236 : vector<1x1x128x128xbf16> to vector<128x128xbf16>
    %cst_280 = arith.constant dense<0.000000e+00> : vector<8x128xf32>
    %238 = tpu.matmul %235, %237, %cst_280 {dimension_numbers = #tpu.dot_dimension_numbers<[1], [0], [0], [1], [0, 0, 1, 1], [], []>} : vector<8x128xbf16>, vector<128x128xbf16>, vector<8x128xf32> -> vector<8x128xf32>
    %239 = arith.addf %233, %238 : vector<8x128xf32>
    %c0_281 = arith.constant 0 : index
    %c2_282 = arith.constant 2 : index
    %c0_283 = arith.constant 0 : index
    %c0_284 = arith.constant 0 : index
    %240 = vector.load %arg13[%c0_281, %c2_282, %c0_283, %c0_284] : memref<3x4x8x128xbf16, #tpu.memory_space<vmem>>, vector<1x1x8x128xbf16>
    %241 = vector.shape_cast %240 : vector<1x1x8x128xbf16> to vector<8x128xbf16>
    %c2_285 = arith.constant 2 : index
    %c0_286 = arith.constant 0 : index
    %c0_287 = arith.constant 0 : index
    %c0_288 = arith.constant 0 : index
    %242 = vector.load %arg6[%c2_285, %c0_286, %c0_287, %c0_288] : memref<3x3x128x128xbf16, #tpu.memory_space<vmem>>, vector<1x1x128x128xbf16>
    %243 = vector.shape_cast %242 : vector<1x1x128x128xbf16> to vector<128x128xbf16>
    %cst_289 = arith.constant dense<0.000000e+00> : vector<8x128xf32>
    %244 = tpu.matmul %241, %243, %cst_289 {dimension_numbers = #tpu.dot_dimension_numbers<[1], [0], [0], [1], [0, 0, 1, 1], [], []>} : vector<8x128xbf16>, vector<128x128xbf16>, vector<8x128xf32> -> vector<8x128xf32>
    %245 = arith.addf %239, %244 : vector<8x128xf32>
    %c1_290 = arith.constant 1 : index
    %c2_291 = arith.constant 2 : index
    %c0_292 = arith.constant 0 : index
    %c0_293 = arith.constant 0 : index
    %246 = vector.load %arg13[%c1_290, %c2_291, %c0_292, %c0_293] : memref<3x4x8x128xbf16, #tpu.memory_space<vmem>>, vector<1x1x8x128xbf16>
    %247 = vector.shape_cast %246 : vector<1x1x8x128xbf16> to vector<8x128xbf16>
    %c2_294 = arith.constant 2 : index
    %c1_295 = arith.constant 1 : index
    %c0_296 = arith.constant 0 : index
    %c0_297 = arith.constant 0 : index
    %248 = vector.load %arg6[%c2_294, %c1_295, %c0_296, %c0_297] : memref<3x3x128x128xbf16, #tpu.memory_space<vmem>>, vector<1x1x128x128xbf16>
    %249 = vector.shape_cast %248 : vector<1x1x128x128xbf16> to vector<128x128xbf16>
    %cst_298 = arith.constant dense<0.000000e+00> : vector<8x128xf32>
    %250 = tpu.matmul %247, %249, %cst_298 {dimension_numbers = #tpu.dot_dimension_numbers<[1], [0], [0], [1], [0, 0, 1, 1], [], []>} : vector<8x128xbf16>, vector<128x128xbf16>, vector<8x128xf32> -> vector<8x128xf32>
    %251 = arith.addf %245, %250 : vector<8x128xf32>
    %c2_299 = arith.constant 2 : index
    %c2_300 = arith.constant 2 : index
    %c0_301 = arith.constant 0 : index
    %c0_302 = arith.constant 0 : index
    %252 = vector.load %arg13[%c2_299, %c2_300, %c0_301, %c0_302] : memref<3x4x8x128xbf16, #tpu.memory_space<vmem>>, vector<1x1x8x128xbf16>
    %253 = vector.shape_cast %252 : vector<1x1x8x128xbf16> to vector<8x128xbf16>
    %c2_303 = arith.constant 2 : index
    %c2_304 = arith.constant 2 : index
    %c0_305 = arith.constant 0 : index
    %c0_306 = arith.constant 0 : index
    %254 = vector.load %arg6[%c2_303, %c2_304, %c0_305, %c0_306] : memref<3x3x128x128xbf16, #tpu.memory_space<vmem>>, vector<1x1x128x128xbf16>
    %255 = vector.shape_cast %254 : vector<1x1x128x128xbf16> to vector<128x128xbf16>
    %cst_307 = arith.constant dense<0.000000e+00> : vector<8x128xf32>
    %256 = tpu.matmul %253, %255, %cst_307 {dimension_numbers = #tpu.dot_dimension_numbers<[1], [0], [0], [1], [0, 0, 1, 1], [], []>} : vector<8x128xbf16>, vector<128x128xbf16>, vector<8x128xf32> -> vector<8x128xf32>
    %257 = arith.addf %251, %256 : vector<8x128xf32>
    %c0_308 = arith.constant 0 : index
    %c0_309 = arith.constant 0 : index
    %258 = vector.load %arg7[%c0_308, %c0_309] : memref<1x128xf32, #tpu.memory_space<vmem>>, vector<1x128xf32>
    %259 = vector.broadcast %258 : vector<1x128xf32> to vector<8x128xf32>
    %260 = arith.mulf %257, %259 : vector<8x128xf32>
    %c0_310 = arith.constant 0 : index
    %c0_311 = arith.constant 0 : index
    %261 = vector.load %arg8[%c0_310, %c0_311] : memref<1x128xf32, #tpu.memory_space<vmem>>, vector<1x128xf32>
    %262 = vector.broadcast %261 : vector<1x128xf32> to vector<8x128xf32>
    %263 = arith.addf %260, %262 : vector<8x128xf32>
    %cst_312 = arith.constant 0.000000e+00 : f32
    %264 = vector.broadcast %cst_312 : f32 to vector<8x128xf32>
    %265 = arith.maximumf %263, %264 : vector<8x128xf32>
    %266 = arith.truncf %265 : vector<8x128xf32> to vector<8x128xbf16>
    %c8_313 = arith.constant 8 : index
    %c0_314 = arith.constant 0 : index
    %267 = vector.load %arg14[%c8_313, %c0_314] : memref<32x128xbf16, #tpu.memory_space<vmem>>, vector<8x128xbf16>
    tpu.vector_store %arg14[%c8_313, %c0_314], %266 {strides = array<i32>} : memref<32x128xbf16, #tpu.memory_space<vmem>>, vector<8x128xbf16>,
    %cst_315 = arith.constant 0.000000e+00 : f32
    %268 = vector.broadcast %cst_315 : f32 to vector<8x128xf32>
    %c0_316 = arith.constant 0 : index
    %c1_317 = arith.constant 1 : index
    %c0_318 = arith.constant 0 : index
    %c0_319 = arith.constant 0 : index
    %269 = vector.load %arg13[%c0_316, %c1_317, %c0_318, %c0_319] : memref<3x4x8x128xbf16, #tpu.memory_space<vmem>>, vector<1x1x8x128xbf16>
    %270 = vector.shape_cast %269 : vector<1x1x8x128xbf16> to vector<8x128xbf16>
    %c0_320 = arith.constant 0 : index
    %c0_321 = arith.constant 0 : index
    %c0_322 = arith.constant 0 : index
    %c0_323 = arith.constant 0 : index
    %271 = vector.load %arg6[%c0_320, %c0_321, %c0_322, %c0_323] : memref<3x3x128x128xbf16, #tpu.memory_space<vmem>>, vector<1x1x128x128xbf16>
    %272 = vector.shape_cast %271 : vector<1x1x128x128xbf16> to vector<128x128xbf16>
    %cst_324 = arith.constant dense<0.000000e+00> : vector<8x128xf32>
    %273 = tpu.matmul %270, %272, %cst_324 {dimension_numbers = #tpu.dot_dimension_numbers<[1], [0], [0], [1], [0, 0, 1, 1], [], []>} : vector<8x128xbf16>, vector<128x128xbf16>, vector<8x128xf32> -> vector<8x128xf32>
    %274 = arith.addf %268, %273 : vector<8x128xf32>
    %c1_325 = arith.constant 1 : index
    %c1_326 = arith.constant 1 : index
    %c0_327 = arith.constant 0 : index
    %c0_328 = arith.constant 0 : index
    %275 = vector.load %arg13[%c1_325, %c1_326, %c0_327, %c0_328] : memref<3x4x8x128xbf16, #tpu.memory_space<vmem>>, vector<1x1x8x128xbf16>
    %276 = vector.shape_cast %275 : vector<1x1x8x128xbf16> to vector<8x128xbf16>
    %c0_329 = arith.constant 0 : index
    %c1_330 = arith.constant 1 : index
    %c0_331 = arith.constant 0 : index
    %c0_332 = arith.constant 0 : index
    %277 = vector.load %arg6[%c0_329, %c1_330, %c0_331, %c0_332] : memref<3x3x128x128xbf16, #tpu.memory_space<vmem>>, vector<1x1x128x128xbf16>
    %278 = vector.shape_cast %277 : vector<1x1x128x128xbf16> to vector<128x128xbf16>
    %cst_333 = arith.constant dense<0.000000e+00> : vector<8x128xf32>
    %279 = tpu.matmul %276, %278, %cst_333 {dimension_numbers = #tpu.dot_dimension_numbers<[1], [0], [0], [1], [0, 0, 1, 1], [], []>} : vector<8x128xbf16>, vector<128x128xbf16>, vector<8x128xf32> -> vector<8x128xf32>
    %280 = arith.addf %274, %279 : vector<8x128xf32>
    %c2_334 = arith.constant 2 : index
    %c1_335 = arith.constant 1 : index
    %c0_336 = arith.constant 0 : index
    %c0_337 = arith.constant 0 : index
    %281 = vector.load %arg13[%c2_334, %c1_335, %c0_336, %c0_337] : memref<3x4x8x128xbf16, #tpu.memory_space<vmem>>, vector<1x1x8x128xbf16>
    %282 = vector.shape_cast %281 : vector<1x1x8x128xbf16> to vector<8x128xbf16>
    %c0_338 = arith.constant 0 : index
    %c2_339 = arith.constant 2 : index
    %c0_340 = arith.constant 0 : index
    %c0_341 = arith.constant 0 : index
    %283 = vector.load %arg6[%c0_338, %c2_339, %c0_340, %c0_341] : memref<3x3x128x128xbf16, #tpu.memory_space<vmem>>, vector<1x1x128x128xbf16>
    %284 = vector.shape_cast %283 : vector<1x1x128x128xbf16> to vector<128x128xbf16>
    %cst_342 = arith.constant dense<0.000000e+00> : vector<8x128xf32>
    %285 = tpu.matmul %282, %284, %cst_342 {dimension_numbers = #tpu.dot_dimension_numbers<[1], [0], [0], [1], [0, 0, 1, 1], [], []>} : vector<8x128xbf16>, vector<128x128xbf16>, vector<8x128xf32> -> vector<8x128xf32>
    %286 = arith.addf %280, %285 : vector<8x128xf32>
    %c0_343 = arith.constant 0 : index
    %c2_344 = arith.constant 2 : index
    %c0_345 = arith.constant 0 : index
    %c0_346 = arith.constant 0 : index
    %287 = vector.load %arg13[%c0_343, %c2_344, %c0_345, %c0_346] : memref<3x4x8x128xbf16, #tpu.memory_space<vmem>>, vector<1x1x8x128xbf16>
    %288 = vector.shape_cast %287 : vector<1x1x8x128xbf16> to vector<8x128xbf16>
    %c1_347 = arith.constant 1 : index
    %c0_348 = arith.constant 0 : index
    %c0_349 = arith.constant 0 : index
    %c0_350 = arith.constant 0 : index
    %289 = vector.load %arg6[%c1_347, %c0_348, %c0_349, %c0_350] : memref<3x3x128x128xbf16, #tpu.memory_space<vmem>>, vector<1x1x128x128xbf16>
    %290 = vector.shape_cast %289 : vector<1x1x128x128xbf16> to vector<128x128xbf16>
    %cst_351 = arith.constant dense<0.000000e+00> : vector<8x128xf32>
    %291 = tpu.matmul %288, %290, %cst_351 {dimension_numbers = #tpu.dot_dimension_numbers<[1], [0], [0], [1], [0, 0, 1, 1], [], []>} : vector<8x128xbf16>, vector<128x128xbf16>, vector<8x128xf32> -> vector<8x128xf32>
    %292 = arith.addf %286, %291 : vector<8x128xf32>
    %c1_352 = arith.constant 1 : index
    %c2_353 = arith.constant 2 : index
    %c0_354 = arith.constant 0 : index
    %c0_355 = arith.constant 0 : index
    %293 = vector.load %arg13[%c1_352, %c2_353, %c0_354, %c0_355] : memref<3x4x8x128xbf16, #tpu.memory_space<vmem>>, vector<1x1x8x128xbf16>
    %294 = vector.shape_cast %293 : vector<1x1x8x128xbf16> to vector<8x128xbf16>
    %c1_356 = arith.constant 1 : index
    %c1_357 = arith.constant 1 : index
    %c0_358 = arith.constant 0 : index
    %c0_359 = arith.constant 0 : index
    %295 = vector.load %arg6[%c1_356, %c1_357, %c0_358, %c0_359] : memref<3x3x128x128xbf16, #tpu.memory_space<vmem>>, vector<1x1x128x128xbf16>
    %296 = vector.shape_cast %295 : vector<1x1x128x128xbf16> to vector<128x128xbf16>
    %cst_360 = arith.constant dense<0.000000e+00> : vector<8x128xf32>
    %297 = tpu.matmul %294, %296, %cst_360 {dimension_numbers = #tpu.dot_dimension_numbers<[1], [0], [0], [1], [0, 0, 1, 1], [], []>} : vector<8x128xbf16>, vector<128x128xbf16>, vector<8x128xf32> -> vector<8x128xf32>
    %298 = arith.addf %292, %297 : vector<8x128xf32>
    %c2_361 = arith.constant 2 : index
    %c2_362 = arith.constant 2 : index
    %c0_363 = arith.constant 0 : index
    %c0_364 = arith.constant 0 : index
    %299 = vector.load %arg13[%c2_361, %c2_362, %c0_363, %c0_364] : memref<3x4x8x128xbf16, #tpu.memory_space<vmem>>, vector<1x1x8x128xbf16>
    %300 = vector.shape_cast %299 : vector<1x1x8x128xbf16> to vector<8x128xbf16>
    %c1_365 = arith.constant 1 : index
    %c2_366 = arith.constant 2 : index
    %c0_367 = arith.constant 0 : index
    %c0_368 = arith.constant 0 : index
    %301 = vector.load %arg6[%c1_365, %c2_366, %c0_367, %c0_368] : memref<3x3x128x128xbf16, #tpu.memory_space<vmem>>, vector<1x1x128x128xbf16>
    %302 = vector.shape_cast %301 : vector<1x1x128x128xbf16> to vector<128x128xbf16>
    %cst_369 = arith.constant dense<0.000000e+00> : vector<8x128xf32>
    %303 = tpu.matmul %300, %302, %cst_369 {dimension_numbers = #tpu.dot_dimension_numbers<[1], [0], [0], [1], [0, 0, 1, 1], [], []>} : vector<8x128xbf16>, vector<128x128xbf16>, vector<8x128xf32> -> vector<8x128xf32>
    %304 = arith.addf %298, %303 : vector<8x128xf32>
    %c0_370 = arith.constant 0 : index
    %c3_371 = arith.constant 3 : index
    %c0_372 = arith.constant 0 : index
    %c0_373 = arith.constant 0 : index
    %305 = vector.load %arg13[%c0_370, %c3_371, %c0_372, %c0_373] : memref<3x4x8x128xbf16, #tpu.memory_space<vmem>>, vector<1x1x8x128xbf16>
    %306 = vector.shape_cast %305 : vector<1x1x8x128xbf16> to vector<8x128xbf16>
    %c2_374 = arith.constant 2 : index
    %c0_375 = arith.constant 0 : index
    %c0_376 = arith.constant 0 : index
    %c0_377 = arith.constant 0 : index
    %307 = vector.load %arg6[%c2_374, %c0_375, %c0_376, %c0_377] : memref<3x3x128x128xbf16, #tpu.memory_space<vmem>>, vector<1x1x128x128xbf16>
    %308 = vector.shape_cast %307 : vector<1x1x128x128xbf16> to vector<128x128xbf16>
    %cst_378 = arith.constant dense<0.000000e+00> : vector<8x128xf32>
    %309 = tpu.matmul %306, %308, %cst_378 {dimension_numbers = #tpu.dot_dimension_numbers<[1], [0], [0], [1], [0, 0, 1, 1], [], []>} : vector<8x128xbf16>, vector<128x128xbf16>, vector<8x128xf32> -> vector<8x128xf32>
    %310 = arith.addf %304, %309 : vector<8x128xf32>
    %c1_379 = arith.constant 1 : index
    %c3_380 = arith.constant 3 : index
    %c0_381 = arith.constant 0 : index
    %c0_382 = arith.constant 0 : index
    %311 = vector.load %arg13[%c1_379, %c3_380, %c0_381, %c0_382] : memref<3x4x8x128xbf16, #tpu.memory_space<vmem>>, vector<1x1x8x128xbf16>
    %312 = vector.shape_cast %311 : vector<1x1x8x128xbf16> to vector<8x128xbf16>
    %c2_383 = arith.constant 2 : index
    %c1_384 = arith.constant 1 : index
    %c0_385 = arith.constant 0 : index
    %c0_386 = arith.constant 0 : index
    %313 = vector.load %arg6[%c2_383, %c1_384, %c0_385, %c0_386] : memref<3x3x128x128xbf16, #tpu.memory_space<vmem>>, vector<1x1x128x128xbf16>
    %314 = vector.shape_cast %313 : vector<1x1x128x128xbf16> to vector<128x128xbf16>
    %cst_387 = arith.constant dense<0.000000e+00> : vector<8x128xf32>
    %315 = tpu.matmul %312, %314, %cst_387 {dimension_numbers = #tpu.dot_dimension_numbers<[1], [0], [0], [1], [0, 0, 1, 1], [], []>} : vector<8x128xbf16>, vector<128x128xbf16>, vector<8x128xf32> -> vector<8x128xf32>
    %316 = arith.addf %310, %315 : vector<8x128xf32>
    %c2_388 = arith.constant 2 : index
    %c3_389 = arith.constant 3 : index
    %c0_390 = arith.constant 0 : index
    %c0_391 = arith.constant 0 : index
    %317 = vector.load %arg13[%c2_388, %c3_389, %c0_390, %c0_391] : memref<3x4x8x128xbf16, #tpu.memory_space<vmem>>, vector<1x1x8x128xbf16>
    %318 = vector.shape_cast %317 : vector<1x1x8x128xbf16> to vector<8x128xbf16>
    %c2_392 = arith.constant 2 : index
    %c2_393 = arith.constant 2 : index
    %c0_394 = arith.constant 0 : index
    %c0_395 = arith.constant 0 : index
    %319 = vector.load %arg6[%c2_392, %c2_393, %c0_394, %c0_395] : memref<3x3x128x128xbf16, #tpu.memory_space<vmem>>, vector<1x1x128x128xbf16>
    %320 = vector.shape_cast %319 : vector<1x1x128x128xbf16> to vector<128x128xbf16>
    %cst_396 = arith.constant dense<0.000000e+00> : vector<8x128xf32>
    %321 = tpu.matmul %318, %320, %cst_396 {dimension_numbers = #tpu.dot_dimension_numbers<[1], [0], [0], [1], [0, 0, 1, 1], [], []>} : vector<8x128xbf16>, vector<128x128xbf16>, vector<8x128xf32> -> vector<8x128xf32>
    %322 = arith.addf %316, %321 : vector<8x128xf32>
    %c0_397 = arith.constant 0 : index
    %c0_398 = arith.constant 0 : index
    %323 = vector.load %arg7[%c0_397, %c0_398] : memref<1x128xf32, #tpu.memory_space<vmem>>, vector<1x128xf32>
    %324 = vector.broadcast %323 : vector<1x128xf32> to vector<8x128xf32>
    %325 = arith.mulf %322, %324 : vector<8x128xf32>
    %c0_399 = arith.constant 0 : index
    %c0_400 = arith.constant 0 : index
    %326 = vector.load %arg8[%c0_399, %c0_400] : memref<1x128xf32, #tpu.memory_space<vmem>>, vector<1x128xf32>
    %327 = vector.broadcast %326 : vector<1x128xf32> to vector<8x128xf32>
    %328 = arith.addf %325, %327 : vector<8x128xf32>
    %cst_401 = arith.constant 0.000000e+00 : f32
    %329 = vector.broadcast %cst_401 : f32 to vector<8x128xf32>
    %330 = arith.maximumf %328, %329 : vector<8x128xf32>
    %331 = arith.truncf %330 : vector<8x128xf32> to vector<8x128xbf16>
    %c16_402 = arith.constant 16 : index
    %c0_403 = arith.constant 0 : index
    %332 = vector.load %arg14[%c16_402, %c0_403] : memref<32x128xbf16, #tpu.memory_space<vmem>>, vector<8x128xbf16>
    tpu.vector_store %arg14[%c16_402, %c0_403], %331 {strides = array<i32>} : memref<32x128xbf16, #tpu.memory_space<vmem>>, vector<8x128xbf16>,
    %cst_404 = arith.constant 0.000000e+00 : f32
    %333 = vector.broadcast %cst_404 : f32 to vector<8x128xf32>
    %c0_405 = arith.constant 0 : index
    %c2_406 = arith.constant 2 : index
    %c0_407 = arith.constant 0 : index
    %c0_408 = arith.constant 0 : index
    %334 = vector.load %arg13[%c0_405, %c2_406, %c0_407, %c0_408] : memref<3x4x8x128xbf16, #tpu.memory_space<vmem>>, vector<1x1x8x128xbf16>
    %335 = vector.shape_cast %334 : vector<1x1x8x128xbf16> to vector<8x128xbf16>
    %c0_409 = arith.constant 0 : index
    %c0_410 = arith.constant 0 : index
    %c0_411 = arith.constant 0 : index
    %c0_412 = arith.constant 0 : index
    %336 = vector.load %arg6[%c0_409, %c0_410, %c0_411, %c0_412] : memref<3x3x128x128xbf16, #tpu.memory_space<vmem>>, vector<1x1x128x128xbf16>
    %337 = vector.shape_cast %336 : vector<1x1x128x128xbf16> to vector<128x128xbf16>
    %cst_413 = arith.constant dense<0.000000e+00> : vector<8x128xf32>
    %338 = tpu.matmul %335, %337, %cst_413 {dimension_numbers = #tpu.dot_dimension_numbers<[1], [0], [0], [1], [0, 0, 1, 1], [], []>} : vector<8x128xbf16>, vector<128x128xbf16>, vector<8x128xf32> -> vector<8x128xf32>
    %339 = arith.addf %333, %338 : vector<8x128xf32>
    %c1_414 = arith.constant 1 : index
    %c2_415 = arith.constant 2 : index
    %c0_416 = arith.constant 0 : index
    %c0_417 = arith.constant 0 : index
    %340 = vector.load %arg13[%c1_414, %c2_415, %c0_416, %c0_417] : memref<3x4x8x128xbf16, #tpu.memory_space<vmem>>, vector<1x1x8x128xbf16>
    %341 = vector.shape_cast %340 : vector<1x1x8x128xbf16> to vector<8x128xbf16>
    %c0_418 = arith.constant 0 : index
    %c1_419 = arith.constant 1 : index
    %c0_420 = arith.constant 0 : index
    %c0_421 = arith.constant 0 : index
    %342 = vector.load %arg6[%c0_418, %c1_419, %c0_420, %c0_421] : memref<3x3x128x128xbf16, #tpu.memory_space<vmem>>, vector<1x1x128x128xbf16>
    %343 = vector.shape_cast %342 : vector<1x1x128x128xbf16> to vector<128x128xbf16>
    %cst_422 = arith.constant dense<0.000000e+00> : vector<8x128xf32>
    %344 = tpu.matmul %341, %343, %cst_422 {dimension_numbers = #tpu.dot_dimension_numbers<[1], [0], [0], [1], [0, 0, 1, 1], [], []>} : vector<8x128xbf16>, vector<128x128xbf16>, vector<8x128xf32> -> vector<8x128xf32>
    %345 = arith.addf %339, %344 : vector<8x128xf32>
    %c2_423 = arith.constant 2 : index
    %c2_424 = arith.constant 2 : index
    %c0_425 = arith.constant 0 : index
    %c0_426 = arith.constant 0 : index
    %346 = vector.load %arg13[%c2_423, %c2_424, %c0_425, %c0_426] : memref<3x4x8x128xbf16, #tpu.memory_space<vmem>>, vector<1x1x8x128xbf16>
    %347 = vector.shape_cast %346 : vector<1x1x8x128xbf16> to vector<8x128xbf16>
    %c0_427 = arith.constant 0 : index
    %c2_428 = arith.constant 2 : index
    %c0_429 = arith.constant 0 : index
    %c0_430 = arith.constant 0 : index
    %348 = vector.load %arg6[%c0_427, %c2_428, %c0_429, %c0_430] : memref<3x3x128x128xbf16, #tpu.memory_space<vmem>>, vector<1x1x128x128xbf16>
    %349 = vector.shape_cast %348 : vector<1x1x128x128xbf16> to vector<128x128xbf16>
    %cst_431 = arith.constant dense<0.000000e+00> : vector<8x128xf32>
    %350 = tpu.matmul %347, %349, %cst_431 {dimension_numbers = #tpu.dot_dimension_numbers<[1], [0], [0], [1], [0, 0, 1, 1], [], []>} : vector<8x128xbf16>, vector<128x128xbf16>, vector<8x128xf32> -> vector<8x128xf32>
    %351 = arith.addf %345, %350 : vector<8x128xf32>
    %c0_432 = arith.constant 0 : index
    %c3_433 = arith.constant 3 : index
    %c0_434 = arith.constant 0 : index
    %c0_435 = arith.constant 0 : index
    %352 = vector.load %arg13[%c0_432, %c3_433, %c0_434, %c0_435] : memref<3x4x8x128xbf16, #tpu.memory_space<vmem>>, vector<1x1x8x128xbf16>
    %353 = vector.shape_cast %352 : vector<1x1x8x128xbf16> to vector<8x128xbf16>
    %c1_436 = arith.constant 1 : index
    %c0_437 = arith.constant 0 : index
    %c0_438 = arith.constant 0 : index
    %c0_439 = arith.constant 0 : index
    %354 = vector.load %arg6[%c1_436, %c0_437, %c0_438, %c0_439] : memref<3x3x128x128xbf16, #tpu.memory_space<vmem>>, vector<1x1x128x128xbf16>
    %355 = vector.shape_cast %354 : vector<1x1x128x128xbf16> to vector<128x128xbf16>
    %cst_440 = arith.constant dense<0.000000e+00> : vector<8x128xf32>
    %356 = tpu.matmul %353, %355, %cst_440 {dimension_numbers = #tpu.dot_dimension_numbers<[1], [0], [0], [1], [0, 0, 1, 1], [], []>} : vector<8x128xbf16>, vector<128x128xbf16>, vector<8x128xf32> -> vector<8x128xf32>
    %357 = arith.addf %351, %356 : vector<8x128xf32>
    %c1_441 = arith.constant 1 : index
    %c3_442 = arith.constant 3 : index
    %c0_443 = arith.constant 0 : index
    %c0_444 = arith.constant 0 : index
    %358 = vector.load %arg13[%c1_441, %c3_442, %c0_443, %c0_444] : memref<3x4x8x128xbf16, #tpu.memory_space<vmem>>, vector<1x1x8x128xbf16>
    %359 = vector.shape_cast %358 : vector<1x1x8x128xbf16> to vector<8x128xbf16>
    %c1_445 = arith.constant 1 : index
    %c1_446 = arith.constant 1 : index
    %c0_447 = arith.constant 0 : index
    %c0_448 = arith.constant 0 : index
    %360 = vector.load %arg6[%c1_445, %c1_446, %c0_447, %c0_448] : memref<3x3x128x128xbf16, #tpu.memory_space<vmem>>, vector<1x1x128x128xbf16>
    %361 = vector.shape_cast %360 : vector<1x1x128x128xbf16> to vector<128x128xbf16>
    %cst_449 = arith.constant dense<0.000000e+00> : vector<8x128xf32>
    %362 = tpu.matmul %359, %361, %cst_449 {dimension_numbers = #tpu.dot_dimension_numbers<[1], [0], [0], [1], [0, 0, 1, 1], [], []>} : vector<8x128xbf16>, vector<128x128xbf16>, vector<8x128xf32> -> vector<8x128xf32>
    %363 = arith.addf %357, %362 : vector<8x128xf32>
    %c2_450 = arith.constant 2 : index
    %c3_451 = arith.constant 3 : index
    %c0_452 = arith.constant 0 : index
    %c0_453 = arith.constant 0 : index
    %364 = vector.load %arg13[%c2_450, %c3_451, %c0_452, %c0_453] : memref<3x4x8x128xbf16, #tpu.memory_space<vmem>>, vector<1x1x8x128xbf16>
    %365 = vector.shape_cast %364 : vector<1x1x8x128xbf16> to vector<8x128xbf16>
    %c1_454 = arith.constant 1 : index
    %c2_455 = arith.constant 2 : index
    %c0_456 = arith.constant 0 : index
    %c0_457 = arith.constant 0 : index
    %366 = vector.load %arg6[%c1_454, %c2_455, %c0_456, %c0_457] : memref<3x3x128x128xbf16, #tpu.memory_space<vmem>>, vector<1x1x128x128xbf16>
    %367 = vector.shape_cast %366 : vector<1x1x128x128xbf16> to vector<128x128xbf16>
    %cst_458 = arith.constant dense<0.000000e+00> : vector<8x128xf32>
    %368 = tpu.matmul %365, %367, %cst_458 {dimension_numbers = #tpu.dot_dimension_numbers<[1], [0], [0], [1], [0, 0, 1, 1], [], []>} : vector<8x128xbf16>, vector<128x128xbf16>, vector<8x128xf32> -> vector<8x128xf32>
    %369 = arith.addf %363, %368 : vector<8x128xf32>
    %c0_459 = arith.constant 0 : index
    %c0_460 = arith.constant 0 : index
    %370 = vector.load %arg7[%c0_459, %c0_460] : memref<1x128xf32, #tpu.memory_space<vmem>>, vector<1x128xf32>
    %371 = vector.broadcast %370 : vector<1x128xf32> to vector<8x128xf32>
    %372 = arith.mulf %369, %371 : vector<8x128xf32>
    %c0_461 = arith.constant 0 : index
    %c0_462 = arith.constant 0 : index
    %373 = vector.load %arg8[%c0_461, %c0_462] : memref<1x128xf32, #tpu.memory_space<vmem>>, vector<1x128xf32>
    %374 = vector.broadcast %373 : vector<1x128xf32> to vector<8x128xf32>
    %375 = arith.addf %372, %374 : vector<8x128xf32>
    %cst_463 = arith.constant 0.000000e+00 : f32
    %376 = vector.broadcast %cst_463 : f32 to vector<8x128xf32>
    %377 = arith.maximumf %375, %376 : vector<8x128xf32>
    %378 = arith.truncf %377 : vector<8x128xf32> to vector<8x128xbf16>
    %c24_464 = arith.constant 24 : index
    %c0_465 = arith.constant 0 : index
    %379 = vector.load %arg14[%c24_464, %c0_465] : memref<32x128xbf16, #tpu.memory_space<vmem>>, vector<8x128xbf16>
    tpu.vector_store %arg14[%c24_464, %c0_465], %378 {strides = array<i32>} : memref<32x128xbf16, #tpu.memory_space<vmem>>, vector<8x128xbf16>,
    %c0_466 = arith.constant 0 : index
    %c0_467 = arith.constant 0 : index
    %380 = vector.load %arg14[%c0_466, %c0_467] : memref<32x128xbf16, #tpu.memory_space<vmem>>, vector<32x128xbf16>
    %c0_468 = arith.constant 0 : index
    %c0_469 = arith.constant 0 : index
    %381 = vector.load %arg9[%c0_468, %c0_469] : memref<128x128xbf16, #tpu.memory_space<vmem>>, vector<128x128xbf16>
    %cst_470 = arith.constant dense<0.000000e+00> : vector<32x128xf32>
    %382 = tpu.matmul %380, %381, %cst_470 {dimension_numbers = #tpu.dot_dimension_numbers<[1], [0], [0], [1], [0, 0, 1, 1], [], []>} : vector<32x128xbf16>, vector<128x128xbf16>, vector<32x128xf32> -> vector<32x128xf32>
    %c0_471 = arith.constant 0 : index
    %c0_472 = arith.constant 0 : index
    %383 = vector.load %arg15[%c0_471, %c0_472] : memref<32x64xbf16, #tpu.memory_space<vmem>>, vector<32x64xbf16>
    %c0_473 = arith.constant 0 : index
    %c0_474 = arith.constant 0 : index
    %384 = vector.load %arg10[%c0_473, %c0_474] : memref<64x128xbf16, #tpu.memory_space<vmem>>, vector<64x128xbf16>
    %cst_475 = arith.constant dense<0.000000e+00> : vector<32x128xf32>
    %385 = tpu.matmul %383, %384, %cst_475 {dimension_numbers = #tpu.dot_dimension_numbers<[1], [0], [0], [1], [0, 0, 1, 1], [], []>} : vector<32x64xbf16>, vector<64x128xbf16>, vector<32x128xf32> -> vector<32x128xf32>
    %386 = arith.addf %382, %385 : vector<32x128xf32>
    %c0_476 = arith.constant 0 : index
    %c0_477 = arith.constant 0 : index
    %387 = vector.load %arg11[%c0_476, %c0_477] : memref<1x128xf32, #tpu.memory_space<vmem>>, vector<1x128xf32>
    %388 = vector.broadcast %387 : vector<1x128xf32> to vector<32x128xf32>
    %389 = arith.addf %386, %388 : vector<32x128xf32>
    %cst_478 = arith.constant 0.000000e+00 : f32
    %390 = vector.broadcast %cst_478 : f32 to vector<32x128xf32>
    %391 = arith.maximumf %389, %390 : vector<32x128xf32>
    %392 = vector.extract_strided_slice %391 {offsets = [0, 0], sizes = [8, 128], strides = [1, 1]} : vector<32x128xf32> to vector<8x128xf32>
    %c0_479 = arith.constant 0 : index
    %c0_480 = arith.constant 0 : index
    %c0_481 = arith.constant 0 : index
    %c0_482 = arith.constant 0 : index
    %393 = vector.load %arg12[%c0_479, %c0_480, %c0_481, %c0_482] : memref<1x4x8x128xf32, #tpu.memory_space<vmem>>, vector<1x1x8x128xf32>
    %394 = vector.shape_cast %393 : vector<1x1x8x128xf32> to vector<8x128xf32>
    %395 = vector.shape_cast %392 : vector<8x128xf32> to vector<1x1x8x128xf32>
    tpu.vector_store %arg12[%c0_479, %c0_480, %c0_481, %c0_482], %395 {strides = array<i32>} : memref<1x4x8x128xf32, #tpu.memory_space<vmem>>, vector<1x1x8x128xf32>,
    %396 = vector.extract_strided_slice %391 {offsets = [8, 0], sizes = [8, 128], strides = [1, 1]} : vector<32x128xf32> to vector<8x128xf32>
    %c0_483 = arith.constant 0 : index
    %c1_484 = arith.constant 1 : index
    %c0_485 = arith.constant 0 : index
    %c0_486 = arith.constant 0 : index
    %397 = vector.load %arg12[%c0_483, %c1_484, %c0_485, %c0_486] : memref<1x4x8x128xf32, #tpu.memory_space<vmem>>, vector<1x1x8x128xf32>
    %398 = vector.shape_cast %397 : vector<1x1x8x128xf32> to vector<8x128xf32>
    %399 = vector.shape_cast %396 : vector<8x128xf32> to vector<1x1x8x128xf32>
    tpu.vector_store %arg12[%c0_483, %c1_484, %c0_485, %c0_486], %399 {strides = array<i32>} : memref<1x4x8x128xf32, #tpu.memory_space<vmem>>, vector<1x1x8x128xf32>,
    %400 = vector.extract_strided_slice %391 {offsets = [16, 0], sizes = [8, 128], strides = [1, 1]} : vector<32x128xf32> to vector<8x128xf32>
    %c0_487 = arith.constant 0 : index
    %c2_488 = arith.constant 2 : index
    %c0_489 = arith.constant 0 : index
    %c0_490 = arith.constant 0 : index
    %401 = vector.load %arg12[%c0_487, %c2_488, %c0_489, %c0_490] : memref<1x4x8x128xf32, #tpu.memory_space<vmem>>, vector<1x1x8x128xf32>
    %402 = vector.shape_cast %401 : vector<1x1x8x128xf32> to vector<8x128xf32>
    %403 = vector.shape_cast %400 : vector<8x128xf32> to vector<1x1x8x128xf32>
    tpu.vector_store %arg12[%c0_487, %c2_488, %c0_489, %c0_490], %403 {strides = array<i32>} : memref<1x4x8x128xf32, #tpu.memory_space<vmem>>, vector<1x1x8x128xf32>,
    %404 = vector.extract_strided_slice %391 {offsets = [24, 0], sizes = [8, 128], strides = [1, 1]} : vector<32x128xf32> to vector<8x128xf32>
    %c0_491 = arith.constant 0 : index
    %c3_492 = arith.constant 3 : index
    %c0_493 = arith.constant 0 : index
    %c0_494 = arith.constant 0 : index
    %405 = vector.load %arg12[%c0_491, %c3_492, %c0_493, %c0_494] : memref<1x4x8x128xf32, #tpu.memory_space<vmem>>, vector<1x1x8x128xf32>
    %406 = vector.shape_cast %405 : vector<1x1x8x128xf32> to vector<8x128xf32>
    %407 = vector.shape_cast %404 : vector<8x128xf32> to vector<1x1x8x128xf32>
    tpu.vector_store %arg12[%c0_491, %c3_492, %c0_493, %c0_494], %407 {strides = array<i32>} : memref<1x4x8x128xf32, #tpu.memory_space<vmem>>, vector<1x1x8x128xf32>,
    return
  }
  func.func @transform_0(%arg0: i32) -> (i32, i32, i32, i32) {
    %c0_i32 = arith.constant 0 : i32
    %c0_i32_0 = arith.constant 0 : i32
    %c0_i32_1 = arith.constant 0 : i32
    %c0_i32_2 = arith.constant 0 : i32
    return %arg0, %c0_i32, %c0_i32_0, %c0_i32_1 : i32, i32, i32, i32
  }
  func.func @transform_1(%arg0: i32) -> (i32, i32) {
    %c0_i32 = arith.constant 0 : i32
    %c0_i32_0 = arith.constant 0 : i32
    %c0_i32_1 = arith.constant 0 : i32
    return %c0_i32, %c0_i32_0 : i32, i32
  }
  func.func @transform_2(%arg0: i32) -> (i32, i32) {
    %c0_i32 = arith.constant 0 : i32
    %c0_i32_0 = arith.constant 0 : i32
    %c0_i32_1 = arith.constant 0 : i32
    return %c0_i32, %c0_i32_0 : i32, i32
  }
  func.func @transform_3(%arg0: i32) -> (i32, i32) {
    %c0_i32 = arith.constant 0 : i32
    %c0_i32_0 = arith.constant 0 : i32
    %c0_i32_1 = arith.constant 0 : i32
    return %c0_i32, %c0_i32_0 : i32, i32
  }
  func.func @transform_4(%arg0: i32) -> (i32, i32, i32) {
    %c0_i32 = arith.constant 0 : i32
    %c0_i32_0 = arith.constant 0 : i32
    %c0_i32_1 = arith.constant 0 : i32
    %c0_i32_2 = arith.constant 0 : i32
    return %c0_i32, %c0_i32_0, %c0_i32_1 : i32, i32, i32
  }
  func.func @transform_5(%arg0: i32) -> (i32, i32, i32, i32) {
    %c0_i32 = arith.constant 0 : i32
    %c0_i32_0 = arith.constant 0 : i32
    %c0_i32_1 = arith.constant 0 : i32
    %c0_i32_2 = arith.constant 0 : i32
    %c0_i32_3 = arith.constant 0 : i32
    return %c0_i32, %c0_i32_0, %c0_i32_1, %c0_i32_2 : i32, i32, i32, i32
  }
  func.func @transform_6(%arg0: i32) -> (i32, i32) {
    %c0_i32 = arith.constant 0 : i32
    %c0_i32_0 = arith.constant 0 : i32
    %c0_i32_1 = arith.constant 0 : i32
    return %c0_i32, %c0_i32_0 : i32, i32
  }
  func.func @transform_7(%arg0: i32) -> (i32, i32) {
    %c0_i32 = arith.constant 0 : i32
    %c0_i32_0 = arith.constant 0 : i32
    %c0_i32_1 = arith.constant 0 : i32
    return %c0_i32, %c0_i32_0 : i32, i32
  }
  func.func @transform_8(%arg0: i32) -> (i32, i32) {
    %c0_i32 = arith.constant 0 : i32
    %c0_i32_0 = arith.constant 0 : i32
    %c0_i32_1 = arith.constant 0 : i32
    return %c0_i32, %c0_i32_0 : i32, i32
  }
  func.func @transform_9(%arg0: i32) -> (i32, i32) {
    %c0_i32 = arith.constant 0 : i32
    %c0_i32_0 = arith.constant 0 : i32
    %c0_i32_1 = arith.constant 0 : i32
    return %c0_i32, %c0_i32_0 : i32, i32
  }
  func.func @transform_10(%arg0: i32) -> (i32, i32) {
    %c0_i32 = arith.constant 0 : i32
    %c0_i32_0 = arith.constant 0 : i32
    %c0_i32_1 = arith.constant 0 : i32
    return %c0_i32, %c0_i32_0 : i32, i32
  }
  func.func @transform_11(%arg0: i32) -> (i32, i32, i32, i32) {
    %c0_i32 = arith.constant 0 : i32
    %c0_i32_0 = arith.constant 0 : i32
    %c0_i32_1 = arith.constant 0 : i32
    %c0_i32_2 = arith.constant 0 : i32
    return %arg0, %c0_i32, %c0_i32_0, %c0_i32_1 : i32, i32, i32, i32
  }
}

</mosaic_0001>

<llo_original>
// kernel: tile.28
$region0: #{tile.28}
  #allocation0 [shape = 's32[1]{0}', space=sflag, size = 0x4, scoped, tag = 'scoped memory for tile.28']
  %s0 = inlined_call_operand.vmem [shape: f32[8], index: 0, kind: input, shape index: {}]
  %s1 = inlined_call_operand.vmem [shape: f32[8,8], index: 1, kind: output, shape index: {}]
  // Predicated region
  $region2: #{tile.28} parent=0 // pred_check
    _
  $region3: #{tile.28} parent=0 // pred_check_branch
    %3 = sbr.rel (0) target = $region5
  $region4: #{tile.28} parent=0 // pred_region
    _
  $region5: #{tile.28} parent=0 // pred_fallthru
    _
  %v4 = vld [vmem:[%s0] ss:$0 sm:$0xff]
  %5 = vst [vmem:[%s1] sm:$0xff] %v4

// kernel: tile.29
$region0: #{tile.29}
  %s0 = inlined_call_operand.vmem [shape: f32[8,8], index: 0, kind: input, shape index: {}]
  %s1 = inlined_call_operand.vmem [shape: f32[64], index: 1, kind: output, shape index: {}]
  $region1: #{tile.29} parent=0
    #allocation0 [shape = 'u8[4096]{0}', space=vmem, size = 0x1000, scoped, tag = 'scoped mem for output reshape']
    %v2 = vld [vmem:[%s0] sm:$0x1]
    %vm3 = vcmask 64512
    %4 = vst.msk [vmem:[#allocation0] sm:$0x1] %vm3, %v2
    %s5 = scalar_lea.vmem %s0, 7
    %v6 = vld [vmem:[%s5] sm:$0x1]
    %7 = vrot.lane.b32.xlu0 %v6, 56
    %v8 = vpop.permute.xlu0 %7
    %vm9 = vcmask 523712
    %10 = vst.msk [vmem:[#allocation0] sm:$0x1] %vm9, %v8
    %s11 = scalar_lea.vmem %s0, 6
    %v12 = vld [vmem:[%s11] sm:$0x1]
    %13 = vrot.lane.b32.xlu0 %v12, 48
    %v14 = vpop.permute.xlu0 %13
    %vm15 = vcmask 458112
    %16 = vst.msk [vmem:[#allocation0] sm:$0x1] %vm15, %v14
    %s17 = scalar_lea.vmem %s0, 5
    %v18 = vld [vmem:[%s17] sm:$0x1]
    %19 = vrot.lane.b32.xlu0 %v18, 40
    %v20 = vpop.permute.xlu0 %19
    %vm21 = vcmask 392512
    %22 = vst.msk [vmem:[#allocation0] sm:$0x1] %vm21, %v20
    %s23 = scalar_lea.vmem %s0, 4
    %v24 = vld [vmem:[%s23] sm:$0x1]
    %25 = vrot.lane.b32.xlu0 %v24, 32
    %v26 = vpop.permute.xlu0 %25
    %vm27 = vcmask 326912
    %28 = vst.msk [vmem:[#allocation0] sm:$0x1] %vm27, %v26
    %s29 = scalar_lea.vmem %s0, 3
    %v30 = vld [vmem:[%s29] sm:$0x1]
    %31 = vrot.lane.b32.xlu0 %v30, 24
    %v32 = vpop.permute.xlu0 %31
    %vm33 = vcmask 261312
    %34 = vst.msk [vmem:[#allocation0] sm:$0x1] %vm33, %v32
    %s35 = scalar_lea.vmem %s0, 2
    %v36 = vld [vmem:[%s35] sm:$0x1]
    %37 = vrot.lane.b32.xlu0 %v36, 16
    %v38 = vpop.permute.xlu0 %37
    %vm39 = vcmask 195712
    %40 = vst.msk [vmem:[#allocation0] sm:$0x1] %vm39, %v38
    %s41 = scalar_lea.vmem %s0, 1
    %v42 = vld [vmem:[%s41] sm:$0x1]
    %43 = vrot.lane.b32.xlu0 %v42, 8
    %v44 = vpop.permute.xlu0 %43
    %vm45 = vcmask 130112
    %46 = vst.msk [vmem:[#allocation0] sm:$0x1] %vm45, %v44
    %s48 = sshll.u32 1, 1
    %s49 = ssub.s32 %s48, 1
    %v51 = vld [vmem:[#allocation0] sm:%s49]
    %s52 = sshll.u32 1, 1
    %s53 = ssub.s32 %s52, 1
    %54 = vst [vmem:[%s1] sm:%s53] %v51

// kernel: tile.38
$region0: #{tile.38}
  #allocation0 [shape = 's32[1]{0}', space=sflag, size = 0x4, scoped, tag = 'scoped memory for tile.38']
  %s0 = inlined_call_operand.vmem [shape: f32[16], index: 0, kind: input, shape index: {}]
  %s1 = inlined_call_operand.vmem [shape: f32[8,16], index: 1, kind: output, shape index: {}]
  // Predicated region
  $region2: #{tile.38} parent=0 // pred_check
    _
  $region3: #{tile.38} parent=0 // pred_check_branch
    %3 = sbr.rel (0) target = $region5
  $region4: #{tile.38} parent=0 // pred_region
    _
  $region5: #{tile.38} parent=0 // pred_fallthru
    _
  %v4 = vld [vmem:[%s0] ss:$0 sm:$0xff]
  %5 = vst [vmem:[%s1] sm:$0xff] %v4

// kernel: tile.39
$region0: #{tile.39}
  %s0 = inlined_call_operand.vmem [shape: f32[8,16], index: 0, kind: input, shape index: {}]
  %s1 = inlined_call_operand.vmem [shape: f32[1,128], index: 1, kind: output, shape index: {}]
  $region1: #{tile.39} parent=0
    #allocation0 [shape = 'u8[4096]{0}', space=vmem, size = 0x1000, scoped, tag = 'scoped mem for output reshape']
    %v2 = vld [vmem:[%s0] sm:$0x1]
    %vm3 = vcmask 130048
    %4 = vst.msk [vmem:[#allocation0] sm:$0x1] %vm3, %v2
    %s5 = scalar_lea.vmem %s0, 7
    %v6 = vld [vmem:[%s5] sm:$0x1]
    %7 = vrot.lane.b32.xlu0 %v6, 112
    %v8 = vpop.permute.xlu0 %7
    %vm9 = vcmask 1048448
    %10 = vst.msk [vmem:[#allocation0] sm:$0x1] %vm9, %v8
    %s11 = scalar_lea.vmem %s0, 6
    %v12 = vld [vmem:[%s11] sm:$0x1]
    %13 = vrot.lane.b32.xlu0 %v12, 96
    %v14 = vpop.permute.xlu0 %13
    %vm15 = vcmask 917248
    %16 = vst.msk [vmem:[#allocation0] sm:$0x1] %vm15, %v14
    %s17 = scalar_lea.vmem %s0, 5
    %v18 = vld [vmem:[%s17] sm:$0x1]
    %19 = vrot.lane.b32.xlu0 %v18, 80
    %v20 = vpop.permute.xlu0 %19
    %vm21 = vcmask 786048
    %22 = vst.msk [vmem:[#allocation0] sm:$0x1] %vm21, %v20
    %s23 = scalar_lea.vmem %s0, 4
    %v24 = vld [vmem:[%s23] sm:$0x1]
    %25 = vrot.lane.b32.xlu0 %v24, 64
    %v26 = vpop.permute.xlu0 %25
    %vm27 = vcmask 654848
    %28 = vst.msk [vmem:[#allocation0] sm:$0x1] %vm27, %v26
    %s29 = scalar_lea.vmem %s0, 3
    %v30 = vld [vmem:[%s29] sm:$0x1]
    %31 = vrot.lane.b32.xlu0 %v30, 48
    %v32 = vpop.permute.xlu0 %31
    %vm33 = vcmask 523648
    %34 = vst.msk [vmem:[#allocation0] sm:$0x1] %vm33, %v32
    %s35 = scalar_lea.vmem %s0, 2
    %v36 = vld [vmem:[%s35] sm:$0x1]
    %37 = vrot.lane.b32.xlu0 %v36, 32
    %v38 = vpop.permute.xlu0 %37
    %vm39 = vcmask 392448
    %40 = vst.msk [vmem:[#allocation0] sm:$0x1] %vm39, %v38
    %s41 = scalar_lea.vmem %s0, 1
    %v42 = vld [vmem:[%s41] sm:$0x1]
    %43 = vrot.lane.b32.xlu0 %v42, 16
    %v44 = vpop.permute.xlu0 %43
    %vm45 = vcmask 261248
    %46 = vst.msk [vmem:[#allocation0] sm:$0x1] %vm45, %v44
    %s48 = sshll.u32 1, 1
    %s49 = ssub.s32 %s48, 1
    %v51 = vld [vmem:[#allocation0] sm:%s49]
    %s52 = sshll.u32 1, 1
    %s53 = ssub.s32 %s52, 1
    %54 = vst [vmem:[%s1] sm:%s53] %v51

// kernel: tile.23
$region0: #{tile.23}
  #allocation0 [shape = 's32[1]{0}', space=sflag, size = 0x4, scoped, tag = 'scoped memory for tile.23']
  %s0 = inlined_call_operand.vmem [shape: f32[8], index: 0, kind: input, shape index: {}]
  %s1 = inlined_call_operand.vmem [shape: f32[16,8], index: 1, kind: output, shape index: {}]
  // Predicated region
  $region2: #{tile.23} parent=0 // pred_check
    _
  $region3: #{tile.23} parent=0 // pred_check_branch
    %3 = sbr.rel (0) target = $region5
  $region4: #{tile.23} parent=0 // pred_region
    _
  $region5: #{tile.23} parent=0 // pred_fallthru
    _
  %v4 = vld [vmem:[%s0] ss:$0 sm:$0xff]
  %5 = vst [vmem:[%s1] sm:$0xff] %v4
  %s6 = scalar_lea.vmem %s1, 8
  %7 = vst [vmem:[%s6] sm:$0xff] %v4

// kernel: tile.24
$region0: #{tile.24}
  %s0 = inlined_call_operand.vmem [shape: f32[16,8], index: 0, kind: input, shape index: {}]
  %s1 = inlined_call_operand.vmem [shape: f32[1,128], index: 1, kind: output, shape index: {}]
  $region1: #{tile.24} parent=0
    #allocation0 [shape = 'u8[4096]{0}', space=vmem, size = 0x1000, scoped, tag = 'scoped mem for output reshape']
    %v2 = vld [vmem:[%s0] sm:$0x1]
    %vm3 = vcmask 64512
    %4 = vst.msk [vmem:[#allocation0] sm:$0x1] %vm3, %v2
    %s5 = scalar_lea.vmem %s0, 15
    %v6 = vld [vmem:[%s5] sm:$0x1]
    %7 = vrot.lane.b32.xlu0 %v6, 120
    %v8 = vpop.permute.xlu0 %7
    %vm9 = vcmask 1048512
    %10 = vst.msk [vmem:[#allocation0] sm:$0x1] %vm9, %v8
    %s11 = scalar_lea.vmem %s0, 14
    %v12 = vld [vmem:[%s11] sm:$0x1]
    %13 = vrot.lane.b32.xlu0 %v12, 112
    %v14 = vpop.permute.xlu0 %13
    %vm15 = vcmask 982912
    %16 = vst.msk [vmem:[#allocation0] sm:$0x1] %vm15, %v14
    %s17 = scalar_lea.vmem %s0, 13
    %v18 = vld [vmem:[%s17] sm:$0x1]
    %19 = vrot.lane.b32.xlu0 %v18, 104
    %v20 = vpop.permute.xlu0 %19
    %vm21 = vcmask 917312
    %22 = vst.msk [vmem:[#allocation0] sm:$0x1] %vm21, %v20
    %s23 = scalar_lea.vmem %s0, 12
    %v24 = vld [vmem:[%s23] sm:$0x1]
    %25 = vrot.lane.b32.xlu0 %v24, 96
    %v26 = vpop.permute.xlu0 %25
    %vm27 = vcmask 851712
    %28 = vst.msk [vmem:[#allocation0] sm:$0x1] %vm27, %v26
    %s29 = scalar_lea.vmem %s0, 11
    %v30 = vld [vmem:[%s29] sm:$0x1]
    %31 = vrot.lane.b32.xlu0 %v30, 88
    %v32 = vpop.permute.xlu0 %31
    %vm33 = vcmask 786112
    %34 = vst.msk [vmem:[#allocation0] sm:$0x1] %vm33, %v32
    %s35 = scalar_lea.vmem %s0, 10
    %v36 = vld [vmem:[%s35] sm:$0x1]
    %37 = vrot.lane.b32.xlu0 %v36, 80
    %v38 = vpop.permute.xlu0 %37
    %vm39 = vcmask 720512
    %40 = vst.msk [vmem:[#allocation0] sm:$0x1] %vm39, %v38
    %s41 = scalar_lea.vmem %s0, 9
    %v42 = vld [vmem:[%s41] sm:$0x1]
    %43 = vrot.lane.b32.xlu0 %v42, 72
    %v44 = vpop.permute.xlu0 %43
    %vm45 = vcmask 654912
    %46 = vst.msk [vmem:[#allocation0] sm:$0x1] %vm45, %v44
    %s47 = scalar_lea.vmem %s0, 8
    %v48 = vld [vmem:[%s47] sm:$0x1]
    %49 = vrot.lane.b32.xlu0 %v48, 64
    %v50 = vpop.permute.xlu0 %49
    %vm51 = vcmask 589312
    %52 = vst.msk [vmem:[#allocation0] sm:$0x1] %vm51, %v50
    %s53 = scalar_lea.vmem %s0, 7
    %v54 = vld [vmem:[%s53] sm:$0x1]
    %55 = vrot.lane.b32.xlu0 %v54, 56
    %v56 = vpop.permute.xlu0 %55
    %vm57 = vcmask 523712
    %58 = vst.msk [vmem:[#allocation0] sm:$0x1] %vm57, %v56
    %s59 = scalar_lea.vmem %s0, 6
    %v60 = vld [vmem:[%s59] sm:$0x1]
    %61 = vrot.lane.b32.xlu0 %v60, 48
    %v62 = vpop.permute.xlu0 %61
    %vm63 = vcmask 458112
    %64 = vst.msk [vmem:[#allocation0] sm:$0x1] %vm63, %v62
    %s65 = scalar_lea.vmem %s0, 5
    %v66 = vld [vmem:[%s65] sm:$0x1]
    %67 = vrot.lane.b32.xlu0 %v66, 40
    %v68 = vpop.permute.xlu0 %67
    %vm69 = vcmask 392512
    %70 = vst.msk [vmem:[#allocation0] sm:$0x1] %vm69, %v68
    %s71 = scalar_lea.vmem %s0, 4
    %v72 = vld [vmem:[%s71] sm:$0x1]
    %73 = vrot.lane.b32.xlu0 %v72, 32
    %v74 = vpop.permute.xlu0 %73
    %vm75 = vcmask 326912
    %76 = vst.msk [vmem:[#allocation0] sm:$0x1] %vm75, %v74
    %s77 = scalar_lea.vmem %s0, 3
    %v78 = vld [vmem:[%s77] sm:$0x1]
    %79 = vrot.lane.b32.xlu0 %v78, 24
    %v80 = vpop.permute.xlu0 %79
    %vm81 = vcmask 261312
    %82 = vst.msk [vmem:[#allocation0] sm:$0x1] %vm81, %v80
    %s83 = scalar_lea.vmem %s0, 2
    %v84 = vld [vmem:[%s83] sm:$0x1]
    %85 = vrot.lane.b32.xlu0 %v84, 16
    %v86 = vpop.permute.xlu0 %85
    %vm87 = vcmask 195712
    %88 = vst.msk [vmem:[#allocation0] sm:$0x1] %vm87, %v86
    %s89 = scalar_lea.vmem %s0, 1
    %v90 = vld [vmem:[%s89] sm:$0x1]
    %91 = vrot.lane.b32.xlu0 %v90, 8
    %v92 = vpop.permute.xlu0 %91
    %vm93 = vcmask 130112
    %94 = vst.msk [vmem:[#allocation0] sm:$0x1] %vm93, %v92
    %s96 = sshll.u32 1, 1
    %s97 = ssub.s32 %s96, 1
    %v99 = vld [vmem:[#allocation0] sm:%s97]
    %s100 = sshll.u32 1, 1
    %s101 = ssub.s32 %s100, 1
    %102 = vst [vmem:[%s1] sm:%s101] %v99

// kernel: residual_conv3d_forward.1
$region0: #{residual_conv3d_forward.1}
  #allocation0 [shape = 'u32[]', space=smem, size = 0x4, offset = 0x4, fixed_abs, tag = 'smem constant byte address 0x4 - core index']
  #allocation1 [shape = 'u32[144,128]{1,0:T(1,128)}', space=vmem, size = 0x12000, scoped, tag = 'internal scratch']
  #allocation2 [shape = 'bf16[3,4,8,128]{3,2,1,0:T(8,128)(2,1)}', space=vmem, size = 0x6000, scoped, tag = 'scratch operand']
  #allocation3 [shape = 'bf16[32,128]{1,0:T(8,128)(2,1)}', space=vmem, size = 0x2000, scoped, tag = 'scratch operand']
  #allocation4 [shape = 'bf16[32,64]{1,0:T(8,128)(2,1)}', space=vmem, size = 0x2000, scoped, tag = 'scratch operand']
  %s0 = inlined_call_operand.vmem [shape: bf16[2,4,16,64], index: 0, kind: input, shape index: {}]
  %s1 = inlined_call_operand.vmem [shape: bf16[64,128], index: 1, kind: input, shape index: {}]
  %s2 = inlined_call_operand.vmem [shape: f32[1,128], index: 2, kind: input, shape index: {}]
  %s3 = inlined_call_operand.vmem [shape: bf16[128,128], index: 3, kind: input, shape index: {}]
  %s4 = inlined_call_operand.vmem [shape: bf16[3,8,16], index: 4, kind: input, shape index: {}]
  %s5 = inlined_call_operand.vmem [shape: bf16[3,3,128,128], index: 5, kind: input, shape index: {}]
  %s6 = inlined_call_operand.vmem [shape: f32[1,128], index: 6, kind: input, shape index: {}]
  %s7 = inlined_call_operand.vmem [shape: f32[1,128], index: 7, kind: input, shape index: {}]
  %s8 = inlined_call_operand.vmem [shape: bf16[128,128], index: 8, kind: input, shape index: {}]
  %s9 = inlined_call_operand.vmem [shape: bf16[64,128], index: 9, kind: input, shape index: {}]
  %s10 = inlined_call_operand.vmem [shape: f32[1,128], index: 10, kind: input, shape index: {}]
  %s11 = inlined_call_operand.vmem [shape: f32[2,4,8,128], index: 11, kind: output, shape index: {}]
  %s12 = sld [smem:[#allocation0]]
  $region77: #{residual_conv3d_forward.1} parent=0
    _
  %s14 = ssub.s32 1, %s12
  %s15 = scalar_select 0, %s14, %s12
  loop: start=0, step=1, limit=4
  $region2: #{residual_conv3d_forward.1} parent=0 // loop_pre_header
    _
  $region3: #{residual_conv3d_forward.1} parent=0 // loop_header
    %s17 = sphi 0, %s21
    %p18 = scmp.ge.s32.totalorder %s17, 4
    %s27 = sphi 0, %s29
    %s30 = sphi 0, %s27
    %s31 = sphi 0, %s30
    %s47 = sphi 0, %s31
    %s51 = sphi 0, %s51
    %s53 = sphi 0, %s51
    %s54 = sphi 0, %s53
    %s68 = sphi 0, %s54
    %s72 = sphi 0, %s72
    %s74 = sphi 0, %s72
    %s75 = sphi 0, %s74
    %s89 = sphi 0, %s75
    %s93 = sphi 0, %s93
    %s95 = sphi 0, %s93
    %s96 = sphi 0, %s95
    %s110 = sphi 0, %s96
    %s114 = sphi 0, %s114
    %s116 = sphi 0, %s114
    %s117 = sphi 0, %s116
    %s131 = sphi 0, %s117
    %s135 = sphi 0, %s135
    %s137 = sphi 0, %s135
    %s138 = sphi 0, %s137
    %s152 = sphi 0, %s138
    %s156 = sphi 0, %s156
    %s158 = sphi 0, %s156
    %s159 = sphi 0, %s158
    %s173 = sphi 0, %s159
    %s177 = sphi 0, %s177
    %s179 = sphi 0, %s177
    %s180 = sphi 0, %s179
    %s194 = sphi 0, %s180
    %s198 = sphi 0, %s198
    %s200 = sphi 0, %s198
    %s201 = sphi 0, %s200
    %s215 = sphi 0, %s201
    %s219 = sphi 0, %s219
    %s221 = sphi 0, %s219
    %s222 = sphi 0, %s221
    %s236 = sphi 0, %s222
    %s240 = sphi 0, %s240
    %s242 = sphi 0, %s240
    %s243 = sphi 0, %s242
    %s257 = sphi 0, %s243
    %s263 = sphi 0, %s265
    %s266 = sphi 0, %s263
    %s267 = sphi 0, %s266
    %s283 = sphi 0, %s267
  $region4: #{residual_conv3d_forward.1} parent=0 // loop_header_branch
    %20 = sbr.rel (%p18) target = $region8
  $region5: #{residual_conv3d_forward.1} parent=0 // loop_body
    %s22 = ssub.s32 %s17, 1
    %s23 = ssub.s32 %s17, 2
    %s24 = sadd.s32 %s17, 1
    %s25 = ssub.s32 %s17, %s24
    %p26 = scmp.eq.s32.totalorder %s25, 0
    %s28 = sadd.s32 %s27, 1
    %s29 = scalar_select %p26, %s27, %s28
    %p32 = pneg %p26
    %p33 = scmp.eq.s32.totalorder %s17, 1
    %p34 = por %p32, %p33
    %p35 = scmp.ne.s32.totalorder %s27, %s30
    %p36 = scmp.eq.s32.totalorder %s17, 0
    %p37 = por %p35, %p36
    %p38 = scmp.ne.s32.totalorder %s27, %s30
    %p39 = scmp.eq.s32.totalorder %s22, 1
    %p40 = por %p38, %p39
    %p41 = scmp.ne.s32.totalorder %s30, %s31
    %p42 = scmp.eq.s32.totalorder %s22, 0
    %p43 = por %p41, %p42
    %p44 = scmp.ne.s32.totalorder %s30, %s31
    %p45 = scmp.eq.s32.totalorder %s23, 1
    %p46 = por %p44, %p45
    %p48 = scmp.ne.s32.totalorder %s31, %s47
    %p49 = scmp.eq.s32.totalorder %s23, 0
    %p50 = por %p48, %p49
    %s52 = sadd.s32 %s51, 1
    %p55 = scmp.eq.s32.totalorder %s17, 1
    %p56 = scmp.ne.s32.totalorder %s51, %s53
    %p57 = scmp.eq.s32.totalorder %s17, 0
    %p58 = por %p56, %p57
    %p59 = scmp.ne.s32.totalorder %s51, %s53
    %p60 = scmp.eq.s32.totalorder %s22, 1
    %p61 = por %p59, %p60
    %p62 = scmp.ne.s32.totalorder %s53, %s54
    %p63 = scmp.eq.s32.totalorder %s22, 0
    %p64 = por %p62, %p63
    %p65 = scmp.ne.s32.totalorder %s53, %s54
    %p66 = scmp.eq.s32.totalorder %s23, 1
    %p67 = por %p65, %p66
    %p69 = scmp.ne.s32.totalorder %s54, %s68
    %p70 = scmp.eq.s32.totalorder %s23, 0
    %p71 = por %p69, %p70
    %s73 = sadd.s32 %s72, 1
    %p76 = scmp.eq.s32.totalorder %s17, 1
    %p77 = scmp.ne.s32.totalorder %s72, %s74
    %p78 = scmp.eq.s32.totalorder %s17, 0
    %p79 = por %p77, %p78
    %p80 = scmp.ne.s32.totalorder %s72, %s74
    %p81 = scmp.eq.s32.totalorder %s22, 1
    %p82 = por %p80, %p81
    %p83 = scmp.ne.s32.totalorder %s74, %s75
    %p84 = scmp.eq.s32.totalorder %s22, 0
    %p85 = por %p83, %p84
    %p86 = scmp.ne.s32.totalorder %s74, %s75
    %p87 = scmp.eq.s32.totalorder %s23, 1
    %p88 = por %p86, %p87
    %p90 = scmp.ne.s32.totalorder %s75, %s89
    %p91 = scmp.eq.s32.totalorder %s23, 0
    %p92 = por %p90, %p91
    %s94 = sadd.s32 %s93, 1
    %p97 = scmp.eq.s32.totalorder %s17, 1
    %p98 = scmp.ne.s32.totalorder %s93, %s95
    %p99 = scmp.eq.s32.totalorder %s17, 0
    %p100 = por %p98, %p99
    %p101 = scmp.ne.s32.totalorder %s93, %s95
    %p102 = scmp.eq.s32.totalorder %s22, 1
    %p103 = por %p101, %p102
    %p104 = scmp.ne.s32.totalorder %s95, %s96
    %p105 = scmp.eq.s32.totalorder %s22, 0
    %p106 = por %p104, %p105
    %p107 = scmp.ne.s32.totalorder %s95, %s96
    %p108 = scmp.eq.s32.totalorder %s23, 1
    %p109 = por %p107, %p108
    %p111 = scmp.ne.s32.totalorder %s96, %s110
    %p112 = scmp.eq.s32.totalorder %s23, 0
    %p113 = por %p111, %p112
    %s115 = sadd.s32 %s114, 1
    %p118 = scmp.eq.s32.totalorder %s17, 1
    %p119 = scmp.ne.s32.totalorder %s114, %s116
    %p120 = scmp.eq.s32.totalorder %s17, 0
    %p121 = por %p119, %p120
    %p122 = scmp.ne.s32.totalorder %s114, %s116
    %p123 = scmp.eq.s32.totalorder %s22, 1
    %p124 = por %p122, %p123
    %p125 = scmp.ne.s32.totalorder %s116, %s117
    %p126 = scmp.eq.s32.totalorder %s22, 0
    %p127 = por %p125, %p126
    %p128 = scmp.ne.s32.totalorder %s116, %s117
    %p129 = scmp.eq.s32.totalorder %s23, 1
    %p130 = por %p128, %p129
    %p132 = scmp.ne.s32.totalorder %s117, %s131
    %p133 = scmp.eq.s32.totalorder %s23, 0
    %p134 = por %p132, %p133
    %s136 = sadd.s32 %s135, 1
    %p139 = scmp.eq.s32.totalorder %s17, 1
    %p140 = scmp.ne.s32.totalorder %s135, %s137
    %p141 = scmp.eq.s32.totalorder %s17, 0
    %p142 = por %p140, %p141
    %p143 = scmp.ne.s32.totalorder %s135, %s137
    %p144 = scmp.eq.s32.totalorder %s22, 1
    %p145 = por %p143, %p144
    %p146 = scmp.ne.s32.totalorder %s137, %s138
    %p147 = scmp.eq.s32.totalorder %s22, 0
    %p148 = por %p146, %p147
    %p149 = scmp.ne.s32.totalorder %s137, %s138
    %p150 = scmp.eq.s32.totalorder %s23, 1
    %p151 = por %p149, %p150
    %p153 = scmp.ne.s32.totalorder %s138, %s152
    %p154 = scmp.eq.s32.totalorder %s23, 0
    %p155 = por %p153, %p154
    %s157 = sadd.s32 %s156, 1
    %p160 = scmp.eq.s32.totalorder %s17, 1
    %p161 = scmp.ne.s32.totalorder %s156, %s158
    %p162 = scmp.eq.s32.totalorder %s17, 0
    %p163 = por %p161, %p162
    %p164 = scmp.ne.s32.totalorder %s156, %s158
    %p165 = scmp.eq.s32.totalorder %s22, 1
    %p166 = por %p164, %p165
    %p167 = scmp.ne.s32.totalorder %s158, %s159
    %p168 = scmp.eq.s32.totalorder %s22, 0
    %p169 = por %p167, %p168
    %p170 = scmp.ne.s32.totalorder %s158, %s159
    %p171 = scmp.eq.s32.totalorder %s23, 1
    %p172 = por %p170, %p171
    %p174 = scmp.ne.s32.totalorder %s159, %s173
    %p175 = scmp.eq.s32.totalorder %s23, 0
    %p176 = por %p174, %p175
    %s178 = sadd.s32 %s177, 1
    %p181 = scmp.eq.s32.totalorder %s17, 1
    %p182 = scmp.ne.s32.totalorder %s177, %s179
    %p183 = scmp.eq.s32.totalorder %s17, 0
    %p184 = por %p182, %p183
    %p185 = scmp.ne.s32.totalorder %s177, %s179
    %p186 = scmp.eq.s32.totalorder %s22, 1
    %p187 = por %p185, %p186
    %p188 = scmp.ne.s32.totalorder %s179, %s180
    %p189 = scmp.eq.s32.totalorder %s22, 0
    %p190 = por %p188, %p189
    %p191 = scmp.ne.s32.totalorder %s179, %s180
    %p192 = scmp.eq.s32.totalorder %s23, 1
    %p193 = por %p191, %p192
    %p195 = scmp.ne.s32.totalorder %s180, %s194
    %p196 = scmp.eq.s32.totalorder %s23, 0
    %p197 = por %p195, %p196
    %s199 = sadd.s32 %s198, 1
    %p202 = scmp.eq.s32.totalorder %s17, 1
    %p203 = scmp.ne.s32.totalorder %s198, %s200
    %p204 = scmp.eq.s32.totalorder %s17, 0
    %p205 = por %p203, %p204
    %p206 = scmp.ne.s32.totalorder %s198, %s200
    %p207 = scmp.eq.s32.totalorder %s22, 1
    %p208 = por %p206, %p207
    %p209 = scmp.ne.s32.totalorder %s200, %s201
    %p210 = scmp.eq.s32.totalorder %s22, 0
    %p211 = por %p209, %p210
    %p212 = scmp.ne.s32.totalorder %s200, %s201
    %p213 = scmp.eq.s32.totalorder %s23, 1
    %p214 = por %p212, %p213
    %p216 = scmp.ne.s32.totalorder %s201, %s215
    %p217 = scmp.eq.s32.totalorder %s23, 0
    %p218 = por %p216, %p217
    %s220 = sadd.s32 %s219, 1
    %p223 = scmp.eq.s32.totalorder %s17, 1
    %p224 = scmp.ne.s32.totalorder %s219, %s221
    %p225 = scmp.eq.s32.totalorder %s17, 0
    %p226 = por %p224, %p225
    %p227 = scmp.ne.s32.totalorder %s219, %s221
    %p228 = scmp.eq.s32.totalorder %s22, 1
    %p229 = por %p227, %p228
    %p230 = scmp.ne.s32.totalorder %s221, %s222
    %p231 = scmp.eq.s32.totalorder %s22, 0
    %p232 = por %p230, %p231
    %p233 = scmp.ne.s32.totalorder %s221, %s222
    %p234 = scmp.eq.s32.totalorder %s23, 1
    %p235 = por %p233, %p234
    %p237 = scmp.ne.s32.totalorder %s222, %s236
    %p238 = scmp.eq.s32.totalorder %s23, 0
    %p239 = por %p237, %p238
    %s241 = sadd.s32 %s240, 1
    %p244 = scmp.eq.s32.totalorder %s17, 1
    %p245 = scmp.ne.s32.totalorder %s240, %s242
    %p246 = scmp.eq.s32.totalorder %s17, 0
    %p247 = por %p245, %p246
    %p248 = scmp.ne.s32.totalorder %s240, %s242
    %p249 = scmp.eq.s32.totalorder %s22, 1
    %p250 = por %p248, %p249
    %p251 = scmp.ne.s32.totalorder %s242, %s243
    %p252 = scmp.eq.s32.totalorder %s22, 0
    %p253 = por %p251, %p252
    %p254 = scmp.ne.s32.totalorder %s242, %s243
    %p255 = scmp.eq.s32.totalorder %s23, 1
    %p256 = por %p254, %p255
    %p258 = scmp.ne.s32.totalorder %s243, %s257
    %p259 = scmp.eq.s32.totalorder %s23, 0
    %p260 = por %p258, %p259
    %s261 = ssub.s32 %s17, %s24
    %p262 = scmp.eq.s32.totalorder %s261, 0
    %s264 = sadd.s32 %s263, 1
    %s265 = scalar_select %p262, %s263, %s264
    %p268 = pneg %p262
    %p269 = scmp.eq.s32.totalorder %s17, 1
    %p270 = por %p268, %p269
    %p271 = scmp.ne.s32.totalorder %s263, %s266
    %p272 = scmp.eq.s32.totalorder %s17, 0
    %p273 = por %p271, %p272
    %p274 = scmp.ne.s32.totalorder %s263, %s266
    %p275 = scmp.eq.s32.totalorder %s22, 1
    %p276 = por %p274, %p275
    %p277 = scmp.ne.s32.totalorder %s266, %s267
    %p278 = scmp.eq.s32.totalorder %s22, 0
    %p279 = por %p277, %p278
    %p280 = scmp.ne.s32.totalorder %s266, %s267
    %p281 = scmp.eq.s32.totalorder %s23, 1
    %p282 = por %p280, %p281
    %p284 = scmp.ne.s32.totalorder %s267, %s283
    %p285 = scmp.eq.s32.totalorder %s23, 0
    %p286 = por %p284, %p285
    %p287 = scmp.le.s32.totalorder 1, %s17
    %p288 = scmp.lt.s32.totalorder %s17, 3
    %p289 = pnand %p287, %p288
    %p290 = pneg %p289
    // Predicated region
    $region9: #{residual_conv3d_forward.1} parent=5 // pred_check
      _
    $region10: #{residual_conv3d_forward.1} parent=5 // pred_check_branch
      %292 = sbr.rel (%p289) target = $region12
    $region11: #{residual_conv3d_forward.1} parent=5 // pred_region
      %s293 = ssub.s32 %s17, 1
      // Predicated region
      $region13: #{residual_conv3d_forward.1} parent=11 // pred_check
        %p294 = pneg %p64
      $region14: #{residual_conv3d_forward.1} parent=11 // pred_check_branch
        %296 = sbr.rel (%p294) target = $region16
      $region15: #{residual_conv3d_forward.1} parent=11 // pred_region
        _
      $region16: #{residual_conv3d_forward.1} parent=11 // pred_fallthru
        _
      // Predicated region
      $region17: #{residual_conv3d_forward.1} parent=11 // pred_check
        %p297 = pneg %p85
      $region18: #{residual_conv3d_forward.1} parent=11 // pred_check_branch
        %299 = sbr.rel (%p297) target = $region20
      $region19: #{residual_conv3d_forward.1} parent=11 // pred_region
        _
      $region20: #{residual_conv3d_forward.1} parent=11 // pred_fallthru
        _
      // Predicated region
      $region21: #{residual_conv3d_forward.1} parent=11 // pred_check
        %p300 = pneg %p106
      $region22: #{residual_conv3d_forward.1} parent=11 // pred_check_branch
        %302 = sbr.rel (%p300) target = $region24
      $region23: #{residual_conv3d_forward.1} parent=11 // pred_region
        _
      $region24: #{residual_conv3d_forward.1} parent=11 // pred_fallthru
        _
      // Predicated region
      $region25: #{residual_conv3d_forward.1} parent=11 // pred_check
        %p303 = pneg %p127
      $region26: #{residual_conv3d_forward.1} parent=11 // pred_check_branch
        %305 = sbr.rel (%p303) target = $region28
      $region27: #{residual_conv3d_forward.1} parent=11 // pred_region
        _
      $region28: #{residual_conv3d_forward.1} parent=11 // pred_fallthru
        _
      // Predicated region
      $region29: #{residual_conv3d_forward.1} parent=11 // pred_check
        %p306 = pneg %p148
      $region30: #{residual_conv3d_forward.1} parent=11 // pred_check_branch
        %308 = sbr.rel (%p306) target = $region32
      $region31: #{residual_conv3d_forward.1} parent=11 // pred_region
        _
      $region32: #{residual_conv3d_forward.1} parent=11 // pred_fallthru
        _
      // Predicated region
      $region33: #{residual_conv3d_forward.1} parent=11 // pred_check
        %p309 = pneg %p169
      $region34: #{residual_conv3d_forward.1} parent=11 // pred_check_branch
        %311 = sbr.rel (%p309) target = $region36
      $region35: #{residual_conv3d_forward.1} parent=11 // pred_region
        _
      $region36: #{residual_conv3d_forward.1} parent=11 // pred_fallthru
        _
      // Predicated region
      $region37: #{residual_conv3d_forward.1} parent=11 // pred_check
        %p312 = pneg %p190
      $region38: #{residual_conv3d_forward.1} parent=11 // pred_check_branch
        %314 = sbr.rel (%p312) target = $region40
      $region39: #{residual_conv3d_forward.1} parent=11 // pred_region
        _
      $region40: #{residual_conv3d_forward.1} parent=11 // pred_fallthru
        _
      // Predicated region
      $region41: #{residual_conv3d_forward.1} parent=11 // pred_check
        %p315 = pneg %p211
      $region42: #{residual_conv3d_forward.1} parent=11 // pred_check_branch
        %317 = sbr.rel (%p315) target = $region44
      $region43: #{residual_conv3d_forward.1} parent=11 // pred_region
        _
      $region44: #{residual_conv3d_forward.1} parent=11 // pred_fallthru
        _
      // Predicated region
      $region45: #{residual_conv3d_forward.1} parent=11 // pred_check
        %p318 = pneg %p232
      $region46: #{residual_conv3d_forward.1} parent=11 // pred_check_branch
        %320 = sbr.rel (%p318) target = $region48
      $region47: #{residual_conv3d_forward.1} parent=11 // pred_region
        _
      $region48: #{residual_conv3d_forward.1} parent=11 // pred_fallthru
        _
      // Predicated region
      $region49: #{residual_conv3d_forward.1} parent=11 // pred_check
        %p321 = pneg %p253
      $region50: #{residual_conv3d_forward.1} parent=11 // pred_check_branch
        %323 = sbr.rel (%p321) target = $region52
      $region51: #{residual_conv3d_forward.1} parent=11 // pred_region
        _
      $region52: #{residual_conv3d_forward.1} parent=11 // pred_fallthru
        _
    $region12: #{residual_conv3d_forward.1} parent=5 // pred_fallthru
      _
    %p324 = scmp.lt.s32.totalorder %s17, 2
    // Predicated region
    $region53: #{residual_conv3d_forward.1} parent=5 // pred_check
      %p325 = pneg %p324
    $region54: #{residual_conv3d_forward.1} parent=5 // pred_check_branch
      %327 = sbr.rel (%p325) target = $region56
    $region55: #{residual_conv3d_forward.1} parent=5 // pred_region
      // Predicated region
      $region57: #{residual_conv3d_forward.1} parent=55 // pred_check
        %p328 = pneg %p37
      $region58: #{residual_conv3d_forward.1} parent=55 // pred_check_branch
        %330 = sbr.rel (%p328) target = $region60
      $region59: #{residual_conv3d_forward.1} parent=55 // pred_region
        %p331 = scmp.lt.s32.totalorder %s17, 1
        %s332 = scalar_select %p331, %s17, 1
        %s333 = smul.addr %s332, 8
        %s334 = smul.addr %s333, 4
        %s335 = scalar_lea.vmem %s0, %s334
      $region60: #{residual_conv3d_forward.1} parent=55 // pred_fallthru
        _
    $region56: #{residual_conv3d_forward.1} parent=5 // pred_fallthru
      _
    %p336 = scmp.le.s32.totalorder 1, %s17
    %p337 = scmp.lt.s32.totalorder %s17, 3
    %p338 = pnand %p336, %p337
    %p339 = pneg %p338
    // Predicated region
    $region61: #{residual_conv3d_forward.1} parent=5 // pred_check
      _
    $region62: #{residual_conv3d_forward.1} parent=5 // pred_check_branch
      %341 = sbr.rel (%p338) target = $region64
    $region63: #{residual_conv3d_forward.1} parent=5 // pred_region
      %s342 = ssub.s32 %s17, 1
      %p343 = scmp.lt.s32.totalorder %s22, 1
      %s344 = scalar_select %p343, %s22, 1
      %s345 = smul.addr %s344, 8
      %s346 = smul.addr %s345, 4
      %s347 = scalar_lea.vmem %s0, %s346
      %p348 = pneg %p43
      %p349 = pneg %p40
      %p350 = pneg %p64
      %p351 = pneg %p61
      %p352 = pneg %p85
      %p353 = pneg %p82
      %p354 = pneg %p106
      %p355 = pneg %p103
      %p356 = pneg %p127
      %p357 = pneg %p124
      %p358 = pneg %p148
      %p359 = pneg %p145
      %p360 = pneg %p169
      %p361 = pneg %p166
      %p362 = pneg %p190
      %p363 = pneg %p187
      %p364 = pneg %p211
      %p365 = pneg %p208
      %p366 = pneg %p232
      %p367 = pneg %p229
      %p368 = pneg %p253
      %p369 = pneg %p250
      %p370 = pneg %p279
      %p371 = pneg %p276
      %p372 = scmp.lt.s32.totalorder %s22, 1
      %s373 = scalar_select %p372, %s22, 1
      %s374 = smul.addr %s373, 4
      %s375 = smul.addr %s374, 8
      %s376 = scalar_lea.vmem %s11, %s375
      %p377 = scmp.lt.s32.totalorder %s22, 1
      %s378 = scalar_select %p377, %s22, 1
      %s379 = smul.addr %s378, 8
      %s380 = smul.addr %s379, 4
      %s381 = scalar_lea.vmem %s0, %s380
      %p382 = scmp.lt.s32.totalorder %s22, 1
      %s383 = scalar_select %p382, %s22, 1
      %s384 = smul.addr %s383, 4
      %s385 = smul.addr %s384, 8
      %s386 = scalar_lea.vmem %s11, %s385
      %v388 = vld [vmem:[%s381] sm:$0xf]
      %v389 = vld [vmem:[%s381 + $0x4] sm:$0xf]
      %v390 = vld [vmem:[%s1] sm:$0xf]
      %v391 = vld [vmem:[%s1 + $0x4] sm:$0xf]
      %v392 = vld [vmem:[%s1 + $0x8] sm:$0xf]
      %v393 = vld [vmem:[%s1 + $0xc] sm:$0xf]
      %v394 = vld [vmem:[%s1 + $0x10] sm:$0xf]
      %v395 = vld [vmem:[%s1 + $0x14] sm:$0xf]
      %v396 = vld [vmem:[%s1 + $0x18] sm:$0xf]
      %v397 = vld [vmem:[%s1 + $0x1c] sm:$0xf]
      %v398 = vld [vmem:[%s2] sm:$0x1]
      %v400 = vlaneseq
      %v401 = vshrl.u32 %v400, 7
      %v402 = vsub.s32 0, %v401
      %v403 = vrot.slane %v398, %v402
      %v407 = vunpack.c.l.b16 %v388
      %v408 = vunpack.c.l.b16 %v389
      %v409 = vpack.c.b16 %v408, %v407
      %v418 = vunpack.c.l.b16 %v390
      %v419 = vunpack.c.l.b16 %v391
      %v420 = vunpack.c.l.b16 %v392
      %v421 = vunpack.c.l.b16 %v393
      %v422 = vunpack.c.l.b16 %v394
      %v423 = vunpack.c.l.b16 %v395
      %v424 = vunpack.c.l.b16 %v396
      %v425 = vunpack.c.l.b16 %v397
      %v426 = vpack.c.b16 %v419, %v418
      %v427 = vpack.c.b16 %v421, %v420
      %v428 = vpack.c.b16 %v423, %v422
      %v429 = vpack.c.b16 %v425, %v424
      %vm434 = vcmask 523264
      %v436 = vsel %vm434, %v409, 0
      %438 = vmatprep.subr.bf16.mxu0 0
      %439 = vmatpush1.bf16.msra.mxu0 0
      %440 = vmatprep.subr.bf16.mxu0 0
      %441 = vmatpush1.bf16.msra.mxu0 0
      %442 = vmatprep.subr.bf16.mxu0 0
      %443 = vmatpush1.bf16.msra.mxu0 0
      %444 = vmatprep.subr.bf16.mxu0 0
      %445 = vmatpush1.bf16.msra.mxu0 0
      %446 = vmatprep.subr.bf16.mxu0 0
      %447 = vmatpush1.bf16.msra.mxu0 %v429
      %448 = vmatprep.subr.bf16.mxu0 0
      %449 = vmatpush1.bf16.msra.mxu0 %v428
      %450 = vmatprep.subr.bf16.mxu0 0
      %451 = vmatpush1.bf16.msra.mxu0 %v427
      %452 = vmatprep.subr.bf16.mxu0 0
      %453 = vmatpush1.bf16.msra.mxu0 %v426
      %454 = vmatprep.subr.bf16.mxu0 0
      %455 = vmatpush2.bf16.msra.mxu0 0
      %456 = vmatprep.subr.bf16.mxu0 0
      %457 = vmatpush2.bf16.msra.mxu0 0
      %458 = vmatprep.subr.bf16.mxu0 0
      %459 = vmatpush2.bf16.msra.mxu0 0
      %460 = vmatprep.subr.bf16.mxu0 0
      %461 = vmatpush2.bf16.msra.mxu0 0
      %462 = vmatprep.subr.bf16.mxu0 0
      %463 = vmatpush2.bf16.msra.mxu0 0
      %464 = vmatprep.subr.bf16.mxu0 0
      %465 = vmatpush2.bf16.msra.mxu0 0
      %466 = vmatprep.subr.bf16.mxu0 0
      %467 = vmatpush2.bf16.msra.mxu0 0
      %468 = vmatprep.subr.bf16.mxu0 0
      %469 = vmatpush2.bf16.msra.mxu0 0
      %470 = vmatprep.mubr.bf16.mxu0 0
      %471 = vmatmul.mubr.bf16.gmra.mxu0 %v436
      %v472 = vpop.f32.mrf.mxu0
      %v473 = vadd.f32 %v403, %v472
      %v474 = vpop.f32.mrf.mxu0
      %v475 = vpop.f32.mrf.mxu0
      %v476 = vadd.f32 %v403, %v475
      %v477 = vpop.f32.mrf.mxu0
      %478 = vdwg.mxu0
      %v479 = vmax.f32 %v473, 0.0
      %v480 = vmax.f32 %v476, 0.0
      %v481 = vpack.c.bf16 %v480, %v479
      %v482 = vld [vmem:[%s3] sm:$0xf]
      %v483 = vld [vmem:[%s3 + $0x4] sm:$0xf]
      %v484 = vld [vmem:[%s3 + $0x8] sm:$0xf]
      %v485 = vld [vmem:[%s3 + $0xc] sm:$0xf]
      %v486 = vld [vmem:[%s3 + $0x10] sm:$0xf]
      %v487 = vld [vmem:[%s3 + $0x14] sm:$0xf]
      %v488 = vld [vmem:[%s3 + $0x18] sm:$0xf]
      %v489 = vld [vmem:[%s3 + $0x1c] sm:$0xf]
      %v490 = vld [vmem:[%s3 + $0x20] sm:$0xf]
      %v491 = vld [vmem:[%s3 + $0x24] sm:$0xf]
      %v492 = vld [vmem:[%s3 + $0x28] sm:$0xf]
      %v493 = vld [vmem:[%s3 + $0x2c] sm:$0xf]
      %v494 = vld [vmem:[%s3 + $0x30] sm:$0xf]
      %v495 = vld [vmem:[%s3 + $0x34] sm:$0xf]
      %v496 = vld [vmem:[%s3 + $0x38] sm:$0xf]
      %v497 = vld [vmem:[%s3 + $0x3c] sm:$0xf]
      %v514 = vunpack.c.l.b16 %v482
      %v515 = vunpack.c.l.b16 %v483
      %v516 = vunpack.c.l.b16 %v484
      %v517 = vunpack.c.l.b16 %v485
      %v518 = vunpack.c.l.b16 %v486
      %v519 = vunpack.c.l.b16 %v487
      %v520 = vunpack.c.l.b16 %v488
      %v521 = vunpack.c.l.b16 %v489
      %v522 = vunpack.c.l.b16 %v490
      %v523 = vunpack.c.l.b16 %v491
      %v524 = vunpack.c.l.b16 %v492
      %v525 = vunpack.c.l.b16 %v493
      %v526 = vunpack.c.l.b16 %v494
      %v527 = vunpack.c.l.b16 %v495
      %v528 = vunpack.c.l.b16 %v496
      %v529 = vunpack.c.l.b16 %v497
      %v530 = vpack.c.b16 %v515, %v514
      %v531 = vpack.c.b16 %v517, %v516
      %v532 = vpack.c.b16 %v519, %v518
      %v533 = vpack.c.b16 %v521, %v520
      %v534 = vpack.c.b16 %v523, %v522
      %v535 = vpack.c.b16 %v525, %v524
      %v536 = vpack.c.b16 %v527, %v526
      %v537 = vpack.c.b16 %v529, %v528
      %546 = vmatprep.subr.bf16.mxu0 0
      %547 = vmatpush1.bf16.msra.mxu0 %v537
      %548 = vmatprep.subr.bf16.mxu0 0
      %549 = vmatpush1.bf16.msra.mxu0 %v536
      %550 = vmatprep.subr.bf16.mxu0 0
      %551 = vmatpush1.bf16.msra.mxu0 %v535
      %552 = vmatprep.subr.bf16.mxu0 0
      %553 = vmatpush1.bf16.msra.mxu0 %v534
      %554 = vmatprep.subr.bf16.mxu0 0
      %555 = vmatpush1.bf16.msra.mxu0 %v533
      %556 = vmatprep.subr.bf16.mxu0 0
      %557 = vmatpush1.bf16.msra.mxu0 %v532
      %558 = vmatprep.subr.bf16.mxu0 0
      %559 = vmatpush1.bf16.msra.mxu0 %v531
      %560 = vmatprep.subr.bf16.mxu0 0
      %561 = vmatpush1.bf16.msra.mxu0 %v530
      %562 = vmatprep.subr.bf16.mxu0 0
      %563 = vmatpush2.bf16.msra.mxu0 0
      %564 = vmatprep.subr.bf16.mxu0 0
      %565 = vmatpush2.bf16.msra.mxu0 0
      %566 = vmatprep.subr.bf16.mxu0 0
      %567 = vmatpush2.bf16.msra.mxu0 0
      %568 = vmatprep.subr.bf16.mxu0 0
      %569 = vmatpush2.bf16.msra.mxu0 0
      %570 = vmatprep.subr.bf16.mxu0 0
      %571 = vmatpush2.bf16.msra.mxu0 0
      %572 = vmatprep.subr.bf16.mxu0 0
      %573 = vmatpush2.bf16.msra.mxu0 0
      %574 = vmatprep.subr.bf16.mxu0 0
      %575 = vmatpush2.bf16.msra.mxu0 0
      %576 = vmatprep.subr.bf16.mxu0 0
      %577 = vmatpush2.bf16.msra.mxu0 0
      %578 = vmatprep.mubr.bf16.mxu0 0
      %579 = vmatmul.mubr.bf16.gmra.mxu0 %v481
      %v580 = vpop.f32.mrf.mxu0
      %v581 = vadd.f32 0.0, %v580
      %v582 = vpop.f32.mrf.mxu0
      %v583 = vpop.f32.mrf.mxu0
      %v584 = vadd.f32 0.0, %v583
      %v585 = vpop.f32.mrf.mxu0
      %586 = vdwg.mxu0
      %v587 = vpack.c.bf16 %v584, %v581
      %v588 = vld [vmem:[%s4] sm:$0xf]
      %vm589 = vcmask 130048
      %v591 = vsel %vm589, %v588, 0
      %593 = vmatprep.subr.bf16.mxu0 0
      %594 = vmatpush1.bf16.msra.mxu0 0
      %595 = vmatprep.subr.bf16.mxu0 0
      %596 = vmatpush1.bf16.msra.mxu0 0
      %597 = vmatprep.subr.bf16.mxu0 0
      %598 = vmatpush1.bf16.msra.mxu0 0
      %599 = vmatprep.subr.bf16.mxu0 0
      %600 = vmatpush1.bf16.msra.mxu0 0
      %601 = vmatprep.subr.bf16.mxu0 0
      %602 = vmatpush1.bf16.msra.mxu0 0
      %603 = vmatprep.subr.bf16.mxu0 0
      %604 = vmatpush1.bf16.msra.mxu0 0
      %605 = vmatprep.subr.bf16.mxu0 0
      %606 = vmatpush1.bf16.msra.mxu0 0
      %607 = vmatprep.subr.bf16.mxu0 0
      %608 = vmatpush1.bf16.msra.mxu0 %v587
      %609 = vmatprep.subr.bf16.mxu0 0
      %610 = vmatpush2.bf16.msra.mxu0 0
      %611 = vmatprep.subr.bf16.mxu0 0
      %612 = vmatpush2.bf16.msra.mxu0 0
      %613 = vmatprep.subr.bf16.mxu0 0
      %614 = vmatpush2.bf16.msra.mxu0 0
      %615 = vmatprep.subr.bf16.mxu0 0
      %616 = vmatpush2.bf16.msra.mxu0 0
      %617 = vmatprep.subr.bf16.mxu0 0
      %618 = vmatpush2.bf16.msra.mxu0 0
      %619 = vmatprep.subr.bf16.mxu0 0
      %620 = vmatpush2.bf16.msra.mxu0 0
      %621 = vmatprep.subr.bf16.mxu0 0
      %622 = vmatpush2.bf16.msra.mxu0 0
      %623 = vmatprep.subr.bf16.mxu0 0
      %624 = vmatpush2.bf16.msra.mxu0 0
      %625 = vmatprep.mubr.bf16.mxu0 0
      %626 = vmatmul.mubr.bf16.gmra.mxu0 %v591
      %v627 = vpop.f32.mrf.mxu0
      %v628 = vadd.f32 0.0, %v627
      %v629 = vpop.f32.mrf.mxu0
      %v630 = vpop.f32.mrf.mxu0
      %v631 = vpop.f32.mrf.mxu0
      %632 = vdwg.mxu0
      %v633 = vpack.c.bf16 %v628, %v628
      %634 = vst [vmem:[#allocation2] sm:$0xf] %v633
      %s635 = scalar_lea.vmem %s4, 4
      %v636 = vld [vmem:[%s635] sm:$0xf]
      %v638 = vsel %vm589, %v636, 0
      %640 = vmatprep.subr.bf16.mxu0 0
      %641 = vmatpush1.bf16.msra.mxu0 0
      %642 = vmatprep.subr.bf16.mxu0 0
      %643 = vmatpush1.bf16.msra.mxu0 0
      %644 = vmatprep.subr.bf16.mxu0 0
      %645 = vmatpush1.bf16.msra.mxu0 0
      %646 = vmatprep.subr.bf16.mxu0 0
      %647 = vmatpush1.bf16.msra.mxu0 0
      %648 = vmatprep.subr.bf16.mxu0 0
      %649 = vmatpush1.bf16.msra.mxu0 0
      %650 = vmatprep.subr.bf16.mxu0 0
      %651 = vmatpush1.bf16.msra.mxu0 0
      %652 = vmatprep.subr.bf16.mxu0 0
      %653 = vmatpush1.bf16.msra.mxu0 0
      %654 = vmatprep.subr.bf16.mxu0 0
      %655 = vmatpush1.bf16.msra.mxu0 %v587
      %656 = vmatprep.subr.bf16.mxu0 0
      %657 = vmatpush2.bf16.msra.mxu0 0
      %658 = vmatprep.subr.bf16.mxu0 0
      %659 = vmatpush2.bf16.msra.mxu0 0
      %660 = vmatprep.subr.bf16.mxu0 0
      %661 = vmatpush2.bf16.msra.mxu0 0
      %662 = vmatprep.subr.bf16.mxu0 0
      %663 = vmatpush2.bf16.msra.mxu0 0
      %664 = vmatprep.subr.bf16.mxu0 0
      %665 = vmatpush2.bf16.msra.mxu0 0
      %666 = vmatprep.subr.bf16.mxu0 0
      %667 = vmatpush2.bf16.msra.mxu0 0
      %668 = vmatprep.subr.bf16.mxu0 0
      %669 = vmatpush2.bf16.msra.mxu0 0
      %670 = vmatprep.subr.bf16.mxu0 0
      %671 = vmatpush2.bf16.msra.mxu0 0
      %672 = vmatprep.mubr.bf16.mxu0 0
      %673 = vmatmul.mubr.bf16.gmra.mxu0 %v638
      %v674 = vpop.f32.mrf.mxu0
      %v675 = vadd.f32 0.0, %v674
      %v676 = vpop.f32.mrf.mxu0
      %v677 = vpop.f32.mrf.mxu0
      %v678 = vpop.f32.mrf.mxu0
      %679 = vdwg.mxu0
      %v680 = vpack.c.bf16 %v675, %v675
      %s681 = scalar_lea.vmem [#allocation2], 16
      %682 = vst [vmem:[%s681] sm:$0xf] %v680
      %s683 = scalar_lea.vmem %s4, 8
      %v684 = vld [vmem:[%s683] sm:$0xf]
      %v686 = vsel %vm589, %v684, 0
      %688 = vmatprep.subr.bf16.mxu0 0
      %689 = vmatpush1.bf16.msra.mxu0 0
      %690 = vmatprep.subr.bf16.mxu0 0
      %691 = vmatpush1.bf16.msra.mxu0 0
      %692 = vmatprep.subr.bf16.mxu0 0
      %693 = vmatpush1.bf16.msra.mxu0 0
      %694 = vmatprep.subr.bf16.mxu0 0
      %695 = vmatpush1.bf16.msra.mxu0 0
      %696 = vmatprep.subr.bf16.mxu0 0
      %697 = vmatpush1.bf16.msra.mxu0 0
      %698 = vmatprep.subr.bf16.mxu0 0
      %699 = vmatpush1.bf16.msra.mxu0 0
      %700 = vmatprep.subr.bf16.mxu0 0
      %701 = vmatpush1.bf16.msra.mxu0 0
      %702 = vmatprep.subr.bf16.mxu0 0
      %703 = vmatpush1.bf16.msra.mxu0 %v587
      %704 = vmatprep.subr.bf16.mxu0 0
      %705 = vmatpush2.bf16.msra.mxu0 0
      %706 = vmatprep.subr.bf16.mxu0 0
      %707 = vmatpush2.bf16.msra.mxu0 0
      %708 = vmatprep.subr.bf16.mxu0 0
      %709 = vmatpush2.bf16.msra.mxu0 0
      %710 = vmatprep.subr.bf16.mxu0 0
      %711 = vmatpush2.bf16.msra.mxu0 0
      %712 = vmatprep.subr.bf16.mxu0 0
      %713 = vmatpush2.bf16.msra.mxu0 0
      %714 = vmatprep.subr.bf16.mxu0 0
      %715 = vmatpush2.bf16.msra.mxu0 0
      %716 = vmatprep.subr.bf16.mxu0 0
      %717 = vmatpush2.bf16.msra.mxu0 0
      %718 = vmatprep.subr.bf16.mxu0 0
      %719 = vmatpush2.bf16.msra.mxu0 0
      %720 = vmatprep.mubr.bf16.mxu0 0
      %721 = vmatmul.mubr.bf16.gmra.mxu0 %v686
      %v722 = vpop.f32.mrf.mxu0
      %v723 = vadd.f32 0.0, %v722
      %v724 = vpop.f32.mrf.mxu0
      %v725 = vpop.f32.mrf.mxu0
      %v726 = vpop.f32.mrf.mxu0
      %727 = vdwg.mxu0
      %v728 = vpack.c.bf16 %v723, %v723
      %s729 = scalar_lea.vmem [#allocation2], 32
      %730 = vst [vmem:[%s729] sm:$0xf] %v728
      %v731 = vld [vmem:[%s635] sm:$0xf]
      %v734 = vsel %vm589, %v731, 0
      %736 = vmatprep.subr.bf16.mxu0 0
      %737 = vmatpush1.bf16.msra.mxu0 0
      %738 = vmatprep.subr.bf16.mxu0 0
      %739 = vmatpush1.bf16.msra.mxu0 0
      %740 = vmatprep.subr.bf16.mxu0 0
      %741 = vmatpush1.bf16.msra.mxu0 0
      %742 = vmatprep.subr.bf16.mxu0 0
      %743 = vmatpush1.bf16.msra.mxu0 0
      %744 = vmatprep.subr.bf16.mxu0 0
      %745 = vmatpush1.bf16.msra.mxu0 0
      %746 = vmatprep.subr.bf16.mxu0 0
      %747 = vmatpush1.bf16.msra.mxu0 0
      %748 = vmatprep.subr.bf16.mxu0 0
      %749 = vmatpush1.bf16.msra.mxu0 0
      %750 = vmatprep.subr.bf16.mxu0 0
      %751 = vmatpush1.bf16.msra.mxu0 %v409
      %752 = vmatprep.subr.bf16.mxu0 0
      %753 = vmatpush2.bf16.msra.mxu0 0
      %754 = vmatprep.subr.bf16.mxu0 0
      %755 = vmatpush2.bf16.msra.mxu0 0
      %756 = vmatprep.subr.bf16.mxu0 0
      %757 = vmatpush2.bf16.msra.mxu0 0
      %758 = vmatprep.subr.bf16.mxu0 0
      %759 = vmatpush2.bf16.msra.mxu0 0
      %760 = vmatprep.subr.bf16.mxu0 0
      %761 = vmatpush2.bf16.msra.mxu0 0
      %762 = vmatprep.subr.bf16.mxu0 0
      %763 = vmatpush2.bf16.msra.mxu0 0
      %764 = vmatprep.subr.bf16.mxu0 0
      %765 = vmatpush2.bf16.msra.mxu0 0
      %766 = vmatprep.subr.bf16.mxu0 0
      %767 = vmatpush2.bf16.msra.mxu0 0
      %768 = vmatprep.mubr.bf16.mxu0 0
      %769 = vmatmul.mubr.bf16.gmra.mxu0 %v734
      %v770 = vpop.f32.mrf.mxu0
      %v771 = vadd.f32 0.0, %v770
      %v772 = vpop.f32.mrf.mxu0
      %v773 = vpop.f32.mrf.mxu0
      %v774 = vpop.f32.mrf.mxu0
      %775 = vdwg.mxu0
      %v776 = vpack.c.bf16 %v771, %v771
      %vm777 = vcmask 519168
      %778 = vst.msk [vmem:[#allocation4] sm:$0xf] %vm777, %v776
      %s779 = scalar_lea.vmem %s381, 8
      %v780 = vld [vmem:[%s779] sm:$0xf]
      %v781 = vld [vmem:[%s779 + $0x4] sm:$0xf]
      %v782 = vld [vmem:[%s1] sm:$0xf]
      %v783 = vld [vmem:[%s1 + $0x4] sm:$0xf]
      %v784 = vld [vmem:[%s1 + $0x8] sm:$0xf]
      %v785 = vld [vmem:[%s1 + $0xc] sm:$0xf]
      %v786 = vld [vmem:[%s1 + $0x10] sm:$0xf]
      %v787 = vld [vmem:[%s1 + $0x14] sm:$0xf]
      %v788 = vld [vmem:[%s1 + $0x18] sm:$0xf]
      %v789 = vld [vmem:[%s1 + $0x1c] sm:$0xf]
      %v790 = vld [vmem:[%s2] sm:$0x1]
      %v792 = vlaneseq
      %v793 = vshrl.u32 %v792, 7
      %v794 = vsub.s32 0, %v793
      %v795 = vrot.slane %v790, %v794
      %v799 = vunpack.c.l.b16 %v780
      %v800 = vunpack.c.l.b16 %v781
      %v801 = vpack.c.b16 %v800, %v799
      %v810 = vunpack.c.l.b16 %v782
      %v811 = vunpack.c.l.b16 %v783
      %v812 = vunpack.c.l.b16 %v784
      %v813 = vunpack.c.l.b16 %v785
      %v814 = vunpack.c.l.b16 %v786
      %v815 = vunpack.c.l.b16 %v787
      %v816 = vunpack.c.l.b16 %v788
      %v817 = vunpack.c.l.b16 %v789
      %v818 = vpack.c.b16 %v811, %v810
      %v819 = vpack.c.b16 %v813, %v812
      %v820 = vpack.c.b16 %v815, %v814
      %v821 = vpack.c.b16 %v817, %v816
      %v827 = vsel %vm434, %v801, 0
      %829 = vmatprep.subr.bf16.mxu0 0
      %830 = vmatpush1.bf16.msra.mxu0 0
      %831 = vmatprep.subr.bf16.mxu0 0
      %832 = vmatpush1.bf16.msra.mxu0 0
      %833 = vmatprep.subr.bf16.mxu0 0
      %834 = vmatpush1.bf16.msra.mxu0 0
      %835 = vmatprep.subr.bf16.mxu0 0
      %836 = vmatpush1.bf16.msra.mxu0 0
      %837 = vmatprep.subr.bf16.mxu0 0
      %838 = vmatpush1.bf16.msra.mxu0 %v821
      %839 = vmatprep.subr.bf16.mxu0 0
      %840 = vmatpush1.bf16.msra.mxu0 %v820
      %841 = vmatprep.subr.bf16.mxu0 0
      %842 = vmatpush1.bf16.msra.mxu0 %v819
      %843 = vmatprep.subr.bf16.mxu0 0
      %844 = vmatpush1.bf16.msra.mxu0 %v818
      %845 = vmatprep.subr.bf16.mxu0 0
      %846 = vmatpush2.bf16.msra.mxu0 0
      %847 = vmatprep.subr.bf16.mxu0 0
      %848 = vmatpush2.bf16.msra.mxu0 0
      %849 = vmatprep.subr.bf16.mxu0 0
      %850 = vmatpush2.bf16.msra.mxu0 0
      %851 = vmatprep.subr.bf16.mxu0 0
      %852 = vmatpush2.bf16.msra.mxu0 0
      %853 = vmatprep.subr.bf16.mxu0 0
      %854 = vmatpush2.bf16.msra.mxu0 0
      %855 = vmatprep.subr.bf16.mxu0 0
      %856 = vmatpush2.bf16.msra.mxu0 0
      %857 = vmatprep.subr.bf16.mxu0 0
      %858 = vmatpush2.bf16.msra.mxu0 0
      %859 = vmatprep.subr.bf16.mxu0 0
      %860 = vmatpush2.bf16.msra.mxu0 0
      %861 = vmatprep.mubr.bf16.mxu0 0
      %862 = vmatmul.mubr.bf16.gmra.mxu0 %v827
      %v863 = vpop.f32.mrf.mxu0
      %v864 = vadd.f32 %v795, %v863
      %v865 = vpop.f32.mrf.mxu0
      %v866 = vpop.f32.mrf.mxu0
      %v867 = vadd.f32 %v795, %v866
      %v868 = vpop.f32.mrf.mxu0
      %869 = vdwg.mxu0
      %v870 = vmax.f32 %v864, 0.0
      %v871 = vmax.f32 %v867, 0.0
      %v872 = vpack.c.bf16 %v871, %v870
      %v873 = vld [vmem:[%s3] sm:$0xf]
      %v874 = vld [vmem:[%s3 + $0x4] sm:$0xf]
      %v875 = vld [vmem:[%s3 + $0x8] sm:$0xf]
      %v876 = vld [vmem:[%s3 + $0xc] sm:$0xf]
      %v877 = vld [vmem:[%s3 + $0x10] sm:$0xf]
      %v878 = vld [vmem:[%s3 + $0x14] sm:$0xf]
      %v879 = vld [vmem:[%s3 + $0x18] sm:$0xf]
      %v880 = vld [vmem:[%s3 + $0x1c] sm:$0xf]
      %v881 = vld [vmem:[%s3 + $0x20] sm:$0xf]
      %v882 = vld [vmem:[%s3 + $0x24] sm:$0xf]
      %v883 = vld [vmem:[%s3 + $0x28] sm:$0xf]
      %v884 = vld [vmem:[%s3 + $0x2c] sm:$0xf]
      %v885 = vld [vmem:[%s3 + $0x30] sm:$0xf]
      %v886 = vld [vmem:[%s3 + $0x34] sm:$0xf]
      %v887 = vld [vmem:[%s3 + $0x38] sm:$0xf]
      %v888 = vld [vmem:[%s3 + $0x3c] sm:$0xf]
      %v905 = vunpack.c.l.b16 %v873
      %v906 = vunpack.c.l.b16 %v874
      %v907 = vunpack.c.l.b16 %v875
      %v908 = vunpack.c.l.b16 %v876
      %v909 = vunpack.c.l.b16 %v877
      %v910 = vunpack.c.l.b16 %v878
      %v911 = vunpack.c.l.b16 %v879
      %v912 = vunpack.c.l.b16 %v880
      %v913 = vunpack.c.l.b16 %v881
      %v914 = vunpack.c.l.b16 %v882
      %v915 = vunpack.c.l.b16 %v883
      %v916 = vunpack.c.l.b16 %v884
      %v917 = vunpack.c.l.b16 %v885
      %v918 = vunpack.c.l.b16 %v886
      %v919 = vunpack.c.l.b16 %v887
      %v920 = vunpack.c.l.b16 %v888
      %v921 = vpack.c.b16 %v906, %v905
      %v922 = vpack.c.b16 %v908, %v907
      %v923 = vpack.c.b16 %v910, %v909
      %v924 = vpack.c.b16 %v912, %v911
      %v925 = vpack.c.b16 %v914, %v913
      %v926 = vpack.c.b16 %v916, %v915
      %v927 = vpack.c.b16 %v918, %v917
      %v928 = vpack.c.b16 %v920, %v919
      %937 = vmatprep.subr.bf16.mxu0 0
      %938 = vmatpush1.bf16.msra.mxu0 %v928
      %939 = vmatprep.subr.bf16.mxu0 0
      %940 = vmatpush1.bf16.msra.mxu0 %v927
      %941 = vmatprep.subr.bf16.mxu0 0
      %942 = vmatpush1.bf16.msra.mxu0 %v926
      %943 = vmatprep.subr.bf16.mxu0 0
      %944 = vmatpush1.bf16.msra.mxu0 %v925
      %945 = vmatprep.subr.bf16.mxu0 0
      %946 = vmatpush1.bf16.msra.mxu0 %v924
      %947 = vmatprep.subr.bf16.mxu0 0
      %948 = vmatpush1.bf16.msra.mxu0 %v923
      %949 = vmatprep.subr.bf16.mxu0 0
      %950 = vmatpush1.bf16.msra.mxu0 %v922
      %951 = vmatprep.subr.bf16.mxu0 0
      %952 = vmatpush1.bf16.msra.mxu0 %v921
      %953 = vmatprep.subr.bf16.mxu0 0
      %954 = vmatpush2.bf16.msra.mxu0 0
      %955 = vmatprep.subr.bf16.mxu0 0
      %956 = vmatpush2.bf16.msra.mxu0 0
      %957 = vmatprep.subr.bf16.mxu0 0
      %958 = vmatpush2.bf16.msra.mxu0 0
      %959 = vmatprep.subr.bf16.mxu0 0
      %960 = vmatpush2.bf16.msra.mxu0 0
      %961 = vmatprep.subr.bf16.mxu0 0
      %962 = vmatpush2.bf16.msra.mxu0 0
      %963 = vmatprep.subr.bf16.mxu0 0
      %964 = vmatpush2.bf16.msra.mxu0 0
      %965 = vmatprep.subr.bf16.mxu0 0
      %966 = vmatpush2.bf16.msra.mxu0 0
      %967 = vmatprep.subr.bf16.mxu0 0
      %968 = vmatpush2.bf16.msra.mxu0 0
      %969 = vmatprep.mubr.bf16.mxu0 0
      %970 = vmatmul.mubr.bf16.gmra.mxu0 %v872
      %v971 = vpop.f32.mrf.mxu0
      %v972 = vadd.f32 0.0, %v971
      %v973 = vpop.f32.mrf.mxu0
      %v974 = vpop.f32.mrf.mxu0
      %v975 = vadd.f32 0.0, %v974
      %v976 = vpop.f32.mrf.mxu0
      %977 = vdwg.mxu0
      %v978 = vpack.c.bf16 %v975, %v972
      %v979 = vld [vmem:[%s4] sm:$0xf]
      %v981 = vsel %vm589, %v979, 0
      %983 = vmatprep.subr.bf16.mxu0 0
      %984 = vmatpush1.bf16.msra.mxu0 0
      %985 = vmatprep.subr.bf16.mxu0 0
      %986 = vmatpush1.bf16.msra.mxu0 0
      %987 = vmatprep.subr.bf16.mxu0 0
      %988 = vmatpush1.bf16.msra.mxu0 0
      %989 = vmatprep.subr.bf16.mxu0 0
      %990 = vmatpush1.bf16.msra.mxu0 0
      %991 = vmatprep.subr.bf16.mxu0 0
      %992 = vmatpush1.bf16.msra.mxu0 0
      %993 = vmatprep.subr.bf16.mxu0 0
      %994 = vmatpush1.bf16.msra.mxu0 0
      %995 = vmatprep.subr.bf16.mxu0 0
      %996 = vmatpush1.bf16.msra.mxu0 0
      %997 = vmatprep.subr.bf16.mxu0 0
      %998 = vmatpush1.bf16.msra.mxu0 %v978
      %999 = vmatprep.subr.bf16.mxu0 0
      %1000 = vmatpush2.bf16.msra.mxu0 0
      %1001 = vmatprep.subr.bf16.mxu0 0
      %1002 = vmatpush2.bf16.msra.mxu0 0
      %1003 = vmatprep.subr.bf16.mxu0 0
      %1004 = vmatpush2.bf16.msra.mxu0 0
      %1005 = vmatprep.subr.bf16.mxu0 0
      %1006 = vmatpush2.bf16.msra.mxu0 0
      %1007 = vmatprep.subr.bf16.mxu0 0
      %1008 = vmatpush2.bf16.msra.mxu0 0
      %1009 = vmatprep.subr.bf16.mxu0 0
      %1010 = vmatpush2.bf16.msra.mxu0 0
      %1011 = vmatprep.subr.bf16.mxu0 0
      %1012 = vmatpush2.bf16.msra.mxu0 0
      %1013 = vmatprep.subr.bf16.mxu0 0
      %1014 = vmatpush2.bf16.msra.mxu0 0
      %1015 = vmatprep.mubr.bf16.mxu0 0
      %1016 = vmatmul.mubr.bf16.gmra.mxu0 %v981
      %v1017 = vpop.f32.mrf.mxu0
      %v1018 = vadd.f32 0.0, %v1017
      %v1019 = vpop.f32.mrf.mxu0
      %v1020 = vpop.f32.mrf.mxu0
      %v1021 = vpop.f32.mrf.mxu0
      %1022 = vdwg.mxu0
      %v1023 = vpack.c.bf16 %v1018, %v1018
      %s1024 = scalar_lea.vmem [#allocation2], 4
      %1025 = vst [vmem:[%s1024] sm:$0xf] %v1023
      %v1026 = vld [vmem:[%s635] sm:$0xf]
      %v1028 = vsel %vm589, %v1026, 0
      %1030 = vmatprep.subr.bf16.mxu0 0
      %1031 = vmatpush1.bf16.msra.mxu0 0
      %1032 = vmatprep.subr.bf16.mxu0 0
      %1033 = vmatpush1.bf16.msra.mxu0 0
      %1034 = vmatprep.subr.bf16.mxu0 0
      %1035 = vmatpush1.bf16.msra.mxu0 0
      %1036 = vmatprep.subr.bf16.mxu0 0
      %1037 = vmatpush1.bf16.msra.mxu0 0
      %1038 = vmatprep.subr.bf16.mxu0 0
      %1039 = vmatpush1.bf16.msra.mxu0 0
      %1040 = vmatprep.subr.bf16.mxu0 0
      %1041 = vmatpush1.bf16.msra.mxu0 0
      %1042 = vmatprep.subr.bf16.mxu0 0
      %1043 = vmatpush1.bf16.msra.mxu0 0
      %1044 = vmatprep.subr.bf16.mxu0 0
      %1045 = vmatpush1.bf16.msra.mxu0 %v978
      %1046 = vmatprep.subr.bf16.mxu0 0
      %1047 = vmatpush2.bf16.msra.mxu0 0
      %1048 = vmatprep.subr.bf16.mxu0 0
      %1049 = vmatpush2.bf16.msra.mxu0 0
      %1050 = vmatprep.subr.bf16.mxu0 0
      %1051 = vmatpush2.bf16.msra.mxu0 0
      %1052 = vmatprep.subr.bf16.mxu0 0
      %1053 = vmatpush2.bf16.msra.mxu0 0
      %1054 = vmatprep.subr.bf16.mxu0 0
      %1055 = vmatpush2.bf16.msra.mxu0 0
      %1056 = vmatprep.subr.bf16.mxu0 0
      %1057 = vmatpush2.bf16.msra.mxu0 0
      %1058 = vmatprep.subr.bf16.mxu0 0
      %1059 = vmatpush2.bf16.msra.mxu0 0
      %1060 = vmatprep.subr.bf16.mxu0 0
      %1061 = vmatpush2.bf16.msra.mxu0 0
      %1062 = vmatprep.mubr.bf16.mxu0 0
      %1063 = vmatmul.mubr.bf16.gmra.mxu0 %v1028
      %v1064 = vpop.f32.mrf.mxu0
      %v1065 = vadd.f32 0.0, %v1064
      %v1066 = vpop.f32.mrf.mxu0
      %v1067 = vpop.f32.mrf.mxu0
      %v1068 = vpop.f32.mrf.mxu0
      %1069 = vdwg.mxu0
      %v1070 = vpack.c.bf16 %v1065, %v1065
      %s1071 = scalar_lea.vmem [#allocation2], 20
      %1072 = vst [vmem:[%s1071] sm:$0xf] %v1070
      %v1073 = vld [vmem:[%s683] sm:$0xf]
      %v1075 = vsel %vm589, %v1073, 0
      %1077 = vmatprep.subr.bf16.mxu0 0
      %1078 = vmatpush1.bf16.msra.mxu0 0
      %1079 = vmatprep.subr.bf16.mxu0 0
      %1080 = vmatpush1.bf16.msra.mxu0 0
      %1081 = vmatprep.subr.bf16.mxu0 0
      %1082 = vmatpush1.bf16.msra.mxu0 0
      %1083 = vmatprep.subr.bf16.mxu0 0
      %1084 = vmatpush1.bf16.msra.mxu0 0
      %1085 = vmatprep.subr.bf16.mxu0 0
      %1086 = vmatpush1.bf16.msra.mxu0 0
      %1087 = vmatprep.subr.bf16.mxu0 0
      %1088 = vmatpush1.bf16.msra.mxu0 0
      %1089 = vmatprep.subr.bf16.mxu0 0
      %1090 = vmatpush1.bf16.msra.mxu0 0
      %1091 = vmatprep.subr.bf16.mxu0 0
      %1092 = vmatpush1.bf16.msra.mxu0 %v978
      %1093 = vmatprep.subr.bf16.mxu0 0
      %1094 = vmatpush2.bf16.msra.mxu0 0
      %1095 = vmatprep.subr.bf16.mxu0 0
      %1096 = vmatpush2.bf16.msra.mxu0 0
      %1097 = vmatprep.subr.bf16.mxu0 0
      %1098 = vmatpush2.bf16.msra.mxu0 0
      %1099 = vmatprep.subr.bf16.mxu0 0
      %1100 = vmatpush2.bf16.msra.mxu0 0
      %1101 = vmatprep.subr.bf16.mxu0 0
      %1102 = vmatpush2.bf16.msra.mxu0 0
      %1103 = vmatprep.subr.bf16.mxu0 0
      %1104 = vmatpush2.bf16.msra.mxu0 0
      %1105 = vmatprep.subr.bf16.mxu0 0
      %1106 = vmatpush2.bf16.msra.mxu0 0
      %1107 = vmatprep.subr.bf16.mxu0 0
      %1108 = vmatpush2.bf16.msra.mxu0 0
      %1109 = vmatprep.mubr.bf16.mxu0 0
      %1110 = vmatmul.mubr.bf16.gmra.mxu0 %v1075
      %v1111 = vpop.f32.mrf.mxu0
      %v1112 = vadd.f32 0.0, %v1111
      %v1113 = vpop.f32.mrf.mxu0
      %v1114 = vpop.f32.mrf.mxu0
      %v1115 = vpop.f32.mrf.mxu0
      %1116 = vdwg.mxu0
      %v1117 = vpack.c.bf16 %v1112, %v1112
      %s1118 = scalar_lea.vmem [#allocation2], 36
      %1119 = vst [vmem:[%s1118] sm:$0xf] %v1117
      %v1120 = vld [vmem:[%s635] sm:$0xf]
      %v1123 = vsel %vm589, %v1120, 0
      %1125 = vmatprep.subr.bf16.mxu0 0
      %1126 = vmatpush1.bf16.msra.mxu0 0
      %1127 = vmatprep.subr.bf16.mxu0 0
      %1128 = vmatpush1.bf16.msra.mxu0 0
      %1129 = vmatprep.subr.bf16.mxu0 0
      %1130 = vmatpush1.bf16.msra.mxu0 0
      %1131 = vmatprep.subr.bf16.mxu0 0
      %1132 = vmatpush1.bf16.msra.mxu0 0
      %1133 = vmatprep.subr.bf16.mxu0 0
      %1134 = vmatpush1.bf16.msra.mxu0 0
      %1135 = vmatprep.subr.bf16.mxu0 0
      %1136 = vmatpush1.bf16.msra.mxu0 0
      %1137 = vmatprep.subr.bf16.mxu0 0
      %1138 = vmatpush1.bf16.msra.mxu0 0
      %1139 = vmatprep.subr.bf16.mxu0 0
      %1140 = vmatpush1.bf16.msra.mxu0 %v801
      %1141 = vmatprep.subr.bf16.mxu0 0
      %1142 = vmatpush2.bf16.msra.mxu0 0
      %1143 = vmatprep.subr.bf16.mxu0 0
      %1144 = vmatpush2.bf16.msra.mxu0 0
      %1145 = vmatprep.subr.bf16.mxu0 0
      %1146 = vmatpush2.bf16.msra.mxu0 0
      %1147 = vmatprep.subr.bf16.mxu0 0
      %1148 = vmatpush2.bf16.msra.mxu0 0
      %1149 = vmatprep.subr.bf16.mxu0 0
      %1150 = vmatpush2.bf16.msra.mxu0 0
      %1151 = vmatprep.subr.bf16.mxu0 0
      %1152 = vmatpush2.bf16.msra.mxu0 0
      %1153 = vmatprep.subr.bf16.mxu0 0
      %1154 = vmatpush2.bf16.msra.mxu0 0
      %1155 = vmatprep.subr.bf16.mxu0 0
      %1156 = vmatpush2.bf16.msra.mxu0 0
      %1157 = vmatprep.mubr.bf16.mxu0 0
      %1158 = vmatmul.mubr.bf16.gmra.mxu0 %v1123
      %v1159 = vpop.f32.mrf.mxu0
      %v1160 = vadd.f32 0.0, %v1159
      %v1161 = vpop.f32.mrf.mxu0
      %v1162 = vpop.f32.mrf.mxu0
      %v1163 = vpop.f32.mrf.mxu0
      %1164 = vdwg.mxu0
      %v1165 = vpack.c.bf16 %v1160, %v1160
      %1166 = vst.msk [vmem:[#allocation4 + $0x4] sm:$0xf] %vm777, %v1165
      %s1167 = scalar_lea.vmem %s381, 16
      %v1168 = vld [vmem:[%s1167] sm:$0xf]
      %v1169 = vld [vmem:[%s1167 + $0x4] sm:$0xf]
      %v1170 = vld [vmem:[%s1] sm:$0xf]
      %v1171 = vld [vmem:[%s1 + $0x4] sm:$0xf]
      %v1172 = vld [vmem:[%s1 + $0x8] sm:$0xf]
      %v1173 = vld [vmem:[%s1 + $0xc] sm:$0xf]
      %v1174 = vld [vmem:[%s1 + $0x10] sm:$0xf]
      %v1175 = vld [vmem:[%s1 + $0x14] sm:$0xf]
      %v1176 = vld [vmem:[%s1 + $0x18] sm:$0xf]
      %v1177 = vld [vmem:[%s1 + $0x1c] sm:$0xf]
      %v1178 = vld [vmem:[%s2] sm:$0x1]
      %v1180 = vlaneseq
      %v1181 = vshrl.u32 %v1180, 7
      %v1182 = vsub.s32 0, %v1181
      %v1183 = vrot.slane %v1178, %v1182
      %v1187 = vunpack.c.l.b16 %v1168
      %v1188 = vunpack.c.l.b16 %v1169
      %v1189 = vpack.c.b16 %v1188, %v1187
      %v1198 = vunpack.c.l.b16 %v1170
      %v1199 = vunpack.c.l.b16 %v1171
      %v1200 = vunpack.c.l.b16 %v1172
      %v1201 = vunpack.c.l.b16 %v1173
      %v1202 = vunpack.c.l.b16 %v1174
      %v1203 = vunpack.c.l.b16 %v1175
      %v1204 = vunpack.c.l.b16 %v1176
      %v1205 = vunpack.c.l.b16 %v1177
      %v1206 = vpack.c.b16 %v1199, %v1198
      %v1207 = vpack.c.b16 %v1201, %v1200
      %v1208 = vpack.c.b16 %v1203, %v1202
      %v1209 = vpack.c.b16 %v1205, %v1204
      %v1215 = vsel %vm434, %v1189, 0
      %1217 = vmatprep.subr.bf16.mxu0 0
      %1218 = vmatpush1.bf16.msra.mxu0 0
      %1219 = vmatprep.subr.bf16.mxu0 0
      %1220 = vmatpush1.bf16.msra.mxu0 0
      %1221 = vmatprep.subr.bf16.mxu0 0
      %1222 = vmatpush1.bf16.msra.mxu0 0
      %1223 = vmatprep.subr.bf16.mxu0 0
      %1224 = vmatpush1.bf16.msra.mxu0 0
      %1225 = vmatprep.subr.bf16.mxu0 0
      %1226 = vmatpush1.bf16.msra.mxu0 %v1209
      %1227 = vmatprep.subr.bf16.mxu0 0
      %1228 = vmatpush1.bf16.msra.mxu0 %v1208
      %1229 = vmatprep.subr.bf16.mxu0 0
      %1230 = vmatpush1.bf16.msra.mxu0 %v1207
      %1231 = vmatprep.subr.bf16.mxu0 0
      %1232 = vmatpush1.bf16.msra.mxu0 %v1206
      %1233 = vmatprep.subr.bf16.mxu0 0
      %1234 = vmatpush2.bf16.msra.mxu0 0
      %1235 = vmatprep.subr.bf16.mxu0 0
      %1236 = vmatpush2.bf16.msra.mxu0 0
      %1237 = vmatprep.subr.bf16.mxu0 0
      %1238 = vmatpush2.bf16.msra.mxu0 0
      %1239 = vmatprep.subr.bf16.mxu0 0
      %1240 = vmatpush2.bf16.msra.mxu0 0
      %1241 = vmatprep.subr.bf16.mxu0 0
      %1242 = vmatpush2.bf16.msra.mxu0 0
      %1243 = vmatprep.subr.bf16.mxu0 0
      %1244 = vmatpush2.bf16.msra.mxu0 0
      %1245 = vmatprep.subr.bf16.mxu0 0
      %1246 = vmatpush2.bf16.msra.mxu0 0
      %1247 = vmatprep.subr.bf16.mxu0 0
      %1248 = vmatpush2.bf16.msra.mxu0 0
      %1249 = vmatprep.mubr.bf16.mxu0 0
      %1250 = vmatmul.mubr.bf16.gmra.mxu0 %v1215
      %v1251 = vpop.f32.mrf.mxu0
      %v1252 = vadd.f32 %v1183, %v1251
      %v1253 = vpop.f32.mrf.mxu0
      %v1254 = vpop.f32.mrf.mxu0
      %v1255 = vadd.f32 %v1183, %v1254
      %v1256 = vpop.f32.mrf.mxu0
      %1257 = vdwg.mxu0
      %v1258 = vmax.f32 %v1252, 0.0
      %v1259 = vmax.f32 %v1255, 0.0
      %v1260 = vpack.c.bf16 %v1259, %v1258
      %v1261 = vld [vmem:[%s3] sm:$0xf]
      %v1262 = vld [vmem:[%s3 + $0x4] sm:$0xf]
      %v1263 = vld [vmem:[%s3 + $0x8] sm:$0xf]
      %v1264 = vld [vmem:[%s3 + $0xc] sm:$0xf]
      %v1265 = vld [vmem:[%s3 + $0x10] sm:$0xf]
      %v1266 = vld [vmem:[%s3 + $0x14] sm:$0xf]
      %v1267 = vld [vmem:[%s3 + $0x18] sm:$0xf]
      %v1268 = vld [vmem:[%s3 + $0x1c] sm:$0xf]
      %v1269 = vld [vmem:[%s3 + $0x20] sm:$0xf]
      %v1270 = vld [vmem:[%s3 + $0x24] sm:$0xf]
      %v1271 = vld [vmem:[%s3 + $0x28] sm:$0xf]
      %v1272 = vld [vmem:[%s3 + $0x2c] sm:$0xf]
      %v1273 = vld [vmem:[%s3 + $0x30] sm:$0xf]
      %v1274 = vld [vmem:[%s3 + $0x34] sm:$0xf]
      %v1275 = vld [vmem:[%s3 + $0x38] sm:$0xf]
      %v1276 = vld [vmem:[%s3 + $0x3c] sm:$0xf]
      %v1293 = vunpack.c.l.b16 %v1261
      %v1294 = vunpack.c.l.b16 %v1262
      %v1295 = vunpack.c.l.b16 %v1263
      %v1296 = vunpack.c.l.b16 %v1264
      %v1297 = vunpack.c.l.b16 %v1265
      %v1298 = vunpack.c.l.b16 %v1266
      %v1299 = vunpack.c.l.b16 %v1267
      %v1300 = vunpack.c.l.b16 %v1268
      %v1301 = vunpack.c.l.b16 %v1269
      %v1302 = vunpack.c.l.b16 %v1270
      %v1303 = vunpack.c.l.b16 %v1271
      %v1304 = vunpack.c.l.b16 %v1272
      %v1305 = vunpack.c.l.b16 %v1273
      %v1306 = vunpack.c.l.b16 %v1274
      %v1307 = vunpack.c.l.b16 %v1275
      %v1308 = vunpack.c.l.b16 %v1276
      %v1309 = vpack.c.b16 %v1294, %v1293
      %v1310 = vpack.c.b16 %v1296, %v1295
      %v1311 = vpack.c.b16 %v1298, %v1297
      %v1312 = vpack.c.b16 %v1300, %v1299
      %v1313 = vpack.c.b16 %v1302, %v1301
      %v1314 = vpack.c.b16 %v1304, %v1303
      %v1315 = vpack.c.b16 %v1306, %v1305
      %v1316 = vpack.c.b16 %v1308, %v1307
      %1325 = vmatprep.subr.bf16.mxu0 0
      %1326 = vmatpush1.bf16.msra.mxu0 %v1316
      %1327 = vmatprep.subr.bf16.mxu0 0
      %1328 = vmatpush1.bf16.msra.mxu0 %v1315
      %1329 = vmatprep.subr.bf16.mxu0 0
      %1330 = vmatpush1.bf16.msra.mxu0 %v1314
      %1331 = vmatprep.subr.bf16.mxu0 0
      %1332 = vmatpush1.bf16.msra.mxu0 %v1313
      %1333 = vmatprep.subr.bf16.mxu0 0
      %1334 = vmatpush1.bf16.msra.mxu0 %v1312
      %1335 = vmatprep.subr.bf16.mxu0 0
      %1336 = vmatpush1.bf16.msra.mxu0 %v1311
      %1337 = vmatprep.subr.bf16.mxu0 0
      %1338 = vmatpush1.bf16.msra.mxu0 %v1310
      %1339 = vmatprep.subr.bf16.mxu0 0
      %1340 = vmatpush1.bf16.msra.mxu0 %v1309
      %1341 = vmatprep.subr.bf16.mxu0 0
      %1342 = vmatpush2.bf16.msra.mxu0 0
      %1343 = vmatprep.subr.bf16.mxu0 0
      %1344 = vmatpush2.bf16.msra.mxu0 0
      %1345 = vmatprep.subr.bf16.mxu0 0
      %1346 = vmatpush2.bf16.msra.mxu0 0
      %1347 = vmatprep.subr.bf16.mxu0 0
      %1348 = vmatpush2.bf16.msra.mxu0 0
      %1349 = vmatprep.subr.bf16.mxu0 0
      %1350 = vmatpush2.bf16.msra.mxu0 0
      %1351 = vmatprep.subr.bf16.mxu0 0
      %1352 = vmatpush2.bf16.msra.mxu0 0
      %1353 = vmatprep.subr.bf16.mxu0 0
      %1354 = vmatpush2.bf16.msra.mxu0 0
      %1355 = vmatprep.subr.bf16.mxu0 0
      %1356 = vmatpush2.bf16.msra.mxu0 0
      %1357 = vmatprep.mubr.bf16.mxu0 0
      %1358 = vmatmul.mubr.bf16.gmra.mxu0 %v1260
      %v1359 = vpop.f32.mrf.mxu0
      %v1360 = vadd.f32 0.0, %v1359
      %v1361 = vpop.f32.mrf.mxu0
      %v1362 = vpop.f32.mrf.mxu0
      %v1363 = vadd.f32 0.0, %v1362
      %v1364 = vpop.f32.mrf.mxu0
      %1365 = vdwg.mxu0
      %v1366 = vpack.c.bf16 %v1363, %v1360
      %v1367 = vld [vmem:[%s4] sm:$0xf]
      %v1369 = vsel %vm589, %v1367, 0
      %1371 = vmatprep.subr.bf16.mxu0 0
      %1372 = vmatpush1.bf16.msra.mxu0 0
      %1373 = vmatprep.subr.bf16.mxu0 0
      %1374 = vmatpush1.bf16.msra.mxu0 0
      %1375 = vmatprep.subr.bf16.mxu0 0
      %1376 = vmatpush1.bf16.msra.mxu0 0
      %1377 = vmatprep.subr.bf16.mxu0 0
      %1378 = vmatpush1.bf16.msra.mxu0 0
      %1379 = vmatprep.subr.bf16.mxu0 0
      %1380 = vmatpush1.bf16.msra.mxu0 0
      %1381 = vmatprep.subr.bf16.mxu0 0
      %1382 = vmatpush1.bf16.msra.mxu0 0
      %1383 = vmatprep.subr.bf16.mxu0 0
      %1384 = vmatpush1.bf16.msra.mxu0 0
      %1385 = vmatprep.subr.bf16.mxu0 0
      %1386 = vmatpush1.bf16.msra.mxu0 %v1366
      %1387 = vmatprep.subr.bf16.mxu0 0
      %1388 = vmatpush2.bf16.msra.mxu0 0
      %1389 = vmatprep.subr.bf16.mxu0 0
      %1390 = vmatpush2.bf16.msra.mxu0 0
      %1391 = vmatprep.subr.bf16.mxu0 0
      %1392 = vmatpush2.bf16.msra.mxu0 0
      %1393 = vmatprep.subr.bf16.mxu0 0
      %1394 = vmatpush2.bf16.msra.mxu0 0
      %1395 = vmatprep.subr.bf16.mxu0 0
      %1396 = vmatpush2.bf16.msra.mxu0 0
      %1397 = vmatprep.subr.bf16.mxu0 0
      %1398 = vmatpush2.bf16.msra.mxu0 0
      %1399 = vmatprep.subr.bf16.mxu0 0
      %1400 = vmatpush2.bf16.msra.mxu0 0
      %1401 = vmatprep.subr.bf16.mxu0 0
      %1402 = vmatpush2.bf16.msra.mxu0 0
      %1403 = vmatprep.mubr.bf16.mxu0 0
      %1404 = vmatmul.mubr.bf16.gmra.mxu0 %v1369
      %v1405 = vpop.f32.mrf.mxu0
      %v1406 = vadd.f32 0.0, %v1405
      %v1407 = vpop.f32.mrf.mxu0
      %v1408 = vpop.f32.mrf.mxu0
      %v1409 = vpop.f32.mrf.mxu0
      %1410 = vdwg.mxu0
      %v1411 = vpack.c.bf16 %v1406, %v1406
      %s1412 = scalar_lea.vmem [#allocation2], 8
      %1413 = vst [vmem:[%s1412] sm:$0xf] %v1411
      %v1414 = vld [vmem:[%s635] sm:$0xf]
      %v1416 = vsel %vm589, %v1414, 0
      %1418 = vmatprep.subr.bf16.mxu0 0
      %1419 = vmatpush1.bf16.msra.mxu0 0
      %1420 = vmatprep.subr.bf16.mxu0 0
      %1421 = vmatpush1.bf16.msra.mxu0 0
      %1422 = vmatprep.subr.bf16.mxu0 0
      %1423 = vmatpush1.bf16.msra.mxu0 0
      %1424 = vmatprep.subr.bf16.mxu0 0
      %1425 = vmatpush1.bf16.msra.mxu0 0
      %1426 = vmatprep.subr.bf16.mxu0 0
      %1427 = vmatpush1.bf16.msra.mxu0 0
      %1428 = vmatprep.subr.bf16.mxu0 0
      %1429 = vmatpush1.bf16.msra.mxu0 0
      %1430 = vmatprep.subr.bf16.mxu0 0
      %1431 = vmatpush1.bf16.msra.mxu0 0
      %1432 = vmatprep.subr.bf16.mxu0 0
      %1433 = vmatpush1.bf16.msra.mxu0 %v1366
      %1434 = vmatprep.subr.bf16.mxu0 0
      %1435 = vmatpush2.bf16.msra.mxu0 0
      %1436 = vmatprep.subr.bf16.mxu0 0
      %1437 = vmatpush2.bf16.msra.mxu0 0
      %1438 = vmatprep.subr.bf16.mxu0 0
      %1439 = vmatpush2.bf16.msra.mxu0 0
      %1440 = vmatprep.subr.bf16.mxu0 0
      %1441 = vmatpush2.bf16.msra.mxu0 0
      %1442 = vmatprep.subr.bf16.mxu0 0
      %1443 = vmatpush2.bf16.msra.mxu0 0
      %1444 = vmatprep.subr.bf16.mxu0 0
      %1445 = vmatpush2.bf16.msra.mxu0 0
      %1446 = vmatprep.subr.bf16.mxu0 0
      %1447 = vmatpush2.bf16.msra.mxu0 0
      %1448 = vmatprep.subr.bf16.mxu0 0
      %1449 = vmatpush2.bf16.msra.mxu0 0
      %1450 = vmatprep.mubr.bf16.mxu0 0
      %1451 = vmatmul.mubr.bf16.gmra.mxu0 %v1416
      %v1452 = vpop.f32.mrf.mxu0
      %v1453 = vadd.f32 0.0, %v1452
      %v1454 = vpop.f32.mrf.mxu0
      %v1455 = vpop.f32.mrf.mxu0
      %v1456 = vpop.f32.mrf.mxu0
      %1457 = vdwg.mxu0
      %v1458 = vpack.c.bf16 %v1453, %v1453
      %s1459 = scalar_lea.vmem [#allocation2], 24
      %1460 = vst [vmem:[%s1459] sm:$0xf] %v1458
      %v1461 = vld [vmem:[%s683] sm:$0xf]
      %v1463 = vsel %vm589, %v1461, 0
      %1465 = vmatprep.subr.bf16.mxu0 0
      %1466 = vmatpush1.bf16.msra.mxu0 0
      %1467 = vmatprep.subr.bf16.mxu0 0
      %1468 = vmatpush1.bf16.msra.mxu0 0
      %1469 = vmatprep.subr.bf16.mxu0 0
      %1470 = vmatpush1.bf16.msra.mxu0 0
      %1471 = vmatprep.subr.bf16.mxu0 0
      %1472 = vmatpush1.bf16.msra.mxu0 0
      %1473 = vmatprep.subr.bf16.mxu0 0
      %1474 = vmatpush1.bf16.msra.mxu0 0
      %1475 = vmatprep.subr.bf16.mxu0 0
      %1476 = vmatpush1.bf16.msra.mxu0 0
      %1477 = vmatprep.subr.bf16.mxu0 0
      %1478 = vmatpush1.bf16.msra.mxu0 0
      %1479 = vmatprep.subr.bf16.mxu0 0
      %1480 = vmatpush1.bf16.msra.mxu0 %v1366
      %1481 = vmatprep.subr.bf16.mxu0 0
      %1482 = vmatpush2.bf16.msra.mxu0 0
      %1483 = vmatprep.subr.bf16.mxu0 0
      %1484 = vmatpush2.bf16.msra.mxu0 0
      %1485 = vmatprep.subr.bf16.mxu0 0
      %1486 = vmatpush2.bf16.msra.mxu0 0
      %1487 = vmatprep.subr.bf16.mxu0 0
      %1488 = vmatpush2.bf16.msra.mxu0 0
      %1489 = vmatprep.subr.bf16.mxu0 0
      %1490 = vmatpush2.bf16.msra.mxu0 0
      %1491 = vmatprep.subr.bf16.mxu0 0
      %1492 = vmatpush2.bf16.msra.mxu0 0
      %1493 = vmatprep.subr.bf16.mxu0 0
      %1494 = vmatpush2.bf16.msra.mxu0 0
      %1495 = vmatprep.subr.bf16.mxu0 0
      %1496 = vmatpush2.bf16.msra.mxu0 0
      %1497 = vmatprep.mubr.bf16.mxu0 0
      %1498 = vmatmul.mubr.bf16.gmra.mxu0 %v1463
      %v1499 = vpop.f32.mrf.mxu0
      %v1500 = vadd.f32 0.0, %v1499
      %v1501 = vpop.f32.mrf.mxu0
      %v1502 = vpop.f32.mrf.mxu0
      %v1503 = vpop.f32.mrf.mxu0
      %1504 = vdwg.mxu0
      %v1505 = vpack.c.bf16 %v1500, %v1500
      %s1506 = scalar_lea.vmem [#allocation2], 40
      %1507 = vst [vmem:[%s1506] sm:$0xf] %v1505
      %v1508 = vld [vmem:[%s635] sm:$0xf]
      %v1511 = vsel %vm589, %v1508, 0
      %1513 = vmatprep.subr.bf16.mxu0 0
      %1514 = vmatpush1.bf16.msra.mxu0 0
      %1515 = vmatprep.subr.bf16.mxu0 0
      %1516 = vmatpush1.bf16.msra.mxu0 0
      %1517 = vmatprep.subr.bf16.mxu0 0
      %1518 = vmatpush1.bf16.msra.mxu0 0
      %1519 = vmatprep.subr.bf16.mxu0 0
      %1520 = vmatpush1.bf16.msra.mxu0 0
      %1521 = vmatprep.subr.bf16.mxu0 0
      %1522 = vmatpush1.bf16.msra.mxu0 0
      %1523 = vmatprep.subr.bf16.mxu0 0
      %1524 = vmatpush1.bf16.msra.mxu0 0
      %1525 = vmatprep.subr.bf16.mxu0 0
      %1526 = vmatpush1.bf16.msra.mxu0 0
      %1527 = vmatprep.subr.bf16.mxu0 0
      %1528 = vmatpush1.bf16.msra.mxu0 %v1189
      %1529 = vmatprep.subr.bf16.mxu0 0
      %1530 = vmatpush2.bf16.msra.mxu0 0
      %1531 = vmatprep.subr.bf16.mxu0 0
      %1532 = vmatpush2.bf16.msra.mxu0 0
      %1533 = vmatprep.subr.bf16.mxu0 0
      %1534 = vmatpush2.bf16.msra.mxu0 0
      %1535 = vmatprep.subr.bf16.mxu0 0
      %1536 = vmatpush2.bf16.msra.mxu0 0
      %1537 = vmatprep.subr.bf16.mxu0 0
      %1538 = vmatpush2.bf16.msra.mxu0 0
      %1539 = vmatprep.subr.bf16.mxu0 0
      %1540 = vmatpush2.bf16.msra.mxu0 0
      %1541 = vmatprep.subr.bf16.mxu0 0
      %1542 = vmatpush2.bf16.msra.mxu0 0
      %1543 = vmatprep.subr.bf16.mxu0 0
      %1544 = vmatpush2.bf16.msra.mxu0 0
      %1545 = vmatprep.mubr.bf16.mxu0 0
      %1546 = vmatmul.mubr.bf16.gmra.mxu0 %v1511
      %v1547 = vpop.f32.mrf.mxu0
      %v1548 = vadd.f32 0.0, %v1547
      %v1549 = vpop.f32.mrf.mxu0
      %v1550 = vpop.f32.mrf.mxu0
      %v1551 = vpop.f32.mrf.mxu0
      %1552 = vdwg.mxu0
      %v1553 = vpack.c.bf16 %v1548, %v1548
      %1554 = vst.msk [vmem:[#allocation4 + $0x8] sm:$0xf] %vm777, %v1553
      %s1555 = scalar_lea.vmem %s381, 24
      %v1556 = vld [vmem:[%s1555] sm:$0xf]
      %v1557 = vld [vmem:[%s1555 + $0x4] sm:$0xf]
      %v1558 = vld [vmem:[%s1] sm:$0xf]
      %v1559 = vld [vmem:[%s1 + $0x4] sm:$0xf]
      %v1560 = vld [vmem:[%s1 + $0x8] sm:$0xf]
      %v1561 = vld [vmem:[%s1 + $0xc] sm:$0xf]
      %v1562 = vld [vmem:[%s1 + $0x10] sm:$0xf]
      %v1563 = vld [vmem:[%s1 + $0x14] sm:$0xf]
      %v1564 = vld [vmem:[%s1 + $0x18] sm:$0xf]
      %v1565 = vld [vmem:[%s1 + $0x1c] sm:$0xf]
      %v1566 = vld [vmem:[%s2] sm:$0x1]
      %v1568 = vlaneseq
      %v1569 = vshrl.u32 %v1568, 7
      %v1570 = vsub.s32 0, %v1569
      %v1571 = vrot.slane %v1566, %v1570
      %v1575 = vunpack.c.l.b16 %v1556
      %v1576 = vunpack.c.l.b16 %v1557
      %v1577 = vpack.c.b16 %v1576, %v1575
      %v1586 = vunpack.c.l.b16 %v1558
      %v1587 = vunpack.c.l.b16 %v1559
      %v1588 = vunpack.c.l.b16 %v1560
      %v1589 = vunpack.c.l.b16 %v1561
      %v1590 = vunpack.c.l.b16 %v1562
      %v1591 = vunpack.c.l.b16 %v1563
      %v1592 = vunpack.c.l.b16 %v1564
      %v1593 = vunpack.c.l.b16 %v1565
      %v1594 = vpack.c.b16 %v1587, %v1586
      %v1595 = vpack.c.b16 %v1589, %v1588
      %v1596 = vpack.c.b16 %v1591, %v1590
      %v1597 = vpack.c.b16 %v1593, %v1592
      %v1603 = vsel %vm434, %v1577, 0
      %1605 = vmatprep.subr.bf16.mxu0 0
      %1606 = vmatpush1.bf16.msra.mxu0 0
      %1607 = vmatprep.subr.bf16.mxu0 0
      %1608 = vmatpush1.bf16.msra.mxu0 0
      %1609 = vmatprep.subr.bf16.mxu0 0
      %1610 = vmatpush1.bf16.msra.mxu0 0
      %1611 = vmatprep.subr.bf16.mxu0 0
      %1612 = vmatpush1.bf16.msra.mxu0 0
      %1613 = vmatprep.subr.bf16.mxu0 0
      %1614 = vmatpush1.bf16.msra.mxu0 %v1597
      %1615 = vmatprep.subr.bf16.mxu0 0
      %1616 = vmatpush1.bf16.msra.mxu0 %v1596
      %1617 = vmatprep.subr.bf16.mxu0 0
      %1618 = vmatpush1.bf16.msra.mxu0 %v1595
      %1619 = vmatprep.subr.bf16.mxu0 0
      %1620 = vmatpush1.bf16.msra.mxu0 %v1594
      %1621 = vmatprep.subr.bf16.mxu0 0
      %1622 = vmatpush2.bf16.msra.mxu0 0
      %1623 = vmatprep.subr.bf16.mxu0 0
      %1624 = vmatpush2.bf16.msra.mxu0 0
      %1625 = vmatprep.subr.bf16.mxu0 0
      %1626 = vmatpush2.bf16.msra.mxu0 0
      %1627 = vmatprep.subr.bf16.mxu0 0
      %1628 = vmatpush2.bf16.msra.mxu0 0
      %1629 = vmatprep.subr.bf16.mxu0 0
      %1630 = vmatpush2.bf16.msra.mxu0 0
      %1631 = vmatprep.subr.bf16.mxu0 0
      %1632 = vmatpush2.bf16.msra.mxu0 0
      %1633 = vmatprep.subr.bf16.mxu0 0
      %1634 = vmatpush2.bf16.msra.mxu0 0
      %1635 = vmatprep.subr.bf16.mxu0 0
      %1636 = vmatpush2.bf16.msra.mxu0 0
      %1637 = vmatprep.mubr.bf16.mxu0 0
      %1638 = vmatmul.mubr.bf16.gmra.mxu0 %v1603
      %v1639 = vpop.f32.mrf.mxu0
      %v1640 = vadd.f32 %v1571, %v1639
      %v1641 = vpop.f32.mrf.mxu0
      %v1642 = vpop.f32.mrf.mxu0
      %v1643 = vadd.f32 %v1571, %v1642
      %v1644 = vpop.f32.mrf.mxu0
      %1645 = vdwg.mxu0
      %v1646 = vmax.f32 %v1640, 0.0
      %v1647 = vmax.f32 %v1643, 0.0
      %v1648 = vpack.c.bf16 %v1647, %v1646
      %v1649 = vld [vmem:[%s3] sm:$0xf]
      %v1650 = vld [vmem:[%s3 + $0x4] sm:$0xf]
      %v1651 = vld [vmem:[%s3 + $0x8] sm:$0xf]
      %v1652 = vld [vmem:[%s3 + $0xc] sm:$0xf]
      %v1653 = vld [vmem:[%s3 + $0x10] sm:$0xf]
      %v1654 = vld [vmem:[%s3 + $0x14] sm:$0xf]
      %v1655 = vld [vmem:[%s3 + $0x18] sm:$0xf]
      %v1656 = vld [vmem:[%s3 + $0x1c] sm:$0xf]
      %v1657 = vld [vmem:[%s3 + $0x20] sm:$0xf]
      %v1658 = vld [vmem:[%s3 + $0x24] sm:$0xf]
      %v1659 = vld [vmem:[%s3 + $0x28] sm:$0xf]
      %v1660 = vld [vmem:[%s3 + $0x2c] sm:$0xf]
      %v1661 = vld [vmem:[%s3 + $0x30] sm:$0xf]
      %v1662 = vld [vmem:[%s3 + $0x34] sm:$0xf]
      %v1663 = vld [vmem:[%s3 + $0x38] sm:$0xf]
      %v1664 = vld [vmem:[%s3 + $0x3c] sm:$0xf]
      %v1681 = vunpack.c.l.b16 %v1649
      %v1682 = vunpack.c.l.b16 %v1650
      %v1683 = vunpack.c.l.b16 %v1651
      %v1684 = vunpack.c.l.b16 %v1652
      %v1685 = vunpack.c.l.b16 %v1653
      %v1686 = vunpack.c.l.b16 %v1654
      %v1687 = vunpack.c.l.b16 %v1655
      %v1688 = vunpack.c.l.b16 %v1656
      %v1689 = vunpack.c.l.b16 %v1657
      %v1690 = vunpack.c.l.b16 %v1658
      %v1691 = vunpack.c.l.b16 %v1659
      %v1692 = vunpack.c.l.b16 %v1660
      %v1693 = vunpack.c.l.b16 %v1661
      %v1694 = vunpack.c.l.b16 %v1662
      %v1695 = vunpack.c.l.b16 %v1663
      %v1696 = vunpack.c.l.b16 %v1664
      %v1697 = vpack.c.b16 %v1682, %v1681
      %v1698 = vpack.c.b16 %v1684, %v1683
      %v1699 = vpack.c.b16 %v1686, %v1685
      %v1700 = vpack.c.b16 %v1688, %v1687
      %v1701 = vpack.c.b16 %v1690, %v1689
      %v1702 = vpack.c.b16 %v1692, %v1691
      %v1703 = vpack.c.b16 %v1694, %v1693
      %v1704 = vpack.c.b16 %v1696, %v1695
      %1713 = vmatprep.subr.bf16.mxu0 0
      %1714 = vmatpush1.bf16.msra.mxu0 %v1704
      %1715 = vmatprep.subr.bf16.mxu0 0
      %1716 = vmatpush1.bf16.msra.mxu0 %v1703
      %1717 = vmatprep.subr.bf16.mxu0 0
      %1718 = vmatpush1.bf16.msra.mxu0 %v1702
      %1719 = vmatprep.subr.bf16.mxu0 0
      %1720 = vmatpush1.bf16.msra.mxu0 %v1701
      %1721 = vmatprep.subr.bf16.mxu0 0
      %1722 = vmatpush1.bf16.msra.mxu0 %v1700
      %1723 = vmatprep.subr.bf16.mxu0 0
      %1724 = vmatpush1.bf16.msra.mxu0 %v1699
      %1725 = vmatprep.subr.bf16.mxu0 0
      %1726 = vmatpush1.bf16.msra.mxu0 %v1698
      %1727 = vmatprep.subr.bf16.mxu0 0
      %1728 = vmatpush1.bf16.msra.mxu0 %v1697
      %1729 = vmatprep.subr.bf16.mxu0 0
      %1730 = vmatpush2.bf16.msra.mxu0 0
      %1731 = vmatprep.subr.bf16.mxu0 0
      %1732 = vmatpush2.bf16.msra.mxu0 0
      %1733 = vmatprep.subr.bf16.mxu0 0
      %1734 = vmatpush2.bf16.msra.mxu0 0
      %1735 = vmatprep.subr.bf16.mxu0 0
      %1736 = vmatpush2.bf16.msra.mxu0 0
      %1737 = vmatprep.subr.bf16.mxu0 0
      %1738 = vmatpush2.bf16.msra.mxu0 0
      %1739 = vmatprep.subr.bf16.mxu0 0
      %1740 = vmatpush2.bf16.msra.mxu0 0
      %1741 = vmatprep.subr.bf16.mxu0 0
      %1742 = vmatpush2.bf16.msra.mxu0 0
      %1743 = vmatprep.subr.bf16.mxu0 0
      %1744 = vmatpush2.bf16.msra.mxu0 0
      %1745 = vmatprep.mubr.bf16.mxu0 0
      %1746 = vmatmul.mubr.bf16.gmra.mxu0 %v1648
      %v1747 = vpop.f32.mrf.mxu0
      %v1748 = vadd.f32 0.0, %v1747
      %v1749 = vpop.f32.mrf.mxu0
      %v1750 = vpop.f32.mrf.mxu0
      %v1751 = vadd.f32 0.0, %v1750
      %v1752 = vpop.f32.mrf.mxu0
      %1753 = vdwg.mxu0
      %v1754 = vpack.c.bf16 %v1751, %v1748
      %v1755 = vld [vmem:[%s4] sm:$0xf]
      %v1757 = vsel %vm589, %v1755, 0
      %1759 = vmatprep.subr.bf16.mxu0 0
      %1760 = vmatpush1.bf16.msra.mxu0 0
      %1761 = vmatprep.subr.bf16.mxu0 0
      %1762 = vmatpush1.bf16.msra.mxu0 0
      %1763 = vmatprep.subr.bf16.mxu0 0
      %1764 = vmatpush1.bf16.msra.mxu0 0
      %1765 = vmatprep.subr.bf16.mxu0 0
      %1766 = vmatpush1.bf16.msra.mxu0 0
      %1767 = vmatprep.subr.bf16.mxu0 0
      %1768 = vmatpush1.bf16.msra.mxu0 0
      %1769 = vmatprep.subr.bf16.mxu0 0
      %1770 = vmatpush1.bf16.msra.mxu0 0
      %1771 = vmatprep.subr.bf16.mxu0 0
      %1772 = vmatpush1.bf16.msra.mxu0 0
      %1773 = vmatprep.subr.bf16.mxu0 0
      %1774 = vmatpush1.bf16.msra.mxu0 %v1754
      %1775 = vmatprep.subr.bf16.mxu0 0
      %1776 = vmatpush2.bf16.msra.mxu0 0
      %1777 = vmatprep.subr.bf16.mxu0 0
      %1778 = vmatpush2.bf16.msra.mxu0 0
      %1779 = vmatprep.subr.bf16.mxu0 0
      %1780 = vmatpush2.bf16.msra.mxu0 0
      %1781 = vmatprep.subr.bf16.mxu0 0
      %1782 = vmatpush2.bf16.msra.mxu0 0
      %1783 = vmatprep.subr.bf16.mxu0 0
      %1784 = vmatpush2.bf16.msra.mxu0 0
      %1785 = vmatprep.subr.bf16.mxu0 0
      %1786 = vmatpush2.bf16.msra.mxu0 0
      %1787 = vmatprep.subr.bf16.mxu0 0
      %1788 = vmatpush2.bf16.msra.mxu0 0
      %1789 = vmatprep.subr.bf16.mxu0 0
      %1790 = vmatpush2.bf16.msra.mxu0 0
      %1791 = vmatprep.mubr.bf16.mxu0 0
      %1792 = vmatmul.mubr.bf16.gmra.mxu0 %v1757
      %v1793 = vpop.f32.mrf.mxu0
      %v1794 = vadd.f32 0.0, %v1793
      %v1795 = vpop.f32.mrf.mxu0
      %v1796 = vpop.f32.mrf.mxu0
      %v1797 = vpop.f32.mrf.mxu0
      %1798 = vdwg.mxu0
      %v1799 = vpack.c.bf16 %v1794, %v1794
      %s1800 = scalar_lea.vmem [#allocation2], 12
      %1801 = vst [vmem:[%s1800] sm:$0xf] %v1799
      %v1802 = vld [vmem:[%s635] sm:$0xf]
      %v1804 = vsel %vm589, %v1802, 0
      %1806 = vmatprep.subr.bf16.mxu0 0
      %1807 = vmatpush1.bf16.msra.mxu0 0
      %1808 = vmatprep.subr.bf16.mxu0 0
      %1809 = vmatpush1.bf16.msra.mxu0 0
      %1810 = vmatprep.subr.bf16.mxu0 0
      %1811 = vmatpush1.bf16.msra.mxu0 0
      %1812 = vmatprep.subr.bf16.mxu0 0
      %1813 = vmatpush1.bf16.msra.mxu0 0
      %1814 = vmatprep.subr.bf16.mxu0 0
      %1815 = vmatpush1.bf16.msra.mxu0 0
      %1816 = vmatprep.subr.bf16.mxu0 0
      %1817 = vmatpush1.bf16.msra.mxu0 0
      %1818 = vmatprep.subr.bf16.mxu0 0
      %1819 = vmatpush1.bf16.msra.mxu0 0
      %1820 = vmatprep.subr.bf16.mxu0 0
      %1821 = vmatpush1.bf16.msra.mxu0 %v1754
      %1822 = vmatprep.subr.bf16.mxu0 0
      %1823 = vmatpush2.bf16.msra.mxu0 0
      %1824 = vmatprep.subr.bf16.mxu0 0
      %1825 = vmatpush2.bf16.msra.mxu0 0
      %1826 = vmatprep.subr.bf16.mxu0 0
      %1827 = vmatpush2.bf16.msra.mxu0 0
      %1828 = vmatprep.subr.bf16.mxu0 0
      %1829 = vmatpush2.bf16.msra.mxu0 0
      %1830 = vmatprep.subr.bf16.mxu0 0
      %1831 = vmatpush2.bf16.msra.mxu0 0
      %1832 = vmatprep.subr.bf16.mxu0 0
      %1833 = vmatpush2.bf16.msra.mxu0 0
      %1834 = vmatprep.subr.bf16.mxu0 0
      %1835 = vmatpush2.bf16.msra.mxu0 0
      %1836 = vmatprep.subr.bf16.mxu0 0
      %1837 = vmatpush2.bf16.msra.mxu0 0
      %1838 = vmatprep.mubr.bf16.mxu0 0
      %1839 = vmatmul.mubr.bf16.gmra.mxu0 %v1804
      %v1840 = vpop.f32.mrf.mxu0
      %v1841 = vadd.f32 0.0, %v1840
      %v1842 = vpop.f32.mrf.mxu0
      %v1843 = vpop.f32.mrf.mxu0
      %v1844 = vpop.f32.mrf.mxu0
      %1845 = vdwg.mxu0
      %v1846 = vpack.c.bf16 %v1841, %v1841
      %s1847 = scalar_lea.vmem [#allocation2], 28
      %1848 = vst [vmem:[%s1847] sm:$0xf] %v1846
      %v1849 = vld [vmem:[%s683] sm:$0xf]
      %v1851 = vsel %vm589, %v1849, 0
      %1853 = vmatprep.subr.bf16.mxu0 0
      %1854 = vmatpush1.bf16.msra.mxu0 0
      %1855 = vmatprep.subr.bf16.mxu0 0
      %1856 = vmatpush1.bf16.msra.mxu0 0
      %1857 = vmatprep.subr.bf16.mxu0 0
      %1858 = vmatpush1.bf16.msra.mxu0 0
      %1859 = vmatprep.subr.bf16.mxu0 0
      %1860 = vmatpush1.bf16.msra.mxu0 0
      %1861 = vmatprep.subr.bf16.mxu0 0
      %1862 = vmatpush1.bf16.msra.mxu0 0
      %1863 = vmatprep.subr.bf16.mxu0 0
      %1864 = vmatpush1.bf16.msra.mxu0 0
      %1865 = vmatprep.subr.bf16.mxu0 0
      %1866 = vmatpush1.bf16.msra.mxu0 0
      %1867 = vmatprep.subr.bf16.mxu0 0
      %1868 = vmatpush1.bf16.msra.mxu0 %v1754
      %1869 = vmatprep.subr.bf16.mxu0 0
      %1870 = vmatpush2.bf16.msra.mxu0 0
      %1871 = vmatprep.subr.bf16.mxu0 0
      %1872 = vmatpush2.bf16.msra.mxu0 0
      %1873 = vmatprep.subr.bf16.mxu0 0
      %1874 = vmatpush2.bf16.msra.mxu0 0
      %1875 = vmatprep.subr.bf16.mxu0 0
      %1876 = vmatpush2.bf16.msra.mxu0 0
      %1877 = vmatprep.subr.bf16.mxu0 0
      %1878 = vmatpush2.bf16.msra.mxu0 0
      %1879 = vmatprep.subr.bf16.mxu0 0
      %1880 = vmatpush2.bf16.msra.mxu0 0
      %1881 = vmatprep.subr.bf16.mxu0 0
      %1882 = vmatpush2.bf16.msra.mxu0 0
      %1883 = vmatprep.subr.bf16.mxu0 0
      %1884 = vmatpush2.bf16.msra.mxu0 0
      %1885 = vmatprep.mubr.bf16.mxu0 0
      %1886 = vmatmul.mubr.bf16.gmra.mxu0 %v1851
      %v1887 = vpop.f32.mrf.mxu0
      %v1888 = vadd.f32 0.0, %v1887
      %v1889 = vpop.f32.mrf.mxu0
      %v1890 = vpop.f32.mrf.mxu0
      %v1891 = vpop.f32.mrf.mxu0
      %1892 = vdwg.mxu0
      %v1893 = vpack.c.bf16 %v1888, %v1888
      %s1894 = scalar_lea.vmem [#allocation2], 44
      %1895 = vst [vmem:[%s1894] sm:$0xf] %v1893
      %v1896 = vld [vmem:[%s635] sm:$0xf]
      %v1899 = vsel %vm589, %v1896, 0
      %1901 = vmatprep.subr.bf16.mxu0 0
      %1902 = vmatpush1.bf16.msra.mxu0 0
      %1903 = vmatprep.subr.bf16.mxu0 0
      %1904 = vmatpush1.bf16.msra.mxu0 0
      %1905 = vmatprep.subr.bf16.mxu0 0
      %1906 = vmatpush1.bf16.msra.mxu0 0
      %1907 = vmatprep.subr.bf16.mxu0 0
      %1908 = vmatpush1.bf16.msra.mxu0 0
      %1909 = vmatprep.subr.bf16.mxu0 0
      %1910 = vmatpush1.bf16.msra.mxu0 0
      %1911 = vmatprep.subr.bf16.mxu0 0
      %1912 = vmatpush1.bf16.msra.mxu0 0
      %1913 = vmatprep.subr.bf16.mxu0 0
      %1914 = vmatpush1.bf16.msra.mxu0 0
      %1915 = vmatprep.subr.bf16.mxu0 0
      %1916 = vmatpush1.bf16.msra.mxu0 %v1577
      %1917 = vmatprep.subr.bf16.mxu0 0
      %1918 = vmatpush2.bf16.msra.mxu0 0
      %1919 = vmatprep.subr.bf16.mxu0 0
      %1920 = vmatpush2.bf16.msra.mxu0 0
      %1921 = vmatprep.subr.bf16.mxu0 0
      %1922 = vmatpush2.bf16.msra.mxu0 0
      %1923 = vmatprep.subr.bf16.mxu0 0
      %1924 = vmatpush2.bf16.msra.mxu0 0
      %1925 = vmatprep.subr.bf16.mxu0 0
      %1926 = vmatpush2.bf16.msra.mxu0 0
      %1927 = vmatprep.subr.bf16.mxu0 0
      %1928 = vmatpush2.bf16.msra.mxu0 0
      %1929 = vmatprep.subr.bf16.mxu0 0
      %1930 = vmatpush2.bf16.msra.mxu0 0
      %1931 = vmatprep.subr.bf16.mxu0 0
      %1932 = vmatpush2.bf16.msra.mxu0 0
      %1933 = vmatprep.mubr.bf16.mxu0 0
      %1934 = vmatmul.mubr.bf16.gmra.mxu0 %v1899
      %v1935 = vpop.f32.mrf.mxu0
      %v1936 = vadd.f32 0.0, %v1935
      %v1937 = vpop.f32.mrf.mxu0
      %v1938 = vpop.f32.mrf.mxu0
      %v1939 = vpop.f32.mrf.mxu0
      %1940 = vdwg.mxu0
      %v1941 = vpack.c.bf16 %v1936, %v1936
      %1942 = vst.msk [vmem:[#allocation4 + $0xc] sm:$0xf] %vm777, %v1941
      %v1943 = vld [vmem:[#allocation2] sm:$0xf]
      %s1944 = scalar_lea.vmem %s5, 192
      %v1945 = vld [vmem:[%s1944] sm:$0xf]
      %v1946 = vld [vmem:[%s1944 + $0x4] sm:$0xf]
      %v1947 = vld [vmem:[%s1944 + $0x8] sm:$0xf]
      %v1948 = vld [vmem:[%s1944 + $0xc] sm:$0xf]
      %v1949 = vld [vmem:[%s1944 + $0x10] sm:$0xf]
      %v1950 = vld [vmem:[%s1944 + $0x14] sm:$0xf]
      %v1951 = vld [vmem:[%s1944 + $0x18] sm:$0xf]
      %v1952 = vld [vmem:[%s1944 + $0x1c] sm:$0xf]
      %v1953 = vld [vmem:[%s1944 + $0x20] sm:$0xf]
      %v1954 = vld [vmem:[%s1944 + $0x24] sm:$0xf]
      %v1955 = vld [vmem:[%s1944 + $0x28] sm:$0xf]
      %v1956 = vld [vmem:[%s1944 + $0x2c] sm:$0xf]
      %v1957 = vld [vmem:[%s1944 + $0x30] sm:$0xf]
      %v1958 = vld [vmem:[%s1944 + $0x34] sm:$0xf]
      %v1959 = vld [vmem:[%s1944 + $0x38] sm:$0xf]
      %v1960 = vld [vmem:[%s1944 + $0x3c] sm:$0xf]
      %v1961 = vld [vmem:[%s681] sm:$0xf]
      %s1962 = scalar_lea.vmem %s5, 256
      %v1963 = vld [vmem:[%s1962] sm:$0xf]
      %v1964 = vld [vmem:[%s1962 + $0x4] sm:$0xf]
      %v1965 = vld [vmem:[%s1962 + $0x8] sm:$0xf]
      %v1966 = vld [vmem:[%s1962 + $0xc] sm:$0xf]
      %v1967 = vld [vmem:[%s1962 + $0x10] sm:$0xf]
      %v1968 = vld [vmem:[%s1962 + $0x14] sm:$0xf]
      %v1969 = vld [vmem:[%s1962 + $0x18] sm:$0xf]
      %v1970 = vld [vmem:[%s1962 + $0x1c] sm:$0xf]
      %v1971 = vld [vmem:[%s1962 + $0x20] sm:$0xf]
      %v1972 = vld [vmem:[%s1962 + $0x24] sm:$0xf]
      %v1973 = vld [vmem:[%s1962 + $0x28] sm:$0xf]
      %v1974 = vld [vmem:[%s1962 + $0x2c] sm:$0xf]
      %v1975 = vld [vmem:[%s1962 + $0x30] sm:$0xf]
      %v1976 = vld [vmem:[%s1962 + $0x34] sm:$0xf]
      %v1977 = vld [vmem:[%s1962 + $0x38] sm:$0xf]
      %v1978 = vld [vmem:[%s1962 + $0x3c] sm:$0xf]
      %v1995 = vunpack.c.l.b16 %v1963
      %v1996 = vunpack.c.l.b16 %v1964
      %v1997 = vunpack.c.l.b16 %v1965
      %v1998 = vunpack.c.l.b16 %v1966
      %v1999 = vunpack.c.l.b16 %v1967
      %v2000 = vunpack.c.l.b16 %v1968
      %v2001 = vunpack.c.l.b16 %v1969
      %v2002 = vunpack.c.l.b16 %v1970
      %v2003 = vunpack.c.l.b16 %v1971
      %v2004 = vunpack.c.l.b16 %v1972
      %v2005 = vunpack.c.l.b16 %v1973
      %v2006 = vunpack.c.l.b16 %v1974
      %v2007 = vunpack.c.l.b16 %v1975
      %v2008 = vunpack.c.l.b16 %v1976
      %v2009 = vunpack.c.l.b16 %v1977
      %v2010 = vunpack.c.l.b16 %v1978
      %v2011 = vpack.c.b16 %v1996, %v1995
      %v2012 = vpack.c.b16 %v1998, %v1997
      %v2013 = vpack.c.b16 %v2000, %v1999
      %v2014 = vpack.c.b16 %v2002, %v2001
      %v2015 = vpack.c.b16 %v2004, %v2003
      %v2016 = vpack.c.b16 %v2006, %v2005
      %v2017 = vpack.c.b16 %v2008, %v2007
      %v2018 = vpack.c.b16 %v2010, %v2009
      %2027 = vmatprep.subr.bf16.mxu0 0
      %2028 = vmatpush1.bf16.msra.mxu0 %v2018
      %2029 = vmatprep.subr.bf16.mxu0 0
      %2030 = vmatpush1.bf16.msra.mxu0 %v2017
      %2031 = vmatprep.subr.bf16.mxu0 0
      %2032 = vmatpush1.bf16.msra.mxu0 %v2016
      %2033 = vmatprep.subr.bf16.mxu0 0
      %2034 = vmatpush1.bf16.msra.mxu0 %v2015
      %2035 = vmatprep.subr.bf16.mxu0 0
      %2036 = vmatpush1.bf16.msra.mxu0 %v2014
      %2037 = vmatprep.subr.bf16.mxu0 0
      %2038 = vmatpush1.bf16.msra.mxu0 %v2013
      %2039 = vmatprep.subr.bf16.mxu0 0
      %2040 = vmatpush1.bf16.msra.mxu0 %v2012
      %2041 = vmatprep.subr.bf16.mxu0 0
      %2042 = vmatpush1.bf16.msra.mxu0 %v2011
      %2043 = vmatprep.subr.bf16.mxu0 0
      %2044 = vmatpush2.bf16.msra.mxu0 0
      %2045 = vmatprep.subr.bf16.mxu0 0
      %2046 = vmatpush2.bf16.msra.mxu0 0
      %2047 = vmatprep.subr.bf16.mxu0 0
      %2048 = vmatpush2.bf16.msra.mxu0 0
      %2049 = vmatprep.subr.bf16.mxu0 0
      %2050 = vmatpush2.bf16.msra.mxu0 0
      %2051 = vmatprep.subr.bf16.mxu0 0
      %2052 = vmatpush2.bf16.msra.mxu0 0
      %2053 = vmatprep.subr.bf16.mxu0 0
      %2054 = vmatpush2.bf16.msra.mxu0 0
      %2055 = vmatprep.subr.bf16.mxu0 0
      %2056 = vmatpush2.bf16.msra.mxu0 0
      %2057 = vmatprep.subr.bf16.mxu0 0
      %2058 = vmatpush2.bf16.msra.mxu0 0
      %2059 = vmatprep.mubr.bf16.mxu0 0
      %2060 = vmatmul.mubr.bf16.gmra.mxu0 %v1961
      %v2061 = vpop.f32.mrf.mxu0
      %v2062 = vadd.f32 0.0, %v2061
      %v2063 = vpop.f32.mrf.mxu0
      %v2064 = vpop.f32.mrf.mxu0
      %v2065 = vpop.f32.mrf.mxu0
      %2066 = vdwg.mxu0
      %v2083 = vunpack.c.l.b16 %v1945
      %v2084 = vunpack.c.l.b16 %v1946
      %v2085 = vunpack.c.l.b16 %v1947
      %v2086 = vunpack.c.l.b16 %v1948
      %v2087 = vunpack.c.l.b16 %v1949
      %v2088 = vunpack.c.l.b16 %v1950
      %v2089 = vunpack.c.l.b16 %v1951
      %v2090 = vunpack.c.l.b16 %v1952
      %v2091 = vunpack.c.l.b16 %v1953
      %v2092 = vunpack.c.l.b16 %v1954
      %v2093 = vunpack.c.l.b16 %v1955
      %v2094 = vunpack.c.l.b16 %v1956
      %v2095 = vunpack.c.l.b16 %v1957
      %v2096 = vunpack.c.l.b16 %v1958
      %v2097 = vunpack.c.l.b16 %v1959
      %v2098 = vunpack.c.l.b16 %v1960
      %v2099 = vpack.c.b16 %v2084, %v2083
      %v2100 = vpack.c.b16 %v2086, %v2085
      %v2101 = vpack.c.b16 %v2088, %v2087
      %v2102 = vpack.c.b16 %v2090, %v2089
      %v2103 = vpack.c.b16 %v2092, %v2091
      %v2104 = vpack.c.b16 %v2094, %v2093
      %v2105 = vpack.c.b16 %v2096, %v2095
      %v2106 = vpack.c.b16 %v2098, %v2097
      %2115 = vmatprep.subr.bf16.mxu0 0
      %2116 = vmatpush1.bf16.msra.mxu0 %v2106
      %2117 = vmatprep.subr.bf16.mxu0 0
      %2118 = vmatpush1.bf16.msra.mxu0 %v2105
      %2119 = vmatprep.subr.bf16.mxu0 0
      %2120 = vmatpush1.bf16.msra.mxu0 %v2104
      %2121 = vmatprep.subr.bf16.mxu0 0
      %2122 = vmatpush1.bf16.msra.mxu0 %v2103
      %2123 = vmatprep.subr.bf16.mxu0 0
      %2124 = vmatpush1.bf16.msra.mxu0 %v2102
      %2125 = vmatprep.subr.bf16.mxu0 0
      %2126 = vmatpush1.bf16.msra.mxu0 %v2101
      %2127 = vmatprep.subr.bf16.mxu0 0
      %2128 = vmatpush1.bf16.msra.mxu0 %v2100
      %2129 = vmatprep.subr.bf16.mxu0 0
      %2130 = vmatpush1.bf16.msra.mxu0 %v2099
      %2131 = vmatprep.subr.bf16.mxu0 0
      %2132 = vmatpush2.bf16.msra.mxu0 0
      %2133 = vmatprep.subr.bf16.mxu0 0
      %2134 = vmatpush2.bf16.msra.mxu0 0
      %2135 = vmatprep.subr.bf16.mxu0 0
      %2136 = vmatpush2.bf16.msra.mxu0 0
      %2137 = vmatprep.subr.bf16.mxu0 0
      %2138 = vmatpush2.bf16.msra.mxu0 0
      %2139 = vmatprep.subr.bf16.mxu0 0
      %2140 = vmatpush2.bf16.msra.mxu0 0
      %2141 = vmatprep.subr.bf16.mxu0 0
      %2142 = vmatpush2.bf16.msra.mxu0 0
      %2143 = vmatprep.subr.bf16.mxu0 0
      %2144 = vmatpush2.bf16.msra.mxu0 0
      %2145 = vmatprep.subr.bf16.mxu0 0
      %2146 = vmatpush2.bf16.msra.mxu0 0
      %2147 = vmatprep.mubr.bf16.mxu0 0
      %2148 = vmatmul.mubr.bf16.gmra.mxu0 %v1943
      %v2149 = vpop.f32.mrf.mxu0
      %v2150 = vadd.f32 %v2062, %v2149
      %v2151 = vpop.f32.mrf.mxu0
      %v2152 = vpop.f32.mrf.mxu0
      %v2153 = vpop.f32.mrf.mxu0
      %2154 = vdwg.mxu0
      %v2155 = vld [vmem:[%s729] sm:$0xf]
      %s2156 = scalar_lea.vmem %s5, 320
      %v2157 = vld [vmem:[%s2156] sm:$0xf]
      %v2158 = vld [vmem:[%s2156 + $0x4] sm:$0xf]
      %v2159 = vld [vmem:[%s2156 + $0x8] sm:$0xf]
      %v2160 = vld [vmem:[%s2156 + $0xc] sm:$0xf]
      %v2161 = vld [vmem:[%s2156 + $0x10] sm:$0xf]
      %v2162 = vld [vmem:[%s2156 + $0x14] sm:$0xf]
      %v2163 = vld [vmem:[%s2156 + $0x18] sm:$0xf]
      %v2164 = vld [vmem:[%s2156 + $0x1c] sm:$0xf]
      %v2165 = vld [vmem:[%s2156 + $0x20] sm:$0xf]
      %v2166 = vld [vmem:[%s2156 + $0x24] sm:$0xf]
      %v2167 = vld [vmem:[%s2156 + $0x28] sm:$0xf]
      %v2168 = vld [vmem:[%s2156 + $0x2c] sm:$0xf]
      %v2169 = vld [vmem:[%s2156 + $0x30] sm:$0xf]
      %v2170 = vld [vmem:[%s2156 + $0x34] sm:$0xf]
      %v2171 = vld [vmem:[%s2156 + $0x38] sm:$0xf]
      %v2172 = vld [vmem:[%s2156 + $0x3c] sm:$0xf]
      %v2189 = vunpack.c.l.b16 %v2157
      %v2190 = vunpack.c.l.b16 %v2158
      %v2191 = vunpack.c.l.b16 %v2159
      %v2192 = vunpack.c.l.b16 %v2160
      %v2193 = vunpack.c.l.b16 %v2161
      %v2194 = vunpack.c.l.b16 %v2162
      %v2195 = vunpack.c.l.b16 %v2163
      %v2196 = vunpack.c.l.b16 %v2164
      %v2197 = vunpack.c.l.b16 %v2165
      %v2198 = vunpack.c.l.b16 %v2166
      %v2199 = vunpack.c.l.b16 %v2167
      %v2200 = vunpack.c.l.b16 %v2168
      %v2201 = vunpack.c.l.b16 %v2169
      %v2202 = vunpack.c.l.b16 %v2170
      %v2203 = vunpack.c.l.b16 %v2171
      %v2204 = vunpack.c.l.b16 %v2172
      %v2205 = vpack.c.b16 %v2190, %v2189
      %v2206 = vpack.c.b16 %v2192, %v2191
      %v2207 = vpack.c.b16 %v2194, %v2193
      %v2208 = vpack.c.b16 %v2196, %v2195
      %v2209 = vpack.c.b16 %v2198, %v2197
      %v2210 = vpack.c.b16 %v2200, %v2199
      %v2211 = vpack.c.b16 %v2202, %v2201
      %v2212 = vpack.c.b16 %v2204, %v2203
      %2221 = vmatprep.subr.bf16.mxu0 0
      %2222 = vmatpush1.bf16.msra.mxu0 %v2212
      %2223 = vmatprep.subr.bf16.mxu0 0
      %2224 = vmatpush1.bf16.msra.mxu0 %v2211
      %2225 = vmatprep.subr.bf16.mxu0 0
      %2226 = vmatpush1.bf16.msra.mxu0 %v2210
      %2227 = vmatprep.subr.bf16.mxu0 0
      %2228 = vmatpush1.bf16.msra.mxu0 %v2209
      %2229 = vmatprep.subr.bf16.mxu0 0
      %2230 = vmatpush1.bf16.msra.mxu0 %v2208
      %2231 = vmatprep.subr.bf16.mxu0 0
      %2232 = vmatpush1.bf16.msra.mxu0 %v2207
      %2233 = vmatprep.subr.bf16.mxu0 0
      %2234 = vmatpush1.bf16.msra.mxu0 %v2206
      %2235 = vmatprep.subr.bf16.mxu0 0
      %2236 = vmatpush1.bf16.msra.mxu0 %v2205
      %2237 = vmatprep.subr.bf16.mxu0 0
      %2238 = vmatpush2.bf16.msra.mxu0 0
      %2239 = vmatprep.subr.bf16.mxu0 0
      %2240 = vmatpush2.bf16.msra.mxu0 0
      %2241 = vmatprep.subr.bf16.mxu0 0
      %2242 = vmatpush2.bf16.msra.mxu0 0
      %2243 = vmatprep.subr.bf16.mxu0 0
      %2244 = vmatpush2.bf16.msra.mxu0 0
      %2245 = vmatprep.subr.bf16.mxu0 0
      %2246 = vmatpush2.bf16.msra.mxu0 0
      %2247 = vmatprep.subr.bf16.mxu0 0
      %2248 = vmatpush2.bf16.msra.mxu0 0
      %2249 = vmatprep.subr.bf16.mxu0 0
      %2250 = vmatpush2.bf16.msra.mxu0 0
      %2251 = vmatprep.subr.bf16.mxu0 0
      %2252 = vmatpush2.bf16.msra.mxu0 0
      %2253 = vmatprep.mubr.bf16.mxu0 0
      %2254 = vmatmul.mubr.bf16.gmra.mxu0 %v2155
      %v2255 = vpop.f32.mrf.mxu0
      %v2256 = vadd.f32 0.0, %v2255
      %v2257 = vpop.f32.mrf.mxu0
      %v2258 = vpop.f32.mrf.mxu0
      %v2259 = vpop.f32.mrf.mxu0
      %2260 = vdwg.mxu0
      %v2261 = vadd.f32 %v2150, %v2256
      %v2262 = vld [vmem:[%s1024] sm:$0xf]
      %s2263 = scalar_lea.vmem %s5, 384
      %v2264 = vld [vmem:[%s2263] sm:$0xf]
      %v2265 = vld [vmem:[%s2263 + $0x4] sm:$0xf]
      %v2266 = vld [vmem:[%s2263 + $0x8] sm:$0xf]
      %v2267 = vld [vmem:[%s2263 + $0xc] sm:$0xf]
      %v2268 = vld [vmem:[%s2263 + $0x10] sm:$0xf]
      %v2269 = vld [vmem:[%s2263 + $0x14] sm:$0xf]
      %v2270 = vld [vmem:[%s2263 + $0x18] sm:$0xf]
      %v2271 = vld [vmem:[%s2263 + $0x1c] sm:$0xf]
      %v2272 = vld [vmem:[%s2263 + $0x20] sm:$0xf]
      %v2273 = vld [vmem:[%s2263 + $0x24] sm:$0xf]
      %v2274 = vld [vmem:[%s2263 + $0x28] sm:$0xf]
      %v2275 = vld [vmem:[%s2263 + $0x2c] sm:$0xf]
      %v2276 = vld [vmem:[%s2263 + $0x30] sm:$0xf]
      %v2277 = vld [vmem:[%s2263 + $0x34] sm:$0xf]
      %v2278 = vld [vmem:[%s2263 + $0x38] sm:$0xf]
      %v2279 = vld [vmem:[%s2263 + $0x3c] sm:$0xf]
      %v2296 = vunpack.c.l.b16 %v2264
      %v2297 = vunpack.c.l.b16 %v2265
      %v2298 = vunpack.c.l.b16 %v2266
      %v2299 = vunpack.c.l.b16 %v2267
      %v2300 = vunpack.c.l.b16 %v2268
      %v2301 = vunpack.c.l.b16 %v2269
      %v2302 = vunpack.c.l.b16 %v2270
      %v2303 = vunpack.c.l.b16 %v2271
      %v2304 = vunpack.c.l.b16 %v2272
      %v2305 = vunpack.c.l.b16 %v2273
      %v2306 = vunpack.c.l.b16 %v2274
      %v2307 = vunpack.c.l.b16 %v2275
      %v2308 = vunpack.c.l.b16 %v2276
      %v2309 = vunpack.c.l.b16 %v2277
      %v2310 = vunpack.c.l.b16 %v2278
      %v2311 = vunpack.c.l.b16 %v2279
      %v2312 = vpack.c.b16 %v2297, %v2296
      %v2313 = vpack.c.b16 %v2299, %v2298
      %v2314 = vpack.c.b16 %v2301, %v2300
      %v2315 = vpack.c.b16 %v2303, %v2302
      %v2316 = vpack.c.b16 %v2305, %v2304
      %v2317 = vpack.c.b16 %v2307, %v2306
      %v2318 = vpack.c.b16 %v2309, %v2308
      %v2319 = vpack.c.b16 %v2311, %v2310
      %2328 = vmatprep.subr.bf16.mxu0 0
      %2329 = vmatpush1.bf16.msra.mxu0 %v2319
      %2330 = vmatprep.subr.bf16.mxu0 0
      %2331 = vmatpush1.bf16.msra.mxu0 %v2318
      %2332 = vmatprep.subr.bf16.mxu0 0
      %2333 = vmatpush1.bf16.msra.mxu0 %v2317
      %2334 = vmatprep.subr.bf16.mxu0 0
      %2335 = vmatpush1.bf16.msra.mxu0 %v2316
      %2336 = vmatprep.subr.bf16.mxu0 0
      %2337 = vmatpush1.bf16.msra.mxu0 %v2315
      %2338 = vmatprep.subr.bf16.mxu0 0
      %2339 = vmatpush1.bf16.msra.mxu0 %v2314
      %2340 = vmatprep.subr.bf16.mxu0 0
      %2341 = vmatpush1.bf16.msra.mxu0 %v2313
      %2342 = vmatprep.subr.bf16.mxu0 0
      %2343 = vmatpush1.bf16.msra.mxu0 %v2312
      %2344 = vmatprep.subr.bf16.mxu0 0
      %2345 = vmatpush2.bf16.msra.mxu0 0
      %2346 = vmatprep.subr.bf16.mxu0 0
      %2347 = vmatpush2.bf16.msra.mxu0 0
      %2348 = vmatprep.subr.bf16.mxu0 0
      %2349 = vmatpush2.bf16.msra.mxu0 0
      %2350 = vmatprep.subr.bf16.mxu0 0
      %2351 = vmatpush2.bf16.msra.mxu0 0
      %2352 = vmatprep.subr.bf16.mxu0 0
      %2353 = vmatpush2.bf16.msra.mxu0 0
      %2354 = vmatprep.subr.bf16.mxu0 0
      %2355 = vmatpush2.bf16.msra.mxu0 0
      %2356 = vmatprep.subr.bf16.mxu0 0
      %2357 = vmatpush2.bf16.msra.mxu0 0
      %2358 = vmatprep.subr.bf16.mxu0 0
      %2359 = vmatpush2.bf16.msra.mxu0 0
      %2360 = vmatprep.mubr.bf16.mxu0 0
      %2361 = vmatmul.mubr.bf16.gmra.mxu0 %v2262
      %v2362 = vpop.f32.mrf.mxu0
      %v2363 = vadd.f32 0.0, %v2362
      %v2364 = vpop.f32.mrf.mxu0
      %v2365 = vpop.f32.mrf.mxu0
      %v2366 = vpop.f32.mrf.mxu0
      %2367 = vdwg.mxu0
      %v2368 = vadd.f32 %v2261, %v2363
      %v2369 = vld [vmem:[%s1071] sm:$0xf]
      %s2370 = scalar_lea.vmem %s5, 448
      %v2371 = vld [vmem:[%s2370] sm:$0xf]
      %v2372 = vld [vmem:[%s2370 + $0x4] sm:$0xf]
      %v2373 = vld [vmem:[%s2370 + $0x8] sm:$0xf]
      %v2374 = vld [vmem:[%s2370 + $0xc] sm:$0xf]
      %v2375 = vld [vmem:[%s2370 + $0x10] sm:$0xf]
      %v2376 = vld [vmem:[%s2370 + $0x14] sm:$0xf]
      %v2377 = vld [vmem:[%s2370 + $0x18] sm:$0xf]
      %v2378 = vld [vmem:[%s2370 + $0x1c] sm:$0xf]
      %v2379 = vld [vmem:[%s2370 + $0x20] sm:$0xf]
      %v2380 = vld [vmem:[%s2370 + $0x24] sm:$0xf]
      %v2381 = vld [vmem:[%s2370 + $0x28] sm:$0xf]
      %v2382 = vld [vmem:[%s2370 + $0x2c] sm:$0xf]
      %v2383 = vld [vmem:[%s2370 + $0x30] sm:$0xf]
      %v2384 = vld [vmem:[%s2370 + $0x34] sm:$0xf]
      %v2385 = vld [vmem:[%s2370 + $0x38] sm:$0xf]
      %v2386 = vld [vmem:[%s2370 + $0x3c] sm:$0xf]
      %v2403 = vunpack.c.l.b16 %v2371
      %v2404 = vunpack.c.l.b16 %v2372
      %v2405 = vunpack.c.l.b16 %v2373
      %v2406 = vunpack.c.l.b16 %v2374
      %v2407 = vunpack.c.l.b16 %v2375
      %v2408 = vunpack.c.l.b16 %v2376
      %v2409 = vunpack.c.l.b16 %v2377
      %v2410 = vunpack.c.l.b16 %v2378
      %v2411 = vunpack.c.l.b16 %v2379
      %v2412 = vunpack.c.l.b16 %v2380
      %v2413 = vunpack.c.l.b16 %v2381
      %v2414 = vunpack.c.l.b16 %v2382
      %v2415 = vunpack.c.l.b16 %v2383
      %v2416 = vunpack.c.l.b16 %v2384
      %v2417 = vunpack.c.l.b16 %v2385
      %v2418 = vunpack.c.l.b16 %v2386
      %v2419 = vpack.c.b16 %v2404, %v2403
      %v2420 = vpack.c.b16 %v2406, %v2405
      %v2421 = vpack.c.b16 %v2408, %v2407
      %v2422 = vpack.c.b16 %v2410, %v2409
      %v2423 = vpack.c.b16 %v2412, %v2411
      %v2424 = vpack.c.b16 %v2414, %v2413
      %v2425 = vpack.c.b16 %v2416, %v2415
      %v2426 = vpack.c.b16 %v2418, %v2417
      %2435 = vmatprep.subr.bf16.mxu0 0
      %2436 = vmatpush1.bf16.msra.mxu0 %v2426
      %2437 = vmatprep.subr.bf16.mxu0 0
      %2438 = vmatpush1.bf16.msra.mxu0 %v2425
      %2439 = vmatprep.subr.bf16.mxu0 0
      %2440 = vmatpush1.bf16.msra.mxu0 %v2424
      %2441 = vmatprep.subr.bf16.mxu0 0
      %2442 = vmatpush1.bf16.msra.mxu0 %v2423
      %2443 = vmatprep.subr.bf16.mxu0 0
      %2444 = vmatpush1.bf16.msra.mxu0 %v2422
      %2445 = vmatprep.subr.bf16.mxu0 0
      %2446 = vmatpush1.bf16.msra.mxu0 %v2421
      %2447 = vmatprep.subr.bf16.mxu0 0
      %2448 = vmatpush1.bf16.msra.mxu0 %v2420
      %2449 = vmatprep.subr.bf16.mxu0 0
      %2450 = vmatpush1.bf16.msra.mxu0 %v2419
      %2451 = vmatprep.subr.bf16.mxu0 0
      %2452 = vmatpush2.bf16.msra.mxu0 0
      %2453 = vmatprep.subr.bf16.mxu0 0
      %2454 = vmatpush2.bf16.msra.mxu0 0
      %2455 = vmatprep.subr.bf16.mxu0 0
      %2456 = vmatpush2.bf16.msra.mxu0 0
      %2457 = vmatprep.subr.bf16.mxu0 0
      %2458 = vmatpush2.bf16.msra.mxu0 0
      %2459 = vmatprep.subr.bf16.mxu0 0
      %2460 = vmatpush2.bf16.msra.mxu0 0
      %2461 = vmatprep.subr.bf16.mxu0 0
      %2462 = vmatpush2.bf16.msra.mxu0 0
      %2463 = vmatprep.subr.bf16.mxu0 0
      %2464 = vmatpush2.bf16.msra.mxu0 0
      %2465 = vmatprep.subr.bf16.mxu0 0
      %2466 = vmatpush2.bf16.msra.mxu0 0
      %2467 = vmatprep.mubr.bf16.mxu0 0
      %2468 = vmatmul.mubr.bf16.gmra.mxu0 %v2369
      %v2469 = vpop.f32.mrf.mxu0
      %v2470 = vadd.f32 0.0, %v2469
      %v2471 = vpop.f32.mrf.mxu0
      %v2472 = vpop.f32.mrf.mxu0
      %v2473 = vpop.f32.mrf.mxu0
      %2474 = vdwg.mxu0
      %v2475 = vadd.f32 %v2368, %v2470
      %v2476 = vld [vmem:[%s1118] sm:$0xf]
      %s2477 = scalar_lea.vmem %s5, 512
      %v2478 = vld [vmem:[%s2477] sm:$0xf]
      %v2479 = vld [vmem:[%s2477 + $0x4] sm:$0xf]
      %v2480 = vld [vmem:[%s2477 + $0x8] sm:$0xf]
      %v2481 = vld [vmem:[%s2477 + $0xc] sm:$0xf]
      %v2482 = vld [vmem:[%s2477 + $0x10] sm:$0xf]
      %v2483 = vld [vmem:[%s2477 + $0x14] sm:$0xf]
      %v2484 = vld [vmem:[%s2477 + $0x18] sm:$0xf]
      %v2485 = vld [vmem:[%s2477 + $0x1c] sm:$0xf]
      %v2486 = vld [vmem:[%s2477 + $0x20] sm:$0xf]
      %v2487 = vld [vmem:[%s2477 + $0x24] sm:$0xf]
      %v2488 = vld [vmem:[%s2477 + $0x28] sm:$0xf]
      %v2489 = vld [vmem:[%s2477 + $0x2c] sm:$0xf]
      %v2490 = vld [vmem:[%s2477 + $0x30] sm:$0xf]
      %v2491 = vld [vmem:[%s2477 + $0x34] sm:$0xf]
      %v2492 = vld [vmem:[%s2477 + $0x38] sm:$0xf]
      %v2493 = vld [vmem:[%s2477 + $0x3c] sm:$0xf]
      %v2510 = vunpack.c.l.b16 %v2478
      %v2511 = vunpack.c.l.b16 %v2479
      %v2512 = vunpack.c.l.b16 %v2480
      %v2513 = vunpack.c.l.b16 %v2481
      %v2514 = vunpack.c.l.b16 %v2482
      %v2515 = vunpack.c.l.b16 %v2483
      %v2516 = vunpack.c.l.b16 %v2484
      %v2517 = vunpack.c.l.b16 %v2485
      %v2518 = vunpack.c.l.b16 %v2486
      %v2519 = vunpack.c.l.b16 %v2487
      %v2520 = vunpack.c.l.b16 %v2488
      %v2521 = vunpack.c.l.b16 %v2489
      %v2522 = vunpack.c.l.b16 %v2490
      %v2523 = vunpack.c.l.b16 %v2491
      %v2524 = vunpack.c.l.b16 %v2492
      %v2525 = vunpack.c.l.b16 %v2493
      %v2526 = vpack.c.b16 %v2511, %v2510
      %v2527 = vpack.c.b16 %v2513, %v2512
      %v2528 = vpack.c.b16 %v2515, %v2514
      %v2529 = vpack.c.b16 %v2517, %v2516
      %v2530 = vpack.c.b16 %v2519, %v2518
      %v2531 = vpack.c.b16 %v2521, %v2520
      %v2532 = vpack.c.b16 %v2523, %v2522
      %v2533 = vpack.c.b16 %v2525, %v2524
      %2542 = vmatprep.subr.bf16.mxu0 0
      %2543 = vmatpush1.bf16.msra.mxu0 %v2533
      %2544 = vmatprep.subr.bf16.mxu0 0
      %2545 = vmatpush1.bf16.msra.mxu0 %v2532
      %2546 = vmatprep.subr.bf16.mxu0 0
      %2547 = vmatpush1.bf16.msra.mxu0 %v2531
      %2548 = vmatprep.subr.bf16.mxu0 0
      %2549 = vmatpush1.bf16.msra.mxu0 %v2530
      %2550 = vmatprep.subr.bf16.mxu0 0
      %2551 = vmatpush1.bf16.msra.mxu0 %v2529
      %2552 = vmatprep.subr.bf16.mxu0 0
      %2553 = vmatpush1.bf16.msra.mxu0 %v2528
      %2554 = vmatprep.subr.bf16.mxu0 0
      %2555 = vmatpush1.bf16.msra.mxu0 %v2527
      %2556 = vmatprep.subr.bf16.mxu0 0
      %2557 = vmatpush1.bf16.msra.mxu0 %v2526
      %2558 = vmatprep.subr.bf16.mxu0 0
      %2559 = vmatpush2.bf16.msra.mxu0 0
      %2560 = vmatprep.subr.bf16.mxu0 0
      %2561 = vmatpush2.bf16.msra.mxu0 0
      %2562 = vmatprep.subr.bf16.mxu0 0
      %2563 = vmatpush2.bf16.msra.mxu0 0
      %2564 = vmatprep.subr.bf16.mxu0 0
      %2565 = vmatpush2.bf16.msra.mxu0 0
      %2566 = vmatprep.subr.bf16.mxu0 0
      %2567 = vmatpush2.bf16.msra.mxu0 0
      %2568 = vmatprep.subr.bf16.mxu0 0
      %2569 = vmatpush2.bf16.msra.mxu0 0
      %2570 = vmatprep.subr.bf16.mxu0 0
      %2571 = vmatpush2.bf16.msra.mxu0 0
      %2572 = vmatprep.subr.bf16.mxu0 0
      %2573 = vmatpush2.bf16.msra.mxu0 0
      %2574 = vmatprep.mubr.bf16.mxu0 0
      %2575 = vmatmul.mubr.bf16.gmra.mxu0 %v2476
      %v2576 = vpop.f32.mrf.mxu0
      %v2577 = vadd.f32 0.0, %v2576
      %v2578 = vpop.f32.mrf.mxu0
      %v2579 = vpop.f32.mrf.mxu0
      %v2580 = vpop.f32.mrf.mxu0
      %2581 = vdwg.mxu0
      %v2582 = vadd.f32 %v2475, %v2577
      %v2583 = vld [vmem:[%s6] sm:$0x1]
      %v2585 = vlaneseq
      %v2586 = vshrl.u32 %v2585, 7
      %v2587 = vsub.s32 0, %v2586
      %v2588 = vrot.slane %v2583, %v2587
      %v2590 = vmul.f32 %v2582, %v2588
      %v2591 = vld [vmem:[%s7] sm:$0x1]
      %v2593 = vlaneseq
      %v2594 = vshrl.u32 %v2593, 7
      %v2595 = vsub.s32 0, %v2594
      %v2596 = vrot.slane %v2591, %v2595
      %v2598 = vadd.f32 %v2590, %v2596
      %v2599 = vmax.f32 %v2598, 0.0
      %v2600 = vpack.c.bf16 %v2599, %v2599
      %2601 = vst [vmem:[#allocation3] sm:$0xf] %v2600
      %v2602 = vld [vmem:[#allocation2] sm:$0xf]
      %v2603 = vld [vmem:[%s5] sm:$0xf]
      %v2604 = vld [vmem:[%s5 + $0x4] sm:$0xf]
      %v2605 = vld [vmem:[%s5 + $0x8] sm:$0xf]
      %v2606 = vld [vmem:[%s5 + $0xc] sm:$0xf]
      %v2607 = vld [vmem:[%s5 + $0x10] sm:$0xf]
      %v2608 = vld [vmem:[%s5 + $0x14] sm:$0xf]
      %v2609 = vld [vmem:[%s5 + $0x18] sm:$0xf]
      %v2610 = vld [vmem:[%s5 + $0x1c] sm:$0xf]
      %v2611 = vld [vmem:[%s5 + $0x20] sm:$0xf]
      %v2612 = vld [vmem:[%s5 + $0x24] sm:$0xf]
      %v2613 = vld [vmem:[%s5 + $0x28] sm:$0xf]
      %v2614 = vld [vmem:[%s5 + $0x2c] sm:$0xf]
      %v2615 = vld [vmem:[%s5 + $0x30] sm:$0xf]
      %v2616 = vld [vmem:[%s5 + $0x34] sm:$0xf]
      %v2617 = vld [vmem:[%s5 + $0x38] sm:$0xf]
      %v2618 = vld [vmem:[%s5 + $0x3c] sm:$0xf]
      %v2619 = vld [vmem:[%s681] sm:$0xf]
      %s2620 = scalar_lea.vmem %s5, 64
      %v2621 = vld [vmem:[%s2620] sm:$0xf]
      %v2622 = vld [vmem:[%s2620 + $0x4] sm:$0xf]
      %v2623 = vld [vmem:[%s2620 + $0x8] sm:$0xf]
      %v2624 = vld [vmem:[%s2620 + $0xc] sm:$0xf]
      %v2625 = vld [vmem:[%s2620 + $0x10] sm:$0xf]
      %v2626 = vld [vmem:[%s2620 + $0x14] sm:$0xf]
      %v2627 = vld [vmem:[%s2620 + $0x18] sm:$0xf]
      %v2628 = vld [vmem:[%s2620 + $0x1c] sm:$0xf]
      %v2629 = vld [vmem:[%s2620 + $0x20] sm:$0xf]
      %v2630 = vld [vmem:[%s2620 + $0x24] sm:$0xf]
      %v2631 = vld [vmem:[%s2620 + $0x28] sm:$0xf]
      %v2632 = vld [vmem:[%s2620 + $0x2c] sm:$0xf]
      %v2633 = vld [vmem:[%s2620 + $0x30] sm:$0xf]
      %v2634 = vld [vmem:[%s2620 + $0x34] sm:$0xf]
      %v2635 = vld [vmem:[%s2620 + $0x38] sm:$0xf]
      %v2636 = vld [vmem:[%s2620 + $0x3c] sm:$0xf]
      %v2653 = vunpack.c.l.b16 %v2621
      %v2654 = vunpack.c.l.b16 %v2622
      %v2655 = vunpack.c.l.b16 %v2623
      %v2656 = vunpack.c.l.b16 %v2624
      %v2657 = vunpack.c.l.b16 %v2625
      %v2658 = vunpack.c.l.b16 %v2626
      %v2659 = vunpack.c.l.b16 %v2627
      %v2660 = vunpack.c.l.b16 %v2628
      %v2661 = vunpack.c.l.b16 %v2629
      %v2662 = vunpack.c.l.b16 %v2630
      %v2663 = vunpack.c.l.b16 %v2631
      %v2664 = vunpack.c.l.b16 %v2632
      %v2665 = vunpack.c.l.b16 %v2633
      %v2666 = vunpack.c.l.b16 %v2634
      %v2667 = vunpack.c.l.b16 %v2635
      %v2668 = vunpack.c.l.b16 %v2636
      %v2669 = vpack.c.b16 %v2654, %v2653
      %v2670 = vpack.c.b16 %v2656, %v2655
      %v2671 = vpack.c.b16 %v2658, %v2657
      %v2672 = vpack.c.b16 %v2660, %v2659
      %v2673 = vpack.c.b16 %v2662, %v2661
      %v2674 = vpack.c.b16 %v2664, %v2663
      %v2675 = vpack.c.b16 %v2666, %v2665
      %v2676 = vpack.c.b16 %v2668, %v2667
      %2685 = vmatprep.subr.bf16.mxu0 0
      %2686 = vmatpush1.bf16.msra.mxu0 %v2676
      %2687 = vmatprep.subr.bf16.mxu0 0
      %2688 = vmatpush1.bf16.msra.mxu0 %v2675
      %2689 = vmatprep.subr.bf16.mxu0 0
      %2690 = vmatpush1.bf16.msra.mxu0 %v2674
      %2691 = vmatprep.subr.bf16.mxu0 0
      %2692 = vmatpush1.bf16.msra.mxu0 %v2673
      %2693 = vmatprep.subr.bf16.mxu0 0
      %2694 = vmatpush1.bf16.msra.mxu0 %v2672
      %2695 = vmatprep.subr.bf16.mxu0 0
      %2696 = vmatpush1.bf16.msra.mxu0 %v2671
      %2697 = vmatprep.subr.bf16.mxu0 0
      %2698 = vmatpush1.bf16.msra.mxu0 %v2670
      %2699 = vmatprep.subr.bf16.mxu0 0
      %2700 = vmatpush1.bf16.msra.mxu0 %v2669
      %2701 = vmatprep.subr.bf16.mxu0 0
      %2702 = vmatpush2.bf16.msra.mxu0 0
      %2703 = vmatprep.subr.bf16.mxu0 0
      %2704 = vmatpush2.bf16.msra.mxu0 0
      %2705 = vmatprep.subr.bf16.mxu0 0
      %2706 = vmatpush2.bf16.msra.mxu0 0
      %2707 = vmatprep.subr.bf16.mxu0 0
      %2708 = vmatpush2.bf16.msra.mxu0 0
      %2709 = vmatprep.subr.bf16.mxu0 0
      %2710 = vmatpush2.bf16.msra.mxu0 0
      %2711 = vmatprep.subr.bf16.mxu0 0
      %2712 = vmatpush2.bf16.msra.mxu0 0
      %2713 = vmatprep.subr.bf16.mxu0 0
      %2714 = vmatpush2.bf16.msra.mxu0 0
      %2715 = vmatprep.subr.bf16.mxu0 0
      %2716 = vmatpush2.bf16.msra.mxu0 0
      %2717 = vmatprep.mubr.bf16.mxu0 0
      %2718 = vmatmul.mubr.bf16.gmra.mxu0 %v2619
      %v2719 = vpop.f32.mrf.mxu0
      %v2720 = vadd.f32 0.0, %v2719
      %v2721 = vpop.f32.mrf.mxu0
      %v2722 = vpop.f32.mrf.mxu0
      %v2723 = vpop.f32.mrf.mxu0
      %2724 = vdwg.mxu0
      %v2741 = vunpack.c.l.b16 %v2603
      %v2742 = vunpack.c.l.b16 %v2604
      %v2743 = vunpack.c.l.b16 %v2605
      %v2744 = vunpack.c.l.b16 %v2606
      %v2745 = vunpack.c.l.b16 %v2607
      %v2746 = vunpack.c.l.b16 %v2608
      %v2747 = vunpack.c.l.b16 %v2609
      %v2748 = vunpack.c.l.b16 %v2610
      %v2749 = vunpack.c.l.b16 %v2611
      %v2750 = vunpack.c.l.b16 %v2612
      %v2751 = vunpack.c.l.b16 %v2613
      %v2752 = vunpack.c.l.b16 %v2614
      %v2753 = vunpack.c.l.b16 %v2615
      %v2754 = vunpack.c.l.b16 %v2616
      %v2755 = vunpack.c.l.b16 %v2617
      %v2756 = vunpack.c.l.b16 %v2618
      %v2757 = vpack.c.b16 %v2742, %v2741
      %v2758 = vpack.c.b16 %v2744, %v2743
      %v2759 = vpack.c.b16 %v2746, %v2745
      %v2760 = vpack.c.b16 %v2748, %v2747
      %v2761 = vpack.c.b16 %v2750, %v2749
      %v2762 = vpack.c.b16 %v2752, %v2751
      %v2763 = vpack.c.b16 %v2754, %v2753
      %v2764 = vpack.c.b16 %v2756, %v2755
      %2773 = vmatprep.subr.bf16.mxu0 0
      %2774 = vmatpush1.bf16.msra.mxu0 %v2764
      %2775 = vmatprep.subr.bf16.mxu0 0
      %2776 = vmatpush1.bf16.msra.mxu0 %v2763
      %2777 = vmatprep.subr.bf16.mxu0 0
      %2778 = vmatpush1.bf16.msra.mxu0 %v2762
      %2779 = vmatprep.subr.bf16.mxu0 0
      %2780 = vmatpush1.bf16.msra.mxu0 %v2761
      %2781 = vmatprep.subr.bf16.mxu0 0
      %2782 = vmatpush1.bf16.msra.mxu0 %v2760
      %2783 = vmatprep.subr.bf16.mxu0 0
      %2784 = vmatpush1.bf16.msra.mxu0 %v2759
      %2785 = vmatprep.subr.bf16.mxu0 0
      %2786 = vmatpush1.bf16.msra.mxu0 %v2758
      %2787 = vmatprep.subr.bf16.mxu0 0
      %2788 = vmatpush1.bf16.msra.mxu0 %v2757
      %2789 = vmatprep.subr.bf16.mxu0 0
      %2790 = vmatpush2.bf16.msra.mxu0 0
      %2791 = vmatprep.subr.bf16.mxu0 0
      %2792 = vmatpush2.bf16.msra.mxu0 0
      %2793 = vmatprep.subr.bf16.mxu0 0
      %2794 = vmatpush2.bf16.msra.mxu0 0
      %2795 = vmatprep.subr.bf16.mxu0 0
      %2796 = vmatpush2.bf16.msra.mxu0 0
      %2797 = vmatprep.subr.bf16.mxu0 0
      %2798 = vmatpush2.bf16.msra.mxu0 0
      %2799 = vmatprep.subr.bf16.mxu0 0
      %2800 = vmatpush2.bf16.msra.mxu0 0
      %2801 = vmatprep.subr.bf16.mxu0 0
      %2802 = vmatpush2.bf16.msra.mxu0 0
      %2803 = vmatprep.subr.bf16.mxu0 0
      %2804 = vmatpush2.bf16.msra.mxu0 0
      %2805 = vmatprep.mubr.bf16.mxu0 0
      %2806 = vmatmul.mubr.bf16.gmra.mxu0 %v2602
      %v2807 = vpop.f32.mrf.mxu0
      %v2808 = vadd.f32 %v2720, %v2807
      %v2809 = vpop.f32.mrf.mxu0
      %v2810 = vpop.f32.mrf.mxu0
      %v2811 = vpop.f32.mrf.mxu0
      %2812 = vdwg.mxu0
      %v2813 = vld [vmem:[%s729] sm:$0xf]
      %s2814 = scalar_lea.vmem %s5, 128
      %v2815 = vld [vmem:[%s2814] sm:$0xf]
      %v2816 = vld [vmem:[%s2814 + $0x4] sm:$0xf]
      %v2817 = vld [vmem:[%s2814 + $0x8] sm:$0xf]
      %v2818 = vld [vmem:[%s2814 + $0xc] sm:$0xf]
      %v2819 = vld [vmem:[%s2814 + $0x10] sm:$0xf]
      %v2820 = vld [vmem:[%s2814 + $0x14] sm:$0xf]
      %v2821 = vld [vmem:[%s2814 + $0x18] sm:$0xf]
      %v2822 = vld [vmem:[%s2814 + $0x1c] sm:$0xf]
      %v2823 = vld [vmem:[%s2814 + $0x20] sm:$0xf]
      %v2824 = vld [vmem:[%s2814 + $0x24] sm:$0xf]
      %v2825 = vld [vmem:[%s2814 + $0x28] sm:$0xf]
      %v2826 = vld [vmem:[%s2814 + $0x2c] sm:$0xf]
      %v2827 = vld [vmem:[%s2814 + $0x30] sm:$0xf]
      %v2828 = vld [vmem:[%s2814 + $0x34] sm:$0xf]
      %v2829 = vld [vmem:[%s2814 + $0x38] sm:$0xf]
      %v2830 = vld [vmem:[%s2814 + $0x3c] sm:$0xf]
      %v2847 = vunpack.c.l.b16 %v2815
      %v2848 = vunpack.c.l.b16 %v2816
      %v2849 = vunpack.c.l.b16 %v2817
      %v2850 = vunpack.c.l.b16 %v2818
      %v2851 = vunpack.c.l.b16 %v2819
      %v2852 = vunpack.c.l.b16 %v2820
      %v2853 = vunpack.c.l.b16 %v2821
      %v2854 = vunpack.c.l.b16 %v2822
      %v2855 = vunpack.c.l.b16 %v2823
      %v2856 = vunpack.c.l.b16 %v2824
      %v2857 = vunpack.c.l.b16 %v2825
      %v2858 = vunpack.c.l.b16 %v2826
      %v2859 = vunpack.c.l.b16 %v2827
      %v2860 = vunpack.c.l.b16 %v2828
      %v2861 = vunpack.c.l.b16 %v2829
      %v2862 = vunpack.c.l.b16 %v2830
      %v2863 = vpack.c.b16 %v2848, %v2847
      %v2864 = vpack.c.b16 %v2850, %v2849
      %v2865 = vpack.c.b16 %v2852, %v2851
      %v2866 = vpack.c.b16 %v2854, %v2853
      %v2867 = vpack.c.b16 %v2856, %v2855
      %v2868 = vpack.c.b16 %v2858, %v2857
      %v2869 = vpack.c.b16 %v2860, %v2859
      %v2870 = vpack.c.b16 %v2862, %v2861
      %2879 = vmatprep.subr.bf16.mxu0 0
      %2880 = vmatpush1.bf16.msra.mxu0 %v2870
      %2881 = vmatprep.subr.bf16.mxu0 0
      %2882 = vmatpush1.bf16.msra.mxu0 %v2869
      %2883 = vmatprep.subr.bf16.mxu0 0
      %2884 = vmatpush1.bf16.msra.mxu0 %v2868
      %2885 = vmatprep.subr.bf16.mxu0 0
      %2886 = vmatpush1.bf16.msra.mxu0 %v2867
      %2887 = vmatprep.subr.bf16.mxu0 0
      %2888 = vmatpush1.bf16.msra.mxu0 %v2866
      %2889 = vmatprep.subr.bf16.mxu0 0
      %2890 = vmatpush1.bf16.msra.mxu0 %v2865
      %2891 = vmatprep.subr.bf16.mxu0 0
      %2892 = vmatpush1.bf16.msra.mxu0 %v2864
      %2893 = vmatprep.subr.bf16.mxu0 0
      %2894 = vmatpush1.bf16.msra.mxu0 %v2863
      %2895 = vmatprep.subr.bf16.mxu0 0
      %2896 = vmatpush2.bf16.msra.mxu0 0
      %2897 = vmatprep.subr.bf16.mxu0 0
      %2898 = vmatpush2.bf16.msra.mxu0 0
      %2899 = vmatprep.subr.bf16.mxu0 0
      %2900 = vmatpush2.bf16.msra.mxu0 0
      %2901 = vmatprep.subr.bf16.mxu0 0
      %2902 = vmatpush2.bf16.msra.mxu0 0
      %2903 = vmatprep.subr.bf16.mxu0 0
      %2904 = vmatpush2.bf16.msra.mxu0 0
      %2905 = vmatprep.subr.bf16.mxu0 0
      %2906 = vmatpush2.bf16.msra.mxu0 0
      %2907 = vmatprep.subr.bf16.mxu0 0
      %2908 = vmatpush2.bf16.msra.mxu0 0
      %2909 = vmatprep.subr.bf16.mxu0 0
      %2910 = vmatpush2.bf16.msra.mxu0 0
      %2911 = vmatprep.mubr.bf16.mxu0 0
      %2912 = vmatmul.mubr.bf16.gmra.mxu0 %v2813
      %v2913 = vpop.f32.mrf.mxu0
      %v2914 = vadd.f32 0.0, %v2913
      %v2915 = vpop.f32.mrf.mxu0
      %v2916 = vpop.f32.mrf.mxu0
      %v2917 = vpop.f32.mrf.mxu0
      %2918 = vdwg.mxu0
      %v2919 = vadd.f32 %v2808, %v2914
      %v2920 = vld [vmem:[%s1024] sm:$0xf]
      %v2921 = vld [vmem:[%s1944] sm:$0xf]
      %v2922 = vld [vmem:[%s1944 + $0x4] sm:$0xf]
      %v2923 = vld [vmem:[%s1944 + $0x8] sm:$0xf]
      %v2924 = vld [vmem:[%s1944 + $0xc] sm:$0xf]
      %v2925 = vld [vmem:[%s1944 + $0x10] sm:$0xf]
      %v2926 = vld [vmem:[%s1944 + $0x14] sm:$0xf]
      %v2927 = vld [vmem:[%s1944 + $0x18] sm:$0xf]
      %v2928 = vld [vmem:[%s1944 + $0x1c] sm:$0xf]
      %v2929 = vld [vmem:[%s1944 + $0x20] sm:$0xf]
      %v2930 = vld [vmem:[%s1944 + $0x24] sm:$0xf]
      %v2931 = vld [vmem:[%s1944 + $0x28] sm:$0xf]
      %v2932 = vld [vmem:[%s1944 + $0x2c] sm:$0xf]
      %v2933 = vld [vmem:[%s1944 + $0x30] sm:$0xf]
      %v2934 = vld [vmem:[%s1944 + $0x34] sm:$0xf]
      %v2935 = vld [vmem:[%s1944 + $0x38] sm:$0xf]
      %v2936 = vld [vmem:[%s1944 + $0x3c] sm:$0xf]
      %v2953 = vunpack.c.l.b16 %v2921
      %v2954 = vunpack.c.l.b16 %v2922
      %v2955 = vunpack.c.l.b16 %v2923
      %v2956 = vunpack.c.l.b16 %v2924
      %v2957 = vunpack.c.l.b16 %v2925
      %v2958 = vunpack.c.l.b16 %v2926
      %v2959 = vunpack.c.l.b16 %v2927
      %v2960 = vunpack.c.l.b16 %v2928
      %v2961 = vunpack.c.l.b16 %v2929
      %v2962 = vunpack.c.l.b16 %v2930
      %v2963 = vunpack.c.l.b16 %v2931
      %v2964 = vunpack.c.l.b16 %v2932
      %v2965 = vunpack.c.l.b16 %v2933
      %v2966 = vunpack.c.l.b16 %v2934
      %v2967 = vunpack.c.l.b16 %v2935
      %v2968 = vunpack.c.l.b16 %v2936
      %v2969 = vpack.c.b16 %v2954, %v2953
      %v2970 = vpack.c.b16 %v2956, %v2955
      %v2971 = vpack.c.b16 %v2958, %v2957
      %v2972 = vpack.c.b16 %v2960, %v2959
      %v2973 = vpack.c.b16 %v2962, %v2961
      %v2974 = vpack.c.b16 %v2964, %v2963
      %v2975 = vpack.c.b16 %v2966, %v2965
      %v2976 = vpack.c.b16 %v2968, %v2967
      %2985 = vmatprep.subr.bf16.mxu0 0
      %2986 = vmatpush1.bf16.msra.mxu0 %v2976
      %2987 = vmatprep.subr.bf16.mxu0 0
      %2988 = vmatpush1.bf16.msra.mxu0 %v2975
      %2989 = vmatprep.subr.bf16.mxu0 0
      %2990 = vmatpush1.bf16.msra.mxu0 %v2974
      %2991 = vmatprep.subr.bf16.mxu0 0
      %2992 = vmatpush1.bf16.msra.mxu0 %v2973
      %2993 = vmatprep.subr.bf16.mxu0 0
      %2994 = vmatpush1.bf16.msra.mxu0 %v2972
      %2995 = vmatprep.subr.bf16.mxu0 0
      %2996 = vmatpush1.bf16.msra.mxu0 %v2971
      %2997 = vmatprep.subr.bf16.mxu0 0
      %2998 = vmatpush1.bf16.msra.mxu0 %v2970
      %2999 = vmatprep.subr.bf16.mxu0 0
      %3000 = vmatpush1.bf16.msra.mxu0 %v2969
      %3001 = vmatprep.subr.bf16.mxu0 0
      %3002 = vmatpush2.bf16.msra.mxu0 0
      %3003 = vmatprep.subr.bf16.mxu0 0
      %3004 = vmatpush2.bf16.msra.mxu0 0
      %3005 = vmatprep.subr.bf16.mxu0 0
      %3006 = vmatpush2.bf16.msra.mxu0 0
      %3007 = vmatprep.subr.bf16.mxu0 0
      %3008 = vmatpush2.bf16.msra.mxu0 0
      %3009 = vmatprep.subr.bf16.mxu0 0
      %3010 = vmatpush2.bf16.msra.mxu0 0
      %3011 = vmatprep.subr.bf16.mxu0 0
      %3012 = vmatpush2.bf16.msra.mxu0 0
      %3013 = vmatprep.subr.bf16.mxu0 0
      %3014 = vmatpush2.bf16.msra.mxu0 0
      %3015 = vmatprep.subr.bf16.mxu0 0
      %3016 = vmatpush2.bf16.msra.mxu0 0
      %3017 = vmatprep.mubr.bf16.mxu0 0
      %3018 = vmatmul.mubr.bf16.gmra.mxu0 %v2920
      %v3019 = vpop.f32.mrf.mxu0
      %v3020 = vadd.f32 0.0, %v3019
      %v3021 = vpop.f32.mrf.mxu0
      %v3022 = vpop.f32.mrf.mxu0
      %v3023 = vpop.f32.mrf.mxu0
      %3024 = vdwg.mxu0
      %v3025 = vadd.f32 %v2919, %v3020
      %v3026 = vld [vmem:[%s1071] sm:$0xf]
      %v3027 = vld [vmem:[%s1962] sm:$0xf]
      %v3028 = vld [vmem:[%s1962 + $0x4] sm:$0xf]
      %v3029 = vld [vmem:[%s1962 + $0x8] sm:$0xf]
      %v3030 = vld [vmem:[%s1962 + $0xc] sm:$0xf]
      %v3031 = vld [vmem:[%s1962 + $0x10] sm:$0xf]
      %v3032 = vld [vmem:[%s1962 + $0x14] sm:$0xf]
      %v3033 = vld [vmem:[%s1962 + $0x18] sm:$0xf]
      %v3034 = vld [vmem:[%s1962 + $0x1c] sm:$0xf]
      %v3035 = vld [vmem:[%s1962 + $0x20] sm:$0xf]
      %v3036 = vld [vmem:[%s1962 + $0x24] sm:$0xf]
      %v3037 = vld [vmem:[%s1962 + $0x28] sm:$0xf]
      %v3038 = vld [vmem:[%s1962 + $0x2c] sm:$0xf]
      %v3039 = vld [vmem:[%s1962 + $0x30] sm:$0xf]
      %v3040 = vld [vmem:[%s1962 + $0x34] sm:$0xf]
      %v3041 = vld [vmem:[%s1962 + $0x38] sm:$0xf]
      %v3042 = vld [vmem:[%s1962 + $0x3c] sm:$0xf]
      %v3059 = vunpack.c.l.b16 %v3027
      %v3060 = vunpack.c.l.b16 %v3028
      %v3061 = vunpack.c.l.b16 %v3029
      %v3062 = vunpack.c.l.b16 %v3030
      %v3063 = vunpack.c.l.b16 %v3031
      %v3064 = vunpack.c.l.b16 %v3032
      %v3065 = vunpack.c.l.b16 %v3033
      %v3066 = vunpack.c.l.b16 %v3034
      %v3067 = vunpack.c.l.b16 %v3035
      %v3068 = vunpack.c.l.b16 %v3036
      %v3069 = vunpack.c.l.b16 %v3037
      %v3070 = vunpack.c.l.b16 %v3038
      %v3071 = vunpack.c.l.b16 %v3039
      %v3072 = vunpack.c.l.b16 %v3040
      %v3073 = vunpack.c.l.b16 %v3041
      %v3074 = vunpack.c.l.b16 %v3042
      %v3075 = vpack.c.b16 %v3060, %v3059
      %v3076 = vpack.c.b16 %v3062, %v3061
      %v3077 = vpack.c.b16 %v3064, %v3063
      %v3078 = vpack.c.b16 %v3066, %v3065
      %v3079 = vpack.c.b16 %v3068, %v3067
      %v3080 = vpack.c.b16 %v3070, %v3069
      %v3081 = vpack.c.b16 %v3072, %v3071
      %v3082 = vpack.c.b16 %v3074, %v3073
      %3091 = vmatprep.subr.bf16.mxu0 0
      %3092 = vmatpush1.bf16.msra.mxu0 %v3082
      %3093 = vmatprep.subr.bf16.mxu0 0
      %3094 = vmatpush1.bf16.msra.mxu0 %v3081
      %3095 = vmatprep.subr.bf16.mxu0 0
      %3096 = vmatpush1.bf16.msra.mxu0 %v3080
      %3097 = vmatprep.subr.bf16.mxu0 0
      %3098 = vmatpush1.bf16.msra.mxu0 %v3079
      %3099 = vmatprep.subr.bf16.mxu0 0
      %3100 = vmatpush1.bf16.msra.mxu0 %v3078
      %3101 = vmatprep.subr.bf16.mxu0 0
      %3102 = vmatpush1.bf16.msra.mxu0 %v3077
      %3103 = vmatprep.subr.bf16.mxu0 0
      %3104 = vmatpush1.bf16.msra.mxu0 %v3076
      %3105 = vmatprep.subr.bf16.mxu0 0
      %3106 = vmatpush1.bf16.msra.mxu0 %v3075
      %3107 = vmatprep.subr.bf16.mxu0 0
      %3108 = vmatpush2.bf16.msra.mxu0 0
      %3109 = vmatprep.subr.bf16.mxu0 0
      %3110 = vmatpush2.bf16.msra.mxu0 0
      %3111 = vmatprep.subr.bf16.mxu0 0
      %3112 = vmatpush2.bf16.msra.mxu0 0
      %3113 = vmatprep.subr.bf16.mxu0 0
      %3114 = vmatpush2.bf16.msra.mxu0 0
      %3115 = vmatprep.subr.bf16.mxu0 0
      %3116 = vmatpush2.bf16.msra.mxu0 0
      %3117 = vmatprep.subr.bf16.mxu0 0
      %3118 = vmatpush2.bf16.msra.mxu0 0
      %3119 = vmatprep.subr.bf16.mxu0 0
      %3120 = vmatpush2.bf16.msra.mxu0 0
      %3121 = vmatprep.subr.bf16.mxu0 0
      %3122 = vmatpush2.bf16.msra.mxu0 0
      %3123 = vmatprep.mubr.bf16.mxu0 0
      %3124 = vmatmul.mubr.bf16.gmra.mxu0 %v3026
      %v3125 = vpop.f32.mrf.mxu0
      %v3126 = vadd.f32 0.0, %v3125
      %v3127 = vpop.f32.mrf.mxu0
      %v3128 = vpop.f32.mrf.mxu0
      %v3129 = vpop.f32.mrf.mxu0
      %3130 = vdwg.mxu0
      %v3131 = vadd.f32 %v3025, %v3126
      %v3132 = vld [vmem:[%s1118] sm:$0xf]
      %v3133 = vld [vmem:[%s2156] sm:$0xf]
      %v3134 = vld [vmem:[%s2156 + $0x4] sm:$0xf]
      %v3135 = vld [vmem:[%s2156 + $0x8] sm:$0xf]
      %v3136 = vld [vmem:[%s2156 + $0xc] sm:$0xf]
      %v3137 = vld [vmem:[%s2156 + $0x10] sm:$0xf]
      %v3138 = vld [vmem:[%s2156 + $0x14] sm:$0xf]
      %v3139 = vld [vmem:[%s2156 + $0x18] sm:$0xf]
      %v3140 = vld [vmem:[%s2156 + $0x1c] sm:$0xf]
      %v3141 = vld [vmem:[%s2156 + $0x20] sm:$0xf]
      %v3142 = vld [vmem:[%s2156 + $0x24] sm:$0xf]
      %v3143 = vld [vmem:[%s2156 + $0x28] sm:$0xf]
      %v3144 = vld [vmem:[%s2156 + $0x2c] sm:$0xf]
      %v3145 = vld [vmem:[%s2156 + $0x30] sm:$0xf]
      %v3146 = vld [vmem:[%s2156 + $0x34] sm:$0xf]
      %v3147 = vld [vmem:[%s2156 + $0x38] sm:$0xf]
      %v3148 = vld [vmem:[%s2156 + $0x3c] sm:$0xf]
      %v3165 = vunpack.c.l.b16 %v3133
      %v3166 = vunpack.c.l.b16 %v3134
      %v3167 = vunpack.c.l.b16 %v3135
      %v3168 = vunpack.c.l.b16 %v3136
      %v3169 = vunpack.c.l.b16 %v3137
      %v3170 = vunpack.c.l.b16 %v3138
      %v3171 = vunpack.c.l.b16 %v3139
      %v3172 = vunpack.c.l.b16 %v3140
      %v3173 = vunpack.c.l.b16 %v3141
      %v3174 = vunpack.c.l.b16 %v3142
      %v3175 = vunpack.c.l.b16 %v3143
      %v3176 = vunpack.c.l.b16 %v3144
      %v3177 = vunpack.c.l.b16 %v3145
      %v3178 = vunpack.c.l.b16 %v3146
      %v3179 = vunpack.c.l.b16 %v3147
      %v3180 = vunpack.c.l.b16 %v3148
      %v3181 = vpack.c.b16 %v3166, %v3165
      %v3182 = vpack.c.b16 %v3168, %v3167
      %v3183 = vpack.c.b16 %v3170, %v3169
      %v3184 = vpack.c.b16 %v3172, %v3171
      %v3185 = vpack.c.b16 %v3174, %v3173
      %v3186 = vpack.c.b16 %v3176, %v3175
      %v3187 = vpack.c.b16 %v3178, %v3177
      %v3188 = vpack.c.b16 %v3180, %v3179
      %3197 = vmatprep.subr.bf16.mxu0 0
      %3198 = vmatpush1.bf16.msra.mxu0 %v3188
      %3199 = vmatprep.subr.bf16.mxu0 0
      %3200 = vmatpush1.bf16.msra.mxu0 %v3187
      %3201 = vmatprep.subr.bf16.mxu0 0
      %3202 = vmatpush1.bf16.msra.mxu0 %v3186
      %3203 = vmatprep.subr.bf16.mxu0 0
      %3204 = vmatpush1.bf16.msra.mxu0 %v3185
      %3205 = vmatprep.subr.bf16.mxu0 0
      %3206 = vmatpush1.bf16.msra.mxu0 %v3184
      %3207 = vmatprep.subr.bf16.mxu0 0
      %3208 = vmatpush1.bf16.msra.mxu0 %v3183
      %3209 = vmatprep.subr.bf16.mxu0 0
      %3210 = vmatpush1.bf16.msra.mxu0 %v3182
      %3211 = vmatprep.subr.bf16.mxu0 0
      %3212 = vmatpush1.bf16.msra.mxu0 %v3181
      %3213 = vmatprep.subr.bf16.mxu0 0
      %3214 = vmatpush2.bf16.msra.mxu0 0
      %3215 = vmatprep.subr.bf16.mxu0 0
      %3216 = vmatpush2.bf16.msra.mxu0 0
      %3217 = vmatprep.subr.bf16.mxu0 0
      %3218 = vmatpush2.bf16.msra.mxu0 0
      %3219 = vmatprep.subr.bf16.mxu0 0
      %3220 = vmatpush2.bf16.msra.mxu0 0
      %3221 = vmatprep.subr.bf16.mxu0 0
      %3222 = vmatpush2.bf16.msra.mxu0 0
      %3223 = vmatprep.subr.bf16.mxu0 0
      %3224 = vmatpush2.bf16.msra.mxu0 0
      %3225 = vmatprep.subr.bf16.mxu0 0
      %3226 = vmatpush2.bf16.msra.mxu0 0
      %3227 = vmatprep.subr.bf16.mxu0 0
      %3228 = vmatpush2.bf16.msra.mxu0 0
      %3229 = vmatprep.mubr.bf16.mxu0 0
      %3230 = vmatmul.mubr.bf16.gmra.mxu0 %v3132
      %v3231 = vpop.f32.mrf.mxu0
      %v3232 = vadd.f32 0.0, %v3231
      %v3233 = vpop.f32.mrf.mxu0
      %v3234 = vpop.f32.mrf.mxu0
      %v3235 = vpop.f32.mrf.mxu0
      %3236 = vdwg.mxu0
      %v3237 = vadd.f32 %v3131, %v3232
      %v3238 = vld [vmem:[%s1412] sm:$0xf]
      %v3239 = vld [vmem:[%s2263] sm:$0xf]
      %v3240 = vld [vmem:[%s2263 + $0x4] sm:$0xf]
      %v3241 = vld [vmem:[%s2263 + $0x8] sm:$0xf]
      %v3242 = vld [vmem:[%s2263 + $0xc] sm:$0xf]
      %v3243 = vld [vmem:[%s2263 + $0x10] sm:$0xf]
      %v3244 = vld [vmem:[%s2263 + $0x14] sm:$0xf]
      %v3245 = vld [vmem:[%s2263 + $0x18] sm:$0xf]
      %v3246 = vld [vmem:[%s2263 + $0x1c] sm:$0xf]
      %v3247 = vld [vmem:[%s2263 + $0x20] sm:$0xf]
      %v3248 = vld [vmem:[%s2263 + $0x24] sm:$0xf]
      %v3249 = vld [vmem:[%s2263 + $0x28] sm:$0xf]
      %v3250 = vld [vmem:[%s2263 + $0x2c] sm:$0xf]
      %v3251 = vld [vmem:[%s2263 + $0x30] sm:$0xf]
      %v3252 = vld [vmem:[%s2263 + $0x34] sm:$0xf]
      %v3253 = vld [vmem:[%s2263 + $0x38] sm:$0xf]
      %v3254 = vld [vmem:[%s2263 + $0x3c] sm:$0xf]
      %v3271 = vunpack.c.l.b16 %v3239
      %v3272 = vunpack.c.l.b16 %v3240
      %v3273 = vunpack.c.l.b16 %v3241
      %v3274 = vunpack.c.l.b16 %v3242
      %v3275 = vunpack.c.l.b16 %v3243
      %v3276 = vunpack.c.l.b16 %v3244
      %v3277 = vunpack.c.l.b16 %v3245
      %v3278 = vunpack.c.l.b16 %v3246
      %v3279 = vunpack.c.l.b16 %v3247
      %v3280 = vunpack.c.l.b16 %v3248
      %v3281 = vunpack.c.l.b16 %v3249
      %v3282 = vunpack.c.l.b16 %v3250
      %v3283 = vunpack.c.l.b16 %v3251
      %v3284 = vunpack.c.l.b16 %v3252
      %v3285 = vunpack.c.l.b16 %v3253
      %v3286 = vunpack.c.l.b16 %v3254
      %v3287 = vpack.c.b16 %v3272, %v3271
      %v3288 = vpack.c.b16 %v3274, %v3273
      %v3289 = vpack.c.b16 %v3276, %v3275
      %v3290 = vpack.c.b16 %v3278, %v3277
      %v3291 = vpack.c.b16 %v3280, %v3279
      %v3292 = vpack.c.b16 %v3282, %v3281
      %v3293 = vpack.c.b16 %v3284, %v3283
      %v3294 = vpack.c.b16 %v3286, %v3285
      %3303 = vmatprep.subr.bf16.mxu0 0
      %3304 = vmatpush1.bf16.msra.mxu0 %v3294
      %3305 = vmatprep.subr.bf16.mxu0 0
      %3306 = vmatpush1.bf16.msra.mxu0 %v3293
      %3307 = vmatprep.subr.bf16.mxu0 0
      %3308 = vmatpush1.bf16.msra.mxu0 %v3292
      %3309 = vmatprep.subr.bf16.mxu0 0
      %3310 = vmatpush1.bf16.msra.mxu0 %v3291
      %3311 = vmatprep.subr.bf16.mxu0 0
      %3312 = vmatpush1.bf16.msra.mxu0 %v3290
      %3313 = vmatprep.subr.bf16.mxu0 0
      %3314 = vmatpush1.bf16.msra.mxu0 %v3289
      %3315 = vmatprep.subr.bf16.mxu0 0
      %3316 = vmatpush1.bf16.msra.mxu0 %v3288
      %3317 = vmatprep.subr.bf16.mxu0 0
      %3318 = vmatpush1.bf16.msra.mxu0 %v3287
      %3319 = vmatprep.subr.bf16.mxu0 0
      %3320 = vmatpush2.bf16.msra.mxu0 0
      %3321 = vmatprep.subr.bf16.mxu0 0
      %3322 = vmatpush2.bf16.msra.mxu0 0
      %3323 = vmatprep.subr.bf16.mxu0 0
      %3324 = vmatpush2.bf16.msra.mxu0 0
      %3325 = vmatprep.subr.bf16.mxu0 0
      %3326 = vmatpush2.bf16.msra.mxu0 0
      %3327 = vmatprep.subr.bf16.mxu0 0
      %3328 = vmatpush2.bf16.msra.mxu0 0
      %3329 = vmatprep.subr.bf16.mxu0 0
      %3330 = vmatpush2.bf16.msra.mxu0 0
      %3331 = vmatprep.subr.bf16.mxu0 0
      %3332 = vmatpush2.bf16.msra.mxu0 0
      %3333 = vmatprep.subr.bf16.mxu0 0
      %3334 = vmatpush2.bf16.msra.mxu0 0
      %3335 = vmatprep.mubr.bf16.mxu0 0
      %3336 = vmatmul.mubr.bf16.gmra.mxu0 %v3238
      %v3337 = vpop.f32.mrf.mxu0
      %v3338 = vadd.f32 0.0, %v3337
      %v3339 = vpop.f32.mrf.mxu0
      %v3340 = vpop.f32.mrf.mxu0
      %v3341 = vpop.f32.mrf.mxu0
      %3342 = vdwg.mxu0
      %v3343 = vadd.f32 %v3237, %v3338
      %v3344 = vld [vmem:[%s1459] sm:$0xf]
      %v3345 = vld [vmem:[%s2370] sm:$0xf]
      %v3346 = vld [vmem:[%s2370 + $0x4] sm:$0xf]
      %v3347 = vld [vmem:[%s2370 + $0x8] sm:$0xf]
      %v3348 = vld [vmem:[%s2370 + $0xc] sm:$0xf]
      %v3349 = vld [vmem:[%s2370 + $0x10] sm:$0xf]
      %v3350 = vld [vmem:[%s2370 + $0x14] sm:$0xf]
      %v3351 = vld [vmem:[%s2370 + $0x18] sm:$0xf]
      %v3352 = vld [vmem:[%s2370 + $0x1c] sm:$0xf]
      %v3353 = vld [vmem:[%s2370 + $0x20] sm:$0xf]
      %v3354 = vld [vmem:[%s2370 + $0x24] sm:$0xf]
      %v3355 = vld [vmem:[%s2370 + $0x28] sm:$0xf]
      %v3356 = vld [vmem:[%s2370 + $0x2c] sm:$0xf]
      %v3357 = vld [vmem:[%s2370 + $0x30] sm:$0xf]
      %v3358 = vld [vmem:[%s2370 + $0x34] sm:$0xf]
      %v3359 = vld [vmem:[%s2370 + $0x38] sm:$0xf]
      %v3360 = vld [vmem:[%s2370 + $0x3c] sm:$0xf]
      %v3377 = vunpack.c.l.b16 %v3345
      %v3378 = vunpack.c.l.b16 %v3346
      %v3379 = vunpack.c.l.b16 %v3347
      %v3380 = vunpack.c.l.b16 %v3348
      %v3381 = vunpack.c.l.b16 %v3349
      %v3382 = vunpack.c.l.b16 %v3350
      %v3383 = vunpack.c.l.b16 %v3351
      %v3384 = vunpack.c.l.b16 %v3352
      %v3385 = vunpack.c.l.b16 %v3353
      %v3386 = vunpack.c.l.b16 %v3354
      %v3387 = vunpack.c.l.b16 %v3355
      %v3388 = vunpack.c.l.b16 %v3356
      %v3389 = vunpack.c.l.b16 %v3357
      %v3390 = vunpack.c.l.b16 %v3358
      %v3391 = vunpack.c.l.b16 %v3359
      %v3392 = vunpack.c.l.b16 %v3360
      %v3393 = vpack.c.b16 %v3378, %v3377
      %v3394 = vpack.c.b16 %v3380, %v3379
      %v3395 = vpack.c.b16 %v3382, %v3381
      %v3396 = vpack.c.b16 %v3384, %v3383
      %v3397 = vpack.c.b16 %v3386, %v3385
      %v3398 = vpack.c.b16 %v3388, %v3387
      %v3399 = vpack.c.b16 %v3390, %v3389
      %v3400 = vpack.c.b16 %v3392, %v3391
      %3409 = vmatprep.subr.bf16.mxu0 0
      %3410 = vmatpush1.bf16.msra.mxu0 %v3400
      %3411 = vmatprep.subr.bf16.mxu0 0
      %3412 = vmatpush1.bf16.msra.mxu0 %v3399
      %3413 = vmatprep.subr.bf16.mxu0 0
      %3414 = vmatpush1.bf16.msra.mxu0 %v3398
      %3415 = vmatprep.subr.bf16.mxu0 0
      %3416 = vmatpush1.bf16.msra.mxu0 %v3397
      %3417 = vmatprep.subr.bf16.mxu0 0
      %3418 = vmatpush1.bf16.msra.mxu0 %v3396
      %3419 = vmatprep.subr.bf16.mxu0 0
      %3420 = vmatpush1.bf16.msra.mxu0 %v3395
      %3421 = vmatprep.subr.bf16.mxu0 0
      %3422 = vmatpush1.bf16.msra.mxu0 %v3394
      %3423 = vmatprep.subr.bf16.mxu0 0
      %3424 = vmatpush1.bf16.msra.mxu0 %v3393
      %3425 = vmatprep.subr.bf16.mxu0 0
      %3426 = vmatpush2.bf16.msra.mxu0 0
      %3427 = vmatprep.subr.bf16.mxu0 0
      %3428 = vmatpush2.bf16.msra.mxu0 0
      %3429 = vmatprep.subr.bf16.mxu0 0
      %3430 = vmatpush2.bf16.msra.mxu0 0
      %3431 = vmatprep.subr.bf16.mxu0 0
      %3432 = vmatpush2.bf16.msra.mxu0 0
      %3433 = vmatprep.subr.bf16.mxu0 0
      %3434 = vmatpush2.bf16.msra.mxu0 0
      %3435 = vmatprep.subr.bf16.mxu0 0
      %3436 = vmatpush2.bf16.msra.mxu0 0
      %3437 = vmatprep.subr.bf16.mxu0 0
      %3438 = vmatpush2.bf16.msra.mxu0 0
      %3439 = vmatprep.subr.bf16.mxu0 0
      %3440 = vmatpush2.bf16.msra.mxu0 0
      %3441 = vmatprep.mubr.bf16.mxu0 0
      %3442 = vmatmul.mubr.bf16.gmra.mxu0 %v3344
      %v3443 = vpop.f32.mrf.mxu0
      %v3444 = vadd.f32 0.0, %v3443
      %v3445 = vpop.f32.mrf.mxu0
      %v3446 = vpop.f32.mrf.mxu0
      %v3447 = vpop.f32.mrf.mxu0
      %3448 = vdwg.mxu0
      %v3449 = vadd.f32 %v3343, %v3444
      %v3450 = vld [vmem:[%s1506] sm:$0xf]
      %v3451 = vld [vmem:[%s2477] sm:$0xf]
      %v3452 = vld [vmem:[%s2477 + $0x4] sm:$0xf]
      %v3453 = vld [vmem:[%s2477 + $0x8] sm:$0xf]
      %v3454 = vld [vmem:[%s2477 + $0xc] sm:$0xf]
      %v3455 = vld [vmem:[%s2477 + $0x10] sm:$0xf]
      %v3456 = vld [vmem:[%s2477 + $0x14] sm:$0xf]
      %v3457 = vld [vmem:[%s2477 + $0x18] sm:$0xf]
      %v3458 = vld [vmem:[%s2477 + $0x1c] sm:$0xf]
      %v3459 = vld [vmem:[%s2477 + $0x20] sm:$0xf]
      %v3460 = vld [vmem:[%s2477 + $0x24] sm:$0xf]
      %v3461 = vld [vmem:[%s2477 + $0x28] sm:$0xf]
      %v3462 = vld [vmem:[%s2477 + $0x2c] sm:$0xf]
      %v3463 = vld [vmem:[%s2477 + $0x30] sm:$0xf]
      %v3464 = vld [vmem:[%s2477 + $0x34] sm:$0xf]
      %v3465 = vld [vmem:[%s2477 + $0x38] sm:$0xf]
      %v3466 = vld [vmem:[%s2477 + $0x3c] sm:$0xf]
      %v3483 = vunpack.c.l.b16 %v3451
      %v3484 = vunpack.c.l.b16 %v3452
      %v3485 = vunpack.c.l.b16 %v3453
      %v3486 = vunpack.c.l.b16 %v3454
      %v3487 = vunpack.c.l.b16 %v3455
      %v3488 = vunpack.c.l.b16 %v3456
      %v3489 = vunpack.c.l.b16 %v3457
      %v3490 = vunpack.c.l.b16 %v3458
      %v3491 = vunpack.c.l.b16 %v3459
      %v3492 = vunpack.c.l.b16 %v3460
      %v3493 = vunpack.c.l.b16 %v3461
      %v3494 = vunpack.c.l.b16 %v3462
      %v3495 = vunpack.c.l.b16 %v3463
      %v3496 = vunpack.c.l.b16 %v3464
      %v3497 = vunpack.c.l.b16 %v3465
      %v3498 = vunpack.c.l.b16 %v3466
      %v3499 = vpack.c.b16 %v3484, %v3483
      %v3500 = vpack.c.b16 %v3486, %v3485
      %v3501 = vpack.c.b16 %v3488, %v3487
      %v3502 = vpack.c.b16 %v3490, %v3489
      %v3503 = vpack.c.b16 %v3492, %v3491
      %v3504 = vpack.c.b16 %v3494, %v3493
      %v3505 = vpack.c.b16 %v3496, %v3495
      %v3506 = vpack.c.b16 %v3498, %v3497
      %3515 = vmatprep.subr.bf16.mxu0 0
      %3516 = vmatpush1.bf16.msra.mxu0 %v3506
      %3517 = vmatprep.subr.bf16.mxu0 0
      %3518 = vmatpush1.bf16.msra.mxu0 %v3505
      %3519 = vmatprep.subr.bf16.mxu0 0
      %3520 = vmatpush1.bf16.msra.mxu0 %v3504
      %3521 = vmatprep.subr.bf16.mxu0 0
      %3522 = vmatpush1.bf16.msra.mxu0 %v3503
      %3523 = vmatprep.subr.bf16.mxu0 0
      %3524 = vmatpush1.bf16.msra.mxu0 %v3502
      %3525 = vmatprep.subr.bf16.mxu0 0
      %3526 = vmatpush1.bf16.msra.mxu0 %v3501
      %3527 = vmatprep.subr.bf16.mxu0 0
      %3528 = vmatpush1.bf16.msra.mxu0 %v3500
      %3529 = vmatprep.subr.bf16.mxu0 0
      %3530 = vmatpush1.bf16.msra.mxu0 %v3499
      %3531 = vmatprep.subr.bf16.mxu0 0
      %3532 = vmatpush2.bf16.msra.mxu0 0
      %3533 = vmatprep.subr.bf16.mxu0 0
      %3534 = vmatpush2.bf16.msra.mxu0 0
      %3535 = vmatprep.subr.bf16.mxu0 0
      %3536 = vmatpush2.bf16.msra.mxu0 0
      %3537 = vmatprep.subr.bf16.mxu0 0
      %3538 = vmatpush2.bf16.msra.mxu0 0
      %3539 = vmatprep.subr.bf16.mxu0 0
      %3540 = vmatpush2.bf16.msra.mxu0 0
      %3541 = vmatprep.subr.bf16.mxu0 0
      %3542 = vmatpush2.bf16.msra.mxu0 0
      %3543 = vmatprep.subr.bf16.mxu0 0
      %3544 = vmatpush2.bf16.msra.mxu0 0
      %3545 = vmatprep.subr.bf16.mxu0 0
      %3546 = vmatpush2.bf16.msra.mxu0 0
      %3547 = vmatprep.mubr.bf16.mxu0 0
      %3548 = vmatmul.mubr.bf16.gmra.mxu0 %v3450
      %v3549 = vpop.f32.mrf.mxu0
      %v3550 = vadd.f32 0.0, %v3549
      %v3551 = vpop.f32.mrf.mxu0
      %v3552 = vpop.f32.mrf.mxu0
      %v3553 = vpop.f32.mrf.mxu0
      %3554 = vdwg.mxu0
      %v3555 = vadd.f32 %v3449, %v3550
      %v3556 = vld [vmem:[%s6] sm:$0x1]
      %v3558 = vlaneseq
      %v3559 = vshrl.u32 %v3558, 7
      %v3560 = vsub.s32 0, %v3559
      %v3561 = vrot.slane %v3556, %v3560
      %v3563 = vmul.f32 %v3555, %v3561
      %v3564 = vld [vmem:[%s7] sm:$0x1]
      %v3566 = vlaneseq
      %v3567 = vshrl.u32 %v3566, 7
      %v3568 = vsub.s32 0, %v3567
      %v3569 = vrot.slane %v3564, %v3568
      %v3571 = vadd.f32 %v3563, %v3569
      %v3572 = vmax.f32 %v3571, 0.0
      %v3573 = vpack.c.bf16 %v3572, %v3572
      %3574 = vst [vmem:[#allocation3 + $0x4] sm:$0xf] %v3573
      %v3575 = vld [vmem:[%s1024] sm:$0xf]
      %v3576 = vld [vmem:[%s5] sm:$0xf]
      %v3577 = vld [vmem:[%s5 + $0x4] sm:$0xf]
      %v3578 = vld [vmem:[%s5 + $0x8] sm:$0xf]
      %v3579 = vld [vmem:[%s5 + $0xc] sm:$0xf]
      %v3580 = vld [vmem:[%s5 + $0x10] sm:$0xf]
      %v3581 = vld [vmem:[%s5 + $0x14] sm:$0xf]
      %v3582 = vld [vmem:[%s5 + $0x18] sm:$0xf]
      %v3583 = vld [vmem:[%s5 + $0x1c] sm:$0xf]
      %v3584 = vld [vmem:[%s5 + $0x20] sm:$0xf]
      %v3585 = vld [vmem:[%s5 + $0x24] sm:$0xf]
      %v3586 = vld [vmem:[%s5 + $0x28] sm:$0xf]
      %v3587 = vld [vmem:[%s5 + $0x2c] sm:$0xf]
      %v3588 = vld [vmem:[%s5 + $0x30] sm:$0xf]
      %v3589 = vld [vmem:[%s5 + $0x34] sm:$0xf]
      %v3590 = vld [vmem:[%s5 + $0x38] sm:$0xf]
      %v3591 = vld [vmem:[%s5 + $0x3c] sm:$0xf]
      %v3592 = vld [vmem:[%s1071] sm:$0xf]
      %v3593 = vld [vmem:[%s2620] sm:$0xf]
      %v3594 = vld [vmem:[%s2620 + $0x4] sm:$0xf]
      %v3595 = vld [vmem:[%s2620 + $0x8] sm:$0xf]
      %v3596 = vld [vmem:[%s2620 + $0xc] sm:$0xf]
      %v3597 = vld [vmem:[%s2620 + $0x10] sm:$0xf]
      %v3598 = vld [vmem:[%s2620 + $0x14] sm:$0xf]
      %v3599 = vld [vmem:[%s2620 + $0x18] sm:$0xf]
      %v3600 = vld [vmem:[%s2620 + $0x1c] sm:$0xf]
      %v3601 = vld [vmem:[%s2620 + $0x20] sm:$0xf]
      %v3602 = vld [vmem:[%s2620 + $0x24] sm:$0xf]
      %v3603 = vld [vmem:[%s2620 + $0x28] sm:$0xf]
      %v3604 = vld [vmem:[%s2620 + $0x2c] sm:$0xf]
      %v3605 = vld [vmem:[%s2620 + $0x30] sm:$0xf]
      %v3606 = vld [vmem:[%s2620 + $0x34] sm:$0xf]
      %v3607 = vld [vmem:[%s2620 + $0x38] sm:$0xf]
      %v3608 = vld [vmem:[%s2620 + $0x3c] sm:$0xf]
      %v3625 = vunpack.c.l.b16 %v3593
      %v3626 = vunpack.c.l.b16 %v3594
      %v3627 = vunpack.c.l.b16 %v3595
      %v3628 = vunpack.c.l.b16 %v3596
      %v3629 = vunpack.c.l.b16 %v3597
      %v3630 = vunpack.c.l.b16 %v3598
      %v3631 = vunpack.c.l.b16 %v3599
      %v3632 = vunpack.c.l.b16 %v3600
      %v3633 = vunpack.c.l.b16 %v3601
      %v3634 = vunpack.c.l.b16 %v3602
      %v3635 = vunpack.c.l.b16 %v3603
      %v3636 = vunpack.c.l.b16 %v3604
      %v3637 = vunpack.c.l.b16 %v3605
      %v3638 = vunpack.c.l.b16 %v3606
      %v3639 = vunpack.c.l.b16 %v3607
      %v3640 = vunpack.c.l.b16 %v3608
      %v3641 = vpack.c.b16 %v3626, %v3625
      %v3642 = vpack.c.b16 %v3628, %v3627
      %v3643 = vpack.c.b16 %v3630, %v3629
      %v3644 = vpack.c.b16 %v3632, %v3631
      %v3645 = vpack.c.b16 %v3634, %v3633
      %v3646 = vpack.c.b16 %v3636, %v3635
      %v3647 = vpack.c.b16 %v3638, %v3637
      %v3648 = vpack.c.b16 %v3640, %v3639
      %3657 = vmatprep.subr.bf16.mxu0 0
      %3658 = vmatpush1.bf16.msra.mxu0 %v3648
      %3659 = vmatprep.subr.bf16.mxu0 0
      %3660 = vmatpush1.bf16.msra.mxu0 %v3647
      %3661 = vmatprep.subr.bf16.mxu0 0
      %3662 = vmatpush1.bf16.msra.mxu0 %v3646
      %3663 = vmatprep.subr.bf16.mxu0 0
      %3664 = vmatpush1.bf16.msra.mxu0 %v3645
      %3665 = vmatprep.subr.bf16.mxu0 0
      %3666 = vmatpush1.bf16.msra.mxu0 %v3644
      %3667 = vmatprep.subr.bf16.mxu0 0
      %3668 = vmatpush1.bf16.msra.mxu0 %v3643
      %3669 = vmatprep.subr.bf16.mxu0 0
      %3670 = vmatpush1.bf16.msra.mxu0 %v3642
      %3671 = vmatprep.subr.bf16.mxu0 0
      %3672 = vmatpush1.bf16.msra.mxu0 %v3641
      %3673 = vmatprep.subr.bf16.mxu0 0
      %3674 = vmatpush2.bf16.msra.mxu0 0
      %3675 = vmatprep.subr.bf16.mxu0 0
      %3676 = vmatpush2.bf16.msra.mxu0 0
      %3677 = vmatprep.subr.bf16.mxu0 0
      %3678 = vmatpush2.bf16.msra.mxu0 0
      %3679 = vmatprep.subr.bf16.mxu0 0
      %3680 = vmatpush2.bf16.msra.mxu0 0
      %3681 = vmatprep.subr.bf16.mxu0 0
      %3682 = vmatpush2.bf16.msra.mxu0 0
      %3683 = vmatprep.subr.bf16.mxu0 0
      %3684 = vmatpush2.bf16.msra.mxu0 0
      %3685 = vmatprep.subr.bf16.mxu0 0
      %3686 = vmatpush2.bf16.msra.mxu0 0
      %3687 = vmatprep.subr.bf16.mxu0 0
      %3688 = vmatpush2.bf16.msra.mxu0 0
      %3689 = vmatprep.mubr.bf16.mxu0 0
      %3690 = vmatmul.mubr.bf16.gmra.mxu0 %v3592
      %v3691 = vpop.f32.mrf.mxu0
      %v3692 = vadd.f32 0.0, %v3691
      %v3693 = vpop.f32.mrf.mxu0
      %v3694 = vpop.f32.mrf.mxu0
      %v3695 = vpop.f32.mrf.mxu0
      %3696 = vdwg.mxu0
      %v3713 = vunpack.c.l.b16 %v3576
      %v3714 = vunpack.c.l.b16 %v3577
      %v3715 = vunpack.c.l.b16 %v3578
      %v3716 = vunpack.c.l.b16 %v3579
      %v3717 = vunpack.c.l.b16 %v3580
      %v3718 = vunpack.c.l.b16 %v3581
      %v3719 = vunpack.c.l.b16 %v3582
      %v3720 = vunpack.c.l.b16 %v3583
      %v3721 = vunpack.c.l.b16 %v3584
      %v3722 = vunpack.c.l.b16 %v3585
      %v3723 = vunpack.c.l.b16 %v3586
      %v3724 = vunpack.c.l.b16 %v3587
      %v3725 = vunpack.c.l.b16 %v3588
      %v3726 = vunpack.c.l.b16 %v3589
      %v3727 = vunpack.c.l.b16 %v3590
      %v3728 = vunpack.c.l.b16 %v3591
      %v3729 = vpack.c.b16 %v3714, %v3713
      %v3730 = vpack.c.b16 %v3716, %v3715
      %v3731 = vpack.c.b16 %v3718, %v3717
      %v3732 = vpack.c.b16 %v3720, %v3719
      %v3733 = vpack.c.b16 %v3722, %v3721
      %v3734 = vpack.c.b16 %v3724, %v3723
      %v3735 = vpack.c.b16 %v3726, %v3725
      %v3736 = vpack.c.b16 %v3728, %v3727
      %3745 = vmatprep.subr.bf16.mxu0 0
      %3746 = vmatpush1.bf16.msra.mxu0 %v3736
      %3747 = vmatprep.subr.bf16.mxu0 0
      %3748 = vmatpush1.bf16.msra.mxu0 %v3735
      %3749 = vmatprep.subr.bf16.mxu0 0
      %3750 = vmatpush1.bf16.msra.mxu0 %v3734
      %3751 = vmatprep.subr.bf16.mxu0 0
      %3752 = vmatpush1.bf16.msra.mxu0 %v3733
      %3753 = vmatprep.subr.bf16.mxu0 0
      %3754 = vmatpush1.bf16.msra.mxu0 %v3732
      %3755 = vmatprep.subr.bf16.mxu0 0
      %3756 = vmatpush1.bf16.msra.mxu0 %v3731
      %3757 = vmatprep.subr.bf16.mxu0 0
      %3758 = vmatpush1.bf16.msra.mxu0 %v3730
      %3759 = vmatprep.subr.bf16.mxu0 0
      %3760 = vmatpush1.bf16.msra.mxu0 %v3729
      %3761 = vmatprep.subr.bf16.mxu0 0
      %3762 = vmatpush2.bf16.msra.mxu0 0
      %3763 = vmatprep.subr.bf16.mxu0 0
      %3764 = vmatpush2.bf16.msra.mxu0 0
      %3765 = vmatprep.subr.bf16.mxu0 0
      %3766 = vmatpush2.bf16.msra.mxu0 0
      %3767 = vmatprep.subr.bf16.mxu0 0
      %3768 = vmatpush2.bf16.msra.mxu0 0
      %3769 = vmatprep.subr.bf16.mxu0 0
      %3770 = vmatpush2.bf16.msra.mxu0 0
      %3771 = vmatprep.subr.bf16.mxu0 0
      %3772 = vmatpush2.bf16.msra.mxu0 0
      %3773 = vmatprep.subr.bf16.mxu0 0
      %3774 = vmatpush2.bf16.msra.mxu0 0
      %3775 = vmatprep.subr.bf16.mxu0 0
      %3776 = vmatpush2.bf16.msra.mxu0 0
      %3777 = vmatprep.mubr.bf16.mxu0 0
      %3778 = vmatmul.mubr.bf16.gmra.mxu0 %v3575
      %v3779 = vpop.f32.mrf.mxu0
      %v3780 = vadd.f32 %v3692, %v3779
      %v3781 = vpop.f32.mrf.mxu0
      %v3782 = vpop.f32.mrf.mxu0
      %v3783 = vpop.f32.mrf.mxu0
      %3784 = vdwg.mxu0
      %v3785 = vld [vmem:[%s1118] sm:$0xf]
      %v3786 = vld [vmem:[%s2814] sm:$0xf]
      %v3787 = vld [vmem:[%s2814 + $0x4] sm:$0xf]
      %v3788 = vld [vmem:[%s2814 + $0x8] sm:$0xf]
      %v3789 = vld [vmem:[%s2814 + $0xc] sm:$0xf]
      %v3790 = vld [vmem:[%s2814 + $0x10] sm:$0xf]
      %v3791 = vld [vmem:[%s2814 + $0x14] sm:$0xf]
      %v3792 = vld [vmem:[%s2814 + $0x18] sm:$0xf]
      %v3793 = vld [vmem:[%s2814 + $0x1c] sm:$0xf]
      %v3794 = vld [vmem:[%s2814 + $0x20] sm:$0xf]
      %v3795 = vld [vmem:[%s2814 + $0x24] sm:$0xf]
      %v3796 = vld [vmem:[%s2814 + $0x28] sm:$0xf]
      %v3797 = vld [vmem:[%s2814 + $0x2c] sm:$0xf]
      %v3798 = vld [vmem:[%s2814 + $0x30] sm:$0xf]
      %v3799 = vld [vmem:[%s2814 + $0x34] sm:$0xf]
      %v3800 = vld [vmem:[%s2814 + $0x38] sm:$0xf]
      %v3801 = vld [vmem:[%s2814 + $0x3c] sm:$0xf]
      %v3818 = vunpack.c.l.b16 %v3786
      %v3819 = vunpack.c.l.b16 %v3787
      %v3820 = vunpack.c.l.b16 %v3788
      %v3821 = vunpack.c.l.b16 %v3789
      %v3822 = vunpack.c.l.b16 %v3790
      %v3823 = vunpack.c.l.b16 %v3791
      %v3824 = vunpack.c.l.b16 %v3792
      %v3825 = vunpack.c.l.b16 %v3793
      %v3826 = vunpack.c.l.b16 %v3794
      %v3827 = vunpack.c.l.b16 %v3795
      %v3828 = vunpack.c.l.b16 %v3796
      %v3829 = vunpack.c.l.b16 %v3797
      %v3830 = vunpack.c.l.b16 %v3798
      %v3831 = vunpack.c.l.b16 %v3799
      %v3832 = vunpack.c.l.b16 %v3800
      %v3833 = vunpack.c.l.b16 %v3801
      %v3834 = vpack.c.b16 %v3819, %v3818
      %v3835 = vpack.c.b16 %v3821, %v3820
      %v3836 = vpack.c.b16 %v3823, %v3822
      %v3837 = vpack.c.b16 %v3825, %v3824
      %v3838 = vpack.c.b16 %v3827, %v3826
      %v3839 = vpack.c.b16 %v3829, %v3828
      %v3840 = vpack.c.b16 %v3831, %v3830
      %v3841 = vpack.c.b16 %v3833, %v3832
      %3850 = vmatprep.subr.bf16.mxu0 0
      %3851 = vmatpush1.bf16.msra.mxu0 %v3841
      %3852 = vmatprep.subr.bf16.mxu0 0
      %3853 = vmatpush1.bf16.msra.mxu0 %v3840
      %3854 = vmatprep.subr.bf16.mxu0 0
      %3855 = vmatpush1.bf16.msra.mxu0 %v3839
      %3856 = vmatprep.subr.bf16.mxu0 0
      %3857 = vmatpush1.bf16.msra.mxu0 %v3838
      %3858 = vmatprep.subr.bf16.mxu0 0
      %3859 = vmatpush1.bf16.msra.mxu0 %v3837
      %3860 = vmatprep.subr.bf16.mxu0 0
      %3861 = vmatpush1.bf16.msra.mxu0 %v3836
      %3862 = vmatprep.subr.bf16.mxu0 0
      %3863 = vmatpush1.bf16.msra.mxu0 %v3835
      %3864 = vmatprep.subr.bf16.mxu0 0
      %3865 = vmatpush1.bf16.msra.mxu0 %v3834
      %3866 = vmatprep.subr.bf16.mxu0 0
      %3867 = vmatpush2.bf16.msra.mxu0 0
      %3868 = vmatprep.subr.bf16.mxu0 0
      %3869 = vmatpush2.bf16.msra.mxu0 0
      %3870 = vmatprep.subr.bf16.mxu0 0
      %3871 = vmatpush2.bf16.msra.mxu0 0
      %3872 = vmatprep.subr.bf16.mxu0 0
      %3873 = vmatpush2.bf16.msra.mxu0 0
      %3874 = vmatprep.subr.bf16.mxu0 0
      %3875 = vmatpush2.bf16.msra.mxu0 0
      %3876 = vmatprep.subr.bf16.mxu0 0
      %3877 = vmatpush2.bf16.msra.mxu0 0
      %3878 = vmatprep.subr.bf16.mxu0 0
      %3879 = vmatpush2.bf16.msra.mxu0 0
      %3880 = vmatprep.subr.bf16.mxu0 0
      %3881 = vmatpush2.bf16.msra.mxu0 0
      %3882 = vmatprep.mubr.bf16.mxu0 0
      %3883 = vmatmul.mubr.bf16.gmra.mxu0 %v3785
      %v3884 = vpop.f32.mrf.mxu0
      %v3885 = vadd.f32 0.0, %v3884
      %v3886 = vpop.f32.mrf.mxu0
      %v3887 = vpop.f32.mrf.mxu0
      %v3888 = vpop.f32.mrf.mxu0
      %3889 = vdwg.mxu0
      %v3890 = vadd.f32 %v3780, %v3885
      %v3891 = vld [vmem:[%s1412] sm:$0xf]
      %v3892 = vld [vmem:[%s1944] sm:$0xf]
      %v3893 = vld [vmem:[%s1944 + $0x4] sm:$0xf]
      %v3894 = vld [vmem:[%s1944 + $0x8] sm:$0xf]
      %v3895 = vld [vmem:[%s1944 + $0xc] sm:$0xf]
      %v3896 = vld [vmem:[%s1944 + $0x10] sm:$0xf]
      %v3897 = vld [vmem:[%s1944 + $0x14] sm:$0xf]
      %v3898 = vld [vmem:[%s1944 + $0x18] sm:$0xf]
      %v3899 = vld [vmem:[%s1944 + $0x1c] sm:$0xf]
      %v3900 = vld [vmem:[%s1944 + $0x20] sm:$0xf]
      %v3901 = vld [vmem:[%s1944 + $0x24] sm:$0xf]
      %v3902 = vld [vmem:[%s1944 + $0x28] sm:$0xf]
      %v3903 = vld [vmem:[%s1944 + $0x2c] sm:$0xf]
      %v3904 = vld [vmem:[%s1944 + $0x30] sm:$0xf]
      %v3905 = vld [vmem:[%s1944 + $0x34] sm:$0xf]
      %v3906 = vld [vmem:[%s1944 + $0x38] sm:$0xf]
      %v3907 = vld [vmem:[%s1944 + $0x3c] sm:$0xf]
      %v3924 = vunpack.c.l.b16 %v3892
      %v3925 = vunpack.c.l.b16 %v3893
      %v3926 = vunpack.c.l.b16 %v3894
      %v3927 = vunpack.c.l.b16 %v3895
      %v3928 = vunpack.c.l.b16 %v3896
      %v3929 = vunpack.c.l.b16 %v3897
      %v3930 = vunpack.c.l.b16 %v3898
      %v3931 = vunpack.c.l.b16 %v3899
      %v3932 = vunpack.c.l.b16 %v3900
      %v3933 = vunpack.c.l.b16 %v3901
      %v3934 = vunpack.c.l.b16 %v3902
      %v3935 = vunpack.c.l.b16 %v3903
      %v3936 = vunpack.c.l.b16 %v3904
      %v3937 = vunpack.c.l.b16 %v3905
      %v3938 = vunpack.c.l.b16 %v3906
      %v3939 = vunpack.c.l.b16 %v3907
      %v3940 = vpack.c.b16 %v3925, %v3924
      %v3941 = vpack.c.b16 %v3927, %v3926
      %v3942 = vpack.c.b16 %v3929, %v3928
      %v3943 = vpack.c.b16 %v3931, %v3930
      %v3944 = vpack.c.b16 %v3933, %v3932
      %v3945 = vpack.c.b16 %v3935, %v3934
      %v3946 = vpack.c.b16 %v3937, %v3936
      %v3947 = vpack.c.b16 %v3939, %v3938
      %3956 = vmatprep.subr.bf16.mxu0 0
      %3957 = vmatpush1.bf16.msra.mxu0 %v3947
      %3958 = vmatprep.subr.bf16.mxu0 0
      %3959 = vmatpush1.bf16.msra.mxu0 %v3946
      %3960 = vmatprep.subr.bf16.mxu0 0
      %3961 = vmatpush1.bf16.msra.mxu0 %v3945
      %3962 = vmatprep.subr.bf16.mxu0 0
      %3963 = vmatpush1.bf16.msra.mxu0 %v3944
      %3964 = vmatprep.subr.bf16.mxu0 0
      %3965 = vmatpush1.bf16.msra.mxu0 %v3943
      %3966 = vmatprep.subr.bf16.mxu0 0
      %3967 = vmatpush1.bf16.msra.mxu0 %v3942
      %3968 = vmatprep.subr.bf16.mxu0 0
      %3969 = vmatpush1.bf16.msra.mxu0 %v3941
      %3970 = vmatprep.subr.bf16.mxu0 0
      %3971 = vmatpush1.bf16.msra.mxu0 %v3940
      %3972 = vmatprep.subr.bf16.mxu0 0
      %3973 = vmatpush2.bf16.msra.mxu0 0
      %3974 = vmatprep.subr.bf16.mxu0 0
      %3975 = vmatpush2.bf16.msra.mxu0 0
      %3976 = vmatprep.subr.bf16.mxu0 0
      %3977 = vmatpush2.bf16.msra.mxu0 0
      %3978 = vmatprep.subr.bf16.mxu0 0
      %3979 = vmatpush2.bf16.msra.mxu0 0
      %3980 = vmatprep.subr.bf16.mxu0 0
      %3981 = vmatpush2.bf16.msra.mxu0 0
      %3982 = vmatprep.subr.bf16.mxu0 0
      %3983 = vmatpush2.bf16.msra.mxu0 0
      %3984 = vmatprep.subr.bf16.mxu0 0
      %3985 = vmatpush2.bf16.msra.mxu0 0
      %3986 = vmatprep.subr.bf16.mxu0 0
      %3987 = vmatpush2.bf16.msra.mxu0 0
      %3988 = vmatprep.mubr.bf16.mxu0 0
      %3989 = vmatmul.mubr.bf16.gmra.mxu0 %v3891
      %v3990 = vpop.f32.mrf.mxu0
      %v3991 = vadd.f32 0.0, %v3990
      %v3992 = vpop.f32.mrf.mxu0
      %v3993 = vpop.f32.mrf.mxu0
      %v3994 = vpop.f32.mrf.mxu0
      %3995 = vdwg.mxu0
      %v3996 = vadd.f32 %v3890, %v3991
      %v3997 = vld [vmem:[%s1459] sm:$0xf]
      %v3998 = vld [vmem:[%s1962] sm:$0xf]
      %v3999 = vld [vmem:[%s1962 + $0x4] sm:$0xf]
      %v4000 = vld [vmem:[%s1962 + $0x8] sm:$0xf]
      %v4001 = vld [vmem:[%s1962 + $0xc] sm:$0xf]
      %v4002 = vld [vmem:[%s1962 + $0x10] sm:$0xf]
      %v4003 = vld [vmem:[%s1962 + $0x14] sm:$0xf]
      %v4004 = vld [vmem:[%s1962 + $0x18] sm:$0xf]
      %v4005 = vld [vmem:[%s1962 + $0x1c] sm:$0xf]
      %v4006 = vld [vmem:[%s1962 + $0x20] sm:$0xf]
      %v4007 = vld [vmem:[%s1962 + $0x24] sm:$0xf]
      %v4008 = vld [vmem:[%s1962 + $0x28] sm:$0xf]
      %v4009 = vld [vmem:[%s1962 + $0x2c] sm:$0xf]
      %v4010 = vld [vmem:[%s1962 + $0x30] sm:$0xf]
      %v4011 = vld [vmem:[%s1962 + $0x34] sm:$0xf]
      %v4012 = vld [vmem:[%s1962 + $0x38] sm:$0xf]
      %v4013 = vld [vmem:[%s1962 + $0x3c] sm:$0xf]
      %v4030 = vunpack.c.l.b16 %v3998
      %v4031 = vunpack.c.l.b16 %v3999
      %v4032 = vunpack.c.l.b16 %v4000
      %v4033 = vunpack.c.l.b16 %v4001
      %v4034 = vunpack.c.l.b16 %v4002
      %v4035 = vunpack.c.l.b16 %v4003
      %v4036 = vunpack.c.l.b16 %v4004
      %v4037 = vunpack.c.l.b16 %v4005
      %v4038 = vunpack.c.l.b16 %v4006
      %v4039 = vunpack.c.l.b16 %v4007
      %v4040 = vunpack.c.l.b16 %v4008
      %v4041 = vunpack.c.l.b16 %v4009
      %v4042 = vunpack.c.l.b16 %v4010
      %v4043 = vunpack.c.l.b16 %v4011
      %v4044 = vunpack.c.l.b16 %v4012
      %v4045 = vunpack.c.l.b16 %v4013
      %v4046 = vpack.c.b16 %v4031, %v4030
      %v4047 = vpack.c.b16 %v4033, %v4032
      %v4048 = vpack.c.b16 %v4035, %v4034
      %v4049 = vpack.c.b16 %v4037, %v4036
      %v4050 = vpack.c.b16 %v4039, %v4038
      %v4051 = vpack.c.b16 %v4041, %v4040
      %v4052 = vpack.c.b16 %v4043, %v4042
      %v4053 = vpack.c.b16 %v4045, %v4044
      %4062 = vmatprep.subr.bf16.mxu0 0
      %4063 = vmatpush1.bf16.msra.mxu0 %v4053
      %4064 = vmatprep.subr.bf16.mxu0 0
      %4065 = vmatpush1.bf16.msra.mxu0 %v4052
      %4066 = vmatprep.subr.bf16.mxu0 0
      %4067 = vmatpush1.bf16.msra.mxu0 %v4051
      %4068 = vmatprep.subr.bf16.mxu0 0
      %4069 = vmatpush1.bf16.msra.mxu0 %v4050
      %4070 = vmatprep.subr.bf16.mxu0 0
      %4071 = vmatpush1.bf16.msra.mxu0 %v4049
      %4072 = vmatprep.subr.bf16.mxu0 0
      %4073 = vmatpush1.bf16.msra.mxu0 %v4048
      %4074 = vmatprep.subr.bf16.mxu0 0
      %4075 = vmatpush1.bf16.msra.mxu0 %v4047
      %4076 = vmatprep.subr.bf16.mxu0 0
      %4077 = vmatpush1.bf16.msra.mxu0 %v4046
      %4078 = vmatprep.subr.bf16.mxu0 0
      %4079 = vmatpush2.bf16.msra.mxu0 0
      %4080 = vmatprep.subr.bf16.mxu0 0
      %4081 = vmatpush2.bf16.msra.mxu0 0
      %4082 = vmatprep.subr.bf16.mxu0 0
      %4083 = vmatpush2.bf16.msra.mxu0 0
      %4084 = vmatprep.subr.bf16.mxu0 0
      %4085 = vmatpush2.bf16.msra.mxu0 0
      %4086 = vmatprep.subr.bf16.mxu0 0
      %4087 = vmatpush2.bf16.msra.mxu0 0
      %4088 = vmatprep.subr.bf16.mxu0 0
      %4089 = vmatpush2.bf16.msra.mxu0 0
      %4090 = vmatprep.subr.bf16.mxu0 0
      %4091 = vmatpush2.bf16.msra.mxu0 0
      %4092 = vmatprep.subr.bf16.mxu0 0
      %4093 = vmatpush2.bf16.msra.mxu0 0
      %4094 = vmatprep.mubr.bf16.mxu0 0
      %4095 = vmatmul.mubr.bf16.gmra.mxu0 %v3997
      %v4096 = vpop.f32.mrf.mxu0
      %v4097 = vadd.f32 0.0, %v4096
      %v4098 = vpop.f32.mrf.mxu0
      %v4099 = vpop.f32.mrf.mxu0
      %v4100 = vpop.f32.mrf.mxu0
      %4101 = vdwg.mxu0
      %v4102 = vadd.f32 %v3996, %v4097
      %v4103 = vld [vmem:[%s1506] sm:$0xf]
      %v4104 = vld [vmem:[%s2156] sm:$0xf]
      %v4105 = vld [vmem:[%s2156 + $0x4] sm:$0xf]
      %v4106 = vld [vmem:[%s2156 + $0x8] sm:$0xf]
      %v4107 = vld [vmem:[%s2156 + $0xc] sm:$0xf]
      %v4108 = vld [vmem:[%s2156 + $0x10] sm:$0xf]
      %v4109 = vld [vmem:[%s2156 + $0x14] sm:$0xf]
      %v4110 = vld [vmem:[%s2156 + $0x18] sm:$0xf]
      %v4111 = vld [vmem:[%s2156 + $0x1c] sm:$0xf]
      %v4112 = vld [vmem:[%s2156 + $0x20] sm:$0xf]
      %v4113 = vld [vmem:[%s2156 + $0x24] sm:$0xf]
      %v4114 = vld [vmem:[%s2156 + $0x28] sm:$0xf]
      %v4115 = vld [vmem:[%s2156 + $0x2c] sm:$0xf]
      %v4116 = vld [vmem:[%s2156 + $0x30] sm:$0xf]
      %v4117 = vld [vmem:[%s2156 + $0x34] sm:$0xf]
      %v4118 = vld [vmem:[%s2156 + $0x38] sm:$0xf]
      %v4119 = vld [vmem:[%s2156 + $0x3c] sm:$0xf]
      %v4136 = vunpack.c.l.b16 %v4104
      %v4137 = vunpack.c.l.b16 %v4105
      %v4138 = vunpack.c.l.b16 %v4106
      %v4139 = vunpack.c.l.b16 %v4107
      %v4140 = vunpack.c.l.b16 %v4108
      %v4141 = vunpack.c.l.b16 %v4109
      %v4142 = vunpack.c.l.b16 %v4110
      %v4143 = vunpack.c.l.b16 %v4111
      %v4144 = vunpack.c.l.b16 %v4112
      %v4145 = vunpack.c.l.b16 %v4113
      %v4146 = vunpack.c.l.b16 %v4114
      %v4147 = vunpack.c.l.b16 %v4115
      %v4148 = vunpack.c.l.b16 %v4116
      %v4149 = vunpack.c.l.b16 %v4117
      %v4150 = vunpack.c.l.b16 %v4118
      %v4151 = vunpack.c.l.b16 %v4119
      %v4152 = vpack.c.b16 %v4137, %v4136
      %v4153 = vpack.c.b16 %v4139, %v4138
      %v4154 = vpack.c.b16 %v4141, %v4140
      %v4155 = vpack.c.b16 %v4143, %v4142
      %v4156 = vpack.c.b16 %v4145, %v4144
      %v4157 = vpack.c.b16 %v4147, %v4146
      %v4158 = vpack.c.b16 %v4149, %v4148
      %v4159 = vpack.c.b16 %v4151, %v4150
      %4168 = vmatprep.subr.bf16.mxu0 0
      %4169 = vmatpush1.bf16.msra.mxu0 %v4159
      %4170 = vmatprep.subr.bf16.mxu0 0
      %4171 = vmatpush1.bf16.msra.mxu0 %v4158
      %4172 = vmatprep.subr.bf16.mxu0 0
      %4173 = vmatpush1.bf16.msra.mxu0 %v4157
      %4174 = vmatprep.subr.bf16.mxu0 0
      %4175 = vmatpush1.bf16.msra.mxu0 %v4156
      %4176 = vmatprep.subr.bf16.mxu0 0
      %4177 = vmatpush1.bf16.msra.mxu0 %v4155
      %4178 = vmatprep.subr.bf16.mxu0 0
      %4179 = vmatpush1.bf16.msra.mxu0 %v4154
      %4180 = vmatprep.subr.bf16.mxu0 0
      %4181 = vmatpush1.bf16.msra.mxu0 %v4153
      %4182 = vmatprep.subr.bf16.mxu0 0
      %4183 = vmatpush1.bf16.msra.mxu0 %v4152
      %4184 = vmatprep.subr.bf16.mxu0 0
      %4185 = vmatpush2.bf16.msra.mxu0 0
      %4186 = vmatprep.subr.bf16.mxu0 0
      %4187 = vmatpush2.bf16.msra.mxu0 0
      %4188 = vmatprep.subr.bf16.mxu0 0
      %4189 = vmatpush2.bf16.msra.mxu0 0
      %4190 = vmatprep.subr.bf16.mxu0 0
      %4191 = vmatpush2.bf16.msra.mxu0 0
      %4192 = vmatprep.subr.bf16.mxu0 0
      %4193 = vmatpush2.bf16.msra.mxu0 0
      %4194 = vmatprep.subr.bf16.mxu0 0
      %4195 = vmatpush2.bf16.msra.mxu0 0
      %4196 = vmatprep.subr.bf16.mxu0 0
      %4197 = vmatpush2.bf16.msra.mxu0 0
      %4198 = vmatprep.subr.bf16.mxu0 0
      %4199 = vmatpush2.bf16.msra.mxu0 0
      %4200 = vmatprep.mubr.bf16.mxu0 0
      %4201 = vmatmul.mubr.bf16.gmra.mxu0 %v4103
      %v4202 = vpop.f32.mrf.mxu0
      %v4203 = vadd.f32 0.0, %v4202
      %v4204 = vpop.f32.mrf.mxu0
      %v4205 = vpop.f32.mrf.mxu0
      %v4206 = vpop.f32.mrf.mxu0
      %4207 = vdwg.mxu0
      %v4208 = vadd.f32 %v4102, %v4203
      %v4209 = vld [vmem:[%s1800] sm:$0xf]
      %v4210 = vld [vmem:[%s2263] sm:$0xf]
      %v4211 = vld [vmem:[%s2263 + $0x4] sm:$0xf]
      %v4212 = vld [vmem:[%s2263 + $0x8] sm:$0xf]
      %v4213 = vld [vmem:[%s2263 + $0xc] sm:$0xf]
      %v4214 = vld [vmem:[%s2263 + $0x10] sm:$0xf]
      %v4215 = vld [vmem:[%s2263 + $0x14] sm:$0xf]
      %v4216 = vld [vmem:[%s2263 + $0x18] sm:$0xf]
      %v4217 = vld [vmem:[%s2263 + $0x1c] sm:$0xf]
      %v4218 = vld [vmem:[%s2263 + $0x20] sm:$0xf]
      %v4219 = vld [vmem:[%s2263 + $0x24] sm:$0xf]
      %v4220 = vld [vmem:[%s2263 + $0x28] sm:$0xf]
      %v4221 = vld [vmem:[%s2263 + $0x2c] sm:$0xf]
      %v4222 = vld [vmem:[%s2263 + $0x30] sm:$0xf]
      %v4223 = vld [vmem:[%s2263 + $0x34] sm:$0xf]
      %v4224 = vld [vmem:[%s2263 + $0x38] sm:$0xf]
      %v4225 = vld [vmem:[%s2263 + $0x3c] sm:$0xf]
      %v4242 = vunpack.c.l.b16 %v4210
      %v4243 = vunpack.c.l.b16 %v4211
      %v4244 = vunpack.c.l.b16 %v4212
      %v4245 = vunpack.c.l.b16 %v4213
      %v4246 = vunpack.c.l.b16 %v4214
      %v4247 = vunpack.c.l.b16 %v4215
      %v4248 = vunpack.c.l.b16 %v4216
      %v4249 = vunpack.c.l.b16 %v4217
      %v4250 = vunpack.c.l.b16 %v4218
      %v4251 = vunpack.c.l.b16 %v4219
      %v4252 = vunpack.c.l.b16 %v4220
      %v4253 = vunpack.c.l.b16 %v4221
      %v4254 = vunpack.c.l.b16 %v4222
      %v4255 = vunpack.c.l.b16 %v4223
      %v4256 = vunpack.c.l.b16 %v4224
      %v4257 = vunpack.c.l.b16 %v4225
      %v4258 = vpack.c.b16 %v4243, %v4242
      %v4259 = vpack.c.b16 %v4245, %v4244
      %v4260 = vpack.c.b16 %v4247, %v4246
      %v4261 = vpack.c.b16 %v4249, %v4248
      %v4262 = vpack.c.b16 %v4251, %v4250
      %v4263 = vpack.c.b16 %v4253, %v4252
      %v4264 = vpack.c.b16 %v4255, %v4254
      %v4265 = vpack.c.b16 %v4257, %v4256
      %4274 = vmatprep.subr.bf16.mxu0 0
      %4275 = vmatpush1.bf16.msra.mxu0 %v4265
      %4276 = vmatprep.subr.bf16.mxu0 0
      %4277 = vmatpush1.bf16.msra.mxu0 %v4264
      %4278 = vmatprep.subr.bf16.mxu0 0
      %4279 = vmatpush1.bf16.msra.mxu0 %v4263
      %4280 = vmatprep.subr.bf16.mxu0 0
      %4281 = vmatpush1.bf16.msra.mxu0 %v4262
      %4282 = vmatprep.subr.bf16.mxu0 0
      %4283 = vmatpush1.bf16.msra.mxu0 %v4261
      %4284 = vmatprep.subr.bf16.mxu0 0
      %4285 = vmatpush1.bf16.msra.mxu0 %v4260
      %4286 = vmatprep.subr.bf16.mxu0 0
      %4287 = vmatpush1.bf16.msra.mxu0 %v4259
      %4288 = vmatprep.subr.bf16.mxu0 0
      %4289 = vmatpush1.bf16.msra.mxu0 %v4258
      %4290 = vmatprep.subr.bf16.mxu0 0
      %4291 = vmatpush2.bf16.msra.mxu0 0
      %4292 = vmatprep.subr.bf16.mxu0 0
      %4293 = vmatpush2.bf16.msra.mxu0 0
      %4294 = vmatprep.subr.bf16.mxu0 0
      %4295 = vmatpush2.bf16.msra.mxu0 0
      %4296 = vmatprep.subr.bf16.mxu0 0
      %4297 = vmatpush2.bf16.msra.mxu0 0
      %4298 = vmatprep.subr.bf16.mxu0 0
      %4299 = vmatpush2.bf16.msra.mxu0 0
      %4300 = vmatprep.subr.bf16.mxu0 0
      %4301 = vmatpush2.bf16.msra.mxu0 0
      %4302 = vmatprep.subr.bf16.mxu0 0
      %4303 = vmatpush2.bf16.msra.mxu0 0
      %4304 = vmatprep.subr.bf16.mxu0 0
      %4305 = vmatpush2.bf16.msra.mxu0 0
      %4306 = vmatprep.mubr.bf16.mxu0 0
      %4307 = vmatmul.mubr.bf16.gmra.mxu0 %v4209
      %v4308 = vpop.f32.mrf.mxu0
      %v4309 = vadd.f32 0.0, %v4308
      %v4310 = vpop.f32.mrf.mxu0
      %v4311 = vpop.f32.mrf.mxu0
      %v4312 = vpop.f32.mrf.mxu0
      %4313 = vdwg.mxu0
      %v4314 = vadd.f32 %v4208, %v4309
      %v4315 = vld [vmem:[%s1847] sm:$0xf]
      %v4316 = vld [vmem:[%s2370] sm:$0xf]
      %v4317 = vld [vmem:[%s2370 + $0x4] sm:$0xf]
      %v4318 = vld [vmem:[%s2370 + $0x8] sm:$0xf]
      %v4319 = vld [vmem:[%s2370 + $0xc] sm:$0xf]
      %v4320 = vld [vmem:[%s2370 + $0x10] sm:$0xf]
      %v4321 = vld [vmem:[%s2370 + $0x14] sm:$0xf]
      %v4322 = vld [vmem:[%s2370 + $0x18] sm:$0xf]
      %v4323 = vld [vmem:[%s2370 + $0x1c] sm:$0xf]
      %v4324 = vld [vmem:[%s2370 + $0x20] sm:$0xf]
      %v4325 = vld [vmem:[%s2370 + $0x24] sm:$0xf]
      %v4326 = vld [vmem:[%s2370 + $0x28] sm:$0xf]
      %v4327 = vld [vmem:[%s2370 + $0x2c] sm:$0xf]
      %v4328 = vld [vmem:[%s2370 + $0x30] sm:$0xf]
      %v4329 = vld [vmem:[%s2370 + $0x34] sm:$0xf]
      %v4330 = vld [vmem:[%s2370 + $0x38] sm:$0xf]
      %v4331 = vld [vmem:[%s2370 + $0x3c] sm:$0xf]
      %v4348 = vunpack.c.l.b16 %v4316
      %v4349 = vunpack.c.l.b16 %v4317
      %v4350 = vunpack.c.l.b16 %v4318
      %v4351 = vunpack.c.l.b16 %v4319
      %v4352 = vunpack.c.l.b16 %v4320
      %v4353 = vunpack.c.l.b16 %v4321
      %v4354 = vunpack.c.l.b16 %v4322
      %v4355 = vunpack.c.l.b16 %v4323
      %v4356 = vunpack.c.l.b16 %v4324
      %v4357 = vunpack.c.l.b16 %v4325
      %v4358 = vunpack.c.l.b16 %v4326
      %v4359 = vunpack.c.l.b16 %v4327
      %v4360 = vunpack.c.l.b16 %v4328
      %v4361 = vunpack.c.l.b16 %v4329
      %v4362 = vunpack.c.l.b16 %v4330
      %v4363 = vunpack.c.l.b16 %v4331
      %v4364 = vpack.c.b16 %v4349, %v4348
      %v4365 = vpack.c.b16 %v4351, %v4350
      %v4366 = vpack.c.b16 %v4353, %v4352
      %v4367 = vpack.c.b16 %v4355, %v4354
      %v4368 = vpack.c.b16 %v4357, %v4356
      %v4369 = vpack.c.b16 %v4359, %v4358
      %v4370 = vpack.c.b16 %v4361, %v4360
      %v4371 = vpack.c.b16 %v4363, %v4362
      %4380 = vmatprep.subr.bf16.mxu0 0
      %4381 = vmatpush1.bf16.msra.mxu0 %v4371
      %4382 = vmatprep.subr.bf16.mxu0 0
      %4383 = vmatpush1.bf16.msra.mxu0 %v4370
      %4384 = vmatprep.subr.bf16.mxu0 0
      %4385 = vmatpush1.bf16.msra.mxu0 %v4369
      %4386 = vmatprep.subr.bf16.mxu0 0
      %4387 = vmatpush1.bf16.msra.mxu0 %v4368
      %4388 = vmatprep.subr.bf16.mxu0 0
      %4389 = vmatpush1.bf16.msra.mxu0 %v4367
      %4390 = vmatprep.subr.bf16.mxu0 0
      %4391 = vmatpush1.bf16.msra.mxu0 %v4366
      %4392 = vmatprep.subr.bf16.mxu0 0
      %4393 = vmatpush1.bf16.msra.mxu0 %v4365
      %4394 = vmatprep.subr.bf16.mxu0 0
      %4395 = vmatpush1.bf16.msra.mxu0 %v4364
      %4396 = vmatprep.subr.bf16.mxu0 0
      %4397 = vmatpush2.bf16.msra.mxu0 0
      %4398 = vmatprep.subr.bf16.mxu0 0
      %4399 = vmatpush2.bf16.msra.mxu0 0
      %4400 = vmatprep.subr.bf16.mxu0 0
      %4401 = vmatpush2.bf16.msra.mxu0 0
      %4402 = vmatprep.subr.bf16.mxu0 0
      %4403 = vmatpush2.bf16.msra.mxu0 0
      %4404 = vmatprep.subr.bf16.mxu0 0
      %4405 = vmatpush2.bf16.msra.mxu0 0
      %4406 = vmatprep.subr.bf16.mxu0 0
      %4407 = vmatpush2.bf16.msra.mxu0 0
      %4408 = vmatprep.subr.bf16.mxu0 0
      %4409 = vmatpush2.bf16.msra.mxu0 0
      %4410 = vmatprep.subr.bf16.mxu0 0
      %4411 = vmatpush2.bf16.msra.mxu0 0
      %4412 = vmatprep.mubr.bf16.mxu0 0
      %4413 = vmatmul.mubr.bf16.gmra.mxu0 %v4315
      %v4414 = vpop.f32.mrf.mxu0
      %v4415 = vadd.f32 0.0, %v4414
      %v4416 = vpop.f32.mrf.mxu0
      %v4417 = vpop.f32.mrf.mxu0
      %v4418 = vpop.f32.mrf.mxu0
      %4419 = vdwg.mxu0
      %v4420 = vadd.f32 %v4314, %v4415
      %v4421 = vld [vmem:[%s1894] sm:$0xf]
      %v4422 = vld [vmem:[%s2477] sm:$0xf]
      %v4423 = vld [vmem:[%s2477 + $0x4] sm:$0xf]
      %v4424 = vld [vmem:[%s2477 + $0x8] sm:$0xf]
      %v4425 = vld [vmem:[%s2477 + $0xc] sm:$0xf]
      %v4426 = vld [vmem:[%s2477 + $0x10] sm:$0xf]
      %v4427 = vld [vmem:[%s2477 + $0x14] sm:$0xf]
      %v4428 = vld [vmem:[%s2477 + $0x18] sm:$0xf]
      %v4429 = vld [vmem:[%s2477 + $0x1c] sm:$0xf]
      %v4430 = vld [vmem:[%s2477 + $0x20] sm:$0xf]
      %v4431 = vld [vmem:[%s2477 + $0x24] sm:$0xf]
      %v4432 = vld [vmem:[%s2477 + $0x28] sm:$0xf]
      %v4433 = vld [vmem:[%s2477 + $0x2c] sm:$0xf]
      %v4434 = vld [vmem:[%s2477 + $0x30] sm:$0xf]
      %v4435 = vld [vmem:[%s2477 + $0x34] sm:$0xf]
      %v4436 = vld [vmem:[%s2477 + $0x38] sm:$0xf]
      %v4437 = vld [vmem:[%s2477 + $0x3c] sm:$0xf]
      %v4454 = vunpack.c.l.b16 %v4422
      %v4455 = vunpack.c.l.b16 %v4423
      %v4456 = vunpack.c.l.b16 %v4424
      %v4457 = vunpack.c.l.b16 %v4425
      %v4458 = vunpack.c.l.b16 %v4426
      %v4459 = vunpack.c.l.b16 %v4427
      %v4460 = vunpack.c.l.b16 %v4428
      %v4461 = vunpack.c.l.b16 %v4429
      %v4462 = vunpack.c.l.b16 %v4430
      %v4463 = vunpack.c.l.b16 %v4431
      %v4464 = vunpack.c.l.b16 %v4432
      %v4465 = vunpack.c.l.b16 %v4433
      %v4466 = vunpack.c.l.b16 %v4434
      %v4467 = vunpack.c.l.b16 %v4435
      %v4468 = vunpack.c.l.b16 %v4436
      %v4469 = vunpack.c.l.b16 %v4437
      %v4470 = vpack.c.b16 %v4455, %v4454
      %v4471 = vpack.c.b16 %v4457, %v4456
      %v4472 = vpack.c.b16 %v4459, %v4458
      %v4473 = vpack.c.b16 %v4461, %v4460
      %v4474 = vpack.c.b16 %v4463, %v4462
      %v4475 = vpack.c.b16 %v4465, %v4464
      %v4476 = vpack.c.b16 %v4467, %v4466
      %v4477 = vpack.c.b16 %v4469, %v4468
      %4486 = vmatprep.subr.bf16.mxu0 0
      %4487 = vmatpush1.bf16.msra.mxu0 %v4477
      %4488 = vmatprep.subr.bf16.mxu0 0
      %4489 = vmatpush1.bf16.msra.mxu0 %v4476
      %4490 = vmatprep.subr.bf16.mxu0 0
      %4491 = vmatpush1.bf16.msra.mxu0 %v4475
      %4492 = vmatprep.subr.bf16.mxu0 0
      %4493 = vmatpush1.bf16.msra.mxu0 %v4474
      %4494 = vmatprep.subr.bf16.mxu0 0
      %4495 = vmatpush1.bf16.msra.mxu0 %v4473
      %4496 = vmatprep.subr.bf16.mxu0 0
      %4497 = vmatpush1.bf16.msra.mxu0 %v4472
      %4498 = vmatprep.subr.bf16.mxu0 0
      %4499 = vmatpush1.bf16.msra.mxu0 %v4471
      %4500 = vmatprep.subr.bf16.mxu0 0
      %4501 = vmatpush1.bf16.msra.mxu0 %v4470
      %4502 = vmatprep.subr.bf16.mxu0 0
      %4503 = vmatpush2.bf16.msra.mxu0 0
      %4504 = vmatprep.subr.bf16.mxu0 0
      %4505 = vmatpush2.bf16.msra.mxu0 0
      %4506 = vmatprep.subr.bf16.mxu0 0
      %4507 = vmatpush2.bf16.msra.mxu0 0
      %4508 = vmatprep.subr.bf16.mxu0 0
      %4509 = vmatpush2.bf16.msra.mxu0 0
      %4510 = vmatprep.subr.bf16.mxu0 0
      %4511 = vmatpush2.bf16.msra.mxu0 0
      %4512 = vmatprep.subr.bf16.mxu0 0
      %4513 = vmatpush2.bf16.msra.mxu0 0
      %4514 = vmatprep.subr.bf16.mxu0 0
      %4515 = vmatpush2.bf16.msra.mxu0 0
      %4516 = vmatprep.subr.bf16.mxu0 0
      %4517 = vmatpush2.bf16.msra.mxu0 0
      %4518 = vmatprep.mubr.bf16.mxu0 0
      %4519 = vmatmul.mubr.bf16.gmra.mxu0 %v4421
      %v4520 = vpop.f32.mrf.mxu0
      %v4521 = vadd.f32 0.0, %v4520
      %v4522 = vpop.f32.mrf.mxu0
      %v4523 = vpop.f32.mrf.mxu0
      %v4524 = vpop.f32.mrf.mxu0
      %4525 = vdwg.mxu0
      %v4526 = vadd.f32 %v4420, %v4521
      %v4527 = vld [vmem:[%s6] sm:$0x1]
      %v4529 = vlaneseq
      %v4530 = vshrl.u32 %v4529, 7
      %v4531 = vsub.s32 0, %v4530
      %v4532 = vrot.slane %v4527, %v4531
      %v4534 = vmul.f32 %v4526, %v4532
      %v4535 = vld [vmem:[%s7] sm:$0x1]
      %v4537 = vlaneseq
      %v4538 = vshrl.u32 %v4537, 7
      %v4539 = vsub.s32 0, %v4538
      %v4540 = vrot.slane %v4535, %v4539
      %v4542 = vadd.f32 %v4534, %v4540
      %v4543 = vmax.f32 %v4542, 0.0
      %v4544 = vpack.c.bf16 %v4543, %v4543
      %4545 = vst [vmem:[#allocation3 + $0x8] sm:$0xf] %v4544
      %v4546 = vld [vmem:[%s1412] sm:$0xf]
      %v4547 = vld [vmem:[%s5] sm:$0xf]
      %v4548 = vld [vmem:[%s5 + $0x4] sm:$0xf]
      %v4549 = vld [vmem:[%s5 + $0x8] sm:$0xf]
      %v4550 = vld [vmem:[%s5 + $0xc] sm:$0xf]
      %v4551 = vld [vmem:[%s5 + $0x10] sm:$0xf]
      %v4552 = vld [vmem:[%s5 + $0x14] sm:$0xf]
      %v4553 = vld [vmem:[%s5 + $0x18] sm:$0xf]
      %v4554 = vld [vmem:[%s5 + $0x1c] sm:$0xf]
      %v4555 = vld [vmem:[%s5 + $0x20] sm:$0xf]
      %v4556 = vld [vmem:[%s5 + $0x24] sm:$0xf]
      %v4557 = vld [vmem:[%s5 + $0x28] sm:$0xf]
      %v4558 = vld [vmem:[%s5 + $0x2c] sm:$0xf]
      %v4559 = vld [vmem:[%s5 + $0x30] sm:$0xf]
      %v4560 = vld [vmem:[%s5 + $0x34] sm:$0xf]
      %v4561 = vld [vmem:[%s5 + $0x38] sm:$0xf]
      %v4562 = vld [vmem:[%s5 + $0x3c] sm:$0xf]
      %v4563 = vld [vmem:[%s1459] sm:$0xf]
      %v4564 = vld [vmem:[%s2620] sm:$0xf]
      %v4565 = vld [vmem:[%s2620 + $0x4] sm:$0xf]
      %v4566 = vld [vmem:[%s2620 + $0x8] sm:$0xf]
      %v4567 = vld [vmem:[%s2620 + $0xc] sm:$0xf]
      %v4568 = vld [vmem:[%s2620 + $0x10] sm:$0xf]
      %v4569 = vld [vmem:[%s2620 + $0x14] sm:$0xf]
      %v4570 = vld [vmem:[%s2620 + $0x18] sm:$0xf]
      %v4571 = vld [vmem:[%s2620 + $0x1c] sm:$0xf]
      %v4572 = vld [vmem:[%s2620 + $0x20] sm:$0xf]
      %v4573 = vld [vmem:[%s2620 + $0x24] sm:$0xf]
      %v4574 = vld [vmem:[%s2620 + $0x28] sm:$0xf]
      %v4575 = vld [vmem:[%s2620 + $0x2c] sm:$0xf]
      %v4576 = vld [vmem:[%s2620 + $0x30] sm:$0xf]
      %v4577 = vld [vmem:[%s2620 + $0x34] sm:$0xf]
      %v4578 = vld [vmem:[%s2620 + $0x38] sm:$0xf]
      %v4579 = vld [vmem:[%s2620 + $0x3c] sm:$0xf]
      %v4596 = vunpack.c.l.b16 %v4564
      %v4597 = vunpack.c.l.b16 %v4565
      %v4598 = vunpack.c.l.b16 %v4566
      %v4599 = vunpack.c.l.b16 %v4567
      %v4600 = vunpack.c.l.b16 %v4568
      %v4601 = vunpack.c.l.b16 %v4569
      %v4602 = vunpack.c.l.b16 %v4570
      %v4603 = vunpack.c.l.b16 %v4571
      %v4604 = vunpack.c.l.b16 %v4572
      %v4605 = vunpack.c.l.b16 %v4573
      %v4606 = vunpack.c.l.b16 %v4574
      %v4607 = vunpack.c.l.b16 %v4575
      %v4608 = vunpack.c.l.b16 %v4576
      %v4609 = vunpack.c.l.b16 %v4577
      %v4610 = vunpack.c.l.b16 %v4578
      %v4611 = vunpack.c.l.b16 %v4579
      %v4612 = vpack.c.b16 %v4597, %v4596
      %v4613 = vpack.c.b16 %v4599, %v4598
      %v4614 = vpack.c.b16 %v4601, %v4600
      %v4615 = vpack.c.b16 %v4603, %v4602
      %v4616 = vpack.c.b16 %v4605, %v4604
      %v4617 = vpack.c.b16 %v4607, %v4606
      %v4618 = vpack.c.b16 %v4609, %v4608
      %v4619 = vpack.c.b16 %v4611, %v4610
      %4628 = vmatprep.subr.bf16.mxu0 0
      %4629 = vmatpush1.bf16.msra.mxu0 %v4619
      %4630 = vmatprep.subr.bf16.mxu0 0
      %4631 = vmatpush1.bf16.msra.mxu0 %v4618
      %4632 = vmatprep.subr.bf16.mxu0 0
      %4633 = vmatpush1.bf16.msra.mxu0 %v4617
      %4634 = vmatprep.subr.bf16.mxu0 0
      %4635 = vmatpush1.bf16.msra.mxu0 %v4616
      %4636 = vmatprep.subr.bf16.mxu0 0
      %4637 = vmatpush1.bf16.msra.mxu0 %v4615
      %4638 = vmatprep.subr.bf16.mxu0 0
      %4639 = vmatpush1.bf16.msra.mxu0 %v4614
      %4640 = vmatprep.subr.bf16.mxu0 0
      %4641 = vmatpush1.bf16.msra.mxu0 %v4613
      %4642 = vmatprep.subr.bf16.mxu0 0
      %4643 = vmatpush1.bf16.msra.mxu0 %v4612
      %4644 = vmatprep.subr.bf16.mxu0 0
      %4645 = vmatpush2.bf16.msra.mxu0 0
      %4646 = vmatprep.subr.bf16.mxu0 0
      %4647 = vmatpush2.bf16.msra.mxu0 0
      %4648 = vmatprep.subr.bf16.mxu0 0
      %4649 = vmatpush2.bf16.msra.mxu0 0
      %4650 = vmatprep.subr.bf16.mxu0 0
      %4651 = vmatpush2.bf16.msra.mxu0 0
      %4652 = vmatprep.subr.bf16.mxu0 0
      %4653 = vmatpush2.bf16.msra.mxu0 0
      %4654 = vmatprep.subr.bf16.mxu0 0
      %4655 = vmatpush2.bf16.msra.mxu0 0
      %4656 = vmatprep.subr.bf16.mxu0 0
      %4657 = vmatpush2.bf16.msra.mxu0 0
      %4658 = vmatprep.subr.bf16.mxu0 0
      %4659 = vmatpush2.bf16.msra.mxu0 0
      %4660 = vmatprep.mubr.bf16.mxu0 0
      %4661 = vmatmul.mubr.bf16.gmra.mxu0 %v4563
      %v4662 = vpop.f32.mrf.mxu0
      %v4663 = vadd.f32 0.0, %v4662
      %v4664 = vpop.f32.mrf.mxu0
      %v4665 = vpop.f32.mrf.mxu0
      %v4666 = vpop.f32.mrf.mxu0
      %4667 = vdwg.mxu0
      %v4684 = vunpack.c.l.b16 %v4547
      %v4685 = vunpack.c.l.b16 %v4548
      %v4686 = vunpack.c.l.b16 %v4549
      %v4687 = vunpack.c.l.b16 %v4550
      %v4688 = vunpack.c.l.b16 %v4551
      %v4689 = vunpack.c.l.b16 %v4552
      %v4690 = vunpack.c.l.b16 %v4553
      %v4691 = vunpack.c.l.b16 %v4554
      %v4692 = vunpack.c.l.b16 %v4555
      %v4693 = vunpack.c.l.b16 %v4556
      %v4694 = vunpack.c.l.b16 %v4557
      %v4695 = vunpack.c.l.b16 %v4558
      %v4696 = vunpack.c.l.b16 %v4559
      %v4697 = vunpack.c.l.b16 %v4560
      %v4698 = vunpack.c.l.b16 %v4561
      %v4699 = vunpack.c.l.b16 %v4562
      %v4700 = vpack.c.b16 %v4685, %v4684
      %v4701 = vpack.c.b16 %v4687, %v4686
      %v4702 = vpack.c.b16 %v4689, %v4688
      %v4703 = vpack.c.b16 %v4691, %v4690
      %v4704 = vpack.c.b16 %v4693, %v4692
      %v4705 = vpack.c.b16 %v4695, %v4694
      %v4706 = vpack.c.b16 %v4697, %v4696
      %v4707 = vpack.c.b16 %v4699, %v4698
      %4716 = vmatprep.subr.bf16.mxu0 0
      %4717 = vmatpush1.bf16.msra.mxu0 %v4707
      %4718 = vmatprep.subr.bf16.mxu0 0
      %4719 = vmatpush1.bf16.msra.mxu0 %v4706
      %4720 = vmatprep.subr.bf16.mxu0 0
      %4721 = vmatpush1.bf16.msra.mxu0 %v4705
      %4722 = vmatprep.subr.bf16.mxu0 0
      %4723 = vmatpush1.bf16.msra.mxu0 %v4704
      %4724 = vmatprep.subr.bf16.mxu0 0
      %4725 = vmatpush1.bf16.msra.mxu0 %v4703
      %4726 = vmatprep.subr.bf16.mxu0 0
      %4727 = vmatpush1.bf16.msra.mxu0 %v4702
      %4728 = vmatprep.subr.bf16.mxu0 0
      %4729 = vmatpush1.bf16.msra.mxu0 %v4701
      %4730 = vmatprep.subr.bf16.mxu0 0
      %4731 = vmatpush1.bf16.msra.mxu0 %v4700
      %4732 = vmatprep.subr.bf16.mxu0 0
      %4733 = vmatpush2.bf16.msra.mxu0 0
      %4734 = vmatprep.subr.bf16.mxu0 0
      %4735 = vmatpush2.bf16.msra.mxu0 0
      %4736 = vmatprep.subr.bf16.mxu0 0
      %4737 = vmatpush2.bf16.msra.mxu0 0
      %4738 = vmatprep.subr.bf16.mxu0 0
      %4739 = vmatpush2.bf16.msra.mxu0 0
      %4740 = vmatprep.subr.bf16.mxu0 0
      %4741 = vmatpush2.bf16.msra.mxu0 0
      %4742 = vmatprep.subr.bf16.mxu0 0
      %4743 = vmatpush2.bf16.msra.mxu0 0
      %4744 = vmatprep.subr.bf16.mxu0 0
      %4745 = vmatpush2.bf16.msra.mxu0 0
      %4746 = vmatprep.subr.bf16.mxu0 0
      %4747 = vmatpush2.bf16.msra.mxu0 0
      %4748 = vmatprep.mubr.bf16.mxu0 0
      %4749 = vmatmul.mubr.bf16.gmra.mxu0 %v4546
      %v4750 = vpop.f32.mrf.mxu0
      %v4751 = vadd.f32 %v4663, %v4750
      %v4752 = vpop.f32.mrf.mxu0
      %v4753 = vpop.f32.mrf.mxu0
      %v4754 = vpop.f32.mrf.mxu0
      %4755 = vdwg.mxu0
      %v4756 = vld [vmem:[%s1506] sm:$0xf]
      %v4757 = vld [vmem:[%s2814] sm:$0xf]
      %v4758 = vld [vmem:[%s2814 + $0x4] sm:$0xf]
      %v4759 = vld [vmem:[%s2814 + $0x8] sm:$0xf]
      %v4760 = vld [vmem:[%s2814 + $0xc] sm:$0xf]
      %v4761 = vld [vmem:[%s2814 + $0x10] sm:$0xf]
      %v4762 = vld [vmem:[%s2814 + $0x14] sm:$0xf]
      %v4763 = vld [vmem:[%s2814 + $0x18] sm:$0xf]
      %v4764 = vld [vmem:[%s2814 + $0x1c] sm:$0xf]
      %v4765 = vld [vmem:[%s2814 + $0x20] sm:$0xf]
      %v4766 = vld [vmem:[%s2814 + $0x24] sm:$0xf]
      %v4767 = vld [vmem:[%s2814 + $0x28] sm:$0xf]
      %v4768 = vld [vmem:[%s2814 + $0x2c] sm:$0xf]
      %v4769 = vld [vmem:[%s2814 + $0x30] sm:$0xf]
      %v4770 = vld [vmem:[%s2814 + $0x34] sm:$0xf]
      %v4771 = vld [vmem:[%s2814 + $0x38] sm:$0xf]
      %v4772 = vld [vmem:[%s2814 + $0x3c] sm:$0xf]
      %v4789 = vunpack.c.l.b16 %v4757
      %v4790 = vunpack.c.l.b16 %v4758
      %v4791 = vunpack.c.l.b16 %v4759
      %v4792 = vunpack.c.l.b16 %v4760
      %v4793 = vunpack.c.l.b16 %v4761
      %v4794 = vunpack.c.l.b16 %v4762
      %v4795 = vunpack.c.l.b16 %v4763
      %v4796 = vunpack.c.l.b16 %v4764
      %v4797 = vunpack.c.l.b16 %v4765
      %v4798 = vunpack.c.l.b16 %v4766
      %v4799 = vunpack.c.l.b16 %v4767
      %v4800 = vunpack.c.l.b16 %v4768
      %v4801 = vunpack.c.l.b16 %v4769
      %v4802 = vunpack.c.l.b16 %v4770
      %v4803 = vunpack.c.l.b16 %v4771
      %v4804 = vunpack.c.l.b16 %v4772
      %v4805 = vpack.c.b16 %v4790, %v4789
      %v4806 = vpack.c.b16 %v4792, %v4791
      %v4807 = vpack.c.b16 %v4794, %v4793
      %v4808 = vpack.c.b16 %v4796, %v4795
      %v4809 = vpack.c.b16 %v4798, %v4797
      %v4810 = vpack.c.b16 %v4800, %v4799
      %v4811 = vpack.c.b16 %v4802, %v4801
      %v4812 = vpack.c.b16 %v4804, %v4803
      %4821 = vmatprep.subr.bf16.mxu0 0
      %4822 = vmatpush1.bf16.msra.mxu0 %v4812
      %4823 = vmatprep.subr.bf16.mxu0 0
      %4824 = vmatpush1.bf16.msra.mxu0 %v4811
      %4825 = vmatprep.subr.bf16.mxu0 0
      %4826 = vmatpush1.bf16.msra.mxu0 %v4810
      %4827 = vmatprep.subr.bf16.mxu0 0
      %4828 = vmatpush1.bf16.msra.mxu0 %v4809
      %4829 = vmatprep.subr.bf16.mxu0 0
      %4830 = vmatpush1.bf16.msra.mxu0 %v4808
      %4831 = vmatprep.subr.bf16.mxu0 0
      %4832 = vmatpush1.bf16.msra.mxu0 %v4807
      %4833 = vmatprep.subr.bf16.mxu0 0
      %4834 = vmatpush1.bf16.msra.mxu0 %v4806
      %4835 = vmatprep.subr.bf16.mxu0 0
      %4836 = vmatpush1.bf16.msra.mxu0 %v4805
      %4837 = vmatprep.subr.bf16.mxu0 0
      %4838 = vmatpush2.bf16.msra.mxu0 0
      %4839 = vmatprep.subr.bf16.mxu0 0
      %4840 = vmatpush2.bf16.msra.mxu0 0
      %4841 = vmatprep.subr.bf16.mxu0 0
      %4842 = vmatpush2.bf16.msra.mxu0 0
      %4843 = vmatprep.subr.bf16.mxu0 0
      %4844 = vmatpush2.bf16.msra.mxu0 0
      %4845 = vmatprep.subr.bf16.mxu0 0
      %4846 = vmatpush2.bf16.msra.mxu0 0
      %4847 = vmatprep.subr.bf16.mxu0 0
      %4848 = vmatpush2.bf16.msra.mxu0 0
      %4849 = vmatprep.subr.bf16.mxu0 0
      %4850 = vmatpush2.bf16.msra.mxu0 0
      %4851 = vmatprep.subr.bf16.mxu0 0
      %4852 = vmatpush2.bf16.msra.mxu0 0
      %4853 = vmatprep.mubr.bf16.mxu0 0
      %4854 = vmatmul.mubr.bf16.gmra.mxu0 %v4756
      %v4855 = vpop.f32.mrf.mxu0
      %v4856 = vadd.f32 0.0, %v4855
      %v4857 = vpop.f32.mrf.mxu0
      %v4858 = vpop.f32.mrf.mxu0
      %v4859 = vpop.f32.mrf.mxu0
      %4860 = vdwg.mxu0
      %v4861 = vadd.f32 %v4751, %v4856
      %v4862 = vld [vmem:[%s1800] sm:$0xf]
      %v4863 = vld [vmem:[%s1944] sm:$0xf]
      %v4864 = vld [vmem:[%s1944 + $0x4] sm:$0xf]
      %v4865 = vld [vmem:[%s1944 + $0x8] sm:$0xf]
      %v4866 = vld [vmem:[%s1944 + $0xc] sm:$0xf]
      %v4867 = vld [vmem:[%s1944 + $0x10] sm:$0xf]
      %v4868 = vld [vmem:[%s1944 + $0x14] sm:$0xf]
      %v4869 = vld [vmem:[%s1944 + $0x18] sm:$0xf]
      %v4870 = vld [vmem:[%s1944 + $0x1c] sm:$0xf]
      %v4871 = vld [vmem:[%s1944 + $0x20] sm:$0xf]
      %v4872 = vld [vmem:[%s1944 + $0x24] sm:$0xf]
      %v4873 = vld [vmem:[%s1944 + $0x28] sm:$0xf]
      %v4874 = vld [vmem:[%s1944 + $0x2c] sm:$0xf]
      %v4875 = vld [vmem:[%s1944 + $0x30] sm:$0xf]
      %v4876 = vld [vmem:[%s1944 + $0x34] sm:$0xf]
      %v4877 = vld [vmem:[%s1944 + $0x38] sm:$0xf]
      %v4878 = vld [vmem:[%s1944 + $0x3c] sm:$0xf]
      %v4895 = vunpack.c.l.b16 %v4863
      %v4896 = vunpack.c.l.b16 %v4864
      %v4897 = vunpack.c.l.b16 %v4865
      %v4898 = vunpack.c.l.b16 %v4866
      %v4899 = vunpack.c.l.b16 %v4867
      %v4900 = vunpack.c.l.b16 %v4868
      %v4901 = vunpack.c.l.b16 %v4869
      %v4902 = vunpack.c.l.b16 %v4870
      %v4903 = vunpack.c.l.b16 %v4871
      %v4904 = vunpack.c.l.b16 %v4872
      %v4905 = vunpack.c.l.b16 %v4873
      %v4906 = vunpack.c.l.b16 %v4874
      %v4907 = vunpack.c.l.b16 %v4875
      %v4908 = vunpack.c.l.b16 %v4876
      %v4909 = vunpack.c.l.b16 %v4877
      %v4910 = vunpack.c.l.b16 %v4878
      %v4911 = vpack.c.b16 %v4896, %v4895
      %v4912 = vpack.c.b16 %v4898, %v4897
      %v4913 = vpack.c.b16 %v4900, %v4899
      %v4914 = vpack.c.b16 %v4902, %v4901
      %v4915 = vpack.c.b16 %v4904, %v4903
      %v4916 = vpack.c.b16 %v4906, %v4905
      %v4917 = vpack.c.b16 %v4908, %v4907
      %v4918 = vpack.c.b16 %v4910, %v4909
      %4927 = vmatprep.subr.bf16.mxu0 0
      %4928 = vmatpush1.bf16.msra.mxu0 %v4918
      %4929 = vmatprep.subr.bf16.mxu0 0
      %4930 = vmatpush1.bf16.msra.mxu0 %v4917
      %4931 = vmatprep.subr.bf16.mxu0 0
      %4932 = vmatpush1.bf16.msra.mxu0 %v4916
      %4933 = vmatprep.subr.bf16.mxu0 0
      %4934 = vmatpush1.bf16.msra.mxu0 %v4915
      %4935 = vmatprep.subr.bf16.mxu0 0
      %4936 = vmatpush1.bf16.msra.mxu0 %v4914
      %4937 = vmatprep.subr.bf16.mxu0 0
      %4938 = vmatpush1.bf16.msra.mxu0 %v4913
      %4939 = vmatprep.subr.bf16.mxu0 0
      %4940 = vmatpush1.bf16.msra.mxu0 %v4912
      %4941 = vmatprep.subr.bf16.mxu0 0
      %4942 = vmatpush1.bf16.msra.mxu0 %v4911
      %4943 = vmatprep.subr.bf16.mxu0 0
      %4944 = vmatpush2.bf16.msra.mxu0 0
      %4945 = vmatprep.subr.bf16.mxu0 0
      %4946 = vmatpush2.bf16.msra.mxu0 0
      %4947 = vmatprep.subr.bf16.mxu0 0
      %4948 = vmatpush2.bf16.msra.mxu0 0
      %4949 = vmatprep.subr.bf16.mxu0 0
      %4950 = vmatpush2.bf16.msra.mxu0 0
      %4951 = vmatprep.subr.bf16.mxu0 0
      %4952 = vmatpush2.bf16.msra.mxu0 0
      %4953 = vmatprep.subr.bf16.mxu0 0
      %4954 = vmatpush2.bf16.msra.mxu0 0
      %4955 = vmatprep.subr.bf16.mxu0 0
      %4956 = vmatpush2.bf16.msra.mxu0 0
      %4957 = vmatprep.subr.bf16.mxu0 0
      %4958 = vmatpush2.bf16.msra.mxu0 0
      %4959 = vmatprep.mubr.bf16.mxu0 0
      %4960 = vmatmul.mubr.bf16.gmra.mxu0 %v4862
      %v4961 = vpop.f32.mrf.mxu0
      %v4962 = vadd.f32 0.0, %v4961
      %v4963 = vpop.f32.mrf.mxu0
      %v4964 = vpop.f32.mrf.mxu0
      %v4965 = vpop.f32.mrf.mxu0
      %4966 = vdwg.mxu0
      %v4967 = vadd.f32 %v4861, %v4962
      %v4968 = vld [vmem:[%s1847] sm:$0xf]
      %v4969 = vld [vmem:[%s1962] sm:$0xf]
      %v4970 = vld [vmem:[%s1962 + $0x4] sm:$0xf]
      %v4971 = vld [vmem:[%s1962 + $0x8] sm:$0xf]
      %v4972 = vld [vmem:[%s1962 + $0xc] sm:$0xf]
      %v4973 = vld [vmem:[%s1962 + $0x10] sm:$0xf]
      %v4974 = vld [vmem:[%s1962 + $0x14] sm:$0xf]
      %v4975 = vld [vmem:[%s1962 + $0x18] sm:$0xf]
      %v4976 = vld [vmem:[%s1962 + $0x1c] sm:$0xf]
      %v4977 = vld [vmem:[%s1962 + $0x20] sm:$0xf]
      %v4978 = vld [vmem:[%s1962 + $0x24] sm:$0xf]
      %v4979 = vld [vmem:[%s1962 + $0x28] sm:$0xf]
      %v4980 = vld [vmem:[%s1962 + $0x2c] sm:$0xf]
      %v4981 = vld [vmem:[%s1962 + $0x30] sm:$0xf]
      %v4982 = vld [vmem:[%s1962 + $0x34] sm:$0xf]
      %v4983 = vld [vmem:[%s1962 + $0x38] sm:$0xf]
      %v4984 = vld [vmem:[%s1962 + $0x3c] sm:$0xf]
      %v5001 = vunpack.c.l.b16 %v4969
      %v5002 = vunpack.c.l.b16 %v4970
      %v5003 = vunpack.c.l.b16 %v4971
      %v5004 = vunpack.c.l.b16 %v4972
      %v5005 = vunpack.c.l.b16 %v4973
      %v5006 = vunpack.c.l.b16 %v4974
      %v5007 = vunpack.c.l.b16 %v4975
      %v5008 = vunpack.c.l.b16 %v4976
      %v5009 = vunpack.c.l.b16 %v4977
      %v5010 = vunpack.c.l.b16 %v4978
      %v5011 = vunpack.c.l.b16 %v4979
      %v5012 = vunpack.c.l.b16 %v4980
      %v5013 = vunpack.c.l.b16 %v4981
      %v5014 = vunpack.c.l.b16 %v4982
      %v5015 = vunpack.c.l.b16 %v4983
      %v5016 = vunpack.c.l.b16 %v4984
      %v5017 = vpack.c.b16 %v5002, %v5001
      %v5018 = vpack.c.b16 %v5004, %v5003
      %v5019 = vpack.c.b16 %v5006, %v5005
      %v5020 = vpack.c.b16 %v5008, %v5007
      %v5021 = vpack.c.b16 %v5010, %v5009
      %v5022 = vpack.c.b16 %v5012, %v5011
      %v5023 = vpack.c.b16 %v5014, %v5013
      %v5024 = vpack.c.b16 %v5016, %v5015
      %5033 = vmatprep.subr.bf16.mxu0 0
      %5034 = vmatpush1.bf16.msra.mxu0 %v5024
      %5035 = vmatprep.subr.bf16.mxu0 0
      %5036 = vmatpush1.bf16.msra.mxu0 %v5023
      %5037 = vmatprep.subr.bf16.mxu0 0
      %5038 = vmatpush1.bf16.msra.mxu0 %v5022
      %5039 = vmatprep.subr.bf16.mxu0 0
      %5040 = vmatpush1.bf16.msra.mxu0 %v5021
      %5041 = vmatprep.subr.bf16.mxu0 0
      %5042 = vmatpush1.bf16.msra.mxu0 %v5020
      %5043 = vmatprep.subr.bf16.mxu0 0
      %5044 = vmatpush1.bf16.msra.mxu0 %v5019
      %5045 = vmatprep.subr.bf16.mxu0 0
      %5046 = vmatpush1.bf16.msra.mxu0 %v5018
      %5047 = vmatprep.subr.bf16.mxu0 0
      %5048 = vmatpush1.bf16.msra.mxu0 %v5017
      %5049 = vmatprep.subr.bf16.mxu0 0
      %5050 = vmatpush2.bf16.msra.mxu0 0
      %5051 = vmatprep.subr.bf16.mxu0 0
      %5052 = vmatpush2.bf16.msra.mxu0 0
      %5053 = vmatprep.subr.bf16.mxu0 0
      %5054 = vmatpush2.bf16.msra.mxu0 0
      %5055 = vmatprep.subr.bf16.mxu0 0
      %5056 = vmatpush2.bf16.msra.mxu0 0
      %5057 = vmatprep.subr.bf16.mxu0 0
      %5058 = vmatpush2.bf16.msra.mxu0 0
      %5059 = vmatprep.subr.bf16.mxu0 0
      %5060 = vmatpush2.bf16.msra.mxu0 0
      %5061 = vmatprep.subr.bf16.mxu0 0
      %5062 = vmatpush2.bf16.msra.mxu0 0
      %5063 = vmatprep.subr.bf16.mxu0 0
      %5064 = vmatpush2.bf16.msra.mxu0 0
      %5065 = vmatprep.mubr.bf16.mxu0 0
      %5066 = vmatmul.mubr.bf16.gmra.mxu0 %v4968
      %v5067 = vpop.f32.mrf.mxu0
      %v5068 = vadd.f32 0.0, %v5067
      %v5069 = vpop.f32.mrf.mxu0
      %v5070 = vpop.f32.mrf.mxu0
      %v5071 = vpop.f32.mrf.mxu0
      %5072 = vdwg.mxu0
      %v5073 = vadd.f32 %v4967, %v5068
      %v5074 = vld [vmem:[%s1894] sm:$0xf]
      %v5075 = vld [vmem:[%s2156] sm:$0xf]
      %v5076 = vld [vmem:[%s2156 + $0x4] sm:$0xf]
      %v5077 = vld [vmem:[%s2156 + $0x8] sm:$0xf]
      %v5078 = vld [vmem:[%s2156 + $0xc] sm:$0xf]
      %v5079 = vld [vmem:[%s2156 + $0x10] sm:$0xf]
      %v5080 = vld [vmem:[%s2156 + $0x14] sm:$0xf]
      %v5081 = vld [vmem:[%s2156 + $0x18] sm:$0xf]
      %v5082 = vld [vmem:[%s2156 + $0x1c] sm:$0xf]
      %v5083 = vld [vmem:[%s2156 + $0x20] sm:$0xf]
      %v5084 = vld [vmem:[%s2156 + $0x24] sm:$0xf]
      %v5085 = vld [vmem:[%s2156 + $0x28] sm:$0xf]
      %v5086 = vld [vmem:[%s2156 + $0x2c] sm:$0xf]
      %v5087 = vld [vmem:[%s2156 + $0x30] sm:$0xf]
      %v5088 = vld [vmem:[%s2156 + $0x34] sm:$0xf]
      %v5089 = vld [vmem:[%s2156 + $0x38] sm:$0xf]
      %v5090 = vld [vmem:[%s2156 + $0x3c] sm:$0xf]
      %v5107 = vunpack.c.l.b16 %v5075
      %v5108 = vunpack.c.l.b16 %v5076
      %v5109 = vunpack.c.l.b16 %v5077
      %v5110 = vunpack.c.l.b16 %v5078
      %v5111 = vunpack.c.l.b16 %v5079
      %v5112 = vunpack.c.l.b16 %v5080
      %v5113 = vunpack.c.l.b16 %v5081
      %v5114 = vunpack.c.l.b16 %v5082
      %v5115 = vunpack.c.l.b16 %v5083
      %v5116 = vunpack.c.l.b16 %v5084
      %v5117 = vunpack.c.l.b16 %v5085
      %v5118 = vunpack.c.l.b16 %v5086
      %v5119 = vunpack.c.l.b16 %v5087
      %v5120 = vunpack.c.l.b16 %v5088
      %v5121 = vunpack.c.l.b16 %v5089
      %v5122 = vunpack.c.l.b16 %v5090
      %v5123 = vpack.c.b16 %v5108, %v5107
      %v5124 = vpack.c.b16 %v5110, %v5109
      %v5125 = vpack.c.b16 %v5112, %v5111
      %v5126 = vpack.c.b16 %v5114, %v5113
      %v5127 = vpack.c.b16 %v5116, %v5115
      %v5128 = vpack.c.b16 %v5118, %v5117
      %v5129 = vpack.c.b16 %v5120, %v5119
      %v5130 = vpack.c.b16 %v5122, %v5121
      %5139 = vmatprep.subr.bf16.mxu0 0
      %5140 = vmatpush1.bf16.msra.mxu0 %v5130
      %5141 = vmatprep.subr.bf16.mxu0 0
      %5142 = vmatpush1.bf16.msra.mxu0 %v5129
      %5143 = vmatprep.subr.bf16.mxu0 0
      %5144 = vmatpush1.bf16.msra.mxu0 %v5128
      %5145 = vmatprep.subr.bf16.mxu0 0
      %5146 = vmatpush1.bf16.msra.mxu0 %v5127
      %5147 = vmatprep.subr.bf16.mxu0 0
      %5148 = vmatpush1.bf16.msra.mxu0 %v5126
      %5149 = vmatprep.subr.bf16.mxu0 0
      %5150 = vmatpush1.bf16.msra.mxu0 %v5125
      %5151 = vmatprep.subr.bf16.mxu0 0
      %5152 = vmatpush1.bf16.msra.mxu0 %v5124
      %5153 = vmatprep.subr.bf16.mxu0 0
      %5154 = vmatpush1.bf16.msra.mxu0 %v5123
      %5155 = vmatprep.subr.bf16.mxu0 0
      %5156 = vmatpush2.bf16.msra.mxu0 0
      %5157 = vmatprep.subr.bf16.mxu0 0
      %5158 = vmatpush2.bf16.msra.mxu0 0
      %5159 = vmatprep.subr.bf16.mxu0 0
      %5160 = vmatpush2.bf16.msra.mxu0 0
      %5161 = vmatprep.subr.bf16.mxu0 0
      %5162 = vmatpush2.bf16.msra.mxu0 0
      %5163 = vmatprep.subr.bf16.mxu0 0
      %5164 = vmatpush2.bf16.msra.mxu0 0
      %5165 = vmatprep.subr.bf16.mxu0 0
      %5166 = vmatpush2.bf16.msra.mxu0 0
      %5167 = vmatprep.subr.bf16.mxu0 0
      %5168 = vmatpush2.bf16.msra.mxu0 0
      %5169 = vmatprep.subr.bf16.mxu0 0
      %5170 = vmatpush2.bf16.msra.mxu0 0
      %5171 = vmatprep.mubr.bf16.mxu0 0
      %5172 = vmatmul.mubr.bf16.gmra.mxu0 %v5074
      %v5173 = vpop.f32.mrf.mxu0
      %v5174 = vadd.f32 0.0, %v5173
      %v5175 = vpop.f32.mrf.mxu0
      %v5176 = vpop.f32.mrf.mxu0
      %v5177 = vpop.f32.mrf.mxu0
      %5178 = vdwg.mxu0
      %v5179 = vadd.f32 %v5073, %v5174
      %v5180 = vld [vmem:[%s6] sm:$0x1]
      %v5182 = vlaneseq
      %v5183 = vshrl.u32 %v5182, 7
      %v5184 = vsub.s32 0, %v5183
      %v5185 = vrot.slane %v5180, %v5184
      %v5187 = vmul.f32 %v5179, %v5185
      %v5188 = vld [vmem:[%s7] sm:$0x1]
      %v5190 = vlaneseq
      %v5191 = vshrl.u32 %v5190, 7
      %v5192 = vsub.s32 0, %v5191
      %v5193 = vrot.slane %v5188, %v5192
      %v5195 = vadd.f32 %v5187, %v5193
      %v5196 = vmax.f32 %v5195, 0.0
      %v5197 = vpack.c.bf16 %v5196, %v5196
      %5198 = vst [vmem:[#allocation3 + $0xc] sm:$0xf] %v5197
      %v5199 = vld [vmem:[#allocation3] sm:$0xf]
      %v5200 = vld [vmem:[#allocation3 + $0x4] sm:$0xf]
      %v5201 = vld [vmem:[#allocation3 + $0x8] sm:$0xf]
      %v5202 = vld [vmem:[#allocation3 + $0xc] sm:$0xf]
      %v5203 = vld [vmem:[%s8] sm:$0xf]
      %v5204 = vld [vmem:[%s8 + $0x4] sm:$0xf]
      %v5205 = vld [vmem:[%s8 + $0x8] sm:$0xf]
      %v5206 = vld [vmem:[%s8 + $0xc] sm:$0xf]
      %v5207 = vld [vmem:[%s8 + $0x10] sm:$0xf]
      %v5208 = vld [vmem:[%s8 + $0x14] sm:$0xf]
      %v5209 = vld [vmem:[%s8 + $0x18] sm:$0xf]
      %v5210 = vld [vmem:[%s8 + $0x1c] sm:$0xf]
      %v5211 = vld [vmem:[%s8 + $0x20] sm:$0xf]
      %v5212 = vld [vmem:[%s8 + $0x24] sm:$0xf]
      %v5213 = vld [vmem:[%s8 + $0x28] sm:$0xf]
      %v5214 = vld [vmem:[%s8 + $0x2c] sm:$0xf]
      %v5215 = vld [vmem:[%s8 + $0x30] sm:$0xf]
      %v5216 = vld [vmem:[%s8 + $0x34] sm:$0xf]
      %v5217 = vld [vmem:[%s8 + $0x38] sm:$0xf]
      %v5218 = vld [vmem:[%s8 + $0x3c] sm:$0xf]
      %v5219 = vld [vmem:[#allocation4] sm:$0xf]
      %v5220 = vld [vmem:[#allocation4 + $0x4] sm:$0xf]
      %v5221 = vld [vmem:[#allocation4 + $0x8] sm:$0xf]
      %v5222 = vld [vmem:[#allocation4 + $0xc] sm:$0xf]
      %v5223 = vld [vmem:[%s9] sm:$0xf]
      %v5224 = vld [vmem:[%s9 + $0x4] sm:$0xf]
      %v5225 = vld [vmem:[%s9 + $0x8] sm:$0xf]
      %v5226 = vld [vmem:[%s9 + $0xc] sm:$0xf]
      %v5227 = vld [vmem:[%s9 + $0x10] sm:$0xf]
      %v5228 = vld [vmem:[%s9 + $0x14] sm:$0xf]
      %v5229 = vld [vmem:[%s9 + $0x18] sm:$0xf]
      %v5230 = vld [vmem:[%s9 + $0x1c] sm:$0xf]
      %v5235 = vunpack.c.l.b16 %v5219
      %v5236 = vunpack.c.l.b16 %v5220
      %v5237 = vunpack.c.l.b16 %v5221
      %v5238 = vunpack.c.l.b16 %v5222
      %v5239 = vpack.c.b16 %v5236, %v5235
      %v5240 = vpack.c.b16 %v5238, %v5237
      %v5249 = vunpack.c.l.b16 %v5223
      %v5250 = vunpack.c.l.b16 %v5224
      %v5251 = vunpack.c.l.b16 %v5225
      %v5252 = vunpack.c.l.b16 %v5226
      %v5253 = vunpack.c.l.b16 %v5227
      %v5254 = vunpack.c.l.b16 %v5228
      %v5255 = vunpack.c.l.b16 %v5229
      %v5256 = vunpack.c.l.b16 %v5230
      %v5257 = vpack.c.b16 %v5250, %v5249
      %v5258 = vpack.c.b16 %v5252, %v5251
      %v5259 = vpack.c.b16 %v5254, %v5253
      %v5260 = vpack.c.b16 %v5256, %v5255
      %v5266 = vsel %vm434, %v5239, 0
      %v5269 = vsel %vm434, %v5240, 0
      %5271 = vmatprep.subr.bf16.mxu0 0
      %5272 = vmatpush1.bf16.msra.mxu0 0
      %5273 = vmatprep.subr.bf16.mxu0 0
      %5274 = vmatpush1.bf16.msra.mxu0 0
      %5275 = vmatprep.subr.bf16.mxu0 0
      %5276 = vmatpush1.bf16.msra.mxu0 0
      %5277 = vmatprep.subr.bf16.mxu0 0
      %5278 = vmatpush1.bf16.msra.mxu0 0
      %5279 = vmatprep.subr.bf16.mxu0 0
      %5280 = vmatpush1.bf16.msra.mxu0 %v5260
      %5281 = vmatprep.subr.bf16.mxu0 0
      %5282 = vmatpush1.bf16.msra.mxu0 %v5259
      %5283 = vmatprep.subr.bf16.mxu0 0
      %5284 = vmatpush1.bf16.msra.mxu0 %v5258
      %5285 = vmatprep.subr.bf16.mxu0 0
      %5286 = vmatpush1.bf16.msra.mxu0 %v5257
      %5287 = vmatprep.subr.bf16.mxu0 0
      %5288 = vmatpush2.bf16.msra.mxu0 0
      %5289 = vmatprep.subr.bf16.mxu0 0
      %5290 = vmatpush2.bf16.msra.mxu0 0
      %5291 = vmatprep.subr.bf16.mxu0 0
      %5292 = vmatpush2.bf16.msra.mxu0 0
      %5293 = vmatprep.subr.bf16.mxu0 0
      %5294 = vmatpush2.bf16.msra.mxu0 0
      %5295 = vmatprep.subr.bf16.mxu0 0
      %5296 = vmatpush2.bf16.msra.mxu0 0
      %5297 = vmatprep.subr.bf16.mxu0 0
      %5298 = vmatpush2.bf16.msra.mxu0 0
      %5299 = vmatprep.subr.bf16.mxu0 0
      %5300 = vmatpush2.bf16.msra.mxu0 0
      %5301 = vmatprep.subr.bf16.mxu0 0
      %5302 = vmatpush2.bf16.msra.mxu0 0
      %5303 = vmatprep.mubr.bf16.mxu0 0
      %5304 = vmatmul.mubr.bf16.gmra.mxu0 %v5266
      %v5305 = vpop.f32.mrf.mxu0
      %v5306 = vadd.f32 0.0, %v5305
      %v5307 = vpop.f32.mrf.mxu0
      %v5308 = vpop.f32.mrf.mxu0
      %v5309 = vadd.f32 0.0, %v5308
      %v5310 = vpop.f32.mrf.mxu0
      %5311 = vmatprep.mubr.bf16.mxu0 0
      %5312 = vmatmul.mubr.bf16.gmra.mxu0 %v5269
      %v5313 = vpop.f32.mrf.mxu0
      %v5314 = vadd.f32 0.0, %v5313
      %v5315 = vpop.f32.mrf.mxu0
      %v5316 = vpop.f32.mrf.mxu0
      %v5317 = vadd.f32 0.0, %v5316
      %v5318 = vpop.f32.mrf.mxu0
      %5319 = vdwg.mxu0
      %v5324 = vunpack.c.l.b16 %v5199
      %v5325 = vunpack.c.l.b16 %v5200
      %v5326 = vunpack.c.l.b16 %v5201
      %v5327 = vunpack.c.l.b16 %v5202
      %v5328 = vpack.c.b16 %v5325, %v5324
      %v5329 = vpack.c.b16 %v5327, %v5326
      %v5348 = vunpack.c.l.b16 %v5203
      %v5349 = vunpack.c.l.b16 %v5204
      %v5350 = vunpack.c.l.b16 %v5205
      %v5351 = vunpack.c.l.b16 %v5206
      %v5352 = vunpack.c.l.b16 %v5207
      %v5353 = vunpack.c.l.b16 %v5208
      %v5354 = vunpack.c.l.b16 %v5209
      %v5355 = vunpack.c.l.b16 %v5210
      %v5356 = vunpack.c.l.b16 %v5211
      %v5357 = vunpack.c.l.b16 %v5212
      %v5358 = vunpack.c.l.b16 %v5213
      %v5359 = vunpack.c.l.b16 %v5214
      %v5360 = vunpack.c.l.b16 %v5215
      %v5361 = vunpack.c.l.b16 %v5216
      %v5362 = vunpack.c.l.b16 %v5217
      %v5363 = vunpack.c.l.b16 %v5218
      %v5364 = vpack.c.b16 %v5349, %v5348
      %v5365 = vpack.c.b16 %v5351, %v5350
      %v5366 = vpack.c.b16 %v5353, %v5352
      %v5367 = vpack.c.b16 %v5355, %v5354
      %v5368 = vpack.c.b16 %v5357, %v5356
      %v5369 = vpack.c.b16 %v5359, %v5358
      %v5370 = vpack.c.b16 %v5361, %v5360
      %v5371 = vpack.c.b16 %v5363, %v5362
      %5380 = vmatprep.subr.bf16.mxu0 0
      %5381 = vmatpush1.bf16.msra.mxu0 %v5371
      %5382 = vmatprep.subr.bf16.mxu0 0
      %5383 = vmatpush1.bf16.msra.mxu0 %v5370
      %5384 = vmatprep.subr.bf16.mxu0 0
      %5385 = vmatpush1.bf16.msra.mxu0 %v5369
      %5386 = vmatprep.subr.bf16.mxu0 0
      %5387 = vmatpush1.bf16.msra.mxu0 %v5368
      %5388 = vmatprep.subr.bf16.mxu0 0
      %5389 = vmatpush1.bf16.msra.mxu0 %v5367
      %5390 = vmatprep.subr.bf16.mxu0 0
      %5391 = vmatpush1.bf16.msra.mxu0 %v5366
      %5392 = vmatprep.subr.bf16.mxu0 0
      %5393 = vmatpush1.bf16.msra.mxu0 %v5365
      %5394 = vmatprep.subr.bf16.mxu0 0
      %5395 = vmatpush1.bf16.msra.mxu0 %v5364
      %5396 = vmatprep.subr.bf16.mxu0 0
      %5397 = vmatpush2.bf16.msra.mxu0 0
      %5398 = vmatprep.subr.bf16.mxu0 0
      %5399 = vmatpush2.bf16.msra.mxu0 0
      %5400 = vmatprep.subr.bf16.mxu0 0
      %5401 = vmatpush2.bf16.msra.mxu0 0
      %5402 = vmatprep.subr.bf16.mxu0 0
      %5403 = vmatpush2.bf16.msra.mxu0 0
      %5404 = vmatprep.subr.bf16.mxu0 0
      %5405 = vmatpush2.bf16.msra.mxu0 0
      %5406 = vmatprep.subr.bf16.mxu0 0
      %5407 = vmatpush2.bf16.msra.mxu0 0
      %5408 = vmatprep.subr.bf16.mxu0 0
      %5409 = vmatpush2.bf16.msra.mxu0 0
      %5410 = vmatprep.subr.bf16.mxu0 0
      %5411 = vmatpush2.bf16.msra.mxu0 0
      %5412 = vmatprep.mubr.bf16.mxu0 0
      %5413 = vmatmul.mubr.bf16.gmra.mxu0 %v5328
      %v5414 = vpop.f32.mrf.mxu0
      %v5415 = vadd.f32 %v5306, %v5414
      %v5416 = vpop.f32.mrf.mxu0
      %v5417 = vpop.f32.mrf.mxu0
      %v5418 = vadd.f32 %v5309, %v5417
      %v5419 = vpop.f32.mrf.mxu0
      %5420 = vmatprep.mubr.bf16.mxu0 0
      %5421 = vmatmul.mubr.bf16.gmra.mxu0 %v5329
      %v5422 = vpop.f32.mrf.mxu0
      %v5423 = vadd.f32 %v5314, %v5422
      %v5424 = vpop.f32.mrf.mxu0
      %v5425 = vpop.f32.mrf.mxu0
      %v5426 = vadd.f32 %v5317, %v5425
      %v5427 = vpop.f32.mrf.mxu0
      %5428 = vdwg.mxu0
      %v5429 = vld [vmem:[%s10] sm:$0x1]
      %v5431 = vlaneseq
      %v5432 = vshrl.u32 %v5431, 7
      %v5433 = vsub.s32 0, %v5432
      %v5434 = vrot.slane %v5429, %v5433
      %v5436 = vadd.f32 %v5415, %v5434
      %v5437 = vadd.f32 %v5418, %v5434
      %v5438 = vadd.f32 %v5423, %v5434
      %v5439 = vadd.f32 %v5426, %v5434
      %v5440 = vmax.f32 %v5436, 0.0
      %v5441 = vmax.f32 %v5437, 0.0
      %v5442 = vmax.f32 %v5438, 0.0
      %v5443 = vmax.f32 %v5439, 0.0
      %5444 = vst [vmem:[%s386] sm:$0xff] %v5440
      %s5445 = scalar_lea.vmem %s386, 8
      %5446 = vst [vmem:[%s5445] sm:$0xff] %v5441
      %s5447 = scalar_lea.vmem %s386, 16
      %5448 = vst [vmem:[%s5447] sm:$0xff] %v5442
      %s5449 = scalar_lea.vmem %s386, 24
      %5450 = vst [vmem:[%s5449] sm:$0xff] %v5443
      %p5451 = scmp.lt.s32.totalorder %s22, 1
      %s5452 = scalar_select %p5451, %s22, 1
      %s5453 = smul.addr %s5452, 4
      %s5454 = smul.addr %s5453, 8
      %s5455 = scalar_lea.vmem %s11, %s5454
      // Predicated region
      $region65: #{residual_conv3d_forward.1} parent=63 // pred_check
        %p5456 = pneg %p276
      $region66: #{residual_conv3d_forward.1} parent=63 // pred_check_branch
        %5458 = sbr.rel (%p5456) target = $region68
      $region67: #{residual_conv3d_forward.1} parent=63 // pred_region
        _
      $region68: #{residual_conv3d_forward.1} parent=63 // pred_fallthru
        _
    $region64: #{residual_conv3d_forward.1} parent=5 // pred_fallthru
      _
    %p5459 = scmp.le.s32.totalorder 2, %s17
    // Predicated region
    $region69: #{residual_conv3d_forward.1} parent=5 // pred_check
      %p5460 = pneg %p5459
    $region70: #{residual_conv3d_forward.1} parent=5 // pred_check_branch
      %5462 = sbr.rel (%p5460) target = $region72
    $region71: #{residual_conv3d_forward.1} parent=5 // pred_region
      %s5463 = ssub.s32 %s17, 2
      // Predicated region
      $region73: #{residual_conv3d_forward.1} parent=71 // pred_check
        %p5464 = pneg %p282
      $region74: #{residual_conv3d_forward.1} parent=71 // pred_check_branch
        %5466 = sbr.rel (%p5464) target = $region76
      $region75: #{residual_conv3d_forward.1} parent=71 // pred_region
        %p5467 = scmp.lt.s32.totalorder %s23, 1
        %s5468 = scalar_select %p5467, %s23, 1
        %s5469 = smul.addr %s5468, 4
        %s5470 = smul.addr %s5469, 8
        %s5471 = scalar_lea.vmem %s11, %s5470
      $region76: #{residual_conv3d_forward.1} parent=71 // pred_fallthru
        _
    $region72: #{residual_conv3d_forward.1} parent=5 // pred_fallthru
      _
  $region6: #{residual_conv3d_forward.1} parent=0 // loop_footer
    %s21 = sadd.s32 1, %s17
  $region7: #{residual_conv3d_forward.1} parent=0 // loop_footer_branch
    %16 = sbr.rel target = $region3
  $region8: #{residual_conv3d_forward.1} parent=0 // loop_exit
    _

</llo_original>
